<compile_context>
chip_gen: v5e
topology: v5e:2x2
jax: 0.10.0
libtpu: 0.0.40
codegen_flags: <defaults>
</compile_context>

<pallas_src>
import functools

import jax
import jax.numpy as jnp
from jax.experimental import pallas as pl
from jax.experimental.pallas import tpu as pltpu

EPS = 1e-5


# ----------------------------- Pallas kernels ------------------------------ #

def _conv3x3_stats_kernel(*refs, fuse_bn_relu):
    """[optional BN+ReLU] -> in-VMEM zero pad -> 3x3 conv (ONE matmul) -> BN stats.

    fuse_bn_relu=False:
        refs = (x_ref, w_ref, out_ref, stats_ref, pad_ref)
    fuse_bn_relu=True:
        refs = (x_ref, scale_ref, shift_ref, w_ref, out_ref, stats_ref, pad_ref)

    x_ref:     (nb, H, W, Ci)   f32 tile (raw activation or raw previous conv output)
    w_ref:     (9*Ci, P)        folded conv weights (bf16), row = (ky*3+kx)*Ci + c
    out_ref:   (nb*H*W, P)      raw conv output (f32)
    stats_ref: (2, P)           [sum; sumsq] accumulated across the whole grid (f32)
    pad_ref:   (nb, H+2, W+2, Ci) f32 VMEM scratch, border stays zero
    """
    if fuse_bn_relu:
        x_ref, scale_ref, shift_ref, w_ref, out_ref, stats_ref, pad_ref = refs
    else:
        x_ref, w_ref, out_ref, stats_ref, pad_ref = refs

    nb, H, W, Ci = x_ref.shape
    Mb = nb * H * W

    @pl.when(pl.program_id(0) == 0)
    def _init():
        stats_ref[...] = jnp.zeros_like(stats_ref)
        pad_ref[...] = jnp.zeros_like(pad_ref)      # halo border; stays zero afterwards

    x = x_ref[...]
    if fuse_bn_relu:
        # Fused BN1 (folded scale/shift) + ReLU on the raw conv1 output, in f32.
        x = jnp.maximum(x * scale_ref[...] + shift_ref[...], 0.0)
    pad_ref[:, 1:H + 1, 1:W + 1, :] = x             # interior rewritten every step

    # Build the (Mb, 9*Ci) im2col patches in VMEM from 9 statically shifted views.
    slabs = [
        pad_ref[:, ky:ky + H, kx:kx + W, :].reshape(Mb, Ci).astype(jnp.bfloat16)
        for ky in range(3) for kx in range(3)
    ]
    patches = jnp.concatenate(slabs, axis=-1)       # (Mb, 9*Ci) bf16

    # Single MXU matmul with K = 9*Ci, f32 accumulation inside the MXU.
    acc = jnp.dot(patches, w_ref[...], preferred_element_type=jnp.float32)
    out_ref[...] = acc

    stats_ref[...] += jnp.concatenate(
        [jnp.sum(acc, axis=0, keepdims=True),
         jnp.sum(acc * acc, axis=0, keepdims=True)], axis=0)     # (2, P)


def _bn_add_relu_kernel(x_ref, scale_ref, shift_ref, res_ref, o_ref):
    """y = relu(x * scale + shift + residual)  on lane-dense (rows, W*P) tiles."""
    y = x_ref[...] * scale_ref[...] + shift_ref[...] + res_ref[...]
    o_ref[...] = jnp.maximum(y, 0.0).astype(o_ref.dtype)


# --------------------------- pallas_call wrappers --------------------------- #

def _conv3x3_stats(x4d, w_mat, scale=None, shift=None):
    """Run the fused (BN+ReLU)+pad+conv+stats kernel, tiled over the batch dim."""
    N, H, W, Ci = x4d.shape
    K9, P = w_mat.shape
    M = N * H * W

    # Images per grid step: keep a couple thousand output rows so the MXU matmul is
    # well filled, while staying well under the scoped-VMEM limit on every chip.
    nb = max(1, min(N, 2048 // max(1, H * W)))
    while N % nb:
        nb -= 1
    Mb = nb * H * W
    grid = (N // nb,)

    fuse = scale is not None
    kernel = functools.partial(_conv3x3_stats_kernel, fuse_bn_relu=fuse)

    x_spec = pl.BlockSpec((nb, H, W, Ci), lambda i: (i, 0, 0, 0))
    w_spec = pl.BlockSpec((K9, P), lambda i: (0, 0))
    vec_spec = pl.BlockSpec((1, Ci), lambda i: (0, 0))

    if fuse:
        in_specs = [x_spec, vec_spec, vec_spec, w_spec]
        args = (x4d,
                scale.reshape(1, Ci).astype(jnp.float32),
                shift.reshape(1, Ci).astype(jnp.float32),
                w_mat)
    else:
        in_specs = [x_spec, w_spec]
        args = (x4d, w_mat)

    flops = 2 * M * K9 * P
    bytes_accessed = (x4d.size * x4d.dtype.itemsize
                      + w_mat.size * w_mat.dtype.itemsize
                      + M * P * 4 + 2 * P * 4)

    return pl.pallas_call(
        kernel,
        out_shape=(jax.ShapeDtypeStruct((M, P), jnp.float32),
                   jax.ShapeDtypeStruct((2, P), jnp.float32)),
        grid_spec=pltpu.PrefetchScalarGridSpec(
            num_scalar_prefetch=0,
            grid=grid,
            in_specs=in_specs,
            out_specs=(
                pl.BlockSpec((Mb, P), lambda i: (i, 0)),
                pl.BlockSpec((2, P), lambda i: (0, 0)),   # grid-resident accumulator
            ),
            scratch_shapes=[pltpu.VMEM((nb, H + 2, W + 2, Ci), jnp.float32)],
        ),
        # Stats accumulate (and pad border is zeroed once) across the grid ->
        # reduction axis must be "arbitrary" (sequential on one core).
        compiler_params=pltpu.CompilerParams(dimension_semantics=("arbitrary",)),
        cost_estimate=pl.CostEstimate(flops=flops, transcendentals=0,
                                      bytes_accessed=bytes_accessed),
    )(*args)


def _pick_row_tile(rows, max_rows=1024):
    if rows <= max_rows:
        return rows
    t = (max_rows // 8) * 8
    while t >= 8:
        if rows % t == 0:
            return t
        t -= 8
    return rows


def _bn_residual_apply(x_ld, scale_row, shift_row, residual, out_dtype=jnp.float32):
    """Apply folded BN scale/shift + residual + ReLU on lane-dense (R, L) data."""
    R, L = x_ld.shape
    rt = _pick_row_tile(R)
    row_spec = pl.BlockSpec((rt, L), lambda i: (i, 0))
    vec_spec = pl.BlockSpec((1, L), lambda i: (0, 0))

    return pl.pallas_call(
        _bn_add_relu_kernel,
        out_shape=jax.ShapeDtypeStruct((R, L), out_dtype),
        grid_spec=pltpu.PrefetchScalarGridSpec(
            num_scalar_prefetch=0,
            grid=(R // rt,),
            in_specs=[row_spec, vec_spec, vec_spec, row_spec],
            out_specs=row_spec,
        ),
        compiler_params=pltpu.CompilerParams(dimension_semantics=("parallel",)),
    )(x_ld, scale_row, shift_row, residual)


# ------------------------------- JAX glue ---------------------------------- #

def _torch_w_to_mat(w_oihw):
    """(O, I, 3, 3) PyTorch conv weight -> (9*I, O); row = (ky*3+kx)*I + i."""
    O, I, KH, KW = w_oihw.shape
    return jnp.transpose(w_oihw, (2, 3, 1, 0)).reshape(KH * KW * I, O)


def _bn_scale_shift(stats, count, gamma, beta):
    """Fold training-mode BN (biased variance) into one per-channel scale/shift."""
    mean = stats[0] / count
    var = jnp.maximum(stats[1] / count - mean * mean, 0.0)
    scale = gamma * jax.lax.rsqrt(var + EPS)
    shift = beta - mean * scale
    return scale, shift


@jax.jit
def basic_block_forward(x_nchw, w1, g1, b1, w2, g2, b2):
    """BasicBlock forward. x_nchw: (N, C, H, W) -> (N, C, H, W)."""
    N, C, H, W = x_nchw.shape
    P = w1.shape[0]
    assert w1.shape == (P, C, 3, 3) and w2.shape == (P, P, 3, 3)
    assert C == P  # stride=1, downsample=None  =>  inplanes == planes
    M = N * H * W

    x_nhwc = jnp.transpose(x_nchw, (0, 2, 3, 1)).astype(jnp.float32)

    # bf16 matmul operands (MXU native), f32 accumulation inside the kernels.
    w1_mat = _torch_w_to_mat(w1).astype(jnp.bfloat16)
    w2_mat = _torch_w_to_mat(w2).astype(jnp.bfloat16)

    # ---- pass A: conv1 (padding in-kernel) + BN1 batch-stat accumulation ----
    c1_raw, stats1 = _conv3x3_stats(x_nhwc, w1_mat)          # (M, P) f32, (2, P) f32
    scale1, shift1 = _bn_scale_shift(stats1, M, g1, b1)

    # ---- pass B: fused BN1-apply + ReLU + pad + conv2 + BN2 stats ----
    c2_raw, stats2 = _conv3x3_stats(c1_raw.reshape(N, H, W, P), w2_mat,
                                    scale=scale1, shift=shift1)
    scale2, shift2 = _bn_scale_shift(stats2, M, g2, b2)

    # ---- pass C: BN2 + residual + ReLU, lane-dense (N*H, W*P) layout ----
    out_ld = _bn_residual_apply(
        c2_raw.reshape(N * H, W * P),                        # free HBM-level reshape
        jnp.tile(scale2, W).reshape(1, W * P),
        jnp.tile(shift2, W).reshape(1, W * P),
        residual=x_nhwc.reshape(N * H, W * C),               # f32 residual
        out_dtype=jnp.float32,
    )

    return jnp.transpose(out_ld.reshape(N, H, W, P), (0, 3, 1, 2))


# ------------------------------ reference ---------------------------------- #

def _conv3x3_ref(x_nchw, w_oihw):
    return jax.lax.conv_general_dilated(
        x_nchw, w_oihw, window_strides=(1, 1), padding=((1, 1), (1, 1)),
        dimension_numbers=("NCHW", "OIHW", "NCHW"))


def _bn_train_ref(x, g, b):
    mean = x.mean(axis=(0, 2, 3), keepdims=True)
    var = ((x - mean) ** 2).mean(axis=(0, 2, 3), keepdims=True)
    return ((x - mean) * jax.lax.rsqrt(var + EPS)
            * g.reshape(1, -1, 1, 1) + b.reshape(1, -1, 1, 1))


def basic_block_ref(x, w1, g1, b1, w2, g2, b2, quantize=False):
    """Pure-JAX reference. quantize=True models the kernel's bf16 matmul operands."""
    q = (lambda a: a.astype(jnp.bfloat16).astype(jnp.float32)) if quantize else (lambda a: a)
    out = jax.nn.relu(_bn_train_ref(_conv3x3_ref(q(x), q(w1)), g1, b1))
    out = _bn_train_ref(_conv3x3_ref(q(out), q(w2)), g2, b2)
    return jax.nn.relu(out + x)


# --------------------------------- main ------------------------------------ #

if __name__ == "__main__":
    N, C, H, W = 2, 8, 16, 16      # inplanes == planes (downsample=None, stride=1)
    planes = C

    key = jax.random.PRNGKey(0)
    kx, k1, k2 = jax.random.split(key, 3)

    x = jax.random.normal(kx, (N, C, H, W), dtype=jnp.float32)
    w1 = 0.1 * jax.random.normal(k1, (planes, C, 3, 3), dtype=jnp.float32)
    w2 = 0.1 * jax.random.normal(k2, (planes, planes, 3, 3), dtype=jnp.float32)
    # BatchNorm2d default init: weight=1, bias=0
    g1 = jnp.ones((planes,), jnp.float32)
    b1 = jnp.zeros((planes,), jnp.float32)
    g2 = jnp.ones((planes,), jnp.float32)
    b2 = jnp.zeros((planes,), jnp.float32)

    out = jax.block_until_ready(basic_block_forward(x, w1, g1, b1, w2, g2, b2))
    assert out.shape == (N, planes, H, W), out.shape

    # Tight check vs a reference that models the deliberate bf16 operand rounding.
    ref_q = basic_block_ref(x, w1, g1, b1, w2, g2, b2, quantize=True)
    err_q = float(jnp.max(jnp.abs(out - ref_q)))
    assert jnp.allclose(out, ref_q, atol=2e-3, rtol=2e-3), err_q

    # Sanity check vs the full-f32 reference (difference = bf16 operand rounding only).
    ref = basic_block_ref(x, w1, g1, b1, w2, g2, b2)
    err = float(jnp.max(jnp.abs(out - ref)))
    assert jnp.allclose(out, ref, atol=6e-2, rtol=6e-2), err

    print("KERNEL_OK")
</pallas_src>

<mosaic_0001>
module attributes {stable_mosaic.version = 11 : i64} {
  func.func @_conv3x3_stats_kernel(%arg0: i32, %arg1: memref<2x16x16x8xf32, #tpu.memory_space<vmem>>, %arg2: memref<72x8xbf16, #tpu.memory_space<vmem>>, %arg3: memref<512x8xf32, #tpu.memory_space<vmem>>, %arg4: memref<2x8xf32, #tpu.memory_space<vmem>>, %arg5: memref<2x18x18x8xf32, #tpu.memory_space<vmem>>) attributes {dimension_semantics = [#tpu.dimension_semantics<arbitrary>], iteration_bounds = array<i64: 1>, scalar_prefetch = 0 : i64, scratch_operands = 1 : i64, tpu.core_type = #tpu.core_type<tc>, window_params = [{transform_indices = @transform_0, window_bounds = array<i64: 2, 16, 16, 8>}, {pipeline_mode = #tpu.pipeline_mode<synchronous>, transform_indices = @transform_1, window_bounds = array<i64: 72, 8>}, {transform_indices = @transform_2, window_bounds = array<i64: 512, 8>}, {pipeline_mode = #tpu.pipeline_mode<synchronous>, transform_indices = @transform_3, window_bounds = array<i64: 2, 8>}]} {
    %c0_i32 = arith.constant 0 : i32
    %0 = arith.cmpi eq, %arg0, %c0_i32 : i32
    %1 = arith.extui %0 : i1 to i32
    %c0_i32_0 = arith.constant 0 : i32
    %2 = arith.cmpi ne, %1, %c0_i32_0 : i32
    scf.if %2 {
      %cst_52 = arith.constant 0.000000e+00 : f32
      %45 = vector.broadcast %cst_52 : f32 to vector<2x8xf32>
      %c0_53 = arith.constant 0 : index
      %c0_54 = arith.constant 0 : index
      %46 = vector.load %arg4[%c0_53, %c0_54] : memref<2x8xf32, #tpu.memory_space<vmem>>, vector<2x8xf32>
      tpu.vector_store %arg4[%c0_53, %c0_54], %45 {strides = array<i32>} : memref<2x8xf32, #tpu.memory_space<vmem>>, vector<2x8xf32>,
      %cst_55 = arith.constant 0.000000e+00 : f32
      %47 = vector.broadcast %cst_55 : f32 to vector<2x18x18x8xf32>
      %c0_56 = arith.constant 0 : index
      %c0_57 = arith.constant 0 : index
      %c0_58 = arith.constant 0 : index
      %c0_59 = arith.constant 0 : index
      %48 = vector.load %arg5[%c0_56, %c0_57, %c0_58, %c0_59] : memref<2x18x18x8xf32, #tpu.memory_space<vmem>>, vector<2x18x18x8xf32>
      tpu.vector_store %arg5[%c0_56, %c0_57, %c0_58, %c0_59], %47 {strides = array<i32>} : memref<2x18x18x8xf32, #tpu.memory_space<vmem>>, vector<2x18x18x8xf32>,
    } else {
    }
    %c0 = arith.constant 0 : index
    %c0_1 = arith.constant 0 : index
    %c0_2 = arith.constant 0 : index
    %c0_3 = arith.constant 0 : index
    %3 = vector.load %arg1[%c0, %c0_1, %c0_2, %c0_3] : memref<2x16x16x8xf32, #tpu.memory_space<vmem>>, vector<2x16x16x8xf32>
    %c0_4 = arith.constant 0 : index
    %c1 = arith.constant 1 : index
    %c1_5 = arith.constant 1 : index
    %c0_6 = arith.constant 0 : index
    %4 = vector.load %arg5[%c0_4, %c1, %c1_5, %c0_6] : memref<2x18x18x8xf32, #tpu.memory_space<vmem>>, vector<2x16x16x8xf32>
    tpu.vector_store %arg5[%c0_4, %c1, %c1_5, %c0_6], %3 {strides = array<i32>} : memref<2x18x18x8xf32, #tpu.memory_space<vmem>>, vector<2x16x16x8xf32>,
    %c0_7 = arith.constant 0 : index
    %c0_8 = arith.constant 0 : index
    %c0_9 = arith.constant 0 : index
    %c0_10 = arith.constant 0 : index
    %5 = vector.load %arg5[%c0_7, %c0_8, %c0_9, %c0_10] : memref<2x18x18x8xf32, #tpu.memory_space<vmem>>, vector<2x16x16x8xf32>
    %6 = vector.shape_cast %5 : vector<2x16x16x8xf32> to vector<512x8xf32>
    %7 = arith.truncf %6 : vector<512x8xf32> to vector<512x8xbf16>
    %c0_11 = arith.constant 0 : index
    %c0_12 = arith.constant 0 : index
    %c1_13 = arith.constant 1 : index
    %c0_14 = arith.constant 0 : index
    %8 = vector.load %arg5[%c0_11, %c0_12, %c1_13, %c0_14] : memref<2x18x18x8xf32, #tpu.memory_space<vmem>>, vector<2x16x16x8xf32>
    %9 = vector.shape_cast %8 : vector<2x16x16x8xf32> to vector<512x8xf32>
    %10 = arith.truncf %9 : vector<512x8xf32> to vector<512x8xbf16>
    %c0_15 = arith.constant 0 : index
    %c0_16 = arith.constant 0 : index
    %c2 = arith.constant 2 : index
    %c0_17 = arith.constant 0 : index
    %11 = vector.load %arg5[%c0_15, %c0_16, %c2, %c0_17] : memref<2x18x18x8xf32, #tpu.memory_space<vmem>>, vector<2x16x16x8xf32>
    %12 = vector.shape_cast %11 : vector<2x16x16x8xf32> to vector<512x8xf32>
    %13 = arith.truncf %12 : vector<512x8xf32> to vector<512x8xbf16>
    %c0_18 = arith.constant 0 : index
    %c1_19 = arith.constant 1 : index
    %c0_20 = arith.constant 0 : index
    %c0_21 = arith.constant 0 : index
    %14 = vector.load %arg5[%c0_18, %c1_19, %c0_20, %c0_21] : memref<2x18x18x8xf32, #tpu.memory_space<vmem>>, vector<2x16x16x8xf32>
    %15 = vector.shape_cast %14 : vector<2x16x16x8xf32> to vector<512x8xf32>
    %16 = arith.truncf %15 : vector<512x8xf32> to vector<512x8xbf16>
    %c0_22 = arith.constant 0 : index
    %c1_23 = arith.constant 1 : index
    %c1_24 = arith.constant 1 : index
    %c0_25 = arith.constant 0 : index
    %17 = vector.load %arg5[%c0_22, %c1_23, %c1_24, %c0_25] : memref<2x18x18x8xf32, #tpu.memory_space<vmem>>, vector<2x16x16x8xf32>
    %18 = vector.shape_cast %17 : vector<2x16x16x8xf32> to vector<512x8xf32>
    %19 = arith.truncf %18 : vector<512x8xf32> to vector<512x8xbf16>
    %c0_26 = arith.constant 0 : index
    %c1_27 = arith.constant 1 : index
    %c2_28 = arith.constant 2 : index
    %c0_29 = arith.constant 0 : index
    %20 = vector.load %arg5[%c0_26, %c1_27, %c2_28, %c0_29] : memref<2x18x18x8xf32, #tpu.memory_space<vmem>>, vector<2x16x16x8xf32>
    %21 = vector.shape_cast %20 : vector<2x16x16x8xf32> to vector<512x8xf32>
    %22 = arith.truncf %21 : vector<512x8xf32> to vector<512x8xbf16>
    %c0_30 = arith.constant 0 : index
    %c2_31 = arith.constant 2 : index
    %c0_32 = arith.constant 0 : index
    %c0_33 = arith.constant 0 : index
    %23 = vector.load %arg5[%c0_30, %c2_31, %c0_32, %c0_33] : memref<2x18x18x8xf32, #tpu.memory_space<vmem>>, vector<2x16x16x8xf32>
    %24 = vector.shape_cast %23 : vector<2x16x16x8xf32> to vector<512x8xf32>
    %25 = arith.truncf %24 : vector<512x8xf32> to vector<512x8xbf16>
    %c0_34 = arith.constant 0 : index
    %c2_35 = arith.constant 2 : index
    %c1_36 = arith.constant 1 : index
    %c0_37 = arith.constant 0 : index
    %26 = vector.load %arg5[%c0_34, %c2_35, %c1_36, %c0_37] : memref<2x18x18x8xf32, #tpu.memory_space<vmem>>, vector<2x16x16x8xf32>
    %27 = vector.shape_cast %26 : vector<2x16x16x8xf32> to vector<512x8xf32>
    %28 = arith.truncf %27 : vector<512x8xf32> to vector<512x8xbf16>
    %c0_38 = arith.constant 0 : index
    %c2_39 = arith.constant 2 : index
    %c2_40 = arith.constant 2 : index
    %c0_41 = arith.constant 0 : index
    %29 = vector.load %arg5[%c0_38, %c2_39, %c2_40, %c0_41] : memref<2x18x18x8xf32, #tpu.memory_space<vmem>>, vector<2x16x16x8xf32>
    %30 = vector.shape_cast %29 : vector<2x16x16x8xf32> to vector<512x8xf32>
    %31 = arith.truncf %30 : vector<512x8xf32> to vector<512x8xbf16>
    %32 = tpu.concatenate %7, %10, %13, %16, %19, %22, %25, %28, %31 in 1 : vector<512x8xbf16>, vector<512x8xbf16>, vector<512x8xbf16>, vector<512x8xbf16>, vector<512x8xbf16>, vector<512x8xbf16>, vector<512x8xbf16>, vector<512x8xbf16>, vector<512x8xbf16> -> vector<512x72xbf16>
    %c0_42 = arith.constant 0 : index
    %c0_43 = arith.constant 0 : index
    %33 = vector.load %arg2[%c0_42, %c0_43] : memref<72x8xbf16, #tpu.memory_space<vmem>>, vector<72x8xbf16>
    %cst = arith.constant dense<0.000000e+00> : vector<512x8xf32>
    %34 = tpu.matmul %32, %33, %cst {dimension_numbers = #tpu.dot_dimension_numbers<[1], [0], [0], [1], [0, 0, 1, 1], [], []>} : vector<512x72xbf16>, vector<72x8xbf16>, vector<512x8xf32> -> vector<512x8xf32>
    %c0_44 = arith.constant 0 : index
    %c0_45 = arith.constant 0 : index
    %35 = vector.load %arg3[%c0_44, %c0_45] : memref<512x8xf32, #tpu.memory_space<vmem>>, vector<512x8xf32>
    tpu.vector_store %arg3[%c0_44, %c0_45], %34 {strides = array<i32>} : memref<512x8xf32, #tpu.memory_space<vmem>>, vector<512x8xf32>,
    %c0_46 = arith.constant 0 : index
    %c0_47 = arith.constant 0 : index
    %36 = vector.load %arg4[%c0_46, %c0_47] : memref<2x8xf32, #tpu.memory_space<vmem>>, vector<2x8xf32>
    %cst_48 = arith.constant dense<0.000000e+00> : vector<8xf32>
    %37 = vector.multi_reduction <add>, %34, %cst_48 [0] : vector<512x8xf32> to vector<8xf32>
    %38 = vector.shape_cast %37 : vector<8xf32> to vector<1x8xf32>
    %39 = arith.mulf %34, %34 : vector<512x8xf32>
    %cst_49 = arith.constant dense<0.000000e+00> : vector<8xf32>
    %40 = vector.multi_reduction <add>, %39, %cst_49 [0] : vector<512x8xf32> to vector<8xf32>
    %41 = vector.shape_cast %40 : vector<8xf32> to vector<1x8xf32>
    %42 = tpu.concatenate %38, %41 in 0 : vector<1x8xf32>, vector<1x8xf32> -> vector<2x8xf32>
    %43 = arith.addf %36, %42 : vector<2x8xf32>
    %c0_50 = arith.constant 0 : index
    %c0_51 = arith.constant 0 : index
    %44 = vector.load %arg4[%c0_50, %c0_51] : memref<2x8xf32, #tpu.memory_space<vmem>>, vector<2x8xf32>
    tpu.vector_store %arg4[%c0_50, %c0_51], %43 {strides = array<i32>} : memref<2x8xf32, #tpu.memory_space<vmem>>, vector<2x8xf32>,
    return
  }
  func.func @transform_0(%arg0: i32) -> (i32, i32, i32, i32) {
    %c0_i32 = arith.constant 0 : i32
    %c0_i32_0 = arith.constant 0 : i32
    %c0_i32_1 = arith.constant 0 : i32
    %c0_i32_2 = arith.constant 0 : i32
    return %arg0, %c0_i32, %c0_i32_0, %c0_i32_1 : i32, i32, i32, i32
  }
  func.func @transform_1(%arg0: i32) -> (i32, i32) {
    %c0_i32 = arith.constant 0 : i32
    %c0_i32_0 = arith.constant 0 : i32
    %c0_i32_1 = arith.constant 0 : i32
    return %c0_i32, %c0_i32_0 : i32, i32
  }
  func.func @transform_2(%arg0: i32) -> (i32, i32) {
    %c0_i32 = arith.constant 0 : i32
    %c0_i32_0 = arith.constant 0 : i32
    return %arg0, %c0_i32 : i32, i32
  }
  func.func @transform_3(%arg0: i32) -> (i32, i32) {
    %c0_i32 = arith.constant 0 : i32
    %c0_i32_0 = arith.constant 0 : i32
    %c0_i32_1 = arith.constant 0 : i32
    return %c0_i32, %c0_i32_0 : i32, i32
  }
}

module attributes {stable_mosaic.version = 11 : i64} {
  func.func @_conv3x3_stats_kernel(%arg0: i32, %arg1: memref<2x16x16x8xf32, #tpu.memory_space<vmem>>, %arg2: memref<1x8xf32, #tpu.memory_space<vmem>>, %arg3: memref<1x8xf32, #tpu.memory_space<vmem>>, %arg4: memref<72x8xbf16, #tpu.memory_space<vmem>>, %arg5: memref<512x8xf32, #tpu.memory_space<vmem>>, %arg6: memref<2x8xf32, #tpu.memory_space<vmem>>, %arg7: memref<2x18x18x8xf32, #tpu.memory_space<vmem>>) attributes {dimension_semantics = [#tpu.dimension_semantics<arbitrary>], iteration_bounds = array<i64: 1>, scalar_prefetch = 0 : i64, scratch_operands = 1 : i64, tpu.core_type = #tpu.core_type<tc>, window_params = [{transform_indices = @transform_0, window_bounds = array<i64: 2, 16, 16, 8>}, {pipeline_mode = #tpu.pipeline_mode<synchronous>, transform_indices = @transform_1, window_bounds = array<i64: 1, 8>}, {pipeline_mode = #tpu.pipeline_mode<synchronous>, transform_indices = @transform_2, window_bounds = array<i64: 1, 8>}, {pipeline_mode = #tpu.pipeline_mode<synchronous>, transform_indices = @transform_3, window_bounds = array<i64: 72, 8>}, {transform_indices = @transform_4, window_bounds = array<i64: 512, 8>}, {pipeline_mode = #tpu.pipeline_mode<synchronous>, transform_indices = @transform_5, window_bounds = array<i64: 2, 8>}]} {
    %c0_i32 = arith.constant 0 : i32
    %0 = arith.cmpi eq, %arg0, %c0_i32 : i32
    %1 = arith.extui %0 : i1 to i32
    %c0_i32_0 = arith.constant 0 : i32
    %2 = arith.cmpi ne, %1, %c0_i32_0 : i32
    scf.if %2 {
      %cst_57 = arith.constant 0.000000e+00 : f32
      %55 = vector.broadcast %cst_57 : f32 to vector<2x8xf32>
      %c0_58 = arith.constant 0 : index
      %c0_59 = arith.constant 0 : index
      %56 = vector.load %arg6[%c0_58, %c0_59] : memref<2x8xf32, #tpu.memory_space<vmem>>, vector<2x8xf32>
      tpu.vector_store %arg6[%c0_58, %c0_59], %55 {strides = array<i32>} : memref<2x8xf32, #tpu.memory_space<vmem>>, vector<2x8xf32>,
      %cst_60 = arith.constant 0.000000e+00 : f32
      %57 = vector.broadcast %cst_60 : f32 to vector<2x18x18x8xf32>
      %c0_61 = arith.constant 0 : index
      %c0_62 = arith.constant 0 : index
      %c0_63 = arith.constant 0 : index
      %c0_64 = arith.constant 0 : index
      %58 = vector.load %arg7[%c0_61, %c0_62, %c0_63, %c0_64] : memref<2x18x18x8xf32, #tpu.memory_space<vmem>>, vector<2x18x18x8xf32>
      tpu.vector_store %arg7[%c0_61, %c0_62, %c0_63, %c0_64], %57 {strides = array<i32>} : memref<2x18x18x8xf32, #tpu.memory_space<vmem>>, vector<2x18x18x8xf32>,
    } else {
    }
    %c0 = arith.constant 0 : index
    %c0_1 = arith.constant 0 : index
    %c0_2 = arith.constant 0 : index
    %c0_3 = arith.constant 0 : index
    %3 = vector.load %arg1[%c0, %c0_1, %c0_2, %c0_3] : memref<2x16x16x8xf32, #tpu.memory_space<vmem>>, vector<2x16x16x8xf32>
    %c0_4 = arith.constant 0 : index
    %c0_5 = arith.constant 0 : index
    %4 = vector.load %arg2[%c0_4, %c0_5] : memref<1x8xf32, #tpu.memory_space<vmem>>, vector<1x8xf32>
    %5 = vector.shape_cast %4 : vector<1x8xf32> to vector<1x1x1x8xf32>
    %6 = vector.broadcast %5 : vector<1x1x1x8xf32> to vector<2x16x16x8xf32>
    %7 = arith.mulf %3, %6 : vector<2x16x16x8xf32>
    %c0_6 = arith.constant 0 : index
    %c0_7 = arith.constant 0 : index
    %8 = vector.load %arg3[%c0_6, %c0_7] : memref<1x8xf32, #tpu.memory_space<vmem>>, vector<1x8xf32>
    %9 = vector.shape_cast %8 : vector<1x8xf32> to vector<1x1x1x8xf32>
    %10 = vector.broadcast %9 : vector<1x1x1x8xf32> to vector<2x16x16x8xf32>
    %11 = arith.addf %7, %10 : vector<2x16x16x8xf32>
    %cst = arith.constant 0.000000e+00 : f32
    %12 = vector.broadcast %cst : f32 to vector<2x16x16x8xf32>
    %13 = arith.maximumf %11, %12 : vector<2x16x16x8xf32>
    %c0_8 = arith.constant 0 : index
    %c1 = arith.constant 1 : index
    %c1_9 = arith.constant 1 : index
    %c0_10 = arith.constant 0 : index
    %14 = vector.load %arg7[%c0_8, %c1, %c1_9, %c0_10] : memref<2x18x18x8xf32, #tpu.memory_space<vmem>>, vector<2x16x16x8xf32>
    tpu.vector_store %arg7[%c0_8, %c1, %c1_9, %c0_10], %13 {strides = array<i32>} : memref<2x18x18x8xf32, #tpu.memory_space<vmem>>, vector<2x16x16x8xf32>,
    %c0_11 = arith.constant 0 : index
    %c0_12 = arith.constant 0 : index
    %c0_13 = arith.constant 0 : index
    %c0_14 = arith.constant 0 : index
    %15 = vector.load %arg7[%c0_11, %c0_12, %c0_13, %c0_14] : memref<2x18x18x8xf32, #tpu.memory_space<vmem>>, vector<2x16x16x8xf32>
    %16 = vector.shape_cast %15 : vector<2x16x16x8xf32> to vector<512x8xf32>
    %17 = arith.truncf %16 : vector<512x8xf32> to vector<512x8xbf16>
    %c0_15 = arith.constant 0 : index
    %c0_16 = arith.constant 0 : index
    %c1_17 = arith.constant 1 : index
    %c0_18 = arith.constant 0 : index
    %18 = vector.load %arg7[%c0_15, %c0_16, %c1_17, %c0_18] : memref<2x18x18x8xf32, #tpu.memory_space<vmem>>, vector<2x16x16x8xf32>
    %19 = vector.shape_cast %18 : vector<2x16x16x8xf32> to vector<512x8xf32>
    %20 = arith.truncf %19 : vector<512x8xf32> to vector<512x8xbf16>
    %c0_19 = arith.constant 0 : index
    %c0_20 = arith.constant 0 : index
    %c2 = arith.constant 2 : index
    %c0_21 = arith.constant 0 : index
    %21 = vector.load %arg7[%c0_19, %c0_20, %c2, %c0_21] : memref<2x18x18x8xf32, #tpu.memory_space<vmem>>, vector<2x16x16x8xf32>
    %22 = vector.shape_cast %21 : vector<2x16x16x8xf32> to vector<512x8xf32>
    %23 = arith.truncf %22 : vector<512x8xf32> to vector<512x8xbf16>
    %c0_22 = arith.constant 0 : index
    %c1_23 = arith.constant 1 : index
    %c0_24 = arith.constant 0 : index
    %c0_25 = arith.constant 0 : index
    %24 = vector.load %arg7[%c0_22, %c1_23, %c0_24, %c0_25] : memref<2x18x18x8xf32, #tpu.memory_space<vmem>>, vector<2x16x16x8xf32>
    %25 = vector.shape_cast %24 : vector<2x16x16x8xf32> to vector<512x8xf32>
    %26 = arith.truncf %25 : vector<512x8xf32> to vector<512x8xbf16>
    %c0_26 = arith.constant 0 : index
    %c1_27 = arith.constant 1 : index
    %c1_28 = arith.constant 1 : index
    %c0_29 = arith.constant 0 : index
    %27 = vector.load %arg7[%c0_26, %c1_27, %c1_28, %c0_29] : memref<2x18x18x8xf32, #tpu.memory_space<vmem>>, vector<2x16x16x8xf32>
    %28 = vector.shape_cast %27 : vector<2x16x16x8xf32> to vector<512x8xf32>
    %29 = arith.truncf %28 : vector<512x8xf32> to vector<512x8xbf16>
    %c0_30 = arith.constant 0 : index
    %c1_31 = arith.constant 1 : index
    %c2_32 = arith.constant 2 : index
    %c0_33 = arith.constant 0 : index
    %30 = vector.load %arg7[%c0_30, %c1_31, %c2_32, %c0_33] : memref<2x18x18x8xf32, #tpu.memory_space<vmem>>, vector<2x16x16x8xf32>
    %31 = vector.shape_cast %30 : vector<2x16x16x8xf32> to vector<512x8xf32>
    %32 = arith.truncf %31 : vector<512x8xf32> to vector<512x8xbf16>
    %c0_34 = arith.constant 0 : index
    %c2_35 = arith.constant 2 : index
    %c0_36 = arith.constant 0 : index
    %c0_37 = arith.constant 0 : index
    %33 = vector.load %arg7[%c0_34, %c2_35, %c0_36, %c0_37] : memref<2x18x18x8xf32, #tpu.memory_space<vmem>>, vector<2x16x16x8xf32>
    %34 = vector.shape_cast %33 : vector<2x16x16x8xf32> to vector<512x8xf32>
    %35 = arith.truncf %34 : vector<512x8xf32> to vector<512x8xbf16>
    %c0_38 = arith.constant 0 : index
    %c2_39 = arith.constant 2 : index
    %c1_40 = arith.constant 1 : index
    %c0_41 = arith.constant 0 : index
    %36 = vector.load %arg7[%c0_38, %c2_39, %c1_40, %c0_41] : memref<2x18x18x8xf32, #tpu.memory_space<vmem>>, vector<2x16x16x8xf32>
    %37 = vector.shape_cast %36 : vector<2x16x16x8xf32> to vector<512x8xf32>
    %38 = arith.truncf %37 : vector<512x8xf32> to vector<512x8xbf16>
    %c0_42 = arith.constant 0 : index
    %c2_43 = arith.constant 2 : index
    %c2_44 = arith.constant 2 : index
    %c0_45 = arith.constant 0 : index
    %39 = vector.load %arg7[%c0_42, %c2_43, %c2_44, %c0_45] : memref<2x18x18x8xf32, #tpu.memory_space<vmem>>, vector<2x16x16x8xf32>
    %40 = vector.shape_cast %39 : vector<2x16x16x8xf32> to vector<512x8xf32>
    %41 = arith.truncf %40 : vector<512x8xf32> to vector<512x8xbf16>
    %42 = tpu.concatenate %17, %20, %23, %26, %29, %32, %35, %38, %41 in 1 : vector<512x8xbf16>, vector<512x8xbf16>, vector<512x8xbf16>, vector<512x8xbf16>, vector<512x8xbf16>, vector<512x8xbf16>, vector<512x8xbf16>, vector<512x8xbf16>, vector<512x8xbf16> -> vector<512x72xbf16>
    %c0_46 = arith.constant 0 : index
    %c0_47 = arith.constant 0 : index
    %43 = vector.load %arg4[%c0_46, %c0_47] : memref<72x8xbf16, #tpu.memory_space<vmem>>, vector<72x8xbf16>
    %cst_48 = arith.constant dense<0.000000e+00> : vector<512x8xf32>
    %44 = tpu.matmul %42, %43, %cst_48 {dimension_numbers = #tpu.dot_dimension_numbers<[1], [0], [0], [1], [0, 0, 1, 1], [], []>} : vector<512x72xbf16>, vector<72x8xbf16>, vector<512x8xf32> -> vector<512x8xf32>
    %c0_49 = arith.constant 0 : index
    %c0_50 = arith.constant 0 : index
    %45 = vector.load %arg5[%c0_49, %c0_50] : memref<512x8xf32, #tpu.memory_space<vmem>>, vector<512x8xf32>
    tpu.vector_store %arg5[%c0_49, %c0_50], %44 {strides = array<i32>} : memref<512x8xf32, #tpu.memory_space<vmem>>, vector<512x8xf32>,
    %c0_51 = arith.constant 0 : index
    %c0_52 = arith.constant 0 : index
    %46 = vector.load %arg6[%c0_51, %c0_52] : memref<2x8xf32, #tpu.memory_space<vmem>>, vector<2x8xf32>
    %cst_53 = arith.constant dense<0.000000e+00> : vector<8xf32>
    %47 = vector.multi_reduction <add>, %44, %cst_53 [0] : vector<512x8xf32> to vector<8xf32>
    %48 = vector.shape_cast %47 : vector<8xf32> to vector<1x8xf32>
    %49 = arith.mulf %44, %44 : vector<512x8xf32>
    %cst_54 = arith.constant dense<0.000000e+00> : vector<8xf32>
    %50 = vector.multi_reduction <add>, %49, %cst_54 [0] : vector<512x8xf32> to vector<8xf32>
    %51 = vector.shape_cast %50 : vector<8xf32> to vector<1x8xf32>
    %52 = tpu.concatenate %48, %51 in 0 : vector<1x8xf32>, vector<1x8xf32> -> vector<2x8xf32>
    %53 = arith.addf %46, %52 : vector<2x8xf32>
    %c0_55 = arith.constant 0 : index
    %c0_56 = arith.constant 0 : index
    %54 = vector.load %arg6[%c0_55, %c0_56] : memref<2x8xf32, #tpu.memory_space<vmem>>, vector<2x8xf32>
    tpu.vector_store %arg6[%c0_55, %c0_56], %53 {strides = array<i32>} : memref<2x8xf32, #tpu.memory_space<vmem>>, vector<2x8xf32>,
    return
  }
  func.func @transform_0(%arg0: i32) -> (i32, i32, i32, i32) {
    %c0_i32 = arith.constant 0 : i32
    %c0_i32_0 = arith.constant 0 : i32
    %c0_i32_1 = arith.constant 0 : i32
    %c0_i32_2 = arith.constant 0 : i32
    return %arg0, %c0_i32, %c0_i32_0, %c0_i32_1 : i32, i32, i32, i32
  }
  func.func @transform_1(%arg0: i32) -> (i32, i32) {
    %c0_i32 = arith.constant 0 : i32
    %c0_i32_0 = arith.constant 0 : i32
    %c0_i32_1 = arith.constant 0 : i32
    return %c0_i32, %c0_i32_0 : i32, i32
  }
  func.func @transform_2(%arg0: i32) -> (i32, i32) {
    %c0_i32 = arith.constant 0 : i32
    %c0_i32_0 = arith.constant 0 : i32
    %c0_i32_1 = arith.constant 0 : i32
    return %c0_i32, %c0_i32_0 : i32, i32
  }
  func.func @transform_3(%arg0: i32) -> (i32, i32) {
    %c0_i32 = arith.constant 0 : i32
    %c0_i32_0 = arith.constant 0 : i32
    %c0_i32_1 = arith.constant 0 : i32
    return %c0_i32, %c0_i32_0 : i32, i32
  }
  func.func @transform_4(%arg0: i32) -> (i32, i32) {
    %c0_i32 = arith.constant 0 : i32
    %c0_i32_0 = arith.constant 0 : i32
    return %arg0, %c0_i32 : i32, i32
  }
  func.func @transform_5(%arg0: i32) -> (i32, i32) {
    %c0_i32 = arith.constant 0 : i32
    %c0_i32_0 = arith.constant 0 : i32
    %c0_i32_1 = arith.constant 0 : i32
    return %c0_i32, %c0_i32_0 : i32, i32
  }
}

module attributes {stable_mosaic.version = 11 : i64} {
  func.func @_bn_add_relu_kernel(%arg0: i32, %arg1: memref<32x128xf32, #tpu.memory_space<vmem>>, %arg2: memref<1x128xf32, #tpu.memory_space<vmem>>, %arg3: memref<1x128xf32, #tpu.memory_space<vmem>>, %arg4: memref<32x128xf32, #tpu.memory_space<vmem>>, %arg5: memref<32x128xf32, #tpu.memory_space<vmem>>) attributes {dimension_semantics = [#tpu.dimension_semantics<parallel>], iteration_bounds = array<i64: 1>, scalar_prefetch = 0 : i64, scratch_operands = 0 : i64, tpu.core_type = #tpu.core_type<tc>, window_params = [{transform_indices = @transform_0, window_bounds = array<i64: 32, 128>}, {pipeline_mode = #tpu.pipeline_mode<synchronous>, transform_indices = @transform_1, window_bounds = array<i64: 1, 128>}, {pipeline_mode = #tpu.pipeline_mode<synchronous>, transform_indices = @transform_2, window_bounds = array<i64: 1, 128>}, {transform_indices = @transform_3, window_bounds = array<i64: 32, 128>}, {transform_indices = @transform_4, window_bounds = array<i64: 32, 128>}]} {
    %c0 = arith.constant 0 : index
    %c0_0 = arith.constant 0 : index
    %0 = vector.load %arg1[%c0, %c0_0] : memref<32x128xf32, #tpu.memory_space<vmem>>, vector<32x128xf32>
    %c0_1 = arith.constant 0 : index
    %c0_2 = arith.constant 0 : index
    %1 = vector.load %arg2[%c0_1, %c0_2] : memref<1x128xf32, #tpu.memory_space<vmem>>, vector<1x128xf32>
    %2 = vector.broadcast %1 : vector<1x128xf32> to vector<32x128xf32>
    %3 = arith.mulf %0, %2 : vector<32x128xf32>
    %c0_3 = arith.constant 0 : index
    %c0_4 = arith.constant 0 : index
    %4 = vector.load %arg3[%c0_3, %c0_4] : memref<1x128xf32, #tpu.memory_space<vmem>>, vector<1x128xf32>
    %5 = vector.broadcast %4 : vector<1x128xf32> to vector<32x128xf32>
    %6 = arith.addf %3, %5 : vector<32x128xf32>
    %c0_5 = arith.constant 0 : index
    %c0_6 = arith.constant 0 : index
    %7 = vector.load %arg4[%c0_5, %c0_6] : memref<32x128xf32, #tpu.memory_space<vmem>>, vector<32x128xf32>
    %8 = arith.addf %6, %7 : vector<32x128xf32>
    %cst = arith.constant 0.000000e+00 : f32
    %9 = vector.broadcast %cst : f32 to vector<32x128xf32>
    %10 = arith.maximumf %8, %9 : vector<32x128xf32>
    %c0_7 = arith.constant 0 : index
    %c0_8 = arith.constant 0 : index
    %11 = vector.load %arg5[%c0_7, %c0_8] : memref<32x128xf32, #tpu.memory_space<vmem>>, vector<32x128xf32>
    tpu.vector_store %arg5[%c0_7, %c0_8], %10 {strides = array<i32>} : memref<32x128xf32, #tpu.memory_space<vmem>>, vector<32x128xf32>,
    return
  }
  func.func @transform_0(%arg0: i32) -> (i32, i32) {
    %c0_i32 = arith.constant 0 : i32
    %c0_i32_0 = arith.constant 0 : i32
    return %arg0, %c0_i32 : i32, i32
  }
  func.func @transform_1(%arg0: i32) -> (i32, i32) {
    %c0_i32 = arith.constant 0 : i32
    %c0_i32_0 = arith.constant 0 : i32
    %c0_i32_1 = arith.constant 0 : i32
    return %c0_i32, %c0_i32_0 : i32, i32
  }
  func.func @transform_2(%arg0: i32) -> (i32, i32) {
    %c0_i32 = arith.constant 0 : i32
    %c0_i32_0 = arith.constant 0 : i32
    %c0_i32_1 = arith.constant 0 : i32
    return %c0_i32, %c0_i32_0 : i32, i32
  }
  func.func @transform_3(%arg0: i32) -> (i32, i32) {
    %c0_i32 = arith.constant 0 : i32
    %c0_i32_0 = arith.constant 0 : i32
    return %arg0, %c0_i32 : i32, i32
  }
  func.func @transform_4(%arg0: i32) -> (i32, i32) {
    %c0_i32 = arith.constant 0 : i32
    %c0_i32_0 = arith.constant 0 : i32
    return %arg0, %c0_i32 : i32, i32
  }
}

</mosaic_0001>

<llo_original>
// kernel: tile.13
$region0: #{tile.13}
  #allocation0 [shape = 's32[1]{0}', space=sflag, size = 0x4, scoped, tag = 'scoped memory for tile.13']
  %s0 = inlined_call_operand.vmem [shape: f32[8], index: 0, kind: input, shape index: {}]
  %s1 = inlined_call_operand.vmem [shape: f32[16,8], index: 1, kind: output, shape index: {}]
  // Predicated region
  $region2: #{tile.13} parent=0 // pred_check
    _
  $region3: #{tile.13} parent=0 // pred_check_branch
    %3 = sbr.rel (0) target = $region5
  $region4: #{tile.13} parent=0 // pred_region
    _
  $region5: #{tile.13} parent=0 // pred_fallthru
    _
  %v4 = vld [vmem:[%s0] ss:$0 sm:$0xff]
  %5 = vst [vmem:[%s1] sm:$0xff] %v4
  %s6 = scalar_lea.vmem %s1, 8
  %7 = vst [vmem:[%s6] sm:$0xff] %v4

// kernel: tile.14
$region0: #{tile.14}
  %s0 = inlined_call_operand.vmem [shape: f32[16,8], index: 0, kind: input, shape index: {}]
  %s1 = inlined_call_operand.vmem [shape: f32[1,128], index: 1, kind: output, shape index: {}]
  $region1: #{tile.14} parent=0
    #allocation0 [shape = 'u8[4096]{0}', space=vmem, size = 0x1000, scoped, tag = 'scoped mem for output reshape']
    %v2 = vld [vmem:[%s0] sm:$0x1]
    %vm3 = vcmask 64512
    %4 = vst.msk [vmem:[#allocation0] sm:$0x1] %vm3, %v2
    %s5 = scalar_lea.vmem %s0, 15
    %v6 = vld [vmem:[%s5] sm:$0x1]
    %7 = vrot.lane.b32.xlu0 %v6, 120
    %v8 = vpop.permute.xlu0 %7
    %vm9 = vcmask 1048512
    %10 = vst.msk [vmem:[#allocation0] sm:$0x1] %vm9, %v8
    %s11 = scalar_lea.vmem %s0, 14
    %v12 = vld [vmem:[%s11] sm:$0x1]
    %13 = vrot.lane.b32.xlu0 %v12, 112
    %v14 = vpop.permute.xlu0 %13
    %vm15 = vcmask 982912
    %16 = vst.msk [vmem:[#allocation0] sm:$0x1] %vm15, %v14
    %s17 = scalar_lea.vmem %s0, 13
    %v18 = vld [vmem:[%s17] sm:$0x1]
    %19 = vrot.lane.b32.xlu0 %v18, 104
    %v20 = vpop.permute.xlu0 %19
    %vm21 = vcmask 917312
    %22 = vst.msk [vmem:[#allocation0] sm:$0x1] %vm21, %v20
    %s23 = scalar_lea.vmem %s0, 12
    %v24 = vld [vmem:[%s23] sm:$0x1]
    %25 = vrot.lane.b32.xlu0 %v24, 96
    %v26 = vpop.permute.xlu0 %25
    %vm27 = vcmask 851712
    %28 = vst.msk [vmem:[#allocation0] sm:$0x1] %vm27, %v26
    %s29 = scalar_lea.vmem %s0, 11
    %v30 = vld [vmem:[%s29] sm:$0x1]
    %31 = vrot.lane.b32.xlu0 %v30, 88
    %v32 = vpop.permute.xlu0 %31
    %vm33 = vcmask 786112
    %34 = vst.msk [vmem:[#allocation0] sm:$0x1] %vm33, %v32
    %s35 = scalar_lea.vmem %s0, 10
    %v36 = vld [vmem:[%s35] sm:$0x1]
    %37 = vrot.lane.b32.xlu0 %v36, 80
    %v38 = vpop.permute.xlu0 %37
    %vm39 = vcmask 720512
    %40 = vst.msk [vmem:[#allocation0] sm:$0x1] %vm39, %v38
    %s41 = scalar_lea.vmem %s0, 9
    %v42 = vld [vmem:[%s41] sm:$0x1]
    %43 = vrot.lane.b32.xlu0 %v42, 72
    %v44 = vpop.permute.xlu0 %43
    %vm45 = vcmask 654912
    %46 = vst.msk [vmem:[#allocation0] sm:$0x1] %vm45, %v44
    %s47 = scalar_lea.vmem %s0, 8
    %v48 = vld [vmem:[%s47] sm:$0x1]
    %49 = vrot.lane.b32.xlu0 %v48, 64
    %v50 = vpop.permute.xlu0 %49
    %vm51 = vcmask 589312
    %52 = vst.msk [vmem:[#allocation0] sm:$0x1] %vm51, %v50
    %s53 = scalar_lea.vmem %s0, 7
    %v54 = vld [vmem:[%s53] sm:$0x1]
    %55 = vrot.lane.b32.xlu0 %v54, 56
    %v56 = vpop.permute.xlu0 %55
    %vm57 = vcmask 523712
    %58 = vst.msk [vmem:[#allocation0] sm:$0x1] %vm57, %v56
    %s59 = scalar_lea.vmem %s0, 6
    %v60 = vld [vmem:[%s59] sm:$0x1]
    %61 = vrot.lane.b32.xlu0 %v60, 48
    %v62 = vpop.permute.xlu0 %61
    %vm63 = vcmask 458112
    %64 = vst.msk [vmem:[#allocation0] sm:$0x1] %vm63, %v62
    %s65 = scalar_lea.vmem %s0, 5
    %v66 = vld [vmem:[%s65] sm:$0x1]
    %67 = vrot.lane.b32.xlu0 %v66, 40
    %v68 = vpop.permute.xlu0 %67
    %vm69 = vcmask 392512
    %70 = vst.msk [vmem:[#allocation0] sm:$0x1] %vm69, %v68
    %s71 = scalar_lea.vmem %s0, 4
    %v72 = vld [vmem:[%s71] sm:$0x1]
    %73 = vrot.lane.b32.xlu0 %v72, 32
    %v74 = vpop.permute.xlu0 %73
    %vm75 = vcmask 326912
    %76 = vst.msk [vmem:[#allocation0] sm:$0x1] %vm75, %v74
    %s77 = scalar_lea.vmem %s0, 3
    %v78 = vld [vmem:[%s77] sm:$0x1]
    %79 = vrot.lane.b32.xlu0 %v78, 24
    %v80 = vpop.permute.xlu0 %79
    %vm81 = vcmask 261312
    %82 = vst.msk [vmem:[#allocation0] sm:$0x1] %vm81, %v80
    %s83 = scalar_lea.vmem %s0, 2
    %v84 = vld [vmem:[%s83] sm:$0x1]
    %85 = vrot.lane.b32.xlu0 %v84, 16
    %v86 = vpop.permute.xlu0 %85
    %vm87 = vcmask 195712
    %88 = vst.msk [vmem:[#allocation0] sm:$0x1] %vm87, %v86
    %s89 = scalar_lea.vmem %s0, 1
    %v90 = vld [vmem:[%s89] sm:$0x1]
    %91 = vrot.lane.b32.xlu0 %v90, 8
    %v92 = vpop.permute.xlu0 %91
    %vm93 = vcmask 130112
    %94 = vst.msk [vmem:[#allocation0] sm:$0x1] %vm93, %v92
    %s96 = ssub.s32 2, 1
    %v97 = vld [vmem:[#allocation0] sm:%s96]
    %s99 = ssub.s32 2, 1
    %100 = vst [vmem:[%s1] sm:%s99] %v97

// kernel: basic_block_forward.5
$region0: #{basic_block_forward.5}
  #allocation0 [shape = 'u32[]', space=smem, size = 0x4, offset = 0x4, fixed_abs, tag = 'smem constant byte address 0x4 - core index']
  #allocation1 [shape = 'u32[72,128]{1,0:T(1,128)}', space=vmem, size = 0x9000, scoped, tag = 'internal scratch']
  %s0 = inlined_call_operand.vmem [shape: f32[32,128], index: 0, kind: input, shape index: {}]
  %s1 = inlined_call_operand.vmem [shape: f32[1,128], index: 1, kind: input, shape index: {}]
  %s2 = inlined_call_operand.vmem [shape: f32[1,128], index: 2, kind: input, shape index: {}]
  %s3 = inlined_call_operand.vmem [shape: f32[32,128], index: 3, kind: input, shape index: {}]
  %s4 = inlined_call_operand.vmem [shape: f32[32,128], index: 4, kind: output, shape index: {}]
  %s5 = sld [smem:[#allocation0]]
  $region26: #{basic_block_forward.5} parent=0
    _
  %s7 = ssub.s32 1, %s5
  %s8 = scalar_select 0, %s7, %s5
  // Predicated region
  $region2: #{basic_block_forward.5} parent=0 // pred_check
    _
  $region3: #{basic_block_forward.5} parent=0 // pred_check_branch
    %10 = sbr.rel (0) target = $region5
  $region4: #{basic_block_forward.5} parent=0 // pred_region
    _
  $region5: #{basic_block_forward.5} parent=0 // pred_fallthru
    _
  // Predicated region
  $region6: #{basic_block_forward.5} parent=0 // pred_check
    _
  $region7: #{basic_block_forward.5} parent=0 // pred_check_branch
    %12 = sbr.rel (0) target = $region9
  $region8: #{basic_block_forward.5} parent=0 // pred_region
    _
  $region9: #{basic_block_forward.5} parent=0 // pred_fallthru
    _
  // Predicated region
  $region10: #{basic_block_forward.5} parent=0 // pred_check
    _
  $region11: #{basic_block_forward.5} parent=0 // pred_check_branch
    %14 = sbr.rel (0) target = $region13
  $region12: #{basic_block_forward.5} parent=0 // pred_region
    _
  $region13: #{basic_block_forward.5} parent=0 // pred_fallthru
    _
  // Predicated region
  $region14: #{basic_block_forward.5} parent=0 // pred_check
    _
  $region15: #{basic_block_forward.5} parent=0 // pred_check_branch
    %16 = sbr.rel (0) target = $region17
  $region16: #{basic_block_forward.5} parent=0 // pred_region
    _
  $region17: #{basic_block_forward.5} parent=0 // pred_fallthru
    _
  %v17 = vld [vmem:[%s0] sm:$0xff]
  %v18 = vld [vmem:[%s0 + $0x8] sm:$0xff]
  %v19 = vld [vmem:[%s0 + $0x10] sm:$0xff]
  %v20 = vld [vmem:[%s0 + $0x18] sm:$0xff]
  %v21 = vld [vmem:[%s1] sm:$0x1]
  %v23 = vperm.slane %v21, 0
  %v25 = vmul.f32 %v17, %v23
  %v26 = vmul.f32 %v18, %v23
  %v27 = vmul.f32 %v19, %v23
  %v28 = vmul.f32 %v20, %v23
  %v29 = vld [vmem:[%s2] sm:$0x1]
  %v31 = vperm.slane %v29, 0
  %v33 = vadd.f32 %v25, %v31
  %v34 = vadd.f32 %v26, %v31
  %v35 = vadd.f32 %v27, %v31
  %v36 = vadd.f32 %v28, %v31
  %v37 = vld [vmem:[%s3] sm:$0xff]
  %v38 = vld [vmem:[%s3 + $0x8] sm:$0xff]
  %v39 = vld [vmem:[%s3 + $0x10] sm:$0xff]
  %v40 = vld [vmem:[%s3 + $0x18] sm:$0xff]
  %v41 = vadd.f32 %v33, %v37
  %v42 = vadd.f32 %v34, %v38
  %v43 = vadd.f32 %v35, %v39
  %v44 = vadd.f32 %v36, %v40
  %v45 = vmax.f32 %v41, 0.0
  %v46 = vmax.f32 %v42, 0.0
  %v47 = vmax.f32 %v43, 0.0
  %v48 = vmax.f32 %v44, 0.0
  %49 = vst [vmem:[%s4] sm:$0xff] %v45
  %50 = vst [vmem:[%s4 + $0x8] sm:$0xff] %v46
  %51 = vst [vmem:[%s4 + $0x10] sm:$0xff] %v47
  %52 = vst [vmem:[%s4 + $0x18] sm:$0xff] %v48
  // Predicated region
  $region18: #{basic_block_forward.5} parent=0 // pred_check
    _
  $region19: #{basic_block_forward.5} parent=0 // pred_check_branch
    %54 = sbr.rel (0) target = $region21
  $region20: #{basic_block_forward.5} parent=0 // pred_region
    _
  $region21: #{basic_block_forward.5} parent=0 // pred_fallthru
    _
  // Predicated region
  $region22: #{basic_block_forward.5} parent=0 // pred_check
    _
  $region23: #{basic_block_forward.5} parent=0 // pred_check_branch
    %56 = sbr.rel (0) target = $region25
  $region24: #{basic_block_forward.5} parent=0 // pred_region
    _
  $region25: #{basic_block_forward.5} parent=0 // pred_fallthru
    _

// kernel: basic_block_forward.3
$region0: #{basic_block_forward.3}
  #allocation0 [shape = 'u32[]', space=smem, size = 0x4, offset = 0x4, fixed_abs, tag = 'smem constant byte address 0x4 - core index']
  #allocation1 [shape = 'u32[72,128]{1,0:T(1,128)}', space=vmem, size = 0x9000, scoped, tag = 'internal scratch']
  #allocation2 [shape = 'f32[2,18,18,8]{3,2,1,0:T(8,128)}', space=vmem, size = 0x6c000, scoped, tag = 'scratch operand']
  %s0 = inlined_call_operand.vmem [shape: f32[2,16,16,8], index: 0, kind: input, shape index: {}]
  %s1 = inlined_call_operand.vmem [shape: bf16[72,8], index: 1, kind: input, shape index: {}]
  %s2 = inlined_call_operand.vmem [shape: f32[512,8], index: 2, kind: output, shape index: {0}]
  %s3 = inlined_call_operand.vmem [shape: f32[2,8], index: 3, kind: output, shape index: {1}]
  %4 = xla_tuple %s2, %s3
  %s5 = sld [smem:[#allocation0]]
  $region30: #{basic_block_forward.3} parent=0
    _
  %s7 = ssub.s32 1, %s5
  %s8 = scalar_select 0, %s7, %s5
  // Predicated region
  $region2: #{basic_block_forward.3} parent=0 // pred_check
    _
  $region3: #{basic_block_forward.3} parent=0 // pred_check_branch
    %10 = sbr.rel (0) target = $region5
  $region4: #{basic_block_forward.3} parent=0 // pred_region
    _
  $region5: #{basic_block_forward.3} parent=0 // pred_fallthru
    _
  // Predicated region
  $region6: #{basic_block_forward.3} parent=0 // pred_check
    _
  $region7: #{basic_block_forward.3} parent=0 // pred_check_branch
    %12 = sbr.rel (0) target = $region9
  $region8: #{basic_block_forward.3} parent=0 // pred_region
    _
  $region9: #{basic_block_forward.3} parent=0 // pred_fallthru
    _
  %p14 = scmp.eq.s32.totalorder 0, 0
  // Predicated region
  $region10: #{basic_block_forward.3} parent=0 // pred_check
    %p15 = pneg %p14
  $region11: #{basic_block_forward.3} parent=0 // pred_check_branch
    %17 = sbr.rel (%p15) target = $region13
  $region12: #{basic_block_forward.3} parent=0 // pred_region
    %vm18 = vcmask 58368
    %19 = vst.msk [vmem:[%s3] sm:$0x3] %vm18, 0.0
    %vm20 = vcmask 64512
    %21 = vst.msk [vmem:[#allocation2] sm:$0xff] %vm20, 0.0
    %22 = vst.msk [vmem:[#allocation2 + $0x8] sm:$0xff] %vm20, 0.0
    %23 = vst.msk [vmem:[#allocation2 + $0x10] sm:$0x3] %vm18, 0.0
    %24 = vst.msk [vmem:[#allocation2 + $0x18] sm:$0xff] %vm20, 0.0
    %25 = vst.msk [vmem:[#allocation2 + $0x20] sm:$0xff] %vm20, 0.0
    %26 = vst.msk [vmem:[#allocation2 + $0x28] sm:$0x3] %vm18, 0.0
    %27 = vst.msk [vmem:[#allocation2 + $0x30] sm:$0xff] %vm20, 0.0
    %28 = vst.msk [vmem:[#allocation2 + $0x38] sm:$0xff] %vm20, 0.0
    %29 = vst.msk [vmem:[#allocation2 + $0x40] sm:$0x3] %vm18, 0.0
    %30 = vst.msk [vmem:[#allocation2 + $0x48] sm:$0xff] %vm20, 0.0
    %31 = vst.msk [vmem:[#allocation2 + $0x50] sm:$0xff] %vm20, 0.0
    %32 = vst.msk [vmem:[#allocation2 + $0x58] sm:$0x3] %vm18, 0.0
    %33 = vst.msk [vmem:[#allocation2 + $0x60] sm:$0xff] %vm20, 0.0
    %34 = vst.msk [vmem:[#allocation2 + $0x68] sm:$0xff] %vm20, 0.0
    %35 = vst.msk [vmem:[#allocation2 + $0x70] sm:$0x3] %vm18, 0.0
    %36 = vst.msk [vmem:[#allocation2 + $0x78] sm:$0xff] %vm20, 0.0
    %37 = vst.msk [vmem:[#allocation2 + $0x80] sm:$0xff] %vm20, 0.0
    %38 = vst.msk [vmem:[#allocation2 + $0x88] sm:$0x3] %vm18, 0.0
    %39 = vst.msk [vmem:[#allocation2 + $0x90] sm:$0xff] %vm20, 0.0
    %40 = vst.msk [vmem:[#allocation2 + $0x98] sm:$0xff] %vm20, 0.0
    %41 = vst.msk [vmem:[#allocation2 + $0xa0] sm:$0x3] %vm18, 0.0
    %42 = vst.msk [vmem:[#allocation2 + $0xa8] sm:$0xff] %vm20, 0.0
    %43 = vst.msk [vmem:[#allocation2 + $0xb0] sm:$0xff] %vm20, 0.0
    %44 = vst.msk [vmem:[#allocation2 + $0xb8] sm:$0x3] %vm18, 0.0
    %45 = vst.msk [vmem:[#allocation2 + $0xc0] sm:$0xff] %vm20, 0.0
    %46 = vst.msk [vmem:[#allocation2 + $0xc8] sm:$0xff] %vm20, 0.0
    %47 = vst.msk [vmem:[#allocation2 + $0xd0] sm:$0x3] %vm18, 0.0
    %48 = vst.msk [vmem:[#allocation2 + $0xd8] sm:$0xff] %vm20, 0.0
    %49 = vst.msk [vmem:[#allocation2 + $0xe0] sm:$0xff] %vm20, 0.0
    %50 = vst.msk [vmem:[#allocation2 + $0xe8] sm:$0x3] %vm18, 0.0
    %51 = vst.msk [vmem:[#allocation2 + $0xf0] sm:$0xff] %vm20, 0.0
    %52 = vst.msk [vmem:[#allocation2 + $0xf8] sm:$0xff] %vm20, 0.0
    %53 = vst.msk [vmem:[#allocation2 + $0x100] sm:$0x3] %vm18, 0.0
    %54 = vst.msk [vmem:[#allocation2 + $0x108] sm:$0xff] %vm20, 0.0
    %55 = vst.msk [vmem:[#allocation2 + $0x110] sm:$0xff] %vm20, 0.0
    %56 = vst.msk [vmem:[#allocation2 + $0x118] sm:$0x3] %vm18, 0.0
    %57 = vst.msk [vmem:[#allocation2 + $0x120] sm:$0xff] %vm20, 0.0
    %58 = vst.msk [vmem:[#allocation2 + $0x128] sm:$0xff] %vm20, 0.0
    %59 = vst.msk [vmem:[#allocation2 + $0x130] sm:$0x3] %vm18, 0.0
    %60 = vst.msk [vmem:[#allocation2 + $0x138] sm:$0xff] %vm20, 0.0
    %61 = vst.msk [vmem:[#allocation2 + $0x140] sm:$0xff] %vm20, 0.0
    %62 = vst.msk [vmem:[#allocation2 + $0x148] sm:$0x3] %vm18, 0.0
    %63 = vst.msk [vmem:[#allocation2 + $0x150] sm:$0xff] %vm20, 0.0
    %64 = vst.msk [vmem:[#allocation2 + $0x158] sm:$0xff] %vm20, 0.0
    %65 = vst.msk [vmem:[#allocation2 + $0x160] sm:$0x3] %vm18, 0.0
    %66 = vst.msk [vmem:[#allocation2 + $0x168] sm:$0xff] %vm20, 0.0
    %67 = vst.msk [vmem:[#allocation2 + $0x170] sm:$0xff] %vm20, 0.0
    %68 = vst.msk [vmem:[#allocation2 + $0x178] sm:$0x3] %vm18, 0.0
    %69 = vst.msk [vmem:[#allocation2 + $0x180] sm:$0xff] %vm20, 0.0
    %70 = vst.msk [vmem:[#allocation2 + $0x188] sm:$0xff] %vm20, 0.0
    %71 = vst.msk [vmem:[#allocation2 + $0x190] sm:$0x3] %vm18, 0.0
    %72 = vst.msk [vmem:[#allocation2 + $0x198] sm:$0xff] %vm20, 0.0
    %73 = vst.msk [vmem:[#allocation2 + $0x1a0] sm:$0xff] %vm20, 0.0
    %74 = vst.msk [vmem:[#allocation2 + $0x1a8] sm:$0x3] %vm18, 0.0
    %75 = vst.msk [vmem:[#allocation2 + $0x1b0] sm:$0xff] %vm20, 0.0
    %76 = vst.msk [vmem:[#allocation2 + $0x1b8] sm:$0xff] %vm20, 0.0
    %77 = vst.msk [vmem:[#allocation2 + $0x1c0] sm:$0x3] %vm18, 0.0
    %78 = vst.msk [vmem:[#allocation2 + $0x1c8] sm:$0xff] %vm20, 0.0
    %79 = vst.msk [vmem:[#allocation2 + $0x1d0] sm:$0xff] %vm20, 0.0
    %80 = vst.msk [vmem:[#allocation2 + $0x1d8] sm:$0x3] %vm18, 0.0
    %81 = vst.msk [vmem:[#allocation2 + $0x1e0] sm:$0xff] %vm20, 0.0
    %82 = vst.msk [vmem:[#allocation2 + $0x1e8] sm:$0xff] %vm20, 0.0
    %83 = vst.msk [vmem:[#allocation2 + $0x1f0] sm:$0x3] %vm18, 0.0
    %84 = vst.msk [vmem:[#allocation2 + $0x1f8] sm:$0xff] %vm20, 0.0
    %85 = vst.msk [vmem:[#allocation2 + $0x200] sm:$0xff] %vm20, 0.0
    %86 = vst.msk [vmem:[#allocation2 + $0x208] sm:$0x3] %vm18, 0.0
    %87 = vst.msk [vmem:[#allocation2 + $0x210] sm:$0xff] %vm20, 0.0
    %88 = vst.msk [vmem:[#allocation2 + $0x218] sm:$0xff] %vm20, 0.0
    %89 = vst.msk [vmem:[#allocation2 + $0x220] sm:$0x3] %vm18, 0.0
    %90 = vst.msk [vmem:[#allocation2 + $0x228] sm:$0xff] %vm20, 0.0
    %91 = vst.msk [vmem:[#allocation2 + $0x230] sm:$0xff] %vm20, 0.0
    %92 = vst.msk [vmem:[#allocation2 + $0x238] sm:$0x3] %vm18, 0.0
    %93 = vst.msk [vmem:[#allocation2 + $0x240] sm:$0xff] %vm20, 0.0
    %94 = vst.msk [vmem:[#allocation2 + $0x248] sm:$0xff] %vm20, 0.0
    %95 = vst.msk [vmem:[#allocation2 + $0x250] sm:$0x3] %vm18, 0.0
    %96 = vst.msk [vmem:[#allocation2 + $0x258] sm:$0xff] %vm20, 0.0
    %97 = vst.msk [vmem:[#allocation2 + $0x260] sm:$0xff] %vm20, 0.0
    %98 = vst.msk [vmem:[#allocation2 + $0x268] sm:$0x3] %vm18, 0.0
    %99 = vst.msk [vmem:[#allocation2 + $0x270] sm:$0xff] %vm20, 0.0
    %100 = vst.msk [vmem:[#allocation2 + $0x278] sm:$0xff] %vm20, 0.0
    %101 = vst.msk [vmem:[#allocation2 + $0x280] sm:$0x3] %vm18, 0.0
    %102 = vst.msk [vmem:[#allocation2 + $0x288] sm:$0xff] %vm20, 0.0
    %103 = vst.msk [vmem:[#allocation2 + $0x290] sm:$0xff] %vm20, 0.0
    %104 = vst.msk [vmem:[#allocation2 + $0x298] sm:$0x3] %vm18, 0.0
    %105 = vst.msk [vmem:[#allocation2 + $0x2a0] sm:$0xff] %vm20, 0.0
    %106 = vst.msk [vmem:[#allocation2 + $0x2a8] sm:$0xff] %vm20, 0.0
    %107 = vst.msk [vmem:[#allocation2 + $0x2b0] sm:$0x3] %vm18, 0.0
    %108 = vst.msk [vmem:[#allocation2 + $0x2b8] sm:$0xff] %vm20, 0.0
    %109 = vst.msk [vmem:[#allocation2 + $0x2c0] sm:$0xff] %vm20, 0.0
    %110 = vst.msk [vmem:[#allocation2 + $0x2c8] sm:$0x3] %vm18, 0.0
    %111 = vst.msk [vmem:[#allocation2 + $0x2d0] sm:$0xff] %vm20, 0.0
    %112 = vst.msk [vmem:[#allocation2 + $0x2d8] sm:$0xff] %vm20, 0.0
    %113 = vst.msk [vmem:[#allocation2 + $0x2e0] sm:$0x3] %vm18, 0.0
    %114 = vst.msk [vmem:[#allocation2 + $0x2e8] sm:$0xff] %vm20, 0.0
    %115 = vst.msk [vmem:[#allocation2 + $0x2f0] sm:$0xff] %vm20, 0.0
    %116 = vst.msk [vmem:[#allocation2 + $0x2f8] sm:$0x3] %vm18, 0.0
    %117 = vst.msk [vmem:[#allocation2 + $0x300] sm:$0xff] %vm20, 0.0
    %118 = vst.msk [vmem:[#allocation2 + $0x308] sm:$0xff] %vm20, 0.0
    %119 = vst.msk [vmem:[#allocation2 + $0x310] sm:$0x3] %vm18, 0.0
    %120 = vst.msk [vmem:[#allocation2 + $0x318] sm:$0xff] %vm20, 0.0
    %121 = vst.msk [vmem:[#allocation2 + $0x320] sm:$0xff] %vm20, 0.0
    %122 = vst.msk [vmem:[#allocation2 + $0x328] sm:$0x3] %vm18, 0.0
    %123 = vst.msk [vmem:[#allocation2 + $0x330] sm:$0xff] %vm20, 0.0
    %124 = vst.msk [vmem:[#allocation2 + $0x338] sm:$0xff] %vm20, 0.0
    %125 = vst.msk [vmem:[#allocation2 + $0x340] sm:$0x3] %vm18, 0.0
    %126 = vst.msk [vmem:[#allocation2 + $0x348] sm:$0xff] %vm20, 0.0
    %127 = vst.msk [vmem:[#allocation2 + $0x350] sm:$0xff] %vm20, 0.0
    %128 = vst.msk [vmem:[#allocation2 + $0x358] sm:$0x3] %vm18, 0.0
  $region13: #{basic_block_forward.3} parent=0 // pred_fallthru
    _
  %v129 = vld [vmem:[%s0] sm:$0xff]
  %v130 = vld [vmem:[%s0 + $0x8] sm:$0xff]
  %v131 = vld [vmem:[%s0 + $0x10] sm:$0xff]
  %v132 = vld [vmem:[%s0 + $0x18] sm:$0xff]
  %v133 = vld [vmem:[%s0 + $0x20] sm:$0xff]
  %v134 = vld [vmem:[%s0 + $0x28] sm:$0xff]
  %v135 = vld [vmem:[%s0 + $0x30] sm:$0xff]
  %v136 = vld [vmem:[%s0 + $0x38] sm:$0xff]
  %v137 = vld [vmem:[%s0 + $0x40] sm:$0xff]
  %v138 = vld [vmem:[%s0 + $0x48] sm:$0xff]
  %v139 = vld [vmem:[%s0 + $0x50] sm:$0xff]
  %v140 = vld [vmem:[%s0 + $0x58] sm:$0xff]
  %v141 = vld [vmem:[%s0 + $0x60] sm:$0xff]
  %v142 = vld [vmem:[%s0 + $0x68] sm:$0xff]
  %v143 = vld [vmem:[%s0 + $0x70] sm:$0xff]
  %v144 = vld [vmem:[%s0 + $0x78] sm:$0xff]
  %v145 = vld [vmem:[%s0 + $0x80] sm:$0xff]
  %v146 = vld [vmem:[%s0 + $0x88] sm:$0xff]
  %v147 = vld [vmem:[%s0 + $0x90] sm:$0xff]
  %v148 = vld [vmem:[%s0 + $0x98] sm:$0xff]
  %v149 = vld [vmem:[%s0 + $0xa0] sm:$0xff]
  %v150 = vld [vmem:[%s0 + $0xa8] sm:$0xff]
  %v151 = vld [vmem:[%s0 + $0xb0] sm:$0xff]
  %v152 = vld [vmem:[%s0 + $0xb8] sm:$0xff]
  %v153 = vld [vmem:[%s0 + $0xc0] sm:$0xff]
  %v154 = vld [vmem:[%s0 + $0xc8] sm:$0xff]
  %v155 = vld [vmem:[%s0 + $0xd0] sm:$0xff]
  %v156 = vld [vmem:[%s0 + $0xd8] sm:$0xff]
  %v157 = vld [vmem:[%s0 + $0xe0] sm:$0xff]
  %v158 = vld [vmem:[%s0 + $0xe8] sm:$0xff]
  %v159 = vld [vmem:[%s0 + $0xf0] sm:$0xff]
  %v160 = vld [vmem:[%s0 + $0xf8] sm:$0xff]
  %v161 = vld [vmem:[%s0 + $0x100] sm:$0xff]
  %v162 = vld [vmem:[%s0 + $0x108] sm:$0xff]
  %v163 = vld [vmem:[%s0 + $0x110] sm:$0xff]
  %v164 = vld [vmem:[%s0 + $0x118] sm:$0xff]
  %v165 = vld [vmem:[%s0 + $0x120] sm:$0xff]
  %v166 = vld [vmem:[%s0 + $0x128] sm:$0xff]
  %v167 = vld [vmem:[%s0 + $0x130] sm:$0xff]
  %v168 = vld [vmem:[%s0 + $0x138] sm:$0xff]
  %v169 = vld [vmem:[%s0 + $0x140] sm:$0xff]
  %v170 = vld [vmem:[%s0 + $0x148] sm:$0xff]
  %v171 = vld [vmem:[%s0 + $0x150] sm:$0xff]
  %v172 = vld [vmem:[%s0 + $0x158] sm:$0xff]
  %v173 = vld [vmem:[%s0 + $0x160] sm:$0xff]
  %v174 = vld [vmem:[%s0 + $0x168] sm:$0xff]
  %v175 = vld [vmem:[%s0 + $0x170] sm:$0xff]
  %v176 = vld [vmem:[%s0 + $0x178] sm:$0xff]
  %v177 = vld [vmem:[%s0 + $0x180] sm:$0xff]
  %v178 = vld [vmem:[%s0 + $0x188] sm:$0xff]
  %v179 = vld [vmem:[%s0 + $0x190] sm:$0xff]
  %v180 = vld [vmem:[%s0 + $0x198] sm:$0xff]
  %v181 = vld [vmem:[%s0 + $0x1a0] sm:$0xff]
  %v182 = vld [vmem:[%s0 + $0x1a8] sm:$0xff]
  %v183 = vld [vmem:[%s0 + $0x1b0] sm:$0xff]
  %v184 = vld [vmem:[%s0 + $0x1b8] sm:$0xff]
  %v185 = vld [vmem:[%s0 + $0x1c0] sm:$0xff]
  %v186 = vld [vmem:[%s0 + $0x1c8] sm:$0xff]
  %v187 = vld [vmem:[%s0 + $0x1d0] sm:$0xff]
  %v188 = vld [vmem:[%s0 + $0x1d8] sm:$0xff]
  %v189 = vld [vmem:[%s0 + $0x1e0] sm:$0xff]
  %v190 = vld [vmem:[%s0 + $0x1e8] sm:$0xff]
  %v191 = vld [vmem:[%s0 + $0x1f0] sm:$0xff]
  %v192 = vld [vmem:[%s0 + $0x1f8] sm:$0xff]
  %s193 = scalar_lea.vmem [#allocation2], 24
  %vm194 = vcmask 64512
  %195 = vst.msk [vmem:[%s193 + $0x1] sm:$0xff] %vm194, %v129
  %196 = vst.msk [vmem:[%s193 + $0x9] sm:$0xff] %vm194, %v130
  %197 = vst.msk [vmem:[%s193 + $0x19] sm:$0xff] %vm194, %v131
  %198 = vst.msk [vmem:[%s193 + $0x21] sm:$0xff] %vm194, %v132
  %199 = vst.msk [vmem:[%s193 + $0x31] sm:$0xff] %vm194, %v133
  %200 = vst.msk [vmem:[%s193 + $0x39] sm:$0xff] %vm194, %v134
  %201 = vst.msk [vmem:[%s193 + $0x49] sm:$0xff] %vm194, %v135
  %202 = vst.msk [vmem:[%s193 + $0x51] sm:$0xff] %vm194, %v136
  %203 = vst.msk [vmem:[%s193 + $0x61] sm:$0xff] %vm194, %v137
  %204 = vst.msk [vmem:[%s193 + $0x69] sm:$0xff] %vm194, %v138
  %205 = vst.msk [vmem:[%s193 + $0x79] sm:$0xff] %vm194, %v139
  %206 = vst.msk [vmem:[%s193 + $0x81] sm:$0xff] %vm194, %v140
  %207 = vst.msk [vmem:[%s193 + $0x91] sm:$0xff] %vm194, %v141
  %208 = vst.msk [vmem:[%s193 + $0x99] sm:$0xff] %vm194, %v142
  %209 = vst.msk [vmem:[%s193 + $0xa9] sm:$0xff] %vm194, %v143
  %210 = vst.msk [vmem:[%s193 + $0xb1] sm:$0xff] %vm194, %v144
  %211 = vst.msk [vmem:[%s193 + $0xc1] sm:$0xff] %vm194, %v145
  %212 = vst.msk [vmem:[%s193 + $0xc9] sm:$0xff] %vm194, %v146
  %213 = vst.msk [vmem:[%s193 + $0xd9] sm:$0xff] %vm194, %v147
  %214 = vst.msk [vmem:[%s193 + $0xe1] sm:$0xff] %vm194, %v148
  %215 = vst.msk [vmem:[%s193 + $0xf1] sm:$0xff] %vm194, %v149
  %216 = vst.msk [vmem:[%s193 + $0xf9] sm:$0xff] %vm194, %v150
  %217 = vst.msk [vmem:[%s193 + $0x109] sm:$0xff] %vm194, %v151
  %218 = vst.msk [vmem:[%s193 + $0x111] sm:$0xff] %vm194, %v152
  %219 = vst.msk [vmem:[%s193 + $0x121] sm:$0xff] %vm194, %v153
  %220 = vst.msk [vmem:[%s193 + $0x129] sm:$0xff] %vm194, %v154
  %221 = vst.msk [vmem:[%s193 + $0x139] sm:$0xff] %vm194, %v155
  %222 = vst.msk [vmem:[%s193 + $0x141] sm:$0xff] %vm194, %v156
  %223 = vst.msk [vmem:[%s193 + $0x151] sm:$0xff] %vm194, %v157
  %224 = vst.msk [vmem:[%s193 + $0x159] sm:$0xff] %vm194, %v158
  %225 = vst.msk [vmem:[%s193 + $0x169] sm:$0xff] %vm194, %v159
  %226 = vst.msk [vmem:[%s193 + $0x171] sm:$0xff] %vm194, %v160
  %227 = vst.msk [vmem:[%s193 + $0x1b1] sm:$0xff] %vm194, %v161
  %228 = vst.msk [vmem:[%s193 + $0x1b9] sm:$0xff] %vm194, %v162
  %229 = vst.msk [vmem:[%s193 + $0x1c9] sm:$0xff] %vm194, %v163
  %230 = vst.msk [vmem:[%s193 + $0x1d1] sm:$0xff] %vm194, %v164
  %231 = vst.msk [vmem:[%s193 + $0x1e1] sm:$0xff] %vm194, %v165
  %232 = vst.msk [vmem:[%s193 + $0x1e9] sm:$0xff] %vm194, %v166
  %233 = vst.msk [vmem:[%s193 + $0x1f9] sm:$0xff] %vm194, %v167
  %234 = vst.msk [vmem:[%s193 + $0x201] sm:$0xff] %vm194, %v168
  %235 = vst.msk [vmem:[%s193 + $0x211] sm:$0xff] %vm194, %v169
  %236 = vst.msk [vmem:[%s193 + $0x219] sm:$0xff] %vm194, %v170
  %237 = vst.msk [vmem:[%s193 + $0x229] sm:$0xff] %vm194, %v171
  %238 = vst.msk [vmem:[%s193 + $0x231] sm:$0xff] %vm194, %v172
  %239 = vst.msk [vmem:[%s193 + $0x241] sm:$0xff] %vm194, %v173
  %240 = vst.msk [vmem:[%s193 + $0x249] sm:$0xff] %vm194, %v174
  %241 = vst.msk [vmem:[%s193 + $0x259] sm:$0xff] %vm194, %v175
  %242 = vst.msk [vmem:[%s193 + $0x261] sm:$0xff] %vm194, %v176
  %243 = vst.msk [vmem:[%s193 + $0x271] sm:$0xff] %vm194, %v177
  %244 = vst.msk [vmem:[%s193 + $0x279] sm:$0xff] %vm194, %v178
  %245 = vst.msk [vmem:[%s193 + $0x289] sm:$0xff] %vm194, %v179
  %246 = vst.msk [vmem:[%s193 + $0x291] sm:$0xff] %vm194, %v180
  %247 = vst.msk [vmem:[%s193 + $0x2a1] sm:$0xff] %vm194, %v181
  %248 = vst.msk [vmem:[%s193 + $0x2a9] sm:$0xff] %vm194, %v182
  %249 = vst.msk [vmem:[%s193 + $0x2b9] sm:$0xff] %vm194, %v183
  %250 = vst.msk [vmem:[%s193 + $0x2c1] sm:$0xff] %vm194, %v184
  %251 = vst.msk [vmem:[%s193 + $0x2d1] sm:$0xff] %vm194, %v185
  %252 = vst.msk [vmem:[%s193 + $0x2d9] sm:$0xff] %vm194, %v186
  %253 = vst.msk [vmem:[%s193 + $0x2e9] sm:$0xff] %vm194, %v187
  %254 = vst.msk [vmem:[%s193 + $0x2f1] sm:$0xff] %vm194, %v188
  %255 = vst.msk [vmem:[%s193 + $0x301] sm:$0xff] %vm194, %v189
  %256 = vst.msk [vmem:[%s193 + $0x309] sm:$0xff] %vm194, %v190
  %257 = vst.msk [vmem:[%s193 + $0x319] sm:$0xff] %vm194, %v191
  %258 = vst.msk [vmem:[%s193 + $0x321] sm:$0xff] %vm194, %v192
  %v259 = vld [vmem:[#allocation2] sm:$0xff]
  %v260 = vld [vmem:[#allocation2 + $0x8] sm:$0xff]
  %v261 = vld [vmem:[#allocation2 + $0x18] sm:$0xff]
  %v262 = vld [vmem:[#allocation2 + $0x20] sm:$0xff]
  %v263 = vld [vmem:[#allocation2 + $0x30] sm:$0xff]
  %v264 = vld [vmem:[#allocation2 + $0x38] sm:$0xff]
  %v265 = vld [vmem:[#allocation2 + $0x48] sm:$0xff]
  %v266 = vld [vmem:[#allocation2 + $0x50] sm:$0xff]
  %v267 = vld [vmem:[#allocation2 + $0x60] sm:$0xff]
  %v268 = vld [vmem:[#allocation2 + $0x68] sm:$0xff]
  %v269 = vld [vmem:[#allocation2 + $0x78] sm:$0xff]
  %v270 = vld [vmem:[#allocation2 + $0x80] sm:$0xff]
  %v271 = vld [vmem:[#allocation2 + $0x90] sm:$0xff]
  %v272 = vld [vmem:[#allocation2 + $0x98] sm:$0xff]
  %v273 = vld [vmem:[#allocation2 + $0xa8] sm:$0xff]
  %v274 = vld [vmem:[#allocation2 + $0xb0] sm:$0xff]
  %v275 = vld [vmem:[#allocation2 + $0xc0] sm:$0xff]
  %v276 = vld [vmem:[#allocation2 + $0xc8] sm:$0xff]
  %v277 = vld [vmem:[#allocation2 + $0xd8] sm:$0xff]
  %v278 = vld [vmem:[#allocation2 + $0xe0] sm:$0xff]
  %v279 = vld [vmem:[#allocation2 + $0xf0] sm:$0xff]
  %v280 = vld [vmem:[#allocation2 + $0xf8] sm:$0xff]
  %v281 = vld [vmem:[#allocation2 + $0x108] sm:$0xff]
  %v282 = vld [vmem:[#allocation2 + $0x110] sm:$0xff]
  %v283 = vld [vmem:[#allocation2 + $0x120] sm:$0xff]
  %v284 = vld [vmem:[#allocation2 + $0x128] sm:$0xff]
  %v285 = vld [vmem:[#allocation2 + $0x138] sm:$0xff]
  %v286 = vld [vmem:[#allocation2 + $0x140] sm:$0xff]
  %v287 = vld [vmem:[#allocation2 + $0x150] sm:$0xff]
  %v288 = vld [vmem:[#allocation2 + $0x158] sm:$0xff]
  %v289 = vld [vmem:[#allocation2 + $0x168] sm:$0xff]
  %v290 = vld [vmem:[#allocation2 + $0x170] sm:$0xff]
  %v291 = vld [vmem:[#allocation2 + $0x1b0] sm:$0xff]
  %v292 = vld [vmem:[#allocation2 + $0x1b8] sm:$0xff]
  %v293 = vld [vmem:[#allocation2 + $0x1c8] sm:$0xff]
  %v294 = vld [vmem:[#allocation2 + $0x1d0] sm:$0xff]
  %v295 = vld [vmem:[#allocation2 + $0x1e0] sm:$0xff]
  %v296 = vld [vmem:[#allocation2 + $0x1e8] sm:$0xff]
  %v297 = vld [vmem:[#allocation2 + $0x1f8] sm:$0xff]
  %v298 = vld [vmem:[#allocation2 + $0x200] sm:$0xff]
  %v299 = vld [vmem:[#allocation2 + $0x210] sm:$0xff]
  %v300 = vld [vmem:[#allocation2 + $0x218] sm:$0xff]
  %v301 = vld [vmem:[#allocation2 + $0x228] sm:$0xff]
  %v302 = vld [vmem:[#allocation2 + $0x230] sm:$0xff]
  %v303 = vld [vmem:[#allocation2 + $0x240] sm:$0xff]
  %v304 = vld [vmem:[#allocation2 + $0x248] sm:$0xff]
  %v305 = vld [vmem:[#allocation2 + $0x258] sm:$0xff]
  %v306 = vld [vmem:[#allocation2 + $0x260] sm:$0xff]
  %v307 = vld [vmem:[#allocation2 + $0x270] sm:$0xff]
  %v308 = vld [vmem:[#allocation2 + $0x278] sm:$0xff]
  %v309 = vld [vmem:[#allocation2 + $0x288] sm:$0xff]
  %v310 = vld [vmem:[#allocation2 + $0x290] sm:$0xff]
  %v311 = vld [vmem:[#allocation2 + $0x2a0] sm:$0xff]
  %v312 = vld [vmem:[#allocation2 + $0x2a8] sm:$0xff]
  %v313 = vld [vmem:[#allocation2 + $0x2b8] sm:$0xff]
  %v314 = vld [vmem:[#allocation2 + $0x2c0] sm:$0xff]
  %v315 = vld [vmem:[#allocation2 + $0x2d0] sm:$0xff]
  %v316 = vld [vmem:[#allocation2 + $0x2d8] sm:$0xff]
  %v317 = vld [vmem:[#allocation2 + $0x2e8] sm:$0xff]
  %v318 = vld [vmem:[#allocation2 + $0x2f0] sm:$0xff]
  %v319 = vld [vmem:[#allocation2 + $0x300] sm:$0xff]
  %v320 = vld [vmem:[#allocation2 + $0x308] sm:$0xff]
  %v321 = vld [vmem:[#allocation2 + $0x318] sm:$0xff]
  %v322 = vld [vmem:[#allocation2 + $0x320] sm:$0xff]
  %v323 = vpack.c.bf16 %v259, %v259
  %v324 = vpack.c.bf16 %v260, %v260
  %v325 = vpack.c.bf16 %v261, %v261
  %v326 = vpack.c.bf16 %v262, %v262
  %v327 = vpack.c.bf16 %v263, %v263
  %v328 = vpack.c.bf16 %v264, %v264
  %v329 = vpack.c.bf16 %v265, %v265
  %v330 = vpack.c.bf16 %v266, %v266
  %v331 = vpack.c.bf16 %v267, %v267
  %v332 = vpack.c.bf16 %v268, %v268
  %v333 = vpack.c.bf16 %v269, %v269
  %v334 = vpack.c.bf16 %v270, %v270
  %v335 = vpack.c.bf16 %v271, %v271
  %v336 = vpack.c.bf16 %v272, %v272
  %v337 = vpack.c.bf16 %v273, %v273
  %v338 = vpack.c.bf16 %v274, %v274
  %v339 = vpack.c.bf16 %v275, %v275
  %v340 = vpack.c.bf16 %v276, %v276
  %v341 = vpack.c.bf16 %v277, %v277
  %v342 = vpack.c.bf16 %v278, %v278
  %v343 = vpack.c.bf16 %v279, %v279
  %v344 = vpack.c.bf16 %v280, %v280
  %v345 = vpack.c.bf16 %v281, %v281
  %v346 = vpack.c.bf16 %v282, %v282
  %v347 = vpack.c.bf16 %v283, %v283
  %v348 = vpack.c.bf16 %v284, %v284
  %v349 = vpack.c.bf16 %v285, %v285
  %v350 = vpack.c.bf16 %v286, %v286
  %v351 = vpack.c.bf16 %v287, %v287
  %v352 = vpack.c.bf16 %v288, %v288
  %v353 = vpack.c.bf16 %v289, %v289
  %v354 = vpack.c.bf16 %v290, %v290
  %v355 = vpack.c.bf16 %v291, %v291
  %v356 = vpack.c.bf16 %v292, %v292
  %v357 = vpack.c.bf16 %v293, %v293
  %v358 = vpack.c.bf16 %v294, %v294
  %v359 = vpack.c.bf16 %v295, %v295
  %v360 = vpack.c.bf16 %v296, %v296
  %v361 = vpack.c.bf16 %v297, %v297
  %v362 = vpack.c.bf16 %v298, %v298
  %v363 = vpack.c.bf16 %v299, %v299
  %v364 = vpack.c.bf16 %v300, %v300
  %v365 = vpack.c.bf16 %v301, %v301
  %v366 = vpack.c.bf16 %v302, %v302
  %v367 = vpack.c.bf16 %v303, %v303
  %v368 = vpack.c.bf16 %v304, %v304
  %v369 = vpack.c.bf16 %v305, %v305
  %v370 = vpack.c.bf16 %v306, %v306
  %v371 = vpack.c.bf16 %v307, %v307
  %v372 = vpack.c.bf16 %v308, %v308
  %v373 = vpack.c.bf16 %v309, %v309
  %v374 = vpack.c.bf16 %v310, %v310
  %v375 = vpack.c.bf16 %v311, %v311
  %v376 = vpack.c.bf16 %v312, %v312
  %v377 = vpack.c.bf16 %v313, %v313
  %v378 = vpack.c.bf16 %v314, %v314
  %v379 = vpack.c.bf16 %v315, %v315
  %v380 = vpack.c.bf16 %v316, %v316
  %v381 = vpack.c.bf16 %v317, %v317
  %v382 = vpack.c.bf16 %v318, %v318
  %v383 = vpack.c.bf16 %v319, %v319
  %v384 = vpack.c.bf16 %v320, %v320
  %v385 = vpack.c.bf16 %v321, %v321
  %v386 = vpack.c.bf16 %v322, %v322
  %v387 = vld [vmem:[#allocation2 + $0x1] sm:$0xff]
  %v388 = vld [vmem:[#allocation2 + $0x9] sm:$0xff]
  %v389 = vld [vmem:[#allocation2 + $0x19] sm:$0xff]
  %v390 = vld [vmem:[#allocation2 + $0x21] sm:$0xff]
  %v391 = vld [vmem:[#allocation2 + $0x31] sm:$0xff]
  %v392 = vld [vmem:[#allocation2 + $0x39] sm:$0xff]
  %v393 = vld [vmem:[#allocation2 + $0x49] sm:$0xff]
  %v394 = vld [vmem:[#allocation2 + $0x51] sm:$0xff]
  %v395 = vld [vmem:[#allocation2 + $0x61] sm:$0xff]
  %v396 = vld [vmem:[#allocation2 + $0x69] sm:$0xff]
  %v397 = vld [vmem:[#allocation2 + $0x79] sm:$0xff]
  %v398 = vld [vmem:[#allocation2 + $0x81] sm:$0xff]
  %v399 = vld [vmem:[#allocation2 + $0x91] sm:$0xff]
  %v400 = vld [vmem:[#allocation2 + $0x99] sm:$0xff]
  %v401 = vld [vmem:[#allocation2 + $0xa9] sm:$0xff]
  %v402 = vld [vmem:[#allocation2 + $0xb1] sm:$0xff]
  %v403 = vld [vmem:[#allocation2 + $0xc1] sm:$0xff]
  %v404 = vld [vmem:[#allocation2 + $0xc9] sm:$0xff]
  %v405 = vld [vmem:[#allocation2 + $0xd9] sm:$0xff]
  %v406 = vld [vmem:[#allocation2 + $0xe1] sm:$0xff]
  %v407 = vld [vmem:[#allocation2 + $0xf1] sm:$0xff]
  %v408 = vld [vmem:[#allocation2 + $0xf9] sm:$0xff]
  %v409 = vld [vmem:[#allocation2 + $0x109] sm:$0xff]
  %v410 = vld [vmem:[#allocation2 + $0x111] sm:$0xff]
  %v411 = vld [vmem:[#allocation2 + $0x121] sm:$0xff]
  %v412 = vld [vmem:[#allocation2 + $0x129] sm:$0xff]
  %v413 = vld [vmem:[#allocation2 + $0x139] sm:$0xff]
  %v414 = vld [vmem:[#allocation2 + $0x141] sm:$0xff]
  %v415 = vld [vmem:[#allocation2 + $0x151] sm:$0xff]
  %v416 = vld [vmem:[#allocation2 + $0x159] sm:$0xff]
  %v417 = vld [vmem:[#allocation2 + $0x169] sm:$0xff]
  %v418 = vld [vmem:[#allocation2 + $0x171] sm:$0xff]
  %v419 = vld [vmem:[#allocation2 + $0x1b1] sm:$0xff]
  %v420 = vld [vmem:[#allocation2 + $0x1b9] sm:$0xff]
  %v421 = vld [vmem:[#allocation2 + $0x1c9] sm:$0xff]
  %v422 = vld [vmem:[#allocation2 + $0x1d1] sm:$0xff]
  %v423 = vld [vmem:[#allocation2 + $0x1e1] sm:$0xff]
  %v424 = vld [vmem:[#allocation2 + $0x1e9] sm:$0xff]
  %v425 = vld [vmem:[#allocation2 + $0x1f9] sm:$0xff]
  %v426 = vld [vmem:[#allocation2 + $0x201] sm:$0xff]
  %v427 = vld [vmem:[#allocation2 + $0x211] sm:$0xff]
  %v428 = vld [vmem:[#allocation2 + $0x219] sm:$0xff]
  %v429 = vld [vmem:[#allocation2 + $0x229] sm:$0xff]
  %v430 = vld [vmem:[#allocation2 + $0x231] sm:$0xff]
  %v431 = vld [vmem:[#allocation2 + $0x241] sm:$0xff]
  %v432 = vld [vmem:[#allocation2 + $0x249] sm:$0xff]
  %v433 = vld [vmem:[#allocation2 + $0x259] sm:$0xff]
  %v434 = vld [vmem:[#allocation2 + $0x261] sm:$0xff]
  %v435 = vld [vmem:[#allocation2 + $0x271] sm:$0xff]
  %v436 = vld [vmem:[#allocation2 + $0x279] sm:$0xff]
  %v437 = vld [vmem:[#allocation2 + $0x289] sm:$0xff]
  %v438 = vld [vmem:[#allocation2 + $0x291] sm:$0xff]
  %v439 = vld [vmem:[#allocation2 + $0x2a1] sm:$0xff]
  %v440 = vld [vmem:[#allocation2 + $0x2a9] sm:$0xff]
  %v441 = vld [vmem:[#allocation2 + $0x2b9] sm:$0xff]
  %v442 = vld [vmem:[#allocation2 + $0x2c1] sm:$0xff]
  %v443 = vld [vmem:[#allocation2 + $0x2d1] sm:$0xff]
  %v444 = vld [vmem:[#allocation2 + $0x2d9] sm:$0xff]
  %v445 = vld [vmem:[#allocation2 + $0x2e9] sm:$0xff]
  %v446 = vld [vmem:[#allocation2 + $0x2f1] sm:$0xff]
  %v447 = vld [vmem:[#allocation2 + $0x301] sm:$0xff]
  %v448 = vld [vmem:[#allocation2 + $0x309] sm:$0xff]
  %v449 = vld [vmem:[#allocation2 + $0x319] sm:$0xff]
  %v450 = vld [vmem:[#allocation2 + $0x321] sm:$0xff]
  %v451 = vpack.c.bf16 %v387, %v387
  %v452 = vpack.c.bf16 %v388, %v388
  %v453 = vpack.c.bf16 %v389, %v389
  %v454 = vpack.c.bf16 %v390, %v390
  %v455 = vpack.c.bf16 %v391, %v391
  %v456 = vpack.c.bf16 %v392, %v392
  %v457 = vpack.c.bf16 %v393, %v393
  %v458 = vpack.c.bf16 %v394, %v394
  %v459 = vpack.c.bf16 %v395, %v395
  %v460 = vpack.c.bf16 %v396, %v396
  %v461 = vpack.c.bf16 %v397, %v397
  %v462 = vpack.c.bf16 %v398, %v398
  %v463 = vpack.c.bf16 %v399, %v399
  %v464 = vpack.c.bf16 %v400, %v400
  %v465 = vpack.c.bf16 %v401, %v401
  %v466 = vpack.c.bf16 %v402, %v402
  %v467 = vpack.c.bf16 %v403, %v403
  %v468 = vpack.c.bf16 %v404, %v404
  %v469 = vpack.c.bf16 %v405, %v405
  %v470 = vpack.c.bf16 %v406, %v406
  %v471 = vpack.c.bf16 %v407, %v407
  %v472 = vpack.c.bf16 %v408, %v408
  %v473 = vpack.c.bf16 %v409, %v409
  %v474 = vpack.c.bf16 %v410, %v410
  %v475 = vpack.c.bf16 %v411, %v411
  %v476 = vpack.c.bf16 %v412, %v412
  %v477 = vpack.c.bf16 %v413, %v413
  %v478 = vpack.c.bf16 %v414, %v414
  %v479 = vpack.c.bf16 %v415, %v415
  %v480 = vpack.c.bf16 %v416, %v416
  %v481 = vpack.c.bf16 %v417, %v417
  %v482 = vpack.c.bf16 %v418, %v418
  %v483 = vpack.c.bf16 %v419, %v419
  %v484 = vpack.c.bf16 %v420, %v420
  %v485 = vpack.c.bf16 %v421, %v421
  %v486 = vpack.c.bf16 %v422, %v422
  %v487 = vpack.c.bf16 %v423, %v423
  %v488 = vpack.c.bf16 %v424, %v424
  %v489 = vpack.c.bf16 %v425, %v425
  %v490 = vpack.c.bf16 %v426, %v426
  %v491 = vpack.c.bf16 %v427, %v427
  %v492 = vpack.c.bf16 %v428, %v428
  %v493 = vpack.c.bf16 %v429, %v429
  %v494 = vpack.c.bf16 %v430, %v430
  %v495 = vpack.c.bf16 %v431, %v431
  %v496 = vpack.c.bf16 %v432, %v432
  %v497 = vpack.c.bf16 %v433, %v433
  %v498 = vpack.c.bf16 %v434, %v434
  %v499 = vpack.c.bf16 %v435, %v435
  %v500 = vpack.c.bf16 %v436, %v436
  %v501 = vpack.c.bf16 %v437, %v437
  %v502 = vpack.c.bf16 %v438, %v438
  %v503 = vpack.c.bf16 %v439, %v439
  %v504 = vpack.c.bf16 %v440, %v440
  %v505 = vpack.c.bf16 %v441, %v441
  %v506 = vpack.c.bf16 %v442, %v442
  %v507 = vpack.c.bf16 %v443, %v443
  %v508 = vpack.c.bf16 %v444, %v444
  %v509 = vpack.c.bf16 %v445, %v445
  %v510 = vpack.c.bf16 %v446, %v446
  %v511 = vpack.c.bf16 %v447, %v447
  %v512 = vpack.c.bf16 %v448, %v448
  %v513 = vpack.c.bf16 %v449, %v449
  %v514 = vpack.c.bf16 %v450, %v450
  %v515 = vld [vmem:[#allocation2 + $0x2] sm:$0xff]
  %v516 = vld [vmem:[#allocation2 + $0xa] sm:$0xff]
  %v517 = vld [vmem:[#allocation2 + $0x1a] sm:$0xff]
  %v518 = vld [vmem:[#allocation2 + $0x22] sm:$0xff]
  %v519 = vld [vmem:[#allocation2 + $0x32] sm:$0xff]
  %v520 = vld [vmem:[#allocation2 + $0x3a] sm:$0xff]
  %v521 = vld [vmem:[#allocation2 + $0x4a] sm:$0xff]
  %v522 = vld [vmem:[#allocation2 + $0x52] sm:$0xff]
  %v523 = vld [vmem:[#allocation2 + $0x62] sm:$0xff]
  %v524 = vld [vmem:[#allocation2 + $0x6a] sm:$0xff]
  %v525 = vld [vmem:[#allocation2 + $0x7a] sm:$0xff]
  %v526 = vld [vmem:[#allocation2 + $0x82] sm:$0xff]
  %v527 = vld [vmem:[#allocation2 + $0x92] sm:$0xff]
  %v528 = vld [vmem:[#allocation2 + $0x9a] sm:$0xff]
  %v529 = vld [vmem:[#allocation2 + $0xaa] sm:$0xff]
  %v530 = vld [vmem:[#allocation2 + $0xb2] sm:$0xff]
  %v531 = vld [vmem:[#allocation2 + $0xc2] sm:$0xff]
  %v532 = vld [vmem:[#allocation2 + $0xca] sm:$0xff]
  %v533 = vld [vmem:[#allocation2 + $0xda] sm:$0xff]
  %v534 = vld [vmem:[#allocation2 + $0xe2] sm:$0xff]
  %v535 = vld [vmem:[#allocation2 + $0xf2] sm:$0xff]
  %v536 = vld [vmem:[#allocation2 + $0xfa] sm:$0xff]
  %v537 = vld [vmem:[#allocation2 + $0x10a] sm:$0xff]
  %v538 = vld [vmem:[#allocation2 + $0x112] sm:$0xff]
  %v539 = vld [vmem:[#allocation2 + $0x122] sm:$0xff]
  %v540 = vld [vmem:[#allocation2 + $0x12a] sm:$0xff]
  %v541 = vld [vmem:[#allocation2 + $0x13a] sm:$0xff]
  %v542 = vld [vmem:[#allocation2 + $0x142] sm:$0xff]
  %v543 = vld [vmem:[#allocation2 + $0x152] sm:$0xff]
  %v544 = vld [vmem:[#allocation2 + $0x15a] sm:$0xff]
  %v545 = vld [vmem:[#allocation2 + $0x16a] sm:$0xff]
  %v546 = vld [vmem:[#allocation2 + $0x172] sm:$0xff]
  %v547 = vld [vmem:[#allocation2 + $0x1b2] sm:$0xff]
  %v548 = vld [vmem:[#allocation2 + $0x1ba] sm:$0xff]
  %v549 = vld [vmem:[#allocation2 + $0x1ca] sm:$0xff]
  %v550 = vld [vmem:[#allocation2 + $0x1d2] sm:$0xff]
  %v551 = vld [vmem:[#allocation2 + $0x1e2] sm:$0xff]
  %v552 = vld [vmem:[#allocation2 + $0x1ea] sm:$0xff]
  %v553 = vld [vmem:[#allocation2 + $0x1fa] sm:$0xff]
  %v554 = vld [vmem:[#allocation2 + $0x202] sm:$0xff]
  %v555 = vld [vmem:[#allocation2 + $0x212] sm:$0xff]
  %v556 = vld [vmem:[#allocation2 + $0x21a] sm:$0xff]
  %v557 = vld [vmem:[#allocation2 + $0x22a] sm:$0xff]
  %v558 = vld [vmem:[#allocation2 + $0x232] sm:$0xff]
  %v559 = vld [vmem:[#allocation2 + $0x242] sm:$0xff]
  %v560 = vld [vmem:[#allocation2 + $0x24a] sm:$0xff]
  %v561 = vld [vmem:[#allocation2 + $0x25a] sm:$0xff]
  %v562 = vld [vmem:[#allocation2 + $0x262] sm:$0xff]
  %v563 = vld [vmem:[#allocation2 + $0x272] sm:$0xff]
  %v564 = vld [vmem:[#allocation2 + $0x27a] sm:$0xff]
  %v565 = vld [vmem:[#allocation2 + $0x28a] sm:$0xff]
  %v566 = vld [vmem:[#allocation2 + $0x292] sm:$0xff]
  %v567 = vld [vmem:[#allocation2 + $0x2a2] sm:$0xff]
  %v568 = vld [vmem:[#allocation2 + $0x2aa] sm:$0xff]
  %v569 = vld [vmem:[#allocation2 + $0x2ba] sm:$0xff]
  %v570 = vld [vmem:[#allocation2 + $0x2c2] sm:$0xff]
  %v571 = vld [vmem:[#allocation2 + $0x2d2] sm:$0xff]
  %v572 = vld [vmem:[#allocation2 + $0x2da] sm:$0xff]
  %v573 = vld [vmem:[#allocation2 + $0x2ea] sm:$0xff]
  %v574 = vld [vmem:[#allocation2 + $0x2f2] sm:$0xff]
  %v575 = vld [vmem:[#allocation2 + $0x302] sm:$0xff]
  %v576 = vld [vmem:[#allocation2 + $0x30a] sm:$0xff]
  %v577 = vld [vmem:[#allocation2 + $0x31a] sm:$0xff]
  %v578 = vld [vmem:[#allocation2 + $0x322] sm:$0xff]
  %v579 = vpack.c.bf16 %v515, %v515
  %v580 = vpack.c.bf16 %v516, %v516
  %v581 = vpack.c.bf16 %v517, %v517
  %v582 = vpack.c.bf16 %v518, %v518
  %v583 = vpack.c.bf16 %v519, %v519
  %v584 = vpack.c.bf16 %v520, %v520
  %v585 = vpack.c.bf16 %v521, %v521
  %v586 = vpack.c.bf16 %v522, %v522
  %v587 = vpack.c.bf16 %v523, %v523
  %v588 = vpack.c.bf16 %v524, %v524
  %v589 = vpack.c.bf16 %v525, %v525
  %v590 = vpack.c.bf16 %v526, %v526
  %v591 = vpack.c.bf16 %v527, %v527
  %v592 = vpack.c.bf16 %v528, %v528
  %v593 = vpack.c.bf16 %v529, %v529
  %v594 = vpack.c.bf16 %v530, %v530
  %v595 = vpack.c.bf16 %v531, %v531
  %v596 = vpack.c.bf16 %v532, %v532
  %v597 = vpack.c.bf16 %v533, %v533
  %v598 = vpack.c.bf16 %v534, %v534
  %v599 = vpack.c.bf16 %v535, %v535
  %v600 = vpack.c.bf16 %v536, %v536
  %v601 = vpack.c.bf16 %v537, %v537
  %v602 = vpack.c.bf16 %v538, %v538
  %v603 = vpack.c.bf16 %v539, %v539
  %v604 = vpack.c.bf16 %v540, %v540
  %v605 = vpack.c.bf16 %v541, %v541
  %v606 = vpack.c.bf16 %v542, %v542
  %v607 = vpack.c.bf16 %v543, %v543
  %v608 = vpack.c.bf16 %v544, %v544
  %v609 = vpack.c.bf16 %v545, %v545
  %v610 = vpack.c.bf16 %v546, %v546
  %v611 = vpack.c.bf16 %v547, %v547
  %v612 = vpack.c.bf16 %v548, %v548
  %v613 = vpack.c.bf16 %v549, %v549
  %v614 = vpack.c.bf16 %v550, %v550
  %v615 = vpack.c.bf16 %v551, %v551
  %v616 = vpack.c.bf16 %v552, %v552
  %v617 = vpack.c.bf16 %v553, %v553
  %v618 = vpack.c.bf16 %v554, %v554
  %v619 = vpack.c.bf16 %v555, %v555
  %v620 = vpack.c.bf16 %v556, %v556
  %v621 = vpack.c.bf16 %v557, %v557
  %v622 = vpack.c.bf16 %v558, %v558
  %v623 = vpack.c.bf16 %v559, %v559
  %v624 = vpack.c.bf16 %v560, %v560
  %v625 = vpack.c.bf16 %v561, %v561
  %v626 = vpack.c.bf16 %v562, %v562
  %v627 = vpack.c.bf16 %v563, %v563
  %v628 = vpack.c.bf16 %v564, %v564
  %v629 = vpack.c.bf16 %v565, %v565
  %v630 = vpack.c.bf16 %v566, %v566
  %v631 = vpack.c.bf16 %v567, %v567
  %v632 = vpack.c.bf16 %v568, %v568
  %v633 = vpack.c.bf16 %v569, %v569
  %v634 = vpack.c.bf16 %v570, %v570
  %v635 = vpack.c.bf16 %v571, %v571
  %v636 = vpack.c.bf16 %v572, %v572
  %v637 = vpack.c.bf16 %v573, %v573
  %v638 = vpack.c.bf16 %v574, %v574
  %v639 = vpack.c.bf16 %v575, %v575
  %v640 = vpack.c.bf16 %v576, %v576
  %v641 = vpack.c.bf16 %v577, %v577
  %v642 = vpack.c.bf16 %v578, %v578
  %v643 = vld [vmem:[%s193] sm:$0xff]
  %v644 = vld [vmem:[%s193 + $0x8] sm:$0xff]
  %v645 = vld [vmem:[%s193 + $0x18] sm:$0xff]
  %v646 = vld [vmem:[%s193 + $0x20] sm:$0xff]
  %v647 = vld [vmem:[%s193 + $0x30] sm:$0xff]
  %v648 = vld [vmem:[%s193 + $0x38] sm:$0xff]
  %v649 = vld [vmem:[%s193 + $0x48] sm:$0xff]
  %v650 = vld [vmem:[%s193 + $0x50] sm:$0xff]
  %v651 = vld [vmem:[%s193 + $0x60] sm:$0xff]
  %v652 = vld [vmem:[%s193 + $0x68] sm:$0xff]
  %v653 = vld [vmem:[%s193 + $0x78] sm:$0xff]
  %v654 = vld [vmem:[%s193 + $0x80] sm:$0xff]
  %v655 = vld [vmem:[%s193 + $0x90] sm:$0xff]
  %v656 = vld [vmem:[%s193 + $0x98] sm:$0xff]
  %v657 = vld [vmem:[%s193 + $0xa8] sm:$0xff]
  %v658 = vld [vmem:[%s193 + $0xb0] sm:$0xff]
  %v659 = vld [vmem:[%s193 + $0xc0] sm:$0xff]
  %v660 = vld [vmem:[%s193 + $0xc8] sm:$0xff]
  %v661 = vld [vmem:[%s193 + $0xd8] sm:$0xff]
  %v662 = vld [vmem:[%s193 + $0xe0] sm:$0xff]
  %v663 = vld [vmem:[%s193 + $0xf0] sm:$0xff]
  %v664 = vld [vmem:[%s193 + $0xf8] sm:$0xff]
  %v665 = vld [vmem:[%s193 + $0x108] sm:$0xff]
  %v666 = vld [vmem:[%s193 + $0x110] sm:$0xff]
  %v667 = vld [vmem:[%s193 + $0x120] sm:$0xff]
  %v668 = vld [vmem:[%s193 + $0x128] sm:$0xff]
  %v669 = vld [vmem:[%s193 + $0x138] sm:$0xff]
  %v670 = vld [vmem:[%s193 + $0x140] sm:$0xff]
  %v671 = vld [vmem:[%s193 + $0x150] sm:$0xff]
  %v672 = vld [vmem:[%s193 + $0x158] sm:$0xff]
  %v673 = vld [vmem:[%s193 + $0x168] sm:$0xff]
  %v674 = vld [vmem:[%s193 + $0x170] sm:$0xff]
  %v675 = vld [vmem:[%s193 + $0x1b0] sm:$0xff]
  %v676 = vld [vmem:[%s193 + $0x1b8] sm:$0xff]
  %v677 = vld [vmem:[%s193 + $0x1c8] sm:$0xff]
  %v678 = vld [vmem:[%s193 + $0x1d0] sm:$0xff]
  %v679 = vld [vmem:[%s193 + $0x1e0] sm:$0xff]
  %v680 = vld [vmem:[%s193 + $0x1e8] sm:$0xff]
  %v681 = vld [vmem:[%s193 + $0x1f8] sm:$0xff]
  %v682 = vld [vmem:[%s193 + $0x200] sm:$0xff]
  %v683 = vld [vmem:[%s193 + $0x210] sm:$0xff]
  %v684 = vld [vmem:[%s193 + $0x218] sm:$0xff]
  %v685 = vld [vmem:[%s193 + $0x228] sm:$0xff]
  %v686 = vld [vmem:[%s193 + $0x230] sm:$0xff]
  %v687 = vld [vmem:[%s193 + $0x240] sm:$0xff]
  %v688 = vld [vmem:[%s193 + $0x248] sm:$0xff]
  %v689 = vld [vmem:[%s193 + $0x258] sm:$0xff]
  %v690 = vld [vmem:[%s193 + $0x260] sm:$0xff]
  %v691 = vld [vmem:[%s193 + $0x270] sm:$0xff]
  %v692 = vld [vmem:[%s193 + $0x278] sm:$0xff]
  %v693 = vld [vmem:[%s193 + $0x288] sm:$0xff]
  %v694 = vld [vmem:[%s193 + $0x290] sm:$0xff]
  %v695 = vld [vmem:[%s193 + $0x2a0] sm:$0xff]
  %v696 = vld [vmem:[%s193 + $0x2a8] sm:$0xff]
  %v697 = vld [vmem:[%s193 + $0x2b8] sm:$0xff]
  %v698 = vld [vmem:[%s193 + $0x2c0] sm:$0xff]
  %v699 = vld [vmem:[%s193 + $0x2d0] sm:$0xff]
  %v700 = vld [vmem:[%s193 + $0x2d8] sm:$0xff]
  %v701 = vld [vmem:[%s193 + $0x2e8] sm:$0xff]
  %v702 = vld [vmem:[%s193 + $0x2f0] sm:$0xff]
  %v703 = vld [vmem:[%s193 + $0x300] sm:$0xff]
  %v704 = vld [vmem:[%s193 + $0x308] sm:$0xff]
  %v705 = vld [vmem:[%s193 + $0x318] sm:$0xff]
  %v706 = vld [vmem:[%s193 + $0x320] sm:$0xff]
  %v707 = vpack.c.bf16 %v643, %v643
  %v708 = vpack.c.bf16 %v644, %v644
  %v709 = vpack.c.bf16 %v645, %v645
  %v710 = vpack.c.bf16 %v646, %v646
  %v711 = vpack.c.bf16 %v647, %v647
  %v712 = vpack.c.bf16 %v648, %v648
  %v713 = vpack.c.bf16 %v649, %v649
  %v714 = vpack.c.bf16 %v650, %v650
  %v715 = vpack.c.bf16 %v651, %v651
  %v716 = vpack.c.bf16 %v652, %v652
  %v717 = vpack.c.bf16 %v653, %v653
  %v718 = vpack.c.bf16 %v654, %v654
  %v719 = vpack.c.bf16 %v655, %v655
  %v720 = vpack.c.bf16 %v656, %v656
  %v721 = vpack.c.bf16 %v657, %v657
  %v722 = vpack.c.bf16 %v658, %v658
  %v723 = vpack.c.bf16 %v659, %v659
  %v724 = vpack.c.bf16 %v660, %v660
  %v725 = vpack.c.bf16 %v661, %v661
  %v726 = vpack.c.bf16 %v662, %v662
  %v727 = vpack.c.bf16 %v663, %v663
  %v728 = vpack.c.bf16 %v664, %v664
  %v729 = vpack.c.bf16 %v665, %v665
  %v730 = vpack.c.bf16 %v666, %v666
  %v731 = vpack.c.bf16 %v667, %v667
  %v732 = vpack.c.bf16 %v668, %v668
  %v733 = vpack.c.bf16 %v669, %v669
  %v734 = vpack.c.bf16 %v670, %v670
  %v735 = vpack.c.bf16 %v671, %v671
  %v736 = vpack.c.bf16 %v672, %v672
  %v737 = vpack.c.bf16 %v673, %v673
  %v738 = vpack.c.bf16 %v674, %v674
  %v739 = vpack.c.bf16 %v675, %v675
  %v740 = vpack.c.bf16 %v676, %v676
  %v741 = vpack.c.bf16 %v677, %v677
  %v742 = vpack.c.bf16 %v678, %v678
  %v743 = vpack.c.bf16 %v679, %v679
  %v744 = vpack.c.bf16 %v680, %v680
  %v745 = vpack.c.bf16 %v681, %v681
  %v746 = vpack.c.bf16 %v682, %v682
  %v747 = vpack.c.bf16 %v683, %v683
  %v748 = vpack.c.bf16 %v684, %v684
  %v749 = vpack.c.bf16 %v685, %v685
  %v750 = vpack.c.bf16 %v686, %v686
  %v751 = vpack.c.bf16 %v687, %v687
  %v752 = vpack.c.bf16 %v688, %v688
  %v753 = vpack.c.bf16 %v689, %v689
  %v754 = vpack.c.bf16 %v690, %v690
  %v755 = vpack.c.bf16 %v691, %v691
  %v756 = vpack.c.bf16 %v692, %v692
  %v757 = vpack.c.bf16 %v693, %v693
  %v758 = vpack.c.bf16 %v694, %v694
  %v759 = vpack.c.bf16 %v695, %v695
  %v760 = vpack.c.bf16 %v696, %v696
  %v761 = vpack.c.bf16 %v697, %v697
  %v762 = vpack.c.bf16 %v698, %v698
  %v763 = vpack.c.bf16 %v699, %v699
  %v764 = vpack.c.bf16 %v700, %v700
  %v765 = vpack.c.bf16 %v701, %v701
  %v766 = vpack.c.bf16 %v702, %v702
  %v767 = vpack.c.bf16 %v703, %v703
  %v768 = vpack.c.bf16 %v704, %v704
  %v769 = vpack.c.bf16 %v705, %v705
  %v770 = vpack.c.bf16 %v706, %v706
  %v771 = vld [vmem:[%s193 + $0x1] sm:$0xff]
  %v772 = vld [vmem:[%s193 + $0x9] sm:$0xff]
  %v773 = vld [vmem:[%s193 + $0x19] sm:$0xff]
  %v774 = vld [vmem:[%s193 + $0x21] sm:$0xff]
  %v775 = vld [vmem:[%s193 + $0x31] sm:$0xff]
  %v776 = vld [vmem:[%s193 + $0x39] sm:$0xff]
  %v777 = vld [vmem:[%s193 + $0x49] sm:$0xff]
  %v778 = vld [vmem:[%s193 + $0x51] sm:$0xff]
  %v779 = vld [vmem:[%s193 + $0x61] sm:$0xff]
  %v780 = vld [vmem:[%s193 + $0x69] sm:$0xff]
  %v781 = vld [vmem:[%s193 + $0x79] sm:$0xff]
  %v782 = vld [vmem:[%s193 + $0x81] sm:$0xff]
  %v783 = vld [vmem:[%s193 + $0x91] sm:$0xff]
  %v784 = vld [vmem:[%s193 + $0x99] sm:$0xff]
  %v785 = vld [vmem:[%s193 + $0xa9] sm:$0xff]
  %v786 = vld [vmem:[%s193 + $0xb1] sm:$0xff]
  %v787 = vld [vmem:[%s193 + $0xc1] sm:$0xff]
  %v788 = vld [vmem:[%s193 + $0xc9] sm:$0xff]
  %v789 = vld [vmem:[%s193 + $0xd9] sm:$0xff]
  %v790 = vld [vmem:[%s193 + $0xe1] sm:$0xff]
  %v791 = vld [vmem:[%s193 + $0xf1] sm:$0xff]
  %v792 = vld [vmem:[%s193 + $0xf9] sm:$0xff]
  %v793 = vld [vmem:[%s193 + $0x109] sm:$0xff]
  %v794 = vld [vmem:[%s193 + $0x111] sm:$0xff]
  %v795 = vld [vmem:[%s193 + $0x121] sm:$0xff]
  %v796 = vld [vmem:[%s193 + $0x129] sm:$0xff]
  %v797 = vld [vmem:[%s193 + $0x139] sm:$0xff]
  %v798 = vld [vmem:[%s193 + $0x141] sm:$0xff]
  %v799 = vld [vmem:[%s193 + $0x151] sm:$0xff]
  %v800 = vld [vmem:[%s193 + $0x159] sm:$0xff]
  %v801 = vld [vmem:[%s193 + $0x169] sm:$0xff]
  %v802 = vld [vmem:[%s193 + $0x171] sm:$0xff]
  %v803 = vld [vmem:[%s193 + $0x1b1] sm:$0xff]
  %v804 = vld [vmem:[%s193 + $0x1b9] sm:$0xff]
  %v805 = vld [vmem:[%s193 + $0x1c9] sm:$0xff]
  %v806 = vld [vmem:[%s193 + $0x1d1] sm:$0xff]
  %v807 = vld [vmem:[%s193 + $0x1e1] sm:$0xff]
  %v808 = vld [vmem:[%s193 + $0x1e9] sm:$0xff]
  %v809 = vld [vmem:[%s193 + $0x1f9] sm:$0xff]
  %v810 = vld [vmem:[%s193 + $0x201] sm:$0xff]
  %v811 = vld [vmem:[%s193 + $0x211] sm:$0xff]
  %v812 = vld [vmem:[%s193 + $0x219] sm:$0xff]
  %v813 = vld [vmem:[%s193 + $0x229] sm:$0xff]
  %v814 = vld [vmem:[%s193 + $0x231] sm:$0xff]
  %v815 = vld [vmem:[%s193 + $0x241] sm:$0xff]
  %v816 = vld [vmem:[%s193 + $0x249] sm:$0xff]
  %v817 = vld [vmem:[%s193 + $0x259] sm:$0xff]
  %v818 = vld [vmem:[%s193 + $0x261] sm:$0xff]
  %v819 = vld [vmem:[%s193 + $0x271] sm:$0xff]
  %v820 = vld [vmem:[%s193 + $0x279] sm:$0xff]
  %v821 = vld [vmem:[%s193 + $0x289] sm:$0xff]
  %v822 = vld [vmem:[%s193 + $0x291] sm:$0xff]
  %v823 = vld [vmem:[%s193 + $0x2a1] sm:$0xff]
  %v824 = vld [vmem:[%s193 + $0x2a9] sm:$0xff]
  %v825 = vld [vmem:[%s193 + $0x2b9] sm:$0xff]
  %v826 = vld [vmem:[%s193 + $0x2c1] sm:$0xff]
  %v827 = vld [vmem:[%s193 + $0x2d1] sm:$0xff]
  %v828 = vld [vmem:[%s193 + $0x2d9] sm:$0xff]
  %v829 = vld [vmem:[%s193 + $0x2e9] sm:$0xff]
  %v830 = vld [vmem:[%s193 + $0x2f1] sm:$0xff]
  %v831 = vld [vmem:[%s193 + $0x301] sm:$0xff]
  %v832 = vld [vmem:[%s193 + $0x309] sm:$0xff]
  %v833 = vld [vmem:[%s193 + $0x319] sm:$0xff]
  %v834 = vld [vmem:[%s193 + $0x321] sm:$0xff]
  %v835 = vpack.c.bf16 %v771, %v771
  %v836 = vpack.c.bf16 %v772, %v772
  %v837 = vpack.c.bf16 %v773, %v773
  %v838 = vpack.c.bf16 %v774, %v774
  %v839 = vpack.c.bf16 %v775, %v775
  %v840 = vpack.c.bf16 %v776, %v776
  %v841 = vpack.c.bf16 %v777, %v777
  %v842 = vpack.c.bf16 %v778, %v778
  %v843 = vpack.c.bf16 %v779, %v779
  %v844 = vpack.c.bf16 %v780, %v780
  %v845 = vpack.c.bf16 %v781, %v781
  %v846 = vpack.c.bf16 %v782, %v782
  %v847 = vpack.c.bf16 %v783, %v783
  %v848 = vpack.c.bf16 %v784, %v784
  %v849 = vpack.c.bf16 %v785, %v785
  %v850 = vpack.c.bf16 %v786, %v786
  %v851 = vpack.c.bf16 %v787, %v787
  %v852 = vpack.c.bf16 %v788, %v788
  %v853 = vpack.c.bf16 %v789, %v789
  %v854 = vpack.c.bf16 %v790, %v790
  %v855 = vpack.c.bf16 %v791, %v791
  %v856 = vpack.c.bf16 %v792, %v792
  %v857 = vpack.c.bf16 %v793, %v793
  %v858 = vpack.c.bf16 %v794, %v794
  %v859 = vpack.c.bf16 %v795, %v795
  %v860 = vpack.c.bf16 %v796, %v796
  %v861 = vpack.c.bf16 %v797, %v797
  %v862 = vpack.c.bf16 %v798, %v798
  %v863 = vpack.c.bf16 %v799, %v799
  %v864 = vpack.c.bf16 %v800, %v800
  %v865 = vpack.c.bf16 %v801, %v801
  %v866 = vpack.c.bf16 %v802, %v802
  %v867 = vpack.c.bf16 %v803, %v803
  %v868 = vpack.c.bf16 %v804, %v804
  %v869 = vpack.c.bf16 %v805, %v805
  %v870 = vpack.c.bf16 %v806, %v806
  %v871 = vpack.c.bf16 %v807, %v807
  %v872 = vpack.c.bf16 %v808, %v808
  %v873 = vpack.c.bf16 %v809, %v809
  %v874 = vpack.c.bf16 %v810, %v810
  %v875 = vpack.c.bf16 %v811, %v811
  %v876 = vpack.c.bf16 %v812, %v812
  %v877 = vpack.c.bf16 %v813, %v813
  %v878 = vpack.c.bf16 %v814, %v814
  %v879 = vpack.c.bf16 %v815, %v815
  %v880 = vpack.c.bf16 %v816, %v816
  %v881 = vpack.c.bf16 %v817, %v817
  %v882 = vpack.c.bf16 %v818, %v818
  %v883 = vpack.c.bf16 %v819, %v819
  %v884 = vpack.c.bf16 %v820, %v820
  %v885 = vpack.c.bf16 %v821, %v821
  %v886 = vpack.c.bf16 %v822, %v822
  %v887 = vpack.c.bf16 %v823, %v823
  %v888 = vpack.c.bf16 %v824, %v824
  %v889 = vpack.c.bf16 %v825, %v825
  %v890 = vpack.c.bf16 %v826, %v826
  %v891 = vpack.c.bf16 %v827, %v827
  %v892 = vpack.c.bf16 %v828, %v828
  %v893 = vpack.c.bf16 %v829, %v829
  %v894 = vpack.c.bf16 %v830, %v830
  %v895 = vpack.c.bf16 %v831, %v831
  %v896 = vpack.c.bf16 %v832, %v832
  %v897 = vpack.c.bf16 %v833, %v833
  %v898 = vpack.c.bf16 %v834, %v834
  %v899 = vld [vmem:[%s193 + $0x2] sm:$0xff]
  %v900 = vld [vmem:[%s193 + $0xa] sm:$0xff]
  %v901 = vld [vmem:[%s193 + $0x1a] sm:$0xff]
  %v902 = vld [vmem:[%s193 + $0x22] sm:$0xff]
  %v903 = vld [vmem:[%s193 + $0x32] sm:$0xff]
  %v904 = vld [vmem:[%s193 + $0x3a] sm:$0xff]
  %v905 = vld [vmem:[%s193 + $0x4a] sm:$0xff]
  %v906 = vld [vmem:[%s193 + $0x52] sm:$0xff]
  %v907 = vld [vmem:[%s193 + $0x62] sm:$0xff]
  %v908 = vld [vmem:[%s193 + $0x6a] sm:$0xff]
  %v909 = vld [vmem:[%s193 + $0x7a] sm:$0xff]
  %v910 = vld [vmem:[%s193 + $0x82] sm:$0xff]
  %v911 = vld [vmem:[%s193 + $0x92] sm:$0xff]
  %v912 = vld [vmem:[%s193 + $0x9a] sm:$0xff]
  %v913 = vld [vmem:[%s193 + $0xaa] sm:$0xff]
  %v914 = vld [vmem:[%s193 + $0xb2] sm:$0xff]
  %v915 = vld [vmem:[%s193 + $0xc2] sm:$0xff]
  %v916 = vld [vmem:[%s193 + $0xca] sm:$0xff]
  %v917 = vld [vmem:[%s193 + $0xda] sm:$0xff]
  %v918 = vld [vmem:[%s193 + $0xe2] sm:$0xff]
  %v919 = vld [vmem:[%s193 + $0xf2] sm:$0xff]
  %v920 = vld [vmem:[%s193 + $0xfa] sm:$0xff]
  %v921 = vld [vmem:[%s193 + $0x10a] sm:$0xff]
  %v922 = vld [vmem:[%s193 + $0x112] sm:$0xff]
  %v923 = vld [vmem:[%s193 + $0x122] sm:$0xff]
  %v924 = vld [vmem:[%s193 + $0x12a] sm:$0xff]
  %v925 = vld [vmem:[%s193 + $0x13a] sm:$0xff]
  %v926 = vld [vmem:[%s193 + $0x142] sm:$0xff]
  %v927 = vld [vmem:[%s193 + $0x152] sm:$0xff]
  %v928 = vld [vmem:[%s193 + $0x15a] sm:$0xff]
  %v929 = vld [vmem:[%s193 + $0x16a] sm:$0xff]
  %v930 = vld [vmem:[%s193 + $0x172] sm:$0xff]
  %v931 = vld [vmem:[%s193 + $0x1b2] sm:$0xff]
  %v932 = vld [vmem:[%s193 + $0x1ba] sm:$0xff]
  %v933 = vld [vmem:[%s193 + $0x1ca] sm:$0xff]
  %v934 = vld [vmem:[%s193 + $0x1d2] sm:$0xff]
  %v935 = vld [vmem:[%s193 + $0x1e2] sm:$0xff]
  %v936 = vld [vmem:[%s193 + $0x1ea] sm:$0xff]
  %v937 = vld [vmem:[%s193 + $0x1fa] sm:$0xff]
  %v938 = vld [vmem:[%s193 + $0x202] sm:$0xff]
  %v939 = vld [vmem:[%s193 + $0x212] sm:$0xff]
  %v940 = vld [vmem:[%s193 + $0x21a] sm:$0xff]
  %v941 = vld [vmem:[%s193 + $0x22a] sm:$0xff]
  %v942 = vld [vmem:[%s193 + $0x232] sm:$0xff]
  %v943 = vld [vmem:[%s193 + $0x242] sm:$0xff]
  %v944 = vld [vmem:[%s193 + $0x24a] sm:$0xff]
  %v945 = vld [vmem:[%s193 + $0x25a] sm:$0xff]
  %v946 = vld [vmem:[%s193 + $0x262] sm:$0xff]
  %v947 = vld [vmem:[%s193 + $0x272] sm:$0xff]
  %v948 = vld [vmem:[%s193 + $0x27a] sm:$0xff]
  %v949 = vld [vmem:[%s193 + $0x28a] sm:$0xff]
  %v950 = vld [vmem:[%s193 + $0x292] sm:$0xff]
  %v951 = vld [vmem:[%s193 + $0x2a2] sm:$0xff]
  %v952 = vld [vmem:[%s193 + $0x2aa] sm:$0xff]
  %v953 = vld [vmem:[%s193 + $0x2ba] sm:$0xff]
  %v954 = vld [vmem:[%s193 + $0x2c2] sm:$0xff]
  %v955 = vld [vmem:[%s193 + $0x2d2] sm:$0xff]
  %v956 = vld [vmem:[%s193 + $0x2da] sm:$0xff]
  %v957 = vld [vmem:[%s193 + $0x2ea] sm:$0xff]
  %v958 = vld [vmem:[%s193 + $0x2f2] sm:$0xff]
  %v959 = vld [vmem:[%s193 + $0x302] sm:$0xff]
  %v960 = vld [vmem:[%s193 + $0x30a] sm:$0xff]
  %v961 = vld [vmem:[%s193 + $0x31a] sm:$0xff]
  %v962 = vld [vmem:[%s193 + $0x322] sm:$0xff]
  %v963 = vpack.c.bf16 %v899, %v899
  %v964 = vpack.c.bf16 %v900, %v900
  %v965 = vpack.c.bf16 %v901, %v901
  %v966 = vpack.c.bf16 %v902, %v902
  %v967 = vpack.c.bf16 %v903, %v903
  %v968 = vpack.c.bf16 %v904, %v904
  %v969 = vpack.c.bf16 %v905, %v905
  %v970 = vpack.c.bf16 %v906, %v906
  %v971 = vpack.c.bf16 %v907, %v907
  %v972 = vpack.c.bf16 %v908, %v908
  %v973 = vpack.c.bf16 %v909, %v909
  %v974 = vpack.c.bf16 %v910, %v910
  %v975 = vpack.c.bf16 %v911, %v911
  %v976 = vpack.c.bf16 %v912, %v912
  %v977 = vpack.c.bf16 %v913, %v913
  %v978 = vpack.c.bf16 %v914, %v914
  %v979 = vpack.c.bf16 %v915, %v915
  %v980 = vpack.c.bf16 %v916, %v916
  %v981 = vpack.c.bf16 %v917, %v917
  %v982 = vpack.c.bf16 %v918, %v918
  %v983 = vpack.c.bf16 %v919, %v919
  %v984 = vpack.c.bf16 %v920, %v920
  %v985 = vpack.c.bf16 %v921, %v921
  %v986 = vpack.c.bf16 %v922, %v922
  %v987 = vpack.c.bf16 %v923, %v923
  %v988 = vpack.c.bf16 %v924, %v924
  %v989 = vpack.c.bf16 %v925, %v925
  %v990 = vpack.c.bf16 %v926, %v926
  %v991 = vpack.c.bf16 %v927, %v927
  %v992 = vpack.c.bf16 %v928, %v928
  %v993 = vpack.c.bf16 %v929, %v929
  %v994 = vpack.c.bf16 %v930, %v930
  %v995 = vpack.c.bf16 %v931, %v931
  %v996 = vpack.c.bf16 %v932, %v932
  %v997 = vpack.c.bf16 %v933, %v933
  %v998 = vpack.c.bf16 %v934, %v934
  %v999 = vpack.c.bf16 %v935, %v935
  %v1000 = vpack.c.bf16 %v936, %v936
  %v1001 = vpack.c.bf16 %v937, %v937
  %v1002 = vpack.c.bf16 %v938, %v938
  %v1003 = vpack.c.bf16 %v939, %v939
  %v1004 = vpack.c.bf16 %v940, %v940
  %v1005 = vpack.c.bf16 %v941, %v941
  %v1006 = vpack.c.bf16 %v942, %v942
  %v1007 = vpack.c.bf16 %v943, %v943
  %v1008 = vpack.c.bf16 %v944, %v944
  %v1009 = vpack.c.bf16 %v945, %v945
  %v1010 = vpack.c.bf16 %v946, %v946
  %v1011 = vpack.c.bf16 %v947, %v947
  %v1012 = vpack.c.bf16 %v948, %v948
  %v1013 = vpack.c.bf16 %v949, %v949
  %v1014 = vpack.c.bf16 %v950, %v950
  %v1015 = vpack.c.bf16 %v951, %v951
  %v1016 = vpack.c.bf16 %v952, %v952
  %v1017 = vpack.c.bf16 %v953, %v953
  %v1018 = vpack.c.bf16 %v954, %v954
  %v1019 = vpack.c.bf16 %v955, %v955
  %v1020 = vpack.c.bf16 %v956, %v956
  %v1021 = vpack.c.bf16 %v957, %v957
  %v1022 = vpack.c.bf16 %v958, %v958
  %v1023 = vpack.c.bf16 %v959, %v959
  %v1024 = vpack.c.bf16 %v960, %v960
  %v1025 = vpack.c.bf16 %v961, %v961
  %v1026 = vpack.c.bf16 %v962, %v962
  %s1027 = scalar_lea.vmem [#allocation2], 48
  %v1028 = vld [vmem:[%s1027] sm:$0xff]
  %v1029 = vld [vmem:[%s1027 + $0x8] sm:$0xff]
  %v1030 = vld [vmem:[%s1027 + $0x18] sm:$0xff]
  %v1031 = vld [vmem:[%s1027 + $0x20] sm:$0xff]
  %v1032 = vld [vmem:[%s1027 + $0x30] sm:$0xff]
  %v1033 = vld [vmem:[%s1027 + $0x38] sm:$0xff]
  %v1034 = vld [vmem:[%s1027 + $0x48] sm:$0xff]
  %v1035 = vld [vmem:[%s1027 + $0x50] sm:$0xff]
  %v1036 = vld [vmem:[%s1027 + $0x60] sm:$0xff]
  %v1037 = vld [vmem:[%s1027 + $0x68] sm:$0xff]
  %v1038 = vld [vmem:[%s1027 + $0x78] sm:$0xff]
  %v1039 = vld [vmem:[%s1027 + $0x80] sm:$0xff]
  %v1040 = vld [vmem:[%s1027 + $0x90] sm:$0xff]
  %v1041 = vld [vmem:[%s1027 + $0x98] sm:$0xff]
  %v1042 = vld [vmem:[%s1027 + $0xa8] sm:$0xff]
  %v1043 = vld [vmem:[%s1027 + $0xb0] sm:$0xff]
  %v1044 = vld [vmem:[%s1027 + $0xc0] sm:$0xff]
  %v1045 = vld [vmem:[%s1027 + $0xc8] sm:$0xff]
  %v1046 = vld [vmem:[%s1027 + $0xd8] sm:$0xff]
  %v1047 = vld [vmem:[%s1027 + $0xe0] sm:$0xff]
  %v1048 = vld [vmem:[%s1027 + $0xf0] sm:$0xff]
  %v1049 = vld [vmem:[%s1027 + $0xf8] sm:$0xff]
  %v1050 = vld [vmem:[%s1027 + $0x108] sm:$0xff]
  %v1051 = vld [vmem:[%s1027 + $0x110] sm:$0xff]
  %v1052 = vld [vmem:[%s1027 + $0x120] sm:$0xff]
  %v1053 = vld [vmem:[%s1027 + $0x128] sm:$0xff]
  %v1054 = vld [vmem:[%s1027 + $0x138] sm:$0xff]
  %v1055 = vld [vmem:[%s1027 + $0x140] sm:$0xff]
  %v1056 = vld [vmem:[%s1027 + $0x150] sm:$0xff]
  %v1057 = vld [vmem:[%s1027 + $0x158] sm:$0xff]
  %v1058 = vld [vmem:[%s1027 + $0x168] sm:$0xff]
  %v1059 = vld [vmem:[%s1027 + $0x170] sm:$0xff]
  %v1060 = vld [vmem:[%s1027 + $0x1b0] sm:$0xff]
  %v1061 = vld [vmem:[%s1027 + $0x1b8] sm:$0xff]
  %v1062 = vld [vmem:[%s1027 + $0x1c8] sm:$0xff]
  %v1063 = vld [vmem:[%s1027 + $0x1d0] sm:$0xff]
  %v1064 = vld [vmem:[%s1027 + $0x1e0] sm:$0xff]
  %v1065 = vld [vmem:[%s1027 + $0x1e8] sm:$0xff]
  %v1066 = vld [vmem:[%s1027 + $0x1f8] sm:$0xff]
  %v1067 = vld [vmem:[%s1027 + $0x200] sm:$0xff]
  %v1068 = vld [vmem:[%s1027 + $0x210] sm:$0xff]
  %v1069 = vld [vmem:[%s1027 + $0x218] sm:$0xff]
  %v1070 = vld [vmem:[%s1027 + $0x228] sm:$0xff]
  %v1071 = vld [vmem:[%s1027 + $0x230] sm:$0xff]
  %v1072 = vld [vmem:[%s1027 + $0x240] sm:$0xff]
  %v1073 = vld [vmem:[%s1027 + $0x248] sm:$0xff]
  %v1074 = vld [vmem:[%s1027 + $0x258] sm:$0xff]
  %v1075 = vld [vmem:[%s1027 + $0x260] sm:$0xff]
  %v1076 = vld [vmem:[%s1027 + $0x270] sm:$0xff]
  %v1077 = vld [vmem:[%s1027 + $0x278] sm:$0xff]
  %v1078 = vld [vmem:[%s1027 + $0x288] sm:$0xff]
  %v1079 = vld [vmem:[%s1027 + $0x290] sm:$0xff]
  %v1080 = vld [vmem:[%s1027 + $0x2a0] sm:$0xff]
  %v1081 = vld [vmem:[%s1027 + $0x2a8] sm:$0xff]
  %v1082 = vld [vmem:[%s1027 + $0x2b8] sm:$0xff]
  %v1083 = vld [vmem:[%s1027 + $0x2c0] sm:$0xff]
  %v1084 = vld [vmem:[%s1027 + $0x2d0] sm:$0xff]
  %v1085 = vld [vmem:[%s1027 + $0x2d8] sm:$0xff]
  %v1086 = vld [vmem:[%s1027 + $0x2e8] sm:$0xff]
  %v1087 = vld [vmem:[%s1027 + $0x2f0] sm:$0xff]
  %v1088 = vld [vmem:[%s1027 + $0x300] sm:$0xff]
  %v1089 = vld [vmem:[%s1027 + $0x308] sm:$0xff]
  %v1090 = vld [vmem:[%s1027 + $0x318] sm:$0xff]
  %v1091 = vld [vmem:[%s1027 + $0x320] sm:$0xff]
  %v1092 = vpack.c.bf16 %v1028, %v1028
  %v1093 = vpack.c.bf16 %v1029, %v1029
  %v1094 = vpack.c.bf16 %v1030, %v1030
  %v1095 = vpack.c.bf16 %v1031, %v1031
  %v1096 = vpack.c.bf16 %v1032, %v1032
  %v1097 = vpack.c.bf16 %v1033, %v1033
  %v1098 = vpack.c.bf16 %v1034, %v1034
  %v1099 = vpack.c.bf16 %v1035, %v1035
  %v1100 = vpack.c.bf16 %v1036, %v1036
  %v1101 = vpack.c.bf16 %v1037, %v1037
  %v1102 = vpack.c.bf16 %v1038, %v1038
  %v1103 = vpack.c.bf16 %v1039, %v1039
  %v1104 = vpack.c.bf16 %v1040, %v1040
  %v1105 = vpack.c.bf16 %v1041, %v1041
  %v1106 = vpack.c.bf16 %v1042, %v1042
  %v1107 = vpack.c.bf16 %v1043, %v1043
  %v1108 = vpack.c.bf16 %v1044, %v1044
  %v1109 = vpack.c.bf16 %v1045, %v1045
  %v1110 = vpack.c.bf16 %v1046, %v1046
  %v1111 = vpack.c.bf16 %v1047, %v1047
  %v1112 = vpack.c.bf16 %v1048, %v1048
  %v1113 = vpack.c.bf16 %v1049, %v1049
  %v1114 = vpack.c.bf16 %v1050, %v1050
  %v1115 = vpack.c.bf16 %v1051, %v1051
  %v1116 = vpack.c.bf16 %v1052, %v1052
  %v1117 = vpack.c.bf16 %v1053, %v1053
  %v1118 = vpack.c.bf16 %v1054, %v1054
  %v1119 = vpack.c.bf16 %v1055, %v1055
  %v1120 = vpack.c.bf16 %v1056, %v1056
  %v1121 = vpack.c.bf16 %v1057, %v1057
  %v1122 = vpack.c.bf16 %v1058, %v1058
  %v1123 = vpack.c.bf16 %v1059, %v1059
  %v1124 = vpack.c.bf16 %v1060, %v1060
  %v1125 = vpack.c.bf16 %v1061, %v1061
  %v1126 = vpack.c.bf16 %v1062, %v1062
  %v1127 = vpack.c.bf16 %v1063, %v1063
  %v1128 = vpack.c.bf16 %v1064, %v1064
  %v1129 = vpack.c.bf16 %v1065, %v1065
  %v1130 = vpack.c.bf16 %v1066, %v1066
  %v1131 = vpack.c.bf16 %v1067, %v1067
  %v1132 = vpack.c.bf16 %v1068, %v1068
  %v1133 = vpack.c.bf16 %v1069, %v1069
  %v1134 = vpack.c.bf16 %v1070, %v1070
  %v1135 = vpack.c.bf16 %v1071, %v1071
  %v1136 = vpack.c.bf16 %v1072, %v1072
  %v1137 = vpack.c.bf16 %v1073, %v1073
  %v1138 = vpack.c.bf16 %v1074, %v1074
  %v1139 = vpack.c.bf16 %v1075, %v1075
  %v1140 = vpack.c.bf16 %v1076, %v1076
  %v1141 = vpack.c.bf16 %v1077, %v1077
  %v1142 = vpack.c.bf16 %v1078, %v1078
  %v1143 = vpack.c.bf16 %v1079, %v1079
  %v1144 = vpack.c.bf16 %v1080, %v1080
  %v1145 = vpack.c.bf16 %v1081, %v1081
  %v1146 = vpack.c.bf16 %v1082, %v1082
  %v1147 = vpack.c.bf16 %v1083, %v1083
  %v1148 = vpack.c.bf16 %v1084, %v1084
  %v1149 = vpack.c.bf16 %v1085, %v1085
  %v1150 = vpack.c.bf16 %v1086, %v1086
  %v1151 = vpack.c.bf16 %v1087, %v1087
  %v1152 = vpack.c.bf16 %v1088, %v1088
  %v1153 = vpack.c.bf16 %v1089, %v1089
  %v1154 = vpack.c.bf16 %v1090, %v1090
  %v1155 = vpack.c.bf16 %v1091, %v1091
  %v1156 = vld [vmem:[%s1027 + $0x1] sm:$0xff]
  %v1157 = vld [vmem:[%s1027 + $0x9] sm:$0xff]
  %v1158 = vld [vmem:[%s1027 + $0x19] sm:$0xff]
  %v1159 = vld [vmem:[%s1027 + $0x21] sm:$0xff]
  %v1160 = vld [vmem:[%s1027 + $0x31] sm:$0xff]
  %v1161 = vld [vmem:[%s1027 + $0x39] sm:$0xff]
  %v1162 = vld [vmem:[%s1027 + $0x49] sm:$0xff]
  %v1163 = vld [vmem:[%s1027 + $0x51] sm:$0xff]
  %v1164 = vld [vmem:[%s1027 + $0x61] sm:$0xff]
  %v1165 = vld [vmem:[%s1027 + $0x69] sm:$0xff]
  %v1166 = vld [vmem:[%s1027 + $0x79] sm:$0xff]
  %v1167 = vld [vmem:[%s1027 + $0x81] sm:$0xff]
  %v1168 = vld [vmem:[%s1027 + $0x91] sm:$0xff]
  %v1169 = vld [vmem:[%s1027 + $0x99] sm:$0xff]
  %v1170 = vld [vmem:[%s1027 + $0xa9] sm:$0xff]
  %v1171 = vld [vmem:[%s1027 + $0xb1] sm:$0xff]
  %v1172 = vld [vmem:[%s1027 + $0xc1] sm:$0xff]
  %v1173 = vld [vmem:[%s1027 + $0xc9] sm:$0xff]
  %v1174 = vld [vmem:[%s1027 + $0xd9] sm:$0xff]
  %v1175 = vld [vmem:[%s1027 + $0xe1] sm:$0xff]
  %v1176 = vld [vmem:[%s1027 + $0xf1] sm:$0xff]
  %v1177 = vld [vmem:[%s1027 + $0xf9] sm:$0xff]
  %v1178 = vld [vmem:[%s1027 + $0x109] sm:$0xff]
  %v1179 = vld [vmem:[%s1027 + $0x111] sm:$0xff]
  %v1180 = vld [vmem:[%s1027 + $0x121] sm:$0xff]
  %v1181 = vld [vmem:[%s1027 + $0x129] sm:$0xff]
  %v1182 = vld [vmem:[%s1027 + $0x139] sm:$0xff]
  %v1183 = vld [vmem:[%s1027 + $0x141] sm:$0xff]
  %v1184 = vld [vmem:[%s1027 + $0x151] sm:$0xff]
  %v1185 = vld [vmem:[%s1027 + $0x159] sm:$0xff]
  %v1186 = vld [vmem:[%s1027 + $0x169] sm:$0xff]
  %v1187 = vld [vmem:[%s1027 + $0x171] sm:$0xff]
  %v1188 = vld [vmem:[%s1027 + $0x1b1] sm:$0xff]
  %v1189 = vld [vmem:[%s1027 + $0x1b9] sm:$0xff]
  %v1190 = vld [vmem:[%s1027 + $0x1c9] sm:$0xff]
  %v1191 = vld [vmem:[%s1027 + $0x1d1] sm:$0xff]
  %v1192 = vld [vmem:[%s1027 + $0x1e1] sm:$0xff]
  %v1193 = vld [vmem:[%s1027 + $0x1e9] sm:$0xff]
  %v1194 = vld [vmem:[%s1027 + $0x1f9] sm:$0xff]
  %v1195 = vld [vmem:[%s1027 + $0x201] sm:$0xff]
  %v1196 = vld [vmem:[%s1027 + $0x211] sm:$0xff]
  %v1197 = vld [vmem:[%s1027 + $0x219] sm:$0xff]
  %v1198 = vld [vmem:[%s1027 + $0x229] sm:$0xff]
  %v1199 = vld [vmem:[%s1027 + $0x231] sm:$0xff]
  %v1200 = vld [vmem:[%s1027 + $0x241] sm:$0xff]
  %v1201 = vld [vmem:[%s1027 + $0x249] sm:$0xff]
  %v1202 = vld [vmem:[%s1027 + $0x259] sm:$0xff]
  %v1203 = vld [vmem:[%s1027 + $0x261] sm:$0xff]
  %v1204 = vld [vmem:[%s1027 + $0x271] sm:$0xff]
  %v1205 = vld [vmem:[%s1027 + $0x279] sm:$0xff]
  %v1206 = vld [vmem:[%s1027 + $0x289] sm:$0xff]
  %v1207 = vld [vmem:[%s1027 + $0x291] sm:$0xff]
  %v1208 = vld [vmem:[%s1027 + $0x2a1] sm:$0xff]
  %v1209 = vld [vmem:[%s1027 + $0x2a9] sm:$0xff]
  %v1210 = vld [vmem:[%s1027 + $0x2b9] sm:$0xff]
  %v1211 = vld [vmem:[%s1027 + $0x2c1] sm:$0xff]
  %v1212 = vld [vmem:[%s1027 + $0x2d1] sm:$0xff]
  %v1213 = vld [vmem:[%s1027 + $0x2d9] sm:$0xff]
  %v1214 = vld [vmem:[%s1027 + $0x2e9] sm:$0xff]
  %v1215 = vld [vmem:[%s1027 + $0x2f1] sm:$0xff]
  %v1216 = vld [vmem:[%s1027 + $0x301] sm:$0xff]
  %v1217 = vld [vmem:[%s1027 + $0x309] sm:$0xff]
  %v1218 = vld [vmem:[%s1027 + $0x319] sm:$0xff]
  %v1219 = vld [vmem:[%s1027 + $0x321] sm:$0xff]
  %v1220 = vpack.c.bf16 %v1156, %v1156
  %v1221 = vpack.c.bf16 %v1157, %v1157
  %v1222 = vpack.c.bf16 %v1158, %v1158
  %v1223 = vpack.c.bf16 %v1159, %v1159
  %v1224 = vpack.c.bf16 %v1160, %v1160
  %v1225 = vpack.c.bf16 %v1161, %v1161
  %v1226 = vpack.c.bf16 %v1162, %v1162
  %v1227 = vpack.c.bf16 %v1163, %v1163
  %v1228 = vpack.c.bf16 %v1164, %v1164
  %v1229 = vpack.c.bf16 %v1165, %v1165
  %v1230 = vpack.c.bf16 %v1166, %v1166
  %v1231 = vpack.c.bf16 %v1167, %v1167
  %v1232 = vpack.c.bf16 %v1168, %v1168
  %v1233 = vpack.c.bf16 %v1169, %v1169
  %v1234 = vpack.c.bf16 %v1170, %v1170
  %v1235 = vpack.c.bf16 %v1171, %v1171
  %v1236 = vpack.c.bf16 %v1172, %v1172
  %v1237 = vpack.c.bf16 %v1173, %v1173
  %v1238 = vpack.c.bf16 %v1174, %v1174
  %v1239 = vpack.c.bf16 %v1175, %v1175
  %v1240 = vpack.c.bf16 %v1176, %v1176
  %v1241 = vpack.c.bf16 %v1177, %v1177
  %v1242 = vpack.c.bf16 %v1178, %v1178
  %v1243 = vpack.c.bf16 %v1179, %v1179
  %v1244 = vpack.c.bf16 %v1180, %v1180
  %v1245 = vpack.c.bf16 %v1181, %v1181
  %v1246 = vpack.c.bf16 %v1182, %v1182
  %v1247 = vpack.c.bf16 %v1183, %v1183
  %v1248 = vpack.c.bf16 %v1184, %v1184
  %v1249 = vpack.c.bf16 %v1185, %v1185
  %v1250 = vpack.c.bf16 %v1186, %v1186
  %v1251 = vpack.c.bf16 %v1187, %v1187
  %v1252 = vpack.c.bf16 %v1188, %v1188
  %v1253 = vpack.c.bf16 %v1189, %v1189
  %v1254 = vpack.c.bf16 %v1190, %v1190
  %v1255 = vpack.c.bf16 %v1191, %v1191
  %v1256 = vpack.c.bf16 %v1192, %v1192
  %v1257 = vpack.c.bf16 %v1193, %v1193
  %v1258 = vpack.c.bf16 %v1194, %v1194
  %v1259 = vpack.c.bf16 %v1195, %v1195
  %v1260 = vpack.c.bf16 %v1196, %v1196
  %v1261 = vpack.c.bf16 %v1197, %v1197
  %v1262 = vpack.c.bf16 %v1198, %v1198
  %v1263 = vpack.c.bf16 %v1199, %v1199
  %v1264 = vpack.c.bf16 %v1200, %v1200
  %v1265 = vpack.c.bf16 %v1201, %v1201
  %v1266 = vpack.c.bf16 %v1202, %v1202
  %v1267 = vpack.c.bf16 %v1203, %v1203
  %v1268 = vpack.c.bf16 %v1204, %v1204
  %v1269 = vpack.c.bf16 %v1205, %v1205
  %v1270 = vpack.c.bf16 %v1206, %v1206
  %v1271 = vpack.c.bf16 %v1207, %v1207
  %v1272 = vpack.c.bf16 %v1208, %v1208
  %v1273 = vpack.c.bf16 %v1209, %v1209
  %v1274 = vpack.c.bf16 %v1210, %v1210
  %v1275 = vpack.c.bf16 %v1211, %v1211
  %v1276 = vpack.c.bf16 %v1212, %v1212
  %v1277 = vpack.c.bf16 %v1213, %v1213
  %v1278 = vpack.c.bf16 %v1214, %v1214
  %v1279 = vpack.c.bf16 %v1215, %v1215
  %v1280 = vpack.c.bf16 %v1216, %v1216
  %v1281 = vpack.c.bf16 %v1217, %v1217
  %v1282 = vpack.c.bf16 %v1218, %v1218
  %v1283 = vpack.c.bf16 %v1219, %v1219
  %v1284 = vld [vmem:[%s1027 + $0x2] sm:$0xff]
  %v1285 = vld [vmem:[%s1027 + $0xa] sm:$0xff]
  %v1286 = vld [vmem:[%s1027 + $0x1a] sm:$0xff]
  %v1287 = vld [vmem:[%s1027 + $0x22] sm:$0xff]
  %v1288 = vld [vmem:[%s1027 + $0x32] sm:$0xff]
  %v1289 = vld [vmem:[%s1027 + $0x3a] sm:$0xff]
  %v1290 = vld [vmem:[%s1027 + $0x4a] sm:$0xff]
  %v1291 = vld [vmem:[%s1027 + $0x52] sm:$0xff]
  %v1292 = vld [vmem:[%s1027 + $0x62] sm:$0xff]
  %v1293 = vld [vmem:[%s1027 + $0x6a] sm:$0xff]
  %v1294 = vld [vmem:[%s1027 + $0x7a] sm:$0xff]
  %v1295 = vld [vmem:[%s1027 + $0x82] sm:$0xff]
  %v1296 = vld [vmem:[%s1027 + $0x92] sm:$0xff]
  %v1297 = vld [vmem:[%s1027 + $0x9a] sm:$0xff]
  %v1298 = vld [vmem:[%s1027 + $0xaa] sm:$0xff]
  %v1299 = vld [vmem:[%s1027 + $0xb2] sm:$0xff]
  %v1300 = vld [vmem:[%s1027 + $0xc2] sm:$0xff]
  %v1301 = vld [vmem:[%s1027 + $0xca] sm:$0xff]
  %v1302 = vld [vmem:[%s1027 + $0xda] sm:$0xff]
  %v1303 = vld [vmem:[%s1027 + $0xe2] sm:$0xff]
  %v1304 = vld [vmem:[%s1027 + $0xf2] sm:$0xff]
  %v1305 = vld [vmem:[%s1027 + $0xfa] sm:$0xff]
  %v1306 = vld [vmem:[%s1027 + $0x10a] sm:$0xff]
  %v1307 = vld [vmem:[%s1027 + $0x112] sm:$0xff]
  %v1308 = vld [vmem:[%s1027 + $0x122] sm:$0xff]
  %v1309 = vld [vmem:[%s1027 + $0x12a] sm:$0xff]
  %v1310 = vld [vmem:[%s1027 + $0x13a] sm:$0xff]
  %v1311 = vld [vmem:[%s1027 + $0x142] sm:$0xff]
  %v1312 = vld [vmem:[%s1027 + $0x152] sm:$0xff]
  %v1313 = vld [vmem:[%s1027 + $0x15a] sm:$0xff]
  %v1314 = vld [vmem:[%s1027 + $0x16a] sm:$0xff]
  %v1315 = vld [vmem:[%s1027 + $0x172] sm:$0xff]
  %v1316 = vld [vmem:[%s1027 + $0x1b2] sm:$0xff]
  %v1317 = vld [vmem:[%s1027 + $0x1ba] sm:$0xff]
  %v1318 = vld [vmem:[%s1027 + $0x1ca] sm:$0xff]
  %v1319 = vld [vmem:[%s1027 + $0x1d2] sm:$0xff]
  %v1320 = vld [vmem:[%s1027 + $0x1e2] sm:$0xff]
  %v1321 = vld [vmem:[%s1027 + $0x1ea] sm:$0xff]
  %v1322 = vld [vmem:[%s1027 + $0x1fa] sm:$0xff]
  %v1323 = vld [vmem:[%s1027 + $0x202] sm:$0xff]
  %v1324 = vld [vmem:[%s1027 + $0x212] sm:$0xff]
  %v1325 = vld [vmem:[%s1027 + $0x21a] sm:$0xff]
  %v1326 = vld [vmem:[%s1027 + $0x22a] sm:$0xff]
  %v1327 = vld [vmem:[%s1027 + $0x232] sm:$0xff]
  %v1328 = vld [vmem:[%s1027 + $0x242] sm:$0xff]
  %v1329 = vld [vmem:[%s1027 + $0x24a] sm:$0xff]
  %v1330 = vld [vmem:[%s1027 + $0x25a] sm:$0xff]
  %v1331 = vld [vmem:[%s1027 + $0x262] sm:$0xff]
  %v1332 = vld [vmem:[%s1027 + $0x272] sm:$0xff]
  %v1333 = vld [vmem:[%s1027 + $0x27a] sm:$0xff]
  %v1334 = vld [vmem:[%s1027 + $0x28a] sm:$0xff]
  %v1335 = vld [vmem:[%s1027 + $0x292] sm:$0xff]
  %v1336 = vld [vmem:[%s1027 + $0x2a2] sm:$0xff]
  %v1337 = vld [vmem:[%s1027 + $0x2aa] sm:$0xff]
  %v1338 = vld [vmem:[%s1027 + $0x2ba] sm:$0xff]
  %v1339 = vld [vmem:[%s1027 + $0x2c2] sm:$0xff]
  %v1340 = vld [vmem:[%s1027 + $0x2d2] sm:$0xff]
  %v1341 = vld [vmem:[%s1027 + $0x2da] sm:$0xff]
  %v1342 = vld [vmem:[%s1027 + $0x2ea] sm:$0xff]
  %v1343 = vld [vmem:[%s1027 + $0x2f2] sm:$0xff]
  %v1344 = vld [vmem:[%s1027 + $0x302] sm:$0xff]
  %v1345 = vld [vmem:[%s1027 + $0x30a] sm:$0xff]
  %v1346 = vld [vmem:[%s1027 + $0x31a] sm:$0xff]
  %v1347 = vld [vmem:[%s1027 + $0x322] sm:$0xff]
  %v1348 = vpack.c.bf16 %v1284, %v1284
  %v1349 = vpack.c.bf16 %v1285, %v1285
  %v1350 = vpack.c.bf16 %v1286, %v1286
  %v1351 = vpack.c.bf16 %v1287, %v1287
  %v1352 = vpack.c.bf16 %v1288, %v1288
  %v1353 = vpack.c.bf16 %v1289, %v1289
  %v1354 = vpack.c.bf16 %v1290, %v1290
  %v1355 = vpack.c.bf16 %v1291, %v1291
  %v1356 = vpack.c.bf16 %v1292, %v1292
  %v1357 = vpack.c.bf16 %v1293, %v1293
  %v1358 = vpack.c.bf16 %v1294, %v1294
  %v1359 = vpack.c.bf16 %v1295, %v1295
  %v1360 = vpack.c.bf16 %v1296, %v1296
  %v1361 = vpack.c.bf16 %v1297, %v1297
  %v1362 = vpack.c.bf16 %v1298, %v1298
  %v1363 = vpack.c.bf16 %v1299, %v1299
  %v1364 = vpack.c.bf16 %v1300, %v1300
  %v1365 = vpack.c.bf16 %v1301, %v1301
  %v1366 = vpack.c.bf16 %v1302, %v1302
  %v1367 = vpack.c.bf16 %v1303, %v1303
  %v1368 = vpack.c.bf16 %v1304, %v1304
  %v1369 = vpack.c.bf16 %v1305, %v1305
  %v1370 = vpack.c.bf16 %v1306, %v1306
  %v1371 = vpack.c.bf16 %v1307, %v1307
  %v1372 = vpack.c.bf16 %v1308, %v1308
  %v1373 = vpack.c.bf16 %v1309, %v1309
  %v1374 = vpack.c.bf16 %v1310, %v1310
  %v1375 = vpack.c.bf16 %v1311, %v1311
  %v1376 = vpack.c.bf16 %v1312, %v1312
  %v1377 = vpack.c.bf16 %v1313, %v1313
  %v1378 = vpack.c.bf16 %v1314, %v1314
  %v1379 = vpack.c.bf16 %v1315, %v1315
  %v1380 = vpack.c.bf16 %v1316, %v1316
  %v1381 = vpack.c.bf16 %v1317, %v1317
  %v1382 = vpack.c.bf16 %v1318, %v1318
  %v1383 = vpack.c.bf16 %v1319, %v1319
  %v1384 = vpack.c.bf16 %v1320, %v1320
  %v1385 = vpack.c.bf16 %v1321, %v1321
  %v1386 = vpack.c.bf16 %v1322, %v1322
  %v1387 = vpack.c.bf16 %v1323, %v1323
  %v1388 = vpack.c.bf16 %v1324, %v1324
  %v1389 = vpack.c.bf16 %v1325, %v1325
  %v1390 = vpack.c.bf16 %v1326, %v1326
  %v1391 = vpack.c.bf16 %v1327, %v1327
  %v1392 = vpack.c.bf16 %v1328, %v1328
  %v1393 = vpack.c.bf16 %v1329, %v1329
  %v1394 = vpack.c.bf16 %v1330, %v1330
  %v1395 = vpack.c.bf16 %v1331, %v1331
  %v1396 = vpack.c.bf16 %v1332, %v1332
  %v1397 = vpack.c.bf16 %v1333, %v1333
  %v1398 = vpack.c.bf16 %v1334, %v1334
  %v1399 = vpack.c.bf16 %v1335, %v1335
  %v1400 = vpack.c.bf16 %v1336, %v1336
  %v1401 = vpack.c.bf16 %v1337, %v1337
  %v1402 = vpack.c.bf16 %v1338, %v1338
  %v1403 = vpack.c.bf16 %v1339, %v1339
  %v1404 = vpack.c.bf16 %v1340, %v1340
  %v1405 = vpack.c.bf16 %v1341, %v1341
  %v1406 = vpack.c.bf16 %v1342, %v1342
  %v1407 = vpack.c.bf16 %v1343, %v1343
  %v1408 = vpack.c.bf16 %v1344, %v1344
  %v1409 = vpack.c.bf16 %v1345, %v1345
  %v1410 = vpack.c.bf16 %v1346, %v1346
  %v1411 = vpack.c.bf16 %v1347, %v1347
  %v1476 = vunpack.c.l.b16 %v323
  %v1477 = vunpack.c.l.b16 %v324
  %v1478 = vunpack.c.l.b16 %v325
  %v1479 = vunpack.c.l.b16 %v326
  %v1480 = vunpack.c.l.b16 %v327
  %v1481 = vunpack.c.l.b16 %v328
  %v1482 = vunpack.c.l.b16 %v329
  %v1483 = vunpack.c.l.b16 %v330
  %v1484 = vunpack.c.l.b16 %v331
  %v1485 = vunpack.c.l.b16 %v332
  %v1486 = vunpack.c.l.b16 %v333
  %v1487 = vunpack.c.l.b16 %v334
  %v1488 = vunpack.c.l.b16 %v335
  %v1489 = vunpack.c.l.b16 %v336
  %v1490 = vunpack.c.l.b16 %v337
  %v1491 = vunpack.c.l.b16 %v338
  %v1492 = vunpack.c.l.b16 %v339
  %v1493 = vunpack.c.l.b16 %v340
  %v1494 = vunpack.c.l.b16 %v341
  %v1495 = vunpack.c.l.b16 %v342
  %v1496 = vunpack.c.l.b16 %v343
  %v1497 = vunpack.c.l.b16 %v344
  %v1498 = vunpack.c.l.b16 %v345
  %v1499 = vunpack.c.l.b16 %v346
  %v1500 = vunpack.c.l.b16 %v347
  %v1501 = vunpack.c.l.b16 %v348
  %v1502 = vunpack.c.l.b16 %v349
  %v1503 = vunpack.c.l.b16 %v350
  %v1504 = vunpack.c.l.b16 %v351
  %v1505 = vunpack.c.l.b16 %v352
  %v1506 = vunpack.c.l.b16 %v353
  %v1507 = vunpack.c.l.b16 %v354
  %v1508 = vunpack.c.l.b16 %v355
  %v1509 = vunpack.c.l.b16 %v356
  %v1510 = vunpack.c.l.b16 %v357
  %v1511 = vunpack.c.l.b16 %v358
  %v1512 = vunpack.c.l.b16 %v359
  %v1513 = vunpack.c.l.b16 %v360
  %v1514 = vunpack.c.l.b16 %v361
  %v1515 = vunpack.c.l.b16 %v362
  %v1516 = vunpack.c.l.b16 %v363
  %v1517 = vunpack.c.l.b16 %v364
  %v1518 = vunpack.c.l.b16 %v365
  %v1519 = vunpack.c.l.b16 %v366
  %v1520 = vunpack.c.l.b16 %v367
  %v1521 = vunpack.c.l.b16 %v368
  %v1522 = vunpack.c.l.b16 %v369
  %v1523 = vunpack.c.l.b16 %v370
  %v1524 = vunpack.c.l.b16 %v371
  %v1525 = vunpack.c.l.b16 %v372
  %v1526 = vunpack.c.l.b16 %v373
  %v1527 = vunpack.c.l.b16 %v374
  %v1528 = vunpack.c.l.b16 %v375
  %v1529 = vunpack.c.l.b16 %v376
  %v1530 = vunpack.c.l.b16 %v377
  %v1531 = vunpack.c.l.b16 %v378
  %v1532 = vunpack.c.l.b16 %v379
  %v1533 = vunpack.c.l.b16 %v380
  %v1534 = vunpack.c.l.b16 %v381
  %v1535 = vunpack.c.l.b16 %v382
  %v1536 = vunpack.c.l.b16 %v383
  %v1537 = vunpack.c.l.b16 %v384
  %v1538 = vunpack.c.l.b16 %v385
  %v1539 = vunpack.c.l.b16 %v386
  %v1540 = vpack.c.b16 %v1477, %v1476
  %v1541 = vpack.c.b16 %v1479, %v1478
  %v1542 = vpack.c.b16 %v1481, %v1480
  %v1543 = vpack.c.b16 %v1483, %v1482
  %v1544 = vpack.c.b16 %v1485, %v1484
  %v1545 = vpack.c.b16 %v1487, %v1486
  %v1546 = vpack.c.b16 %v1489, %v1488
  %v1547 = vpack.c.b16 %v1491, %v1490
  %v1548 = vpack.c.b16 %v1493, %v1492
  %v1549 = vpack.c.b16 %v1495, %v1494
  %v1550 = vpack.c.b16 %v1497, %v1496
  %v1551 = vpack.c.b16 %v1499, %v1498
  %v1552 = vpack.c.b16 %v1501, %v1500
  %v1553 = vpack.c.b16 %v1503, %v1502
  %v1554 = vpack.c.b16 %v1505, %v1504
  %v1555 = vpack.c.b16 %v1507, %v1506
  %v1556 = vpack.c.b16 %v1509, %v1508
  %v1557 = vpack.c.b16 %v1511, %v1510
  %v1558 = vpack.c.b16 %v1513, %v1512
  %v1559 = vpack.c.b16 %v1515, %v1514
  %v1560 = vpack.c.b16 %v1517, %v1516
  %v1561 = vpack.c.b16 %v1519, %v1518
  %v1562 = vpack.c.b16 %v1521, %v1520
  %v1563 = vpack.c.b16 %v1523, %v1522
  %v1564 = vpack.c.b16 %v1525, %v1524
  %v1565 = vpack.c.b16 %v1527, %v1526
  %v1566 = vpack.c.b16 %v1529, %v1528
  %v1567 = vpack.c.b16 %v1531, %v1530
  %v1568 = vpack.c.b16 %v1533, %v1532
  %v1569 = vpack.c.b16 %v1535, %v1534
  %v1570 = vpack.c.b16 %v1537, %v1536
  %v1571 = vpack.c.b16 %v1539, %v1538
  %v1636 = vunpack.c.l.b16 %v451
  %v1637 = vunpack.c.l.b16 %v452
  %v1638 = vunpack.c.l.b16 %v453
  %v1639 = vunpack.c.l.b16 %v454
  %v1640 = vunpack.c.l.b16 %v455
  %v1641 = vunpack.c.l.b16 %v456
  %v1642 = vunpack.c.l.b16 %v457
  %v1643 = vunpack.c.l.b16 %v458
  %v1644 = vunpack.c.l.b16 %v459
  %v1645 = vunpack.c.l.b16 %v460
  %v1646 = vunpack.c.l.b16 %v461
  %v1647 = vunpack.c.l.b16 %v462
  %v1648 = vunpack.c.l.b16 %v463
  %v1649 = vunpack.c.l.b16 %v464
  %v1650 = vunpack.c.l.b16 %v465
  %v1651 = vunpack.c.l.b16 %v466
  %v1652 = vunpack.c.l.b16 %v467
  %v1653 = vunpack.c.l.b16 %v468
  %v1654 = vunpack.c.l.b16 %v469
  %v1655 = vunpack.c.l.b16 %v470
  %v1656 = vunpack.c.l.b16 %v471
  %v1657 = vunpack.c.l.b16 %v472
  %v1658 = vunpack.c.l.b16 %v473
  %v1659 = vunpack.c.l.b16 %v474
  %v1660 = vunpack.c.l.b16 %v475
  %v1661 = vunpack.c.l.b16 %v476
  %v1662 = vunpack.c.l.b16 %v477
  %v1663 = vunpack.c.l.b16 %v478
  %v1664 = vunpack.c.l.b16 %v479
  %v1665 = vunpack.c.l.b16 %v480
  %v1666 = vunpack.c.l.b16 %v481
  %v1667 = vunpack.c.l.b16 %v482
  %v1668 = vunpack.c.l.b16 %v483
  %v1669 = vunpack.c.l.b16 %v484
  %v1670 = vunpack.c.l.b16 %v485
  %v1671 = vunpack.c.l.b16 %v486
  %v1672 = vunpack.c.l.b16 %v487
  %v1673 = vunpack.c.l.b16 %v488
  %v1674 = vunpack.c.l.b16 %v489
  %v1675 = vunpack.c.l.b16 %v490
  %v1676 = vunpack.c.l.b16 %v491
  %v1677 = vunpack.c.l.b16 %v492
  %v1678 = vunpack.c.l.b16 %v493
  %v1679 = vunpack.c.l.b16 %v494
  %v1680 = vunpack.c.l.b16 %v495
  %v1681 = vunpack.c.l.b16 %v496
  %v1682 = vunpack.c.l.b16 %v497
  %v1683 = vunpack.c.l.b16 %v498
  %v1684 = vunpack.c.l.b16 %v499
  %v1685 = vunpack.c.l.b16 %v500
  %v1686 = vunpack.c.l.b16 %v501
  %v1687 = vunpack.c.l.b16 %v502
  %v1688 = vunpack.c.l.b16 %v503
  %v1689 = vunpack.c.l.b16 %v504
  %v1690 = vunpack.c.l.b16 %v505
  %v1691 = vunpack.c.l.b16 %v506
  %v1692 = vunpack.c.l.b16 %v507
  %v1693 = vunpack.c.l.b16 %v508
  %v1694 = vunpack.c.l.b16 %v509
  %v1695 = vunpack.c.l.b16 %v510
  %v1696 = vunpack.c.l.b16 %v511
  %v1697 = vunpack.c.l.b16 %v512
  %v1698 = vunpack.c.l.b16 %v513
  %v1699 = vunpack.c.l.b16 %v514
  %v1700 = vpack.c.b16 %v1637, %v1636
  %v1701 = vpack.c.b16 %v1639, %v1638
  %v1702 = vpack.c.b16 %v1641, %v1640
  %v1703 = vpack.c.b16 %v1643, %v1642
  %v1704 = vpack.c.b16 %v1645, %v1644
  %v1705 = vpack.c.b16 %v1647, %v1646
  %v1706 = vpack.c.b16 %v1649, %v1648
  %v1707 = vpack.c.b16 %v1651, %v1650
  %v1708 = vpack.c.b16 %v1653, %v1652
  %v1709 = vpack.c.b16 %v1655, %v1654
  %v1710 = vpack.c.b16 %v1657, %v1656
  %v1711 = vpack.c.b16 %v1659, %v1658
  %v1712 = vpack.c.b16 %v1661, %v1660
  %v1713 = vpack.c.b16 %v1663, %v1662
  %v1714 = vpack.c.b16 %v1665, %v1664
  %v1715 = vpack.c.b16 %v1667, %v1666
  %v1716 = vpack.c.b16 %v1669, %v1668
  %v1717 = vpack.c.b16 %v1671, %v1670
  %v1718 = vpack.c.b16 %v1673, %v1672
  %v1719 = vpack.c.b16 %v1675, %v1674
  %v1720 = vpack.c.b16 %v1677, %v1676
  %v1721 = vpack.c.b16 %v1679, %v1678
  %v1722 = vpack.c.b16 %v1681, %v1680
  %v1723 = vpack.c.b16 %v1683, %v1682
  %v1724 = vpack.c.b16 %v1685, %v1684
  %v1725 = vpack.c.b16 %v1687, %v1686
  %v1726 = vpack.c.b16 %v1689, %v1688
  %v1727 = vpack.c.b16 %v1691, %v1690
  %v1728 = vpack.c.b16 %v1693, %v1692
  %v1729 = vpack.c.b16 %v1695, %v1694
  %v1730 = vpack.c.b16 %v1697, %v1696
  %v1731 = vpack.c.b16 %v1699, %v1698
  %1732 = vrot.lane.b32.xlu0 %v1700, 8
  %v1733 = vpop.permute.xlu0 %1732
  %1734 = vrot.lane.b32.xlu0 %v1701, 8
  %v1735 = vpop.permute.xlu0 %1734
  %1736 = vrot.lane.b32.xlu0 %v1702, 8
  %v1737 = vpop.permute.xlu0 %1736
  %1738 = vrot.lane.b32.xlu0 %v1703, 8
  %v1739 = vpop.permute.xlu0 %1738
  %1740 = vrot.lane.b32.xlu0 %v1704, 8
  %v1741 = vpop.permute.xlu0 %1740
  %1742 = vrot.lane.b32.xlu0 %v1705, 8
  %v1743 = vpop.permute.xlu0 %1742
  %1744 = vrot.lane.b32.xlu0 %v1706, 8
  %v1745 = vpop.permute.xlu0 %1744
  %1746 = vrot.lane.b32.xlu0 %v1707, 8
  %v1747 = vpop.permute.xlu0 %1746
  %1748 = vrot.lane.b32.xlu0 %v1708, 8
  %v1749 = vpop.permute.xlu0 %1748
  %1750 = vrot.lane.b32.xlu0 %v1709, 8
  %v1751 = vpop.permute.xlu0 %1750
  %1752 = vrot.lane.b32.xlu0 %v1710, 8
  %v1753 = vpop.permute.xlu0 %1752
  %1754 = vrot.lane.b32.xlu0 %v1711, 8
  %v1755 = vpop.permute.xlu0 %1754
  %1756 = vrot.lane.b32.xlu0 %v1712, 8
  %v1757 = vpop.permute.xlu0 %1756
  %1758 = vrot.lane.b32.xlu0 %v1713, 8
  %v1759 = vpop.permute.xlu0 %1758
  %1760 = vrot.lane.b32.xlu0 %v1714, 8
  %v1761 = vpop.permute.xlu0 %1760
  %1762 = vrot.lane.b32.xlu0 %v1715, 8
  %v1763 = vpop.permute.xlu0 %1762
  %1764 = vrot.lane.b32.xlu0 %v1716, 8
  %v1765 = vpop.permute.xlu0 %1764
  %1766 = vrot.lane.b32.xlu0 %v1717, 8
  %v1767 = vpop.permute.xlu0 %1766
  %1768 = vrot.lane.b32.xlu0 %v1718, 8
  %v1769 = vpop.permute.xlu0 %1768
  %1770 = vrot.lane.b32.xlu0 %v1719, 8
  %v1771 = vpop.permute.xlu0 %1770
  %1772 = vrot.lane.b32.xlu0 %v1720, 8
  %v1773 = vpop.permute.xlu0 %1772
  %1774 = vrot.lane.b32.xlu0 %v1721, 8
  %v1775 = vpop.permute.xlu0 %1774
  %1776 = vrot.lane.b32.xlu0 %v1722, 8
  %v1777 = vpop.permute.xlu0 %1776
  %1778 = vrot.lane.b32.xlu0 %v1723, 8
  %v1779 = vpop.permute.xlu0 %1778
  %1780 = vrot.lane.b32.xlu0 %v1724, 8
  %v1781 = vpop.permute.xlu0 %1780
  %1782 = vrot.lane.b32.xlu0 %v1725, 8
  %v1783 = vpop.permute.xlu0 %1782
  %1784 = vrot.lane.b32.xlu0 %v1726, 8
  %v1785 = vpop.permute.xlu0 %1784
  %1786 = vrot.lane.b32.xlu0 %v1727, 8
  %v1787 = vpop.permute.xlu0 %1786
  %1788 = vrot.lane.b32.xlu0 %v1728, 8
  %v1789 = vpop.permute.xlu0 %1788
  %1790 = vrot.lane.b32.xlu0 %v1729, 8
  %v1791 = vpop.permute.xlu0 %1790
  %1792 = vrot.lane.b32.xlu0 %v1730, 8
  %v1793 = vpop.permute.xlu0 %1792
  %1794 = vrot.lane.b32.xlu0 %v1731, 8
  %v1795 = vpop.permute.xlu0 %1794
  %v1860 = vunpack.c.l.b16 %v579
  %v1861 = vunpack.c.l.b16 %v580
  %v1862 = vunpack.c.l.b16 %v581
  %v1863 = vunpack.c.l.b16 %v582
  %v1864 = vunpack.c.l.b16 %v583
  %v1865 = vunpack.c.l.b16 %v584
  %v1866 = vunpack.c.l.b16 %v585
  %v1867 = vunpack.c.l.b16 %v586
  %v1868 = vunpack.c.l.b16 %v587
  %v1869 = vunpack.c.l.b16 %v588
  %v1870 = vunpack.c.l.b16 %v589
  %v1871 = vunpack.c.l.b16 %v590
  %v1872 = vunpack.c.l.b16 %v591
  %v1873 = vunpack.c.l.b16 %v592
  %v1874 = vunpack.c.l.b16 %v593
  %v1875 = vunpack.c.l.b16 %v594
  %v1876 = vunpack.c.l.b16 %v595
  %v1877 = vunpack.c.l.b16 %v596
  %v1878 = vunpack.c.l.b16 %v597
  %v1879 = vunpack.c.l.b16 %v598
  %v1880 = vunpack.c.l.b16 %v599
  %v1881 = vunpack.c.l.b16 %v600
  %v1882 = vunpack.c.l.b16 %v601
  %v1883 = vunpack.c.l.b16 %v602
  %v1884 = vunpack.c.l.b16 %v603
  %v1885 = vunpack.c.l.b16 %v604
  %v1886 = vunpack.c.l.b16 %v605
  %v1887 = vunpack.c.l.b16 %v606
  %v1888 = vunpack.c.l.b16 %v607
  %v1889 = vunpack.c.l.b16 %v608
  %v1890 = vunpack.c.l.b16 %v609
  %v1891 = vunpack.c.l.b16 %v610
  %v1892 = vunpack.c.l.b16 %v611
  %v1893 = vunpack.c.l.b16 %v612
  %v1894 = vunpack.c.l.b16 %v613
  %v1895 = vunpack.c.l.b16 %v614
  %v1896 = vunpack.c.l.b16 %v615
  %v1897 = vunpack.c.l.b16 %v616
  %v1898 = vunpack.c.l.b16 %v617
  %v1899 = vunpack.c.l.b16 %v618
  %v1900 = vunpack.c.l.b16 %v619
  %v1901 = vunpack.c.l.b16 %v620
  %v1902 = vunpack.c.l.b16 %v621
  %v1903 = vunpack.c.l.b16 %v622
  %v1904 = vunpack.c.l.b16 %v623
  %v1905 = vunpack.c.l.b16 %v624
  %v1906 = vunpack.c.l.b16 %v625
  %v1907 = vunpack.c.l.b16 %v626
  %v1908 = vunpack.c.l.b16 %v627
  %v1909 = vunpack.c.l.b16 %v628
  %v1910 = vunpack.c.l.b16 %v629
  %v1911 = vunpack.c.l.b16 %v630
  %v1912 = vunpack.c.l.b16 %v631
  %v1913 = vunpack.c.l.b16 %v632
  %v1914 = vunpack.c.l.b16 %v633
  %v1915 = vunpack.c.l.b16 %v634
  %v1916 = vunpack.c.l.b16 %v635
  %v1917 = vunpack.c.l.b16 %v636
  %v1918 = vunpack.c.l.b16 %v637
  %v1919 = vunpack.c.l.b16 %v638
  %v1920 = vunpack.c.l.b16 %v639
  %v1921 = vunpack.c.l.b16 %v640
  %v1922 = vunpack.c.l.b16 %v641
  %v1923 = vunpack.c.l.b16 %v642
  %v1924 = vpack.c.b16 %v1861, %v1860
  %v1925 = vpack.c.b16 %v1863, %v1862
  %v1926 = vpack.c.b16 %v1865, %v1864
  %v1927 = vpack.c.b16 %v1867, %v1866
  %v1928 = vpack.c.b16 %v1869, %v1868
  %v1929 = vpack.c.b16 %v1871, %v1870
  %v1930 = vpack.c.b16 %v1873, %v1872
  %v1931 = vpack.c.b16 %v1875, %v1874
  %v1932 = vpack.c.b16 %v1877, %v1876
  %v1933 = vpack.c.b16 %v1879, %v1878
  %v1934 = vpack.c.b16 %v1881, %v1880
  %v1935 = vpack.c.b16 %v1883, %v1882
  %v1936 = vpack.c.b16 %v1885, %v1884
  %v1937 = vpack.c.b16 %v1887, %v1886
  %v1938 = vpack.c.b16 %v1889, %v1888
  %v1939 = vpack.c.b16 %v1891, %v1890
  %v1940 = vpack.c.b16 %v1893, %v1892
  %v1941 = vpack.c.b16 %v1895, %v1894
  %v1942 = vpack.c.b16 %v1897, %v1896
  %v1943 = vpack.c.b16 %v1899, %v1898
  %v1944 = vpack.c.b16 %v1901, %v1900
  %v1945 = vpack.c.b16 %v1903, %v1902
  %v1946 = vpack.c.b16 %v1905, %v1904
  %v1947 = vpack.c.b16 %v1907, %v1906
  %v1948 = vpack.c.b16 %v1909, %v1908
  %v1949 = vpack.c.b16 %v1911, %v1910
  %v1950 = vpack.c.b16 %v1913, %v1912
  %v1951 = vpack.c.b16 %v1915, %v1914
  %v1952 = vpack.c.b16 %v1917, %v1916
  %v1953 = vpack.c.b16 %v1919, %v1918
  %v1954 = vpack.c.b16 %v1921, %v1920
  %v1955 = vpack.c.b16 %v1923, %v1922
  %1956 = vrot.lane.b32.xlu0 %v1924, 16
  %v1957 = vpop.permute.xlu0 %1956
  %1958 = vrot.lane.b32.xlu0 %v1925, 16
  %v1959 = vpop.permute.xlu0 %1958
  %1960 = vrot.lane.b32.xlu0 %v1926, 16
  %v1961 = vpop.permute.xlu0 %1960
  %1962 = vrot.lane.b32.xlu0 %v1927, 16
  %v1963 = vpop.permute.xlu0 %1962
  %1964 = vrot.lane.b32.xlu0 %v1928, 16
  %v1965 = vpop.permute.xlu0 %1964
  %1966 = vrot.lane.b32.xlu0 %v1929, 16
  %v1967 = vpop.permute.xlu0 %1966
  %1968 = vrot.lane.b32.xlu0 %v1930, 16
  %v1969 = vpop.permute.xlu0 %1968
  %1970 = vrot.lane.b32.xlu0 %v1931, 16
  %v1971 = vpop.permute.xlu0 %1970
  %1972 = vrot.lane.b32.xlu0 %v1932, 16
  %v1973 = vpop.permute.xlu0 %1972
  %1974 = vrot.lane.b32.xlu0 %v1933, 16
  %v1975 = vpop.permute.xlu0 %1974
  %1976 = vrot.lane.b32.xlu0 %v1934, 16
  %v1977 = vpop.permute.xlu0 %1976
  %1978 = vrot.lane.b32.xlu0 %v1935, 16
  %v1979 = vpop.permute.xlu0 %1978
  %1980 = vrot.lane.b32.xlu0 %v1936, 16
  %v1981 = vpop.permute.xlu0 %1980
  %1982 = vrot.lane.b32.xlu0 %v1937, 16
  %v1983 = vpop.permute.xlu0 %1982
  %1984 = vrot.lane.b32.xlu0 %v1938, 16
  %v1985 = vpop.permute.xlu0 %1984
  %1986 = vrot.lane.b32.xlu0 %v1939, 16
  %v1987 = vpop.permute.xlu0 %1986
  %1988 = vrot.lane.b32.xlu0 %v1940, 16
  %v1989 = vpop.permute.xlu0 %1988
  %1990 = vrot.lane.b32.xlu0 %v1941, 16
  %v1991 = vpop.permute.xlu0 %1990
  %1992 = vrot.lane.b32.xlu0 %v1942, 16
  %v1993 = vpop.permute.xlu0 %1992
  %1994 = vrot.lane.b32.xlu0 %v1943, 16
  %v1995 = vpop.permute.xlu0 %1994
  %1996 = vrot.lane.b32.xlu0 %v1944, 16
  %v1997 = vpop.permute.xlu0 %1996
  %1998 = vrot.lane.b32.xlu0 %v1945, 16
  %v1999 = vpop.permute.xlu0 %1998
  %2000 = vrot.lane.b32.xlu0 %v1946, 16
  %v2001 = vpop.permute.xlu0 %2000
  %2002 = vrot.lane.b32.xlu0 %v1947, 16
  %v2003 = vpop.permute.xlu0 %2002
  %2004 = vrot.lane.b32.xlu0 %v1948, 16
  %v2005 = vpop.permute.xlu0 %2004
  %2006 = vrot.lane.b32.xlu0 %v1949, 16
  %v2007 = vpop.permute.xlu0 %2006
  %2008 = vrot.lane.b32.xlu0 %v1950, 16
  %v2009 = vpop.permute.xlu0 %2008
  %2010 = vrot.lane.b32.xlu0 %v1951, 16
  %v2011 = vpop.permute.xlu0 %2010
  %2012 = vrot.lane.b32.xlu0 %v1952, 16
  %v2013 = vpop.permute.xlu0 %2012
  %2014 = vrot.lane.b32.xlu0 %v1953, 16
  %v2015 = vpop.permute.xlu0 %2014
  %2016 = vrot.lane.b32.xlu0 %v1954, 16
  %v2017 = vpop.permute.xlu0 %2016
  %2018 = vrot.lane.b32.xlu0 %v1955, 16
  %v2019 = vpop.permute.xlu0 %2018
  %v2084 = vunpack.c.l.b16 %v707
  %v2085 = vunpack.c.l.b16 %v708
  %v2086 = vunpack.c.l.b16 %v709
  %v2087 = vunpack.c.l.b16 %v710
  %v2088 = vunpack.c.l.b16 %v711
  %v2089 = vunpack.c.l.b16 %v712
  %v2090 = vunpack.c.l.b16 %v713
  %v2091 = vunpack.c.l.b16 %v714
  %v2092 = vunpack.c.l.b16 %v715
  %v2093 = vunpack.c.l.b16 %v716
  %v2094 = vunpack.c.l.b16 %v717
  %v2095 = vunpack.c.l.b16 %v718
  %v2096 = vunpack.c.l.b16 %v719
  %v2097 = vunpack.c.l.b16 %v720
  %v2098 = vunpack.c.l.b16 %v721
  %v2099 = vunpack.c.l.b16 %v722
  %v2100 = vunpack.c.l.b16 %v723
  %v2101 = vunpack.c.l.b16 %v724
  %v2102 = vunpack.c.l.b16 %v725
  %v2103 = vunpack.c.l.b16 %v726
  %v2104 = vunpack.c.l.b16 %v727
  %v2105 = vunpack.c.l.b16 %v728
  %v2106 = vunpack.c.l.b16 %v729
  %v2107 = vunpack.c.l.b16 %v730
  %v2108 = vunpack.c.l.b16 %v731
  %v2109 = vunpack.c.l.b16 %v732
  %v2110 = vunpack.c.l.b16 %v733
  %v2111 = vunpack.c.l.b16 %v734
  %v2112 = vunpack.c.l.b16 %v735
  %v2113 = vunpack.c.l.b16 %v736
  %v2114 = vunpack.c.l.b16 %v737
  %v2115 = vunpack.c.l.b16 %v738
  %v2116 = vunpack.c.l.b16 %v739
  %v2117 = vunpack.c.l.b16 %v740
  %v2118 = vunpack.c.l.b16 %v741
  %v2119 = vunpack.c.l.b16 %v742
  %v2120 = vunpack.c.l.b16 %v743
  %v2121 = vunpack.c.l.b16 %v744
  %v2122 = vunpack.c.l.b16 %v745
  %v2123 = vunpack.c.l.b16 %v746
  %v2124 = vunpack.c.l.b16 %v747
  %v2125 = vunpack.c.l.b16 %v748
  %v2126 = vunpack.c.l.b16 %v749
  %v2127 = vunpack.c.l.b16 %v750
  %v2128 = vunpack.c.l.b16 %v751
  %v2129 = vunpack.c.l.b16 %v752
  %v2130 = vunpack.c.l.b16 %v753
  %v2131 = vunpack.c.l.b16 %v754
  %v2132 = vunpack.c.l.b16 %v755
  %v2133 = vunpack.c.l.b16 %v756
  %v2134 = vunpack.c.l.b16 %v757
  %v2135 = vunpack.c.l.b16 %v758
  %v2136 = vunpack.c.l.b16 %v759
  %v2137 = vunpack.c.l.b16 %v760
  %v2138 = vunpack.c.l.b16 %v761
  %v2139 = vunpack.c.l.b16 %v762
  %v2140 = vunpack.c.l.b16 %v763
  %v2141 = vunpack.c.l.b16 %v764
  %v2142 = vunpack.c.l.b16 %v765
  %v2143 = vunpack.c.l.b16 %v766
  %v2144 = vunpack.c.l.b16 %v767
  %v2145 = vunpack.c.l.b16 %v768
  %v2146 = vunpack.c.l.b16 %v769
  %v2147 = vunpack.c.l.b16 %v770
  %v2148 = vpack.c.b16 %v2085, %v2084
  %v2149 = vpack.c.b16 %v2087, %v2086
  %v2150 = vpack.c.b16 %v2089, %v2088
  %v2151 = vpack.c.b16 %v2091, %v2090
  %v2152 = vpack.c.b16 %v2093, %v2092
  %v2153 = vpack.c.b16 %v2095, %v2094
  %v2154 = vpack.c.b16 %v2097, %v2096
  %v2155 = vpack.c.b16 %v2099, %v2098
  %v2156 = vpack.c.b16 %v2101, %v2100
  %v2157 = vpack.c.b16 %v2103, %v2102
  %v2158 = vpack.c.b16 %v2105, %v2104
  %v2159 = vpack.c.b16 %v2107, %v2106
  %v2160 = vpack.c.b16 %v2109, %v2108
  %v2161 = vpack.c.b16 %v2111, %v2110
  %v2162 = vpack.c.b16 %v2113, %v2112
  %v2163 = vpack.c.b16 %v2115, %v2114
  %v2164 = vpack.c.b16 %v2117, %v2116
  %v2165 = vpack.c.b16 %v2119, %v2118
  %v2166 = vpack.c.b16 %v2121, %v2120
  %v2167 = vpack.c.b16 %v2123, %v2122
  %v2168 = vpack.c.b16 %v2125, %v2124
  %v2169 = vpack.c.b16 %v2127, %v2126
  %v2170 = vpack.c.b16 %v2129, %v2128
  %v2171 = vpack.c.b16 %v2131, %v2130
  %v2172 = vpack.c.b16 %v2133, %v2132
  %v2173 = vpack.c.b16 %v2135, %v2134
  %v2174 = vpack.c.b16 %v2137, %v2136
  %v2175 = vpack.c.b16 %v2139, %v2138
  %v2176 = vpack.c.b16 %v2141, %v2140
  %v2177 = vpack.c.b16 %v2143, %v2142
  %v2178 = vpack.c.b16 %v2145, %v2144
  %v2179 = vpack.c.b16 %v2147, %v2146
  %2180 = vrot.lane.b32.xlu0 %v2148, 24
  %v2181 = vpop.permute.xlu0 %2180
  %2182 = vrot.lane.b32.xlu0 %v2149, 24
  %v2183 = vpop.permute.xlu0 %2182
  %2184 = vrot.lane.b32.xlu0 %v2150, 24
  %v2185 = vpop.permute.xlu0 %2184
  %2186 = vrot.lane.b32.xlu0 %v2151, 24
  %v2187 = vpop.permute.xlu0 %2186
  %2188 = vrot.lane.b32.xlu0 %v2152, 24
  %v2189 = vpop.permute.xlu0 %2188
  %2190 = vrot.lane.b32.xlu0 %v2153, 24
  %v2191 = vpop.permute.xlu0 %2190
  %2192 = vrot.lane.b32.xlu0 %v2154, 24
  %v2193 = vpop.permute.xlu0 %2192
  %2194 = vrot.lane.b32.xlu0 %v2155, 24
  %v2195 = vpop.permute.xlu0 %2194
  %2196 = vrot.lane.b32.xlu0 %v2156, 24
  %v2197 = vpop.permute.xlu0 %2196
  %2198 = vrot.lane.b32.xlu0 %v2157, 24
  %v2199 = vpop.permute.xlu0 %2198
  %2200 = vrot.lane.b32.xlu0 %v2158, 24
  %v2201 = vpop.permute.xlu0 %2200
  %2202 = vrot.lane.b32.xlu0 %v2159, 24
  %v2203 = vpop.permute.xlu0 %2202
  %2204 = vrot.lane.b32.xlu0 %v2160, 24
  %v2205 = vpop.permute.xlu0 %2204
  %2206 = vrot.lane.b32.xlu0 %v2161, 24
  %v2207 = vpop.permute.xlu0 %2206
  %2208 = vrot.lane.b32.xlu0 %v2162, 24
  %v2209 = vpop.permute.xlu0 %2208
  %2210 = vrot.lane.b32.xlu0 %v2163, 24
  %v2211 = vpop.permute.xlu0 %2210
  %2212 = vrot.lane.b32.xlu0 %v2164, 24
  %v2213 = vpop.permute.xlu0 %2212
  %2214 = vrot.lane.b32.xlu0 %v2165, 24
  %v2215 = vpop.permute.xlu0 %2214
  %2216 = vrot.lane.b32.xlu0 %v2166, 24
  %v2217 = vpop.permute.xlu0 %2216
  %2218 = vrot.lane.b32.xlu0 %v2167, 24
  %v2219 = vpop.permute.xlu0 %2218
  %2220 = vrot.lane.b32.xlu0 %v2168, 24
  %v2221 = vpop.permute.xlu0 %2220
  %2222 = vrot.lane.b32.xlu0 %v2169, 24
  %v2223 = vpop.permute.xlu0 %2222
  %2224 = vrot.lane.b32.xlu0 %v2170, 24
  %v2225 = vpop.permute.xlu0 %2224
  %2226 = vrot.lane.b32.xlu0 %v2171, 24
  %v2227 = vpop.permute.xlu0 %2226
  %2228 = vrot.lane.b32.xlu0 %v2172, 24
  %v2229 = vpop.permute.xlu0 %2228
  %2230 = vrot.lane.b32.xlu0 %v2173, 24
  %v2231 = vpop.permute.xlu0 %2230
  %2232 = vrot.lane.b32.xlu0 %v2174, 24
  %v2233 = vpop.permute.xlu0 %2232
  %2234 = vrot.lane.b32.xlu0 %v2175, 24
  %v2235 = vpop.permute.xlu0 %2234
  %2236 = vrot.lane.b32.xlu0 %v2176, 24
  %v2237 = vpop.permute.xlu0 %2236
  %2238 = vrot.lane.b32.xlu0 %v2177, 24
  %v2239 = vpop.permute.xlu0 %2238
  %2240 = vrot.lane.b32.xlu0 %v2178, 24
  %v2241 = vpop.permute.xlu0 %2240
  %2242 = vrot.lane.b32.xlu0 %v2179, 24
  %v2243 = vpop.permute.xlu0 %2242
  %v2308 = vunpack.c.l.b16 %v835
  %v2309 = vunpack.c.l.b16 %v836
  %v2310 = vunpack.c.l.b16 %v837
  %v2311 = vunpack.c.l.b16 %v838
  %v2312 = vunpack.c.l.b16 %v839
  %v2313 = vunpack.c.l.b16 %v840
  %v2314 = vunpack.c.l.b16 %v841
  %v2315 = vunpack.c.l.b16 %v842
  %v2316 = vunpack.c.l.b16 %v843
  %v2317 = vunpack.c.l.b16 %v844
  %v2318 = vunpack.c.l.b16 %v845
  %v2319 = vunpack.c.l.b16 %v846
  %v2320 = vunpack.c.l.b16 %v847
  %v2321 = vunpack.c.l.b16 %v848
  %v2322 = vunpack.c.l.b16 %v849
  %v2323 = vunpack.c.l.b16 %v850
  %v2324 = vunpack.c.l.b16 %v851
  %v2325 = vunpack.c.l.b16 %v852
  %v2326 = vunpack.c.l.b16 %v853
  %v2327 = vunpack.c.l.b16 %v854
  %v2328 = vunpack.c.l.b16 %v855
  %v2329 = vunpack.c.l.b16 %v856
  %v2330 = vunpack.c.l.b16 %v857
  %v2331 = vunpack.c.l.b16 %v858
  %v2332 = vunpack.c.l.b16 %v859
  %v2333 = vunpack.c.l.b16 %v860
  %v2334 = vunpack.c.l.b16 %v861
  %v2335 = vunpack.c.l.b16 %v862
  %v2336 = vunpack.c.l.b16 %v863
  %v2337 = vunpack.c.l.b16 %v864
  %v2338 = vunpack.c.l.b16 %v865
  %v2339 = vunpack.c.l.b16 %v866
  %v2340 = vunpack.c.l.b16 %v867
  %v2341 = vunpack.c.l.b16 %v868
  %v2342 = vunpack.c.l.b16 %v869
  %v2343 = vunpack.c.l.b16 %v870
  %v2344 = vunpack.c.l.b16 %v871
  %v2345 = vunpack.c.l.b16 %v872
  %v2346 = vunpack.c.l.b16 %v873
  %v2347 = vunpack.c.l.b16 %v874
  %v2348 = vunpack.c.l.b16 %v875
  %v2349 = vunpack.c.l.b16 %v876
  %v2350 = vunpack.c.l.b16 %v877
  %v2351 = vunpack.c.l.b16 %v878
  %v2352 = vunpack.c.l.b16 %v879
  %v2353 = vunpack.c.l.b16 %v880
  %v2354 = vunpack.c.l.b16 %v881
  %v2355 = vunpack.c.l.b16 %v882
  %v2356 = vunpack.c.l.b16 %v883
  %v2357 = vunpack.c.l.b16 %v884
  %v2358 = vunpack.c.l.b16 %v885
  %v2359 = vunpack.c.l.b16 %v886
  %v2360 = vunpack.c.l.b16 %v887
  %v2361 = vunpack.c.l.b16 %v888
  %v2362 = vunpack.c.l.b16 %v889
  %v2363 = vunpack.c.l.b16 %v890
  %v2364 = vunpack.c.l.b16 %v891
  %v2365 = vunpack.c.l.b16 %v892
  %v2366 = vunpack.c.l.b16 %v893
  %v2367 = vunpack.c.l.b16 %v894
  %v2368 = vunpack.c.l.b16 %v895
  %v2369 = vunpack.c.l.b16 %v896
  %v2370 = vunpack.c.l.b16 %v897
  %v2371 = vunpack.c.l.b16 %v898
  %v2372 = vpack.c.b16 %v2309, %v2308
  %v2373 = vpack.c.b16 %v2311, %v2310
  %v2374 = vpack.c.b16 %v2313, %v2312
  %v2375 = vpack.c.b16 %v2315, %v2314
  %v2376 = vpack.c.b16 %v2317, %v2316
  %v2377 = vpack.c.b16 %v2319, %v2318
  %v2378 = vpack.c.b16 %v2321, %v2320
  %v2379 = vpack.c.b16 %v2323, %v2322
  %v2380 = vpack.c.b16 %v2325, %v2324
  %v2381 = vpack.c.b16 %v2327, %v2326
  %v2382 = vpack.c.b16 %v2329, %v2328
  %v2383 = vpack.c.b16 %v2331, %v2330
  %v2384 = vpack.c.b16 %v2333, %v2332
  %v2385 = vpack.c.b16 %v2335, %v2334
  %v2386 = vpack.c.b16 %v2337, %v2336
  %v2387 = vpack.c.b16 %v2339, %v2338
  %v2388 = vpack.c.b16 %v2341, %v2340
  %v2389 = vpack.c.b16 %v2343, %v2342
  %v2390 = vpack.c.b16 %v2345, %v2344
  %v2391 = vpack.c.b16 %v2347, %v2346
  %v2392 = vpack.c.b16 %v2349, %v2348
  %v2393 = vpack.c.b16 %v2351, %v2350
  %v2394 = vpack.c.b16 %v2353, %v2352
  %v2395 = vpack.c.b16 %v2355, %v2354
  %v2396 = vpack.c.b16 %v2357, %v2356
  %v2397 = vpack.c.b16 %v2359, %v2358
  %v2398 = vpack.c.b16 %v2361, %v2360
  %v2399 = vpack.c.b16 %v2363, %v2362
  %v2400 = vpack.c.b16 %v2365, %v2364
  %v2401 = vpack.c.b16 %v2367, %v2366
  %v2402 = vpack.c.b16 %v2369, %v2368
  %v2403 = vpack.c.b16 %v2371, %v2370
  %2404 = vrot.lane.b32.xlu0 %v2372, 32
  %v2405 = vpop.permute.xlu0 %2404
  %2406 = vrot.lane.b32.xlu0 %v2373, 32
  %v2407 = vpop.permute.xlu0 %2406
  %2408 = vrot.lane.b32.xlu0 %v2374, 32
  %v2409 = vpop.permute.xlu0 %2408
  %2410 = vrot.lane.b32.xlu0 %v2375, 32
  %v2411 = vpop.permute.xlu0 %2410
  %2412 = vrot.lane.b32.xlu0 %v2376, 32
  %v2413 = vpop.permute.xlu0 %2412
  %2414 = vrot.lane.b32.xlu0 %v2377, 32
  %v2415 = vpop.permute.xlu0 %2414
  %2416 = vrot.lane.b32.xlu0 %v2378, 32
  %v2417 = vpop.permute.xlu0 %2416
  %2418 = vrot.lane.b32.xlu0 %v2379, 32
  %v2419 = vpop.permute.xlu0 %2418
  %2420 = vrot.lane.b32.xlu0 %v2380, 32
  %v2421 = vpop.permute.xlu0 %2420
  %2422 = vrot.lane.b32.xlu0 %v2381, 32
  %v2423 = vpop.permute.xlu0 %2422
  %2424 = vrot.lane.b32.xlu0 %v2382, 32
  %v2425 = vpop.permute.xlu0 %2424
  %2426 = vrot.lane.b32.xlu0 %v2383, 32
  %v2427 = vpop.permute.xlu0 %2426
  %2428 = vrot.lane.b32.xlu0 %v2384, 32
  %v2429 = vpop.permute.xlu0 %2428
  %2430 = vrot.lane.b32.xlu0 %v2385, 32
  %v2431 = vpop.permute.xlu0 %2430
  %2432 = vrot.lane.b32.xlu0 %v2386, 32
  %v2433 = vpop.permute.xlu0 %2432
  %2434 = vrot.lane.b32.xlu0 %v2387, 32
  %v2435 = vpop.permute.xlu0 %2434
  %2436 = vrot.lane.b32.xlu0 %v2388, 32
  %v2437 = vpop.permute.xlu0 %2436
  %2438 = vrot.lane.b32.xlu0 %v2389, 32
  %v2439 = vpop.permute.xlu0 %2438
  %2440 = vrot.lane.b32.xlu0 %v2390, 32
  %v2441 = vpop.permute.xlu0 %2440
  %2442 = vrot.lane.b32.xlu0 %v2391, 32
  %v2443 = vpop.permute.xlu0 %2442
  %2444 = vrot.lane.b32.xlu0 %v2392, 32
  %v2445 = vpop.permute.xlu0 %2444
  %2446 = vrot.lane.b32.xlu0 %v2393, 32
  %v2447 = vpop.permute.xlu0 %2446
  %2448 = vrot.lane.b32.xlu0 %v2394, 32
  %v2449 = vpop.permute.xlu0 %2448
  %2450 = vrot.lane.b32.xlu0 %v2395, 32
  %v2451 = vpop.permute.xlu0 %2450
  %2452 = vrot.lane.b32.xlu0 %v2396, 32
  %v2453 = vpop.permute.xlu0 %2452
  %2454 = vrot.lane.b32.xlu0 %v2397, 32
  %v2455 = vpop.permute.xlu0 %2454
  %2456 = vrot.lane.b32.xlu0 %v2398, 32
  %v2457 = vpop.permute.xlu0 %2456
  %2458 = vrot.lane.b32.xlu0 %v2399, 32
  %v2459 = vpop.permute.xlu0 %2458
  %2460 = vrot.lane.b32.xlu0 %v2400, 32
  %v2461 = vpop.permute.xlu0 %2460
  %2462 = vrot.lane.b32.xlu0 %v2401, 32
  %v2463 = vpop.permute.xlu0 %2462
  %2464 = vrot.lane.b32.xlu0 %v2402, 32
  %v2465 = vpop.permute.xlu0 %2464
  %2466 = vrot.lane.b32.xlu0 %v2403, 32
  %v2467 = vpop.permute.xlu0 %2466
  %v2532 = vunpack.c.l.b16 %v963
  %v2533 = vunpack.c.l.b16 %v964
  %v2534 = vunpack.c.l.b16 %v965
  %v2535 = vunpack.c.l.b16 %v966
  %v2536 = vunpack.c.l.b16 %v967
  %v2537 = vunpack.c.l.b16 %v968
  %v2538 = vunpack.c.l.b16 %v969
  %v2539 = vunpack.c.l.b16 %v970
  %v2540 = vunpack.c.l.b16 %v971
  %v2541 = vunpack.c.l.b16 %v972
  %v2542 = vunpack.c.l.b16 %v973
  %v2543 = vunpack.c.l.b16 %v974
  %v2544 = vunpack.c.l.b16 %v975
  %v2545 = vunpack.c.l.b16 %v976
  %v2546 = vunpack.c.l.b16 %v977
  %v2547 = vunpack.c.l.b16 %v978
  %v2548 = vunpack.c.l.b16 %v979
  %v2549 = vunpack.c.l.b16 %v980
  %v2550 = vunpack.c.l.b16 %v981
  %v2551 = vunpack.c.l.b16 %v982
  %v2552 = vunpack.c.l.b16 %v983
  %v2553 = vunpack.c.l.b16 %v984
  %v2554 = vunpack.c.l.b16 %v985
  %v2555 = vunpack.c.l.b16 %v986
  %v2556 = vunpack.c.l.b16 %v987
  %v2557 = vunpack.c.l.b16 %v988
  %v2558 = vunpack.c.l.b16 %v989
  %v2559 = vunpack.c.l.b16 %v990
  %v2560 = vunpack.c.l.b16 %v991
  %v2561 = vunpack.c.l.b16 %v992
  %v2562 = vunpack.c.l.b16 %v993
  %v2563 = vunpack.c.l.b16 %v994
  %v2564 = vunpack.c.l.b16 %v995
  %v2565 = vunpack.c.l.b16 %v996
  %v2566 = vunpack.c.l.b16 %v997
  %v2567 = vunpack.c.l.b16 %v998
  %v2568 = vunpack.c.l.b16 %v999
  %v2569 = vunpack.c.l.b16 %v1000
  %v2570 = vunpack.c.l.b16 %v1001
  %v2571 = vunpack.c.l.b16 %v1002
  %v2572 = vunpack.c.l.b16 %v1003
  %v2573 = vunpack.c.l.b16 %v1004
  %v2574 = vunpack.c.l.b16 %v1005
  %v2575 = vunpack.c.l.b16 %v1006
  %v2576 = vunpack.c.l.b16 %v1007
  %v2577 = vunpack.c.l.b16 %v1008
  %v2578 = vunpack.c.l.b16 %v1009
  %v2579 = vunpack.c.l.b16 %v1010
  %v2580 = vunpack.c.l.b16 %v1011
  %v2581 = vunpack.c.l.b16 %v1012
  %v2582 = vunpack.c.l.b16 %v1013
  %v2583 = vunpack.c.l.b16 %v1014
  %v2584 = vunpack.c.l.b16 %v1015
  %v2585 = vunpack.c.l.b16 %v1016
  %v2586 = vunpack.c.l.b16 %v1017
  %v2587 = vunpack.c.l.b16 %v1018
  %v2588 = vunpack.c.l.b16 %v1019
  %v2589 = vunpack.c.l.b16 %v1020
  %v2590 = vunpack.c.l.b16 %v1021
  %v2591 = vunpack.c.l.b16 %v1022
  %v2592 = vunpack.c.l.b16 %v1023
  %v2593 = vunpack.c.l.b16 %v1024
  %v2594 = vunpack.c.l.b16 %v1025
  %v2595 = vunpack.c.l.b16 %v1026
  %v2596 = vpack.c.b16 %v2533, %v2532
  %v2597 = vpack.c.b16 %v2535, %v2534
  %v2598 = vpack.c.b16 %v2537, %v2536
  %v2599 = vpack.c.b16 %v2539, %v2538
  %v2600 = vpack.c.b16 %v2541, %v2540
  %v2601 = vpack.c.b16 %v2543, %v2542
  %v2602 = vpack.c.b16 %v2545, %v2544
  %v2603 = vpack.c.b16 %v2547, %v2546
  %v2604 = vpack.c.b16 %v2549, %v2548
  %v2605 = vpack.c.b16 %v2551, %v2550
  %v2606 = vpack.c.b16 %v2553, %v2552
  %v2607 = vpack.c.b16 %v2555, %v2554
  %v2608 = vpack.c.b16 %v2557, %v2556
  %v2609 = vpack.c.b16 %v2559, %v2558
  %v2610 = vpack.c.b16 %v2561, %v2560
  %v2611 = vpack.c.b16 %v2563, %v2562
  %v2612 = vpack.c.b16 %v2565, %v2564
  %v2613 = vpack.c.b16 %v2567, %v2566
  %v2614 = vpack.c.b16 %v2569, %v2568
  %v2615 = vpack.c.b16 %v2571, %v2570
  %v2616 = vpack.c.b16 %v2573, %v2572
  %v2617 = vpack.c.b16 %v2575, %v2574
  %v2618 = vpack.c.b16 %v2577, %v2576
  %v2619 = vpack.c.b16 %v2579, %v2578
  %v2620 = vpack.c.b16 %v2581, %v2580
  %v2621 = vpack.c.b16 %v2583, %v2582
  %v2622 = vpack.c.b16 %v2585, %v2584
  %v2623 = vpack.c.b16 %v2587, %v2586
  %v2624 = vpack.c.b16 %v2589, %v2588
  %v2625 = vpack.c.b16 %v2591, %v2590
  %v2626 = vpack.c.b16 %v2593, %v2592
  %v2627 = vpack.c.b16 %v2595, %v2594
  %2628 = vrot.lane.b32.xlu0 %v2596, 40
  %v2629 = vpop.permute.xlu0 %2628
  %2630 = vrot.lane.b32.xlu0 %v2597, 40
  %v2631 = vpop.permute.xlu0 %2630
  %2632 = vrot.lane.b32.xlu0 %v2598, 40
  %v2633 = vpop.permute.xlu0 %2632
  %2634 = vrot.lane.b32.xlu0 %v2599, 40
  %v2635 = vpop.permute.xlu0 %2634
  %2636 = vrot.lane.b32.xlu0 %v2600, 40
  %v2637 = vpop.permute.xlu0 %2636
  %2638 = vrot.lane.b32.xlu0 %v2601, 40
  %v2639 = vpop.permute.xlu0 %2638
  %2640 = vrot.lane.b32.xlu0 %v2602, 40
  %v2641 = vpop.permute.xlu0 %2640
  %2642 = vrot.lane.b32.xlu0 %v2603, 40
  %v2643 = vpop.permute.xlu0 %2642
  %2644 = vrot.lane.b32.xlu0 %v2604, 40
  %v2645 = vpop.permute.xlu0 %2644
  %2646 = vrot.lane.b32.xlu0 %v2605, 40
  %v2647 = vpop.permute.xlu0 %2646
  %2648 = vrot.lane.b32.xlu0 %v2606, 40
  %v2649 = vpop.permute.xlu0 %2648
  %2650 = vrot.lane.b32.xlu0 %v2607, 40
  %v2651 = vpop.permute.xlu0 %2650
  %2652 = vrot.lane.b32.xlu0 %v2608, 40
  %v2653 = vpop.permute.xlu0 %2652
  %2654 = vrot.lane.b32.xlu0 %v2609, 40
  %v2655 = vpop.permute.xlu0 %2654
  %2656 = vrot.lane.b32.xlu0 %v2610, 40
  %v2657 = vpop.permute.xlu0 %2656
  %2658 = vrot.lane.b32.xlu0 %v2611, 40
  %v2659 = vpop.permute.xlu0 %2658
  %2660 = vrot.lane.b32.xlu0 %v2612, 40
  %v2661 = vpop.permute.xlu0 %2660
  %2662 = vrot.lane.b32.xlu0 %v2613, 40
  %v2663 = vpop.permute.xlu0 %2662
  %2664 = vrot.lane.b32.xlu0 %v2614, 40
  %v2665 = vpop.permute.xlu0 %2664
  %2666 = vrot.lane.b32.xlu0 %v2615, 40
  %v2667 = vpop.permute.xlu0 %2666
  %2668 = vrot.lane.b32.xlu0 %v2616, 40
  %v2669 = vpop.permute.xlu0 %2668
  %2670 = vrot.lane.b32.xlu0 %v2617, 40
  %v2671 = vpop.permute.xlu0 %2670
  %2672 = vrot.lane.b32.xlu0 %v2618, 40
  %v2673 = vpop.permute.xlu0 %2672
  %2674 = vrot.lane.b32.xlu0 %v2619, 40
  %v2675 = vpop.permute.xlu0 %2674
  %2676 = vrot.lane.b32.xlu0 %v2620, 40
  %v2677 = vpop.permute.xlu0 %2676
  %2678 = vrot.lane.b32.xlu0 %v2621, 40
  %v2679 = vpop.permute.xlu0 %2678
  %2680 = vrot.lane.b32.xlu0 %v2622, 40
  %v2681 = vpop.permute.xlu0 %2680
  %2682 = vrot.lane.b32.xlu0 %v2623, 40
  %v2683 = vpop.permute.xlu0 %2682
  %2684 = vrot.lane.b32.xlu0 %v2624, 40
  %v2685 = vpop.permute.xlu0 %2684
  %2686 = vrot.lane.b32.xlu0 %v2625, 40
  %v2687 = vpop.permute.xlu0 %2686
  %2688 = vrot.lane.b32.xlu0 %v2626, 40
  %v2689 = vpop.permute.xlu0 %2688
  %2690 = vrot.lane.b32.xlu0 %v2627, 40
  %v2691 = vpop.permute.xlu0 %2690
  %v2756 = vunpack.c.l.b16 %v1092
  %v2757 = vunpack.c.l.b16 %v1093
  %v2758 = vunpack.c.l.b16 %v1094
  %v2759 = vunpack.c.l.b16 %v1095
  %v2760 = vunpack.c.l.b16 %v1096
  %v2761 = vunpack.c.l.b16 %v1097
  %v2762 = vunpack.c.l.b16 %v1098
  %v2763 = vunpack.c.l.b16 %v1099
  %v2764 = vunpack.c.l.b16 %v1100
  %v2765 = vunpack.c.l.b16 %v1101
  %v2766 = vunpack.c.l.b16 %v1102
  %v2767 = vunpack.c.l.b16 %v1103
  %v2768 = vunpack.c.l.b16 %v1104
  %v2769 = vunpack.c.l.b16 %v1105
  %v2770 = vunpack.c.l.b16 %v1106
  %v2771 = vunpack.c.l.b16 %v1107
  %v2772 = vunpack.c.l.b16 %v1108
  %v2773 = vunpack.c.l.b16 %v1109
  %v2774 = vunpack.c.l.b16 %v1110
  %v2775 = vunpack.c.l.b16 %v1111
  %v2776 = vunpack.c.l.b16 %v1112
  %v2777 = vunpack.c.l.b16 %v1113
  %v2778 = vunpack.c.l.b16 %v1114
  %v2779 = vunpack.c.l.b16 %v1115
  %v2780 = vunpack.c.l.b16 %v1116
  %v2781 = vunpack.c.l.b16 %v1117
  %v2782 = vunpack.c.l.b16 %v1118
  %v2783 = vunpack.c.l.b16 %v1119
  %v2784 = vunpack.c.l.b16 %v1120
  %v2785 = vunpack.c.l.b16 %v1121
  %v2786 = vunpack.c.l.b16 %v1122
  %v2787 = vunpack.c.l.b16 %v1123
  %v2788 = vunpack.c.l.b16 %v1124
  %v2789 = vunpack.c.l.b16 %v1125
  %v2790 = vunpack.c.l.b16 %v1126
  %v2791 = vunpack.c.l.b16 %v1127
  %v2792 = vunpack.c.l.b16 %v1128
  %v2793 = vunpack.c.l.b16 %v1129
  %v2794 = vunpack.c.l.b16 %v1130
  %v2795 = vunpack.c.l.b16 %v1131
  %v2796 = vunpack.c.l.b16 %v1132
  %v2797 = vunpack.c.l.b16 %v1133
  %v2798 = vunpack.c.l.b16 %v1134
  %v2799 = vunpack.c.l.b16 %v1135
  %v2800 = vunpack.c.l.b16 %v1136
  %v2801 = vunpack.c.l.b16 %v1137
  %v2802 = vunpack.c.l.b16 %v1138
  %v2803 = vunpack.c.l.b16 %v1139
  %v2804 = vunpack.c.l.b16 %v1140
  %v2805 = vunpack.c.l.b16 %v1141
  %v2806 = vunpack.c.l.b16 %v1142
  %v2807 = vunpack.c.l.b16 %v1143
  %v2808 = vunpack.c.l.b16 %v1144
  %v2809 = vunpack.c.l.b16 %v1145
  %v2810 = vunpack.c.l.b16 %v1146
  %v2811 = vunpack.c.l.b16 %v1147
  %v2812 = vunpack.c.l.b16 %v1148
  %v2813 = vunpack.c.l.b16 %v1149
  %v2814 = vunpack.c.l.b16 %v1150
  %v2815 = vunpack.c.l.b16 %v1151
  %v2816 = vunpack.c.l.b16 %v1152
  %v2817 = vunpack.c.l.b16 %v1153
  %v2818 = vunpack.c.l.b16 %v1154
  %v2819 = vunpack.c.l.b16 %v1155
  %v2820 = vpack.c.b16 %v2757, %v2756
  %v2821 = vpack.c.b16 %v2759, %v2758
  %v2822 = vpack.c.b16 %v2761, %v2760
  %v2823 = vpack.c.b16 %v2763, %v2762
  %v2824 = vpack.c.b16 %v2765, %v2764
  %v2825 = vpack.c.b16 %v2767, %v2766
  %v2826 = vpack.c.b16 %v2769, %v2768
  %v2827 = vpack.c.b16 %v2771, %v2770
  %v2828 = vpack.c.b16 %v2773, %v2772
  %v2829 = vpack.c.b16 %v2775, %v2774
  %v2830 = vpack.c.b16 %v2777, %v2776
  %v2831 = vpack.c.b16 %v2779, %v2778
  %v2832 = vpack.c.b16 %v2781, %v2780
  %v2833 = vpack.c.b16 %v2783, %v2782
  %v2834 = vpack.c.b16 %v2785, %v2784
  %v2835 = vpack.c.b16 %v2787, %v2786
  %v2836 = vpack.c.b16 %v2789, %v2788
  %v2837 = vpack.c.b16 %v2791, %v2790
  %v2838 = vpack.c.b16 %v2793, %v2792
  %v2839 = vpack.c.b16 %v2795, %v2794
  %v2840 = vpack.c.b16 %v2797, %v2796
  %v2841 = vpack.c.b16 %v2799, %v2798
  %v2842 = vpack.c.b16 %v2801, %v2800
  %v2843 = vpack.c.b16 %v2803, %v2802
  %v2844 = vpack.c.b16 %v2805, %v2804
  %v2845 = vpack.c.b16 %v2807, %v2806
  %v2846 = vpack.c.b16 %v2809, %v2808
  %v2847 = vpack.c.b16 %v2811, %v2810
  %v2848 = vpack.c.b16 %v2813, %v2812
  %v2849 = vpack.c.b16 %v2815, %v2814
  %v2850 = vpack.c.b16 %v2817, %v2816
  %v2851 = vpack.c.b16 %v2819, %v2818
  %2852 = vrot.lane.b32.xlu0 %v2820, 48
  %v2853 = vpop.permute.xlu0 %2852
  %2854 = vrot.lane.b32.xlu0 %v2821, 48
  %v2855 = vpop.permute.xlu0 %2854
  %2856 = vrot.lane.b32.xlu0 %v2822, 48
  %v2857 = vpop.permute.xlu0 %2856
  %2858 = vrot.lane.b32.xlu0 %v2823, 48
  %v2859 = vpop.permute.xlu0 %2858
  %2860 = vrot.lane.b32.xlu0 %v2824, 48
  %v2861 = vpop.permute.xlu0 %2860
  %2862 = vrot.lane.b32.xlu0 %v2825, 48
  %v2863 = vpop.permute.xlu0 %2862
  %2864 = vrot.lane.b32.xlu0 %v2826, 48
  %v2865 = vpop.permute.xlu0 %2864
  %2866 = vrot.lane.b32.xlu0 %v2827, 48
  %v2867 = vpop.permute.xlu0 %2866
  %2868 = vrot.lane.b32.xlu0 %v2828, 48
  %v2869 = vpop.permute.xlu0 %2868
  %2870 = vrot.lane.b32.xlu0 %v2829, 48
  %v2871 = vpop.permute.xlu0 %2870
  %2872 = vrot.lane.b32.xlu0 %v2830, 48
  %v2873 = vpop.permute.xlu0 %2872
  %2874 = vrot.lane.b32.xlu0 %v2831, 48
  %v2875 = vpop.permute.xlu0 %2874
  %2876 = vrot.lane.b32.xlu0 %v2832, 48
  %v2877 = vpop.permute.xlu0 %2876
  %2878 = vrot.lane.b32.xlu0 %v2833, 48
  %v2879 = vpop.permute.xlu0 %2878
  %2880 = vrot.lane.b32.xlu0 %v2834, 48
  %v2881 = vpop.permute.xlu0 %2880
  %2882 = vrot.lane.b32.xlu0 %v2835, 48
  %v2883 = vpop.permute.xlu0 %2882
  %2884 = vrot.lane.b32.xlu0 %v2836, 48
  %v2885 = vpop.permute.xlu0 %2884
  %2886 = vrot.lane.b32.xlu0 %v2837, 48
  %v2887 = vpop.permute.xlu0 %2886
  %2888 = vrot.lane.b32.xlu0 %v2838, 48
  %v2889 = vpop.permute.xlu0 %2888
  %2890 = vrot.lane.b32.xlu0 %v2839, 48
  %v2891 = vpop.permute.xlu0 %2890
  %2892 = vrot.lane.b32.xlu0 %v2840, 48
  %v2893 = vpop.permute.xlu0 %2892
  %2894 = vrot.lane.b32.xlu0 %v2841, 48
  %v2895 = vpop.permute.xlu0 %2894
  %2896 = vrot.lane.b32.xlu0 %v2842, 48
  %v2897 = vpop.permute.xlu0 %2896
  %2898 = vrot.lane.b32.xlu0 %v2843, 48
  %v2899 = vpop.permute.xlu0 %2898
  %2900 = vrot.lane.b32.xlu0 %v2844, 48
  %v2901 = vpop.permute.xlu0 %2900
  %2902 = vrot.lane.b32.xlu0 %v2845, 48
  %v2903 = vpop.permute.xlu0 %2902
  %2904 = vrot.lane.b32.xlu0 %v2846, 48
  %v2905 = vpop.permute.xlu0 %2904
  %2906 = vrot.lane.b32.xlu0 %v2847, 48
  %v2907 = vpop.permute.xlu0 %2906
  %2908 = vrot.lane.b32.xlu0 %v2848, 48
  %v2909 = vpop.permute.xlu0 %2908
  %2910 = vrot.lane.b32.xlu0 %v2849, 48
  %v2911 = vpop.permute.xlu0 %2910
  %2912 = vrot.lane.b32.xlu0 %v2850, 48
  %v2913 = vpop.permute.xlu0 %2912
  %2914 = vrot.lane.b32.xlu0 %v2851, 48
  %v2915 = vpop.permute.xlu0 %2914
  %v2980 = vunpack.c.l.b16 %v1220
  %v2981 = vunpack.c.l.b16 %v1221
  %v2982 = vunpack.c.l.b16 %v1222
  %v2983 = vunpack.c.l.b16 %v1223
  %v2984 = vunpack.c.l.b16 %v1224
  %v2985 = vunpack.c.l.b16 %v1225
  %v2986 = vunpack.c.l.b16 %v1226
  %v2987 = vunpack.c.l.b16 %v1227
  %v2988 = vunpack.c.l.b16 %v1228
  %v2989 = vunpack.c.l.b16 %v1229
  %v2990 = vunpack.c.l.b16 %v1230
  %v2991 = vunpack.c.l.b16 %v1231
  %v2992 = vunpack.c.l.b16 %v1232
  %v2993 = vunpack.c.l.b16 %v1233
  %v2994 = vunpack.c.l.b16 %v1234
  %v2995 = vunpack.c.l.b16 %v1235
  %v2996 = vunpack.c.l.b16 %v1236
  %v2997 = vunpack.c.l.b16 %v1237
  %v2998 = vunpack.c.l.b16 %v1238
  %v2999 = vunpack.c.l.b16 %v1239
  %v3000 = vunpack.c.l.b16 %v1240
  %v3001 = vunpack.c.l.b16 %v1241
  %v3002 = vunpack.c.l.b16 %v1242
  %v3003 = vunpack.c.l.b16 %v1243
  %v3004 = vunpack.c.l.b16 %v1244
  %v3005 = vunpack.c.l.b16 %v1245
  %v3006 = vunpack.c.l.b16 %v1246
  %v3007 = vunpack.c.l.b16 %v1247
  %v3008 = vunpack.c.l.b16 %v1248
  %v3009 = vunpack.c.l.b16 %v1249
  %v3010 = vunpack.c.l.b16 %v1250
  %v3011 = vunpack.c.l.b16 %v1251
  %v3012 = vunpack.c.l.b16 %v1252
  %v3013 = vunpack.c.l.b16 %v1253
  %v3014 = vunpack.c.l.b16 %v1254
  %v3015 = vunpack.c.l.b16 %v1255
  %v3016 = vunpack.c.l.b16 %v1256
  %v3017 = vunpack.c.l.b16 %v1257
  %v3018 = vunpack.c.l.b16 %v1258
  %v3019 = vunpack.c.l.b16 %v1259
  %v3020 = vunpack.c.l.b16 %v1260
  %v3021 = vunpack.c.l.b16 %v1261
  %v3022 = vunpack.c.l.b16 %v1262
  %v3023 = vunpack.c.l.b16 %v1263
  %v3024 = vunpack.c.l.b16 %v1264
  %v3025 = vunpack.c.l.b16 %v1265
  %v3026 = vunpack.c.l.b16 %v1266
  %v3027 = vunpack.c.l.b16 %v1267
  %v3028 = vunpack.c.l.b16 %v1268
  %v3029 = vunpack.c.l.b16 %v1269
  %v3030 = vunpack.c.l.b16 %v1270
  %v3031 = vunpack.c.l.b16 %v1271
  %v3032 = vunpack.c.l.b16 %v1272
  %v3033 = vunpack.c.l.b16 %v1273
  %v3034 = vunpack.c.l.b16 %v1274
  %v3035 = vunpack.c.l.b16 %v1275
  %v3036 = vunpack.c.l.b16 %v1276
  %v3037 = vunpack.c.l.b16 %v1277
  %v3038 = vunpack.c.l.b16 %v1278
  %v3039 = vunpack.c.l.b16 %v1279
  %v3040 = vunpack.c.l.b16 %v1280
  %v3041 = vunpack.c.l.b16 %v1281
  %v3042 = vunpack.c.l.b16 %v1282
  %v3043 = vunpack.c.l.b16 %v1283
  %v3044 = vpack.c.b16 %v2981, %v2980
  %v3045 = vpack.c.b16 %v2983, %v2982
  %v3046 = vpack.c.b16 %v2985, %v2984
  %v3047 = vpack.c.b16 %v2987, %v2986
  %v3048 = vpack.c.b16 %v2989, %v2988
  %v3049 = vpack.c.b16 %v2991, %v2990
  %v3050 = vpack.c.b16 %v2993, %v2992
  %v3051 = vpack.c.b16 %v2995, %v2994
  %v3052 = vpack.c.b16 %v2997, %v2996
  %v3053 = vpack.c.b16 %v2999, %v2998
  %v3054 = vpack.c.b16 %v3001, %v3000
  %v3055 = vpack.c.b16 %v3003, %v3002
  %v3056 = vpack.c.b16 %v3005, %v3004
  %v3057 = vpack.c.b16 %v3007, %v3006
  %v3058 = vpack.c.b16 %v3009, %v3008
  %v3059 = vpack.c.b16 %v3011, %v3010
  %v3060 = vpack.c.b16 %v3013, %v3012
  %v3061 = vpack.c.b16 %v3015, %v3014
  %v3062 = vpack.c.b16 %v3017, %v3016
  %v3063 = vpack.c.b16 %v3019, %v3018
  %v3064 = vpack.c.b16 %v3021, %v3020
  %v3065 = vpack.c.b16 %v3023, %v3022
  %v3066 = vpack.c.b16 %v3025, %v3024
  %v3067 = vpack.c.b16 %v3027, %v3026
  %v3068 = vpack.c.b16 %v3029, %v3028
  %v3069 = vpack.c.b16 %v3031, %v3030
  %v3070 = vpack.c.b16 %v3033, %v3032
  %v3071 = vpack.c.b16 %v3035, %v3034
  %v3072 = vpack.c.b16 %v3037, %v3036
  %v3073 = vpack.c.b16 %v3039, %v3038
  %v3074 = vpack.c.b16 %v3041, %v3040
  %v3075 = vpack.c.b16 %v3043, %v3042
  %3076 = vrot.lane.b32.xlu0 %v3044, 56
  %v3077 = vpop.permute.xlu0 %3076
  %3078 = vrot.lane.b32.xlu0 %v3045, 56
  %v3079 = vpop.permute.xlu0 %3078
  %3080 = vrot.lane.b32.xlu0 %v3046, 56
  %v3081 = vpop.permute.xlu0 %3080
  %3082 = vrot.lane.b32.xlu0 %v3047, 56
  %v3083 = vpop.permute.xlu0 %3082
  %3084 = vrot.lane.b32.xlu0 %v3048, 56
  %v3085 = vpop.permute.xlu0 %3084
  %3086 = vrot.lane.b32.xlu0 %v3049, 56
  %v3087 = vpop.permute.xlu0 %3086
  %3088 = vrot.lane.b32.xlu0 %v3050, 56
  %v3089 = vpop.permute.xlu0 %3088
  %3090 = vrot.lane.b32.xlu0 %v3051, 56
  %v3091 = vpop.permute.xlu0 %3090
  %3092 = vrot.lane.b32.xlu0 %v3052, 56
  %v3093 = vpop.permute.xlu0 %3092
  %3094 = vrot.lane.b32.xlu0 %v3053, 56
  %v3095 = vpop.permute.xlu0 %3094
  %3096 = vrot.lane.b32.xlu0 %v3054, 56
  %v3097 = vpop.permute.xlu0 %3096
  %3098 = vrot.lane.b32.xlu0 %v3055, 56
  %v3099 = vpop.permute.xlu0 %3098
  %3100 = vrot.lane.b32.xlu0 %v3056, 56
  %v3101 = vpop.permute.xlu0 %3100
  %3102 = vrot.lane.b32.xlu0 %v3057, 56
  %v3103 = vpop.permute.xlu0 %3102
  %3104 = vrot.lane.b32.xlu0 %v3058, 56
  %v3105 = vpop.permute.xlu0 %3104
  %3106 = vrot.lane.b32.xlu0 %v3059, 56
  %v3107 = vpop.permute.xlu0 %3106
  %3108 = vrot.lane.b32.xlu0 %v3060, 56
  %v3109 = vpop.permute.xlu0 %3108
  %3110 = vrot.lane.b32.xlu0 %v3061, 56
  %v3111 = vpop.permute.xlu0 %3110
  %3112 = vrot.lane.b32.xlu0 %v3062, 56
  %v3113 = vpop.permute.xlu0 %3112
  %3114 = vrot.lane.b32.xlu0 %v3063, 56
  %v3115 = vpop.permute.xlu0 %3114
  %3116 = vrot.lane.b32.xlu0 %v3064, 56
  %v3117 = vpop.permute.xlu0 %3116
  %3118 = vrot.lane.b32.xlu0 %v3065, 56
  %v3119 = vpop.permute.xlu0 %3118
  %3120 = vrot.lane.b32.xlu0 %v3066, 56
  %v3121 = vpop.permute.xlu0 %3120
  %3122 = vrot.lane.b32.xlu0 %v3067, 56
  %v3123 = vpop.permute.xlu0 %3122
  %3124 = vrot.lane.b32.xlu0 %v3068, 56
  %v3125 = vpop.permute.xlu0 %3124
  %3126 = vrot.lane.b32.xlu0 %v3069, 56
  %v3127 = vpop.permute.xlu0 %3126
  %3128 = vrot.lane.b32.xlu0 %v3070, 56
  %v3129 = vpop.permute.xlu0 %3128
  %3130 = vrot.lane.b32.xlu0 %v3071, 56
  %v3131 = vpop.permute.xlu0 %3130
  %3132 = vrot.lane.b32.xlu0 %v3072, 56
  %v3133 = vpop.permute.xlu0 %3132
  %3134 = vrot.lane.b32.xlu0 %v3073, 56
  %v3135 = vpop.permute.xlu0 %3134
  %3136 = vrot.lane.b32.xlu0 %v3074, 56
  %v3137 = vpop.permute.xlu0 %3136
  %3138 = vrot.lane.b32.xlu0 %v3075, 56
  %v3139 = vpop.permute.xlu0 %3138
  %v3204 = vunpack.c.l.b16 %v1348
  %v3205 = vunpack.c.l.b16 %v1349
  %v3206 = vunpack.c.l.b16 %v1350
  %v3207 = vunpack.c.l.b16 %v1351
  %v3208 = vunpack.c.l.b16 %v1352
  %v3209 = vunpack.c.l.b16 %v1353
  %v3210 = vunpack.c.l.b16 %v1354
  %v3211 = vunpack.c.l.b16 %v1355
  %v3212 = vunpack.c.l.b16 %v1356
  %v3213 = vunpack.c.l.b16 %v1357
  %v3214 = vunpack.c.l.b16 %v1358
  %v3215 = vunpack.c.l.b16 %v1359
  %v3216 = vunpack.c.l.b16 %v1360
  %v3217 = vunpack.c.l.b16 %v1361
  %v3218 = vunpack.c.l.b16 %v1362
  %v3219 = vunpack.c.l.b16 %v1363
  %v3220 = vunpack.c.l.b16 %v1364
  %v3221 = vunpack.c.l.b16 %v1365
  %v3222 = vunpack.c.l.b16 %v1366
  %v3223 = vunpack.c.l.b16 %v1367
  %v3224 = vunpack.c.l.b16 %v1368
  %v3225 = vunpack.c.l.b16 %v1369
  %v3226 = vunpack.c.l.b16 %v1370
  %v3227 = vunpack.c.l.b16 %v1371
  %v3228 = vunpack.c.l.b16 %v1372
  %v3229 = vunpack.c.l.b16 %v1373
  %v3230 = vunpack.c.l.b16 %v1374
  %v3231 = vunpack.c.l.b16 %v1375
  %v3232 = vunpack.c.l.b16 %v1376
  %v3233 = vunpack.c.l.b16 %v1377
  %v3234 = vunpack.c.l.b16 %v1378
  %v3235 = vunpack.c.l.b16 %v1379
  %v3236 = vunpack.c.l.b16 %v1380
  %v3237 = vunpack.c.l.b16 %v1381
  %v3238 = vunpack.c.l.b16 %v1382
  %v3239 = vunpack.c.l.b16 %v1383
  %v3240 = vunpack.c.l.b16 %v1384
  %v3241 = vunpack.c.l.b16 %v1385
  %v3242 = vunpack.c.l.b16 %v1386
  %v3243 = vunpack.c.l.b16 %v1387
  %v3244 = vunpack.c.l.b16 %v1388
  %v3245 = vunpack.c.l.b16 %v1389
  %v3246 = vunpack.c.l.b16 %v1390
  %v3247 = vunpack.c.l.b16 %v1391
  %v3248 = vunpack.c.l.b16 %v1392
  %v3249 = vunpack.c.l.b16 %v1393
  %v3250 = vunpack.c.l.b16 %v1394
  %v3251 = vunpack.c.l.b16 %v1395
  %v3252 = vunpack.c.l.b16 %v1396
  %v3253 = vunpack.c.l.b16 %v1397
  %v3254 = vunpack.c.l.b16 %v1398
  %v3255 = vunpack.c.l.b16 %v1399
  %v3256 = vunpack.c.l.b16 %v1400
  %v3257 = vunpack.c.l.b16 %v1401
  %v3258 = vunpack.c.l.b16 %v1402
  %v3259 = vunpack.c.l.b16 %v1403
  %v3260 = vunpack.c.l.b16 %v1404
  %v3261 = vunpack.c.l.b16 %v1405
  %v3262 = vunpack.c.l.b16 %v1406
  %v3263 = vunpack.c.l.b16 %v1407
  %v3264 = vunpack.c.l.b16 %v1408
  %v3265 = vunpack.c.l.b16 %v1409
  %v3266 = vunpack.c.l.b16 %v1410
  %v3267 = vunpack.c.l.b16 %v1411
  %v3268 = vpack.c.b16 %v3205, %v3204
  %v3269 = vpack.c.b16 %v3207, %v3206
  %v3270 = vpack.c.b16 %v3209, %v3208
  %v3271 = vpack.c.b16 %v3211, %v3210
  %v3272 = vpack.c.b16 %v3213, %v3212
  %v3273 = vpack.c.b16 %v3215, %v3214
  %v3274 = vpack.c.b16 %v3217, %v3216
  %v3275 = vpack.c.b16 %v3219, %v3218
  %v3276 = vpack.c.b16 %v3221, %v3220
  %v3277 = vpack.c.b16 %v3223, %v3222
  %v3278 = vpack.c.b16 %v3225, %v3224
  %v3279 = vpack.c.b16 %v3227, %v3226
  %v3280 = vpack.c.b16 %v3229, %v3228
  %v3281 = vpack.c.b16 %v3231, %v3230
  %v3282 = vpack.c.b16 %v3233, %v3232
  %v3283 = vpack.c.b16 %v3235, %v3234
  %v3284 = vpack.c.b16 %v3237, %v3236
  %v3285 = vpack.c.b16 %v3239, %v3238
  %v3286 = vpack.c.b16 %v3241, %v3240
  %v3287 = vpack.c.b16 %v3243, %v3242
  %v3288 = vpack.c.b16 %v3245, %v3244
  %v3289 = vpack.c.b16 %v3247, %v3246
  %v3290 = vpack.c.b16 %v3249, %v3248
  %v3291 = vpack.c.b16 %v3251, %v3250
  %v3292 = vpack.c.b16 %v3253, %v3252
  %v3293 = vpack.c.b16 %v3255, %v3254
  %v3294 = vpack.c.b16 %v3257, %v3256
  %v3295 = vpack.c.b16 %v3259, %v3258
  %v3296 = vpack.c.b16 %v3261, %v3260
  %v3297 = vpack.c.b16 %v3263, %v3262
  %v3298 = vpack.c.b16 %v3265, %v3264
  %v3299 = vpack.c.b16 %v3267, %v3266
  %3300 = vrot.lane.b32.xlu0 %v3268, 64
  %v3301 = vpop.permute.xlu0 %3300
  %3302 = vrot.lane.b32.xlu0 %v3269, 64
  %v3303 = vpop.permute.xlu0 %3302
  %3304 = vrot.lane.b32.xlu0 %v3270, 64
  %v3305 = vpop.permute.xlu0 %3304
  %3306 = vrot.lane.b32.xlu0 %v3271, 64
  %v3307 = vpop.permute.xlu0 %3306
  %3308 = vrot.lane.b32.xlu0 %v3272, 64
  %v3309 = vpop.permute.xlu0 %3308
  %3310 = vrot.lane.b32.xlu0 %v3273, 64
  %v3311 = vpop.permute.xlu0 %3310
  %3312 = vrot.lane.b32.xlu0 %v3274, 64
  %v3313 = vpop.permute.xlu0 %3312
  %3314 = vrot.lane.b32.xlu0 %v3275, 64
  %v3315 = vpop.permute.xlu0 %3314
  %3316 = vrot.lane.b32.xlu0 %v3276, 64
  %v3317 = vpop.permute.xlu0 %3316
  %3318 = vrot.lane.b32.xlu0 %v3277, 64
  %v3319 = vpop.permute.xlu0 %3318
  %3320 = vrot.lane.b32.xlu0 %v3278, 64
  %v3321 = vpop.permute.xlu0 %3320
  %3322 = vrot.lane.b32.xlu0 %v3279, 64
  %v3323 = vpop.permute.xlu0 %3322
  %3324 = vrot.lane.b32.xlu0 %v3280, 64
  %v3325 = vpop.permute.xlu0 %3324
  %3326 = vrot.lane.b32.xlu0 %v3281, 64
  %v3327 = vpop.permute.xlu0 %3326
  %3328 = vrot.lane.b32.xlu0 %v3282, 64
  %v3329 = vpop.permute.xlu0 %3328
  %3330 = vrot.lane.b32.xlu0 %v3283, 64
  %v3331 = vpop.permute.xlu0 %3330
  %3332 = vrot.lane.b32.xlu0 %v3284, 64
  %v3333 = vpop.permute.xlu0 %3332
  %3334 = vrot.lane.b32.xlu0 %v3285, 64
  %v3335 = vpop.permute.xlu0 %3334
  %3336 = vrot.lane.b32.xlu0 %v3286, 64
  %v3337 = vpop.permute.xlu0 %3336
  %3338 = vrot.lane.b32.xlu0 %v3287, 64
  %v3339 = vpop.permute.xlu0 %3338
  %3340 = vrot.lane.b32.xlu0 %v3288, 64
  %v3341 = vpop.permute.xlu0 %3340
  %3342 = vrot.lane.b32.xlu0 %v3289, 64
  %v3343 = vpop.permute.xlu0 %3342
  %3344 = vrot.lane.b32.xlu0 %v3290, 64
  %v3345 = vpop.permute.xlu0 %3344
  %3346 = vrot.lane.b32.xlu0 %v3291, 64
  %v3347 = vpop.permute.xlu0 %3346
  %3348 = vrot.lane.b32.xlu0 %v3292, 64
  %v3349 = vpop.permute.xlu0 %3348
  %3350 = vrot.lane.b32.xlu0 %v3293, 64
  %v3351 = vpop.permute.xlu0 %3350
  %3352 = vrot.lane.b32.xlu0 %v3294, 64
  %v3353 = vpop.permute.xlu0 %3352
  %3354 = vrot.lane.b32.xlu0 %v3295, 64
  %v3355 = vpop.permute.xlu0 %3354
  %3356 = vrot.lane.b32.xlu0 %v3296, 64
  %v3357 = vpop.permute.xlu0 %3356
  %3358 = vrot.lane.b32.xlu0 %v3297, 64
  %v3359 = vpop.permute.xlu0 %3358
  %3360 = vrot.lane.b32.xlu0 %v3298, 64
  %v3361 = vpop.permute.xlu0 %3360
  %3362 = vrot.lane.b32.xlu0 %v3299, 64
  %v3363 = vpop.permute.xlu0 %3362
  %v3366 = vsel %vm194, %v1540, %v1733
  %v3369 = vsel %vm194, %v1541, %v1735
  %v3372 = vsel %vm194, %v1542, %v1737
  %v3375 = vsel %vm194, %v1543, %v1739
  %v3378 = vsel %vm194, %v1544, %v1741
  %v3381 = vsel %vm194, %v1545, %v1743
  %v3384 = vsel %vm194, %v1546, %v1745
  %v3387 = vsel %vm194, %v1547, %v1747
  %v3390 = vsel %vm194, %v1548, %v1749
  %v3393 = vsel %vm194, %v1549, %v1751
  %v3396 = vsel %vm194, %v1550, %v1753
  %v3399 = vsel %vm194, %v1551, %v1755
  %v3402 = vsel %vm194, %v1552, %v1757
  %v3405 = vsel %vm194, %v1553, %v1759
  %v3408 = vsel %vm194, %v1554, %v1761
  %v3411 = vsel %vm194, %v1555, %v1763
  %v3414 = vsel %vm194, %v1556, %v1765
  %v3417 = vsel %vm194, %v1557, %v1767
  %v3420 = vsel %vm194, %v1558, %v1769
  %v3423 = vsel %vm194, %v1559, %v1771
  %v3426 = vsel %vm194, %v1560, %v1773
  %v3429 = vsel %vm194, %v1561, %v1775
  %v3432 = vsel %vm194, %v1562, %v1777
  %v3435 = vsel %vm194, %v1563, %v1779
  %v3438 = vsel %vm194, %v1564, %v1781
  %v3441 = vsel %vm194, %v1565, %v1783
  %v3444 = vsel %vm194, %v1566, %v1785
  %v3447 = vsel %vm194, %v1567, %v1787
  %v3450 = vsel %vm194, %v1568, %v1789
  %v3453 = vsel %vm194, %v1569, %v1791
  %v3456 = vsel %vm194, %v1570, %v1793
  %v3459 = vsel %vm194, %v1571, %v1795
  %vm3460 = vcmask 130048
  %v3462 = vsel %vm3460, %v3366, %v1957
  %v3464 = vsel %vm3460, %v3369, %v1959
  %v3466 = vsel %vm3460, %v3372, %v1961
  %v3468 = vsel %vm3460, %v3375, %v1963
  %v3470 = vsel %vm3460, %v3378, %v1965
  %v3472 = vsel %vm3460, %v3381, %v1967
  %v3474 = vsel %vm3460, %v3384, %v1969
  %v3476 = vsel %vm3460, %v3387, %v1971
  %v3478 = vsel %vm3460, %v3390, %v1973
  %v3480 = vsel %vm3460, %v3393, %v1975
  %v3482 = vsel %vm3460, %v3396, %v1977
  %v3484 = vsel %vm3460, %v3399, %v1979
  %v3486 = vsel %vm3460, %v3402, %v1981
  %v3488 = vsel %vm3460, %v3405, %v1983
  %v3490 = vsel %vm3460, %v3408, %v1985
  %v3492 = vsel %vm3460, %v3411, %v1987
  %v3494 = vsel %vm3460, %v3414, %v1989
  %v3496 = vsel %vm3460, %v3417, %v1991
  %v3498 = vsel %vm3460, %v3420, %v1993
  %v3500 = vsel %vm3460, %v3423, %v1995
  %v3502 = vsel %vm3460, %v3426, %v1997
  %v3504 = vsel %vm3460, %v3429, %v1999
  %v3506 = vsel %vm3460, %v3432, %v2001
  %v3508 = vsel %vm3460, %v3435, %v2003
  %v3510 = vsel %vm3460, %v3438, %v2005
  %v3512 = vsel %vm3460, %v3441, %v2007
  %v3514 = vsel %vm3460, %v3444, %v2009
  %v3516 = vsel %vm3460, %v3447, %v2011
  %v3518 = vsel %vm3460, %v3450, %v2013
  %v3520 = vsel %vm3460, %v3453, %v2015
  %v3522 = vsel %vm3460, %v3456, %v2017
  %v3524 = vsel %vm3460, %v3459, %v2019
  %vm3525 = vcmask 195584
  %v3527 = vsel %vm3525, %v3462, %v2181
  %v3529 = vsel %vm3525, %v3464, %v2183
  %v3531 = vsel %vm3525, %v3466, %v2185
  %v3533 = vsel %vm3525, %v3468, %v2187
  %v3535 = vsel %vm3525, %v3470, %v2189
  %v3537 = vsel %vm3525, %v3472, %v2191
  %v3539 = vsel %vm3525, %v3474, %v2193
  %v3541 = vsel %vm3525, %v3476, %v2195
  %v3543 = vsel %vm3525, %v3478, %v2197
  %v3545 = vsel %vm3525, %v3480, %v2199
  %v3547 = vsel %vm3525, %v3482, %v2201
  %v3549 = vsel %vm3525, %v3484, %v2203
  %v3551 = vsel %vm3525, %v3486, %v2205
  %v3553 = vsel %vm3525, %v3488, %v2207
  %v3555 = vsel %vm3525, %v3490, %v2209
  %v3557 = vsel %vm3525, %v3492, %v2211
  %v3559 = vsel %vm3525, %v3494, %v2213
  %v3561 = vsel %vm3525, %v3496, %v2215
  %v3563 = vsel %vm3525, %v3498, %v2217
  %v3565 = vsel %vm3525, %v3500, %v2219
  %v3567 = vsel %vm3525, %v3502, %v2221
  %v3569 = vsel %vm3525, %v3504, %v2223
  %v3571 = vsel %vm3525, %v3506, %v2225
  %v3573 = vsel %vm3525, %v3508, %v2227
  %v3575 = vsel %vm3525, %v3510, %v2229
  %v3577 = vsel %vm3525, %v3512, %v2231
  %v3579 = vsel %vm3525, %v3514, %v2233
  %v3581 = vsel %vm3525, %v3516, %v2235
  %v3583 = vsel %vm3525, %v3518, %v2237
  %v3585 = vsel %vm3525, %v3520, %v2239
  %v3587 = vsel %vm3525, %v3522, %v2241
  %v3589 = vsel %vm3525, %v3524, %v2243
  %vm3590 = vcmask 261120
  %v3592 = vsel %vm3590, %v3527, %v2405
  %v3594 = vsel %vm3590, %v3529, %v2407
  %v3596 = vsel %vm3590, %v3531, %v2409
  %v3598 = vsel %vm3590, %v3533, %v2411
  %v3600 = vsel %vm3590, %v3535, %v2413
  %v3602 = vsel %vm3590, %v3537, %v2415
  %v3604 = vsel %vm3590, %v3539, %v2417
  %v3606 = vsel %vm3590, %v3541, %v2419
  %v3608 = vsel %vm3590, %v3543, %v2421
  %v3610 = vsel %vm3590, %v3545, %v2423
  %v3612 = vsel %vm3590, %v3547, %v2425
  %v3614 = vsel %vm3590, %v3549, %v2427
  %v3616 = vsel %vm3590, %v3551, %v2429
  %v3618 = vsel %vm3590, %v3553, %v2431
  %v3620 = vsel %vm3590, %v3555, %v2433
  %v3622 = vsel %vm3590, %v3557, %v2435
  %v3624 = vsel %vm3590, %v3559, %v2437
  %v3626 = vsel %vm3590, %v3561, %v2439
  %v3628 = vsel %vm3590, %v3563, %v2441
  %v3630 = vsel %vm3590, %v3565, %v2443
  %v3632 = vsel %vm3590, %v3567, %v2445
  %v3634 = vsel %vm3590, %v3569, %v2447
  %v3636 = vsel %vm3590, %v3571, %v2449
  %v3638 = vsel %vm3590, %v3573, %v2451
  %v3640 = vsel %vm3590, %v3575, %v2453
  %v3642 = vsel %vm3590, %v3577, %v2455
  %v3644 = vsel %vm3590, %v3579, %v2457
  %v3646 = vsel %vm3590, %v3581, %v2459
  %v3648 = vsel %vm3590, %v3583, %v2461
  %v3650 = vsel %vm3590, %v3585, %v2463
  %v3652 = vsel %vm3590, %v3587, %v2465
  %v3654 = vsel %vm3590, %v3589, %v2467
  %vm3655 = vcmask 326656
  %v3657 = vsel %vm3655, %v3592, %v2629
  %v3659 = vsel %vm3655, %v3594, %v2631
  %v3661 = vsel %vm3655, %v3596, %v2633
  %v3663 = vsel %vm3655, %v3598, %v2635
  %v3665 = vsel %vm3655, %v3600, %v2637
  %v3667 = vsel %vm3655, %v3602, %v2639
  %v3669 = vsel %vm3655, %v3604, %v2641
  %v3671 = vsel %vm3655, %v3606, %v2643
  %v3673 = vsel %vm3655, %v3608, %v2645
  %v3675 = vsel %vm3655, %v3610, %v2647
  %v3677 = vsel %vm3655, %v3612, %v2649
  %v3679 = vsel %vm3655, %v3614, %v2651
  %v3681 = vsel %vm3655, %v3616, %v2653
  %v3683 = vsel %vm3655, %v3618, %v2655
  %v3685 = vsel %vm3655, %v3620, %v2657
  %v3687 = vsel %vm3655, %v3622, %v2659
  %v3689 = vsel %vm3655, %v3624, %v2661
  %v3691 = vsel %vm3655, %v3626, %v2663
  %v3693 = vsel %vm3655, %v3628, %v2665
  %v3695 = vsel %vm3655, %v3630, %v2667
  %v3697 = vsel %vm3655, %v3632, %v2669
  %v3699 = vsel %vm3655, %v3634, %v2671
  %v3701 = vsel %vm3655, %v3636, %v2673
  %v3703 = vsel %vm3655, %v3638, %v2675
  %v3705 = vsel %vm3655, %v3640, %v2677
  %v3707 = vsel %vm3655, %v3642, %v2679
  %v3709 = vsel %vm3655, %v3644, %v2681
  %v3711 = vsel %vm3655, %v3646, %v2683
  %v3713 = vsel %vm3655, %v3648, %v2685
  %v3715 = vsel %vm3655, %v3650, %v2687
  %v3717 = vsel %vm3655, %v3652, %v2689
  %v3719 = vsel %vm3655, %v3654, %v2691
  %vm3720 = vcmask 392192
  %v3722 = vsel %vm3720, %v3657, %v2853
  %v3724 = vsel %vm3720, %v3659, %v2855
  %v3726 = vsel %vm3720, %v3661, %v2857
  %v3728 = vsel %vm3720, %v3663, %v2859
  %v3730 = vsel %vm3720, %v3665, %v2861
  %v3732 = vsel %vm3720, %v3667, %v2863
  %v3734 = vsel %vm3720, %v3669, %v2865
  %v3736 = vsel %vm3720, %v3671, %v2867
  %v3738 = vsel %vm3720, %v3673, %v2869
  %v3740 = vsel %vm3720, %v3675, %v2871
  %v3742 = vsel %vm3720, %v3677, %v2873
  %v3744 = vsel %vm3720, %v3679, %v2875
  %v3746 = vsel %vm3720, %v3681, %v2877
  %v3748 = vsel %vm3720, %v3683, %v2879
  %v3750 = vsel %vm3720, %v3685, %v2881
  %v3752 = vsel %vm3720, %v3687, %v2883
  %v3754 = vsel %vm3720, %v3689, %v2885
  %v3756 = vsel %vm3720, %v3691, %v2887
  %v3758 = vsel %vm3720, %v3693, %v2889
  %v3760 = vsel %vm3720, %v3695, %v2891
  %v3762 = vsel %vm3720, %v3697, %v2893
  %v3764 = vsel %vm3720, %v3699, %v2895
  %v3766 = vsel %vm3720, %v3701, %v2897
  %v3768 = vsel %vm3720, %v3703, %v2899
  %v3770 = vsel %vm3720, %v3705, %v2901
  %v3772 = vsel %vm3720, %v3707, %v2903
  %v3774 = vsel %vm3720, %v3709, %v2905
  %v3776 = vsel %vm3720, %v3711, %v2907
  %v3778 = vsel %vm3720, %v3713, %v2909
  %v3780 = vsel %vm3720, %v3715, %v2911
  %v3782 = vsel %vm3720, %v3717, %v2913
  %v3784 = vsel %vm3720, %v3719, %v2915
  %vm3785 = vcmask 457728
  %v3787 = vsel %vm3785, %v3722, %v3077
  %v3789 = vsel %vm3785, %v3724, %v3079
  %v3791 = vsel %vm3785, %v3726, %v3081
  %v3793 = vsel %vm3785, %v3728, %v3083
  %v3795 = vsel %vm3785, %v3730, %v3085
  %v3797 = vsel %vm3785, %v3732, %v3087
  %v3799 = vsel %vm3785, %v3734, %v3089
  %v3801 = vsel %vm3785, %v3736, %v3091
  %v3803 = vsel %vm3785, %v3738, %v3093
  %v3805 = vsel %vm3785, %v3740, %v3095
  %v3807 = vsel %vm3785, %v3742, %v3097
  %v3809 = vsel %vm3785, %v3744, %v3099
  %v3811 = vsel %vm3785, %v3746, %v3101
  %v3813 = vsel %vm3785, %v3748, %v3103
  %v3815 = vsel %vm3785, %v3750, %v3105
  %v3817 = vsel %vm3785, %v3752, %v3107
  %v3819 = vsel %vm3785, %v3754, %v3109
  %v3821 = vsel %vm3785, %v3756, %v3111
  %v3823 = vsel %vm3785, %v3758, %v3113
  %v3825 = vsel %vm3785, %v3760, %v3115
  %v3827 = vsel %vm3785, %v3762, %v3117
  %v3829 = vsel %vm3785, %v3764, %v3119
  %v3831 = vsel %vm3785, %v3766, %v3121
  %v3833 = vsel %vm3785, %v3768, %v3123
  %v3835 = vsel %vm3785, %v3770, %v3125
  %v3837 = vsel %vm3785, %v3772, %v3127
  %v3839 = vsel %vm3785, %v3774, %v3129
  %v3841 = vsel %vm3785, %v3776, %v3131
  %v3843 = vsel %vm3785, %v3778, %v3133
  %v3845 = vsel %vm3785, %v3780, %v3135
  %v3847 = vsel %vm3785, %v3782, %v3137
  %v3849 = vsel %vm3785, %v3784, %v3139
  %vm3850 = vcmask 523264
  %v3852 = vsel %vm3850, %v3787, %v3301
  %v3854 = vsel %vm3850, %v3789, %v3303
  %v3856 = vsel %vm3850, %v3791, %v3305
  %v3858 = vsel %vm3850, %v3793, %v3307
  %v3860 = vsel %vm3850, %v3795, %v3309
  %v3862 = vsel %vm3850, %v3797, %v3311
  %v3864 = vsel %vm3850, %v3799, %v3313
  %v3866 = vsel %vm3850, %v3801, %v3315
  %v3868 = vsel %vm3850, %v3803, %v3317
  %v3870 = vsel %vm3850, %v3805, %v3319
  %v3872 = vsel %vm3850, %v3807, %v3321
  %v3874 = vsel %vm3850, %v3809, %v3323
  %v3876 = vsel %vm3850, %v3811, %v3325
  %v3878 = vsel %vm3850, %v3813, %v3327
  %v3880 = vsel %vm3850, %v3815, %v3329
  %v3882 = vsel %vm3850, %v3817, %v3331
  %v3884 = vsel %vm3850, %v3819, %v3333
  %v3886 = vsel %vm3850, %v3821, %v3335
  %v3888 = vsel %vm3850, %v3823, %v3337
  %v3890 = vsel %vm3850, %v3825, %v3339
  %v3892 = vsel %vm3850, %v3827, %v3341
  %v3894 = vsel %vm3850, %v3829, %v3343
  %v3896 = vsel %vm3850, %v3831, %v3345
  %v3898 = vsel %vm3850, %v3833, %v3347
  %v3900 = vsel %vm3850, %v3835, %v3349
  %v3902 = vsel %vm3850, %v3837, %v3351
  %v3904 = vsel %vm3850, %v3839, %v3353
  %v3906 = vsel %vm3850, %v3841, %v3355
  %v3908 = vsel %vm3850, %v3843, %v3357
  %v3910 = vsel %vm3850, %v3845, %v3359
  %v3912 = vsel %vm3850, %v3847, %v3361
  %v3914 = vsel %vm3850, %v3849, %v3363
  %v3915 = vld [vmem:[%s1] sm:$0xf]
  %v3916 = vld [vmem:[%s1 + $0x4] sm:$0xf]
  %v3917 = vld [vmem:[%s1 + $0x8] sm:$0xf]
  %v3918 = vld [vmem:[%s1 + $0xc] sm:$0xf]
  %v3919 = vld [vmem:[%s1 + $0x10] sm:$0xf]
  %v3920 = vld [vmem:[%s1 + $0x14] sm:$0xf]
  %v3921 = vld [vmem:[%s1 + $0x18] sm:$0xf]
  %v3922 = vld [vmem:[%s1 + $0x1c] sm:$0xf]
  %v3923 = vld [vmem:[%s1 + $0x20] sm:$0xf]
  %v3933 = vunpack.c.l.b16 %v3915
  %v3934 = vunpack.c.l.b16 %v3916
  %v3935 = vunpack.c.l.b16 %v3917
  %v3936 = vunpack.c.l.b16 %v3918
  %v3937 = vunpack.c.l.b16 %v3919
  %v3938 = vunpack.c.l.b16 %v3920
  %v3939 = vunpack.c.l.b16 %v3921
  %v3940 = vunpack.c.l.b16 %v3922
  %v3941 = vunpack.c.l.b16 %v3923
  %v3942 = vpack.c.b16 %v3934, %v3933
  %v3943 = vpack.c.b16 %v3936, %v3935
  %v3944 = vpack.c.b16 %v3938, %v3937
  %v3945 = vpack.c.b16 %v3940, %v3939
  %v3946 = vpack.c.b16 %v3941, %v3941
  %vm3951 = vcmask 588800
  %v3952 = vsel %vm3951, %v3852, 0
  %v3954 = vsel %vm3951, %v3854, 0
  %v3956 = vsel %vm3951, %v3856, 0
  %v3958 = vsel %vm3951, %v3858, 0
  %v3960 = vsel %vm3951, %v3860, 0
  %v3962 = vsel %vm3951, %v3862, 0
  %v3964 = vsel %vm3951, %v3864, 0
  %v3966 = vsel %vm3951, %v3866, 0
  %v3968 = vsel %vm3951, %v3868, 0
  %v3970 = vsel %vm3951, %v3870, 0
  %v3972 = vsel %vm3951, %v3872, 0
  %v3974 = vsel %vm3951, %v3874, 0
  %v3976 = vsel %vm3951, %v3876, 0
  %v3978 = vsel %vm3951, %v3878, 0
  %v3980 = vsel %vm3951, %v3880, 0
  %v3982 = vsel %vm3951, %v3882, 0
  %v3984 = vsel %vm3951, %v3884, 0
  %v3986 = vsel %vm3951, %v3886, 0
  %v3988 = vsel %vm3951, %v3888, 0
  %v3990 = vsel %vm3951, %v3890, 0
  %v3992 = vsel %vm3951, %v3892, 0
  %v3994 = vsel %vm3951, %v3894, 0
  %v3996 = vsel %vm3951, %v3896, 0
  %v3998 = vsel %vm3951, %v3898, 0
  %v4000 = vsel %vm3951, %v3900, 0
  %v4002 = vsel %vm3951, %v3902, 0
  %v4004 = vsel %vm3951, %v3904, 0
  %v4006 = vsel %vm3951, %v3906, 0
  %v4008 = vsel %vm3951, %v3908, 0
  %v4010 = vsel %vm3951, %v3910, 0
  %v4012 = vsel %vm3951, %v3912, 0
  %v4014 = vsel %vm3951, %v3914, 0
  %vm4016 = vcmask 1043456
  %v4018 = vsel %vm4016, %v3946, 0
  %4020 = vmatpush.bf16.msra.mxu0 0
  %4021 = vmatpush.bf16.msra.mxu0 0
  %4022 = vmatpush.bf16.msra.mxu0 0
  %4023 = vmatpush.bf16.msra.mxu0 %v4018
  %4024 = vmatpush.bf16.msra.mxu0 %v3945
  %4025 = vmatpush.bf16.msra.mxu0 %v3944
  %4026 = vmatpush.bf16.msra.mxu0 %v3943
  %4027 = vmatpush.bf16.msra.mxu0 %v3942
  %4028 = vmatmul.bf16.gmra.mxu0 %v3952
  %v4029 = vpop.f32.mrf.mxu0
  %v4030 = vadd.f32 0.0, %v4029
  %v4031 = vpop.f32.mrf.mxu0
  %v4032 = vadd.f32 0.0, %v4031
  %4033 = vmatmul.bf16.gmra.mxu0 %v3954
  %v4034 = vpop.f32.mrf.mxu0
  %v4035 = vadd.f32 0.0, %v4034
  %v4036 = vpop.f32.mrf.mxu0
  %v4037 = vadd.f32 0.0, %v4036
  %4038 = vmatmul.bf16.gmra.mxu0 %v3956
  %v4039 = vpop.f32.mrf.mxu0
  %v4040 = vadd.f32 0.0, %v4039
  %v4041 = vpop.f32.mrf.mxu0
  %v4042 = vadd.f32 0.0, %v4041
  %4043 = vmatmul.bf16.gmra.mxu0 %v3958
  %v4044 = vpop.f32.mrf.mxu0
  %v4045 = vadd.f32 0.0, %v4044
  %v4046 = vpop.f32.mrf.mxu0
  %v4047 = vadd.f32 0.0, %v4046
  %4048 = vmatmul.bf16.gmra.mxu0 %v3960
  %v4049 = vpop.f32.mrf.mxu0
  %v4050 = vadd.f32 0.0, %v4049
  %v4051 = vpop.f32.mrf.mxu0
  %v4052 = vadd.f32 0.0, %v4051
  %4053 = vmatmul.bf16.gmra.mxu0 %v3962
  %v4054 = vpop.f32.mrf.mxu0
  %v4055 = vadd.f32 0.0, %v4054
  %v4056 = vpop.f32.mrf.mxu0
  %v4057 = vadd.f32 0.0, %v4056
  %4058 = vmatmul.bf16.gmra.mxu0 %v3964
  %v4059 = vpop.f32.mrf.mxu0
  %v4060 = vadd.f32 0.0, %v4059
  %v4061 = vpop.f32.mrf.mxu0
  %v4062 = vadd.f32 0.0, %v4061
  %4063 = vmatmul.bf16.gmra.mxu0 %v3966
  %v4064 = vpop.f32.mrf.mxu0
  %v4065 = vadd.f32 0.0, %v4064
  %v4066 = vpop.f32.mrf.mxu0
  %v4067 = vadd.f32 0.0, %v4066
  %4068 = vmatmul.bf16.gmra.mxu0 %v3968
  %v4069 = vpop.f32.mrf.mxu0
  %v4070 = vadd.f32 0.0, %v4069
  %v4071 = vpop.f32.mrf.mxu0
  %v4072 = vadd.f32 0.0, %v4071
  %4073 = vmatmul.bf16.gmra.mxu0 %v3970
  %v4074 = vpop.f32.mrf.mxu0
  %v4075 = vadd.f32 0.0, %v4074
  %v4076 = vpop.f32.mrf.mxu0
  %v4077 = vadd.f32 0.0, %v4076
  %4078 = vmatmul.bf16.gmra.mxu0 %v3972
  %v4079 = vpop.f32.mrf.mxu0
  %v4080 = vadd.f32 0.0, %v4079
  %v4081 = vpop.f32.mrf.mxu0
  %v4082 = vadd.f32 0.0, %v4081
  %4083 = vmatmul.bf16.gmra.mxu0 %v3974
  %v4084 = vpop.f32.mrf.mxu0
  %v4085 = vadd.f32 0.0, %v4084
  %v4086 = vpop.f32.mrf.mxu0
  %v4087 = vadd.f32 0.0, %v4086
  %4088 = vmatmul.bf16.gmra.mxu0 %v3976
  %v4089 = vpop.f32.mrf.mxu0
  %v4090 = vadd.f32 0.0, %v4089
  %v4091 = vpop.f32.mrf.mxu0
  %v4092 = vadd.f32 0.0, %v4091
  %4093 = vmatmul.bf16.gmra.mxu0 %v3978
  %v4094 = vpop.f32.mrf.mxu0
  %v4095 = vadd.f32 0.0, %v4094
  %v4096 = vpop.f32.mrf.mxu0
  %v4097 = vadd.f32 0.0, %v4096
  %4098 = vmatmul.bf16.gmra.mxu0 %v3980
  %v4099 = vpop.f32.mrf.mxu0
  %v4100 = vadd.f32 0.0, %v4099
  %v4101 = vpop.f32.mrf.mxu0
  %v4102 = vadd.f32 0.0, %v4101
  %4103 = vmatmul.bf16.gmra.mxu0 %v3982
  %v4104 = vpop.f32.mrf.mxu0
  %v4105 = vadd.f32 0.0, %v4104
  %v4106 = vpop.f32.mrf.mxu0
  %v4107 = vadd.f32 0.0, %v4106
  %4108 = vmatmul.bf16.gmra.mxu0 %v3984
  %v4109 = vpop.f32.mrf.mxu0
  %v4110 = vadd.f32 0.0, %v4109
  %v4111 = vpop.f32.mrf.mxu0
  %v4112 = vadd.f32 0.0, %v4111
  %4113 = vmatmul.bf16.gmra.mxu0 %v3986
  %v4114 = vpop.f32.mrf.mxu0
  %v4115 = vadd.f32 0.0, %v4114
  %v4116 = vpop.f32.mrf.mxu0
  %v4117 = vadd.f32 0.0, %v4116
  %4118 = vmatmul.bf16.gmra.mxu0 %v3988
  %v4119 = vpop.f32.mrf.mxu0
  %v4120 = vadd.f32 0.0, %v4119
  %v4121 = vpop.f32.mrf.mxu0
  %v4122 = vadd.f32 0.0, %v4121
  %4123 = vmatmul.bf16.gmra.mxu0 %v3990
  %v4124 = vpop.f32.mrf.mxu0
  %v4125 = vadd.f32 0.0, %v4124
  %v4126 = vpop.f32.mrf.mxu0
  %v4127 = vadd.f32 0.0, %v4126
  %4128 = vmatmul.bf16.gmra.mxu0 %v3992
  %v4129 = vpop.f32.mrf.mxu0
  %v4130 = vadd.f32 0.0, %v4129
  %v4131 = vpop.f32.mrf.mxu0
  %v4132 = vadd.f32 0.0, %v4131
  %4133 = vmatmul.bf16.gmra.mxu0 %v3994
  %v4134 = vpop.f32.mrf.mxu0
  %v4135 = vadd.f32 0.0, %v4134
  %v4136 = vpop.f32.mrf.mxu0
  %v4137 = vadd.f32 0.0, %v4136
  %4138 = vmatmul.bf16.gmra.mxu0 %v3996
  %v4139 = vpop.f32.mrf.mxu0
  %v4140 = vadd.f32 0.0, %v4139
  %v4141 = vpop.f32.mrf.mxu0
  %v4142 = vadd.f32 0.0, %v4141
  %4143 = vmatmul.bf16.gmra.mxu0 %v3998
  %v4144 = vpop.f32.mrf.mxu0
  %v4145 = vadd.f32 0.0, %v4144
  %v4146 = vpop.f32.mrf.mxu0
  %v4147 = vadd.f32 0.0, %v4146
  %4148 = vmatmul.bf16.gmra.mxu0 %v4000
  %v4149 = vpop.f32.mrf.mxu0
  %v4150 = vadd.f32 0.0, %v4149
  %v4151 = vpop.f32.mrf.mxu0
  %v4152 = vadd.f32 0.0, %v4151
  %4153 = vmatmul.bf16.gmra.mxu0 %v4002
  %v4154 = vpop.f32.mrf.mxu0
  %v4155 = vadd.f32 0.0, %v4154
  %v4156 = vpop.f32.mrf.mxu0
  %v4157 = vadd.f32 0.0, %v4156
  %4158 = vmatmul.bf16.gmra.mxu0 %v4004
  %v4159 = vpop.f32.mrf.mxu0
  %v4160 = vadd.f32 0.0, %v4159
  %v4161 = vpop.f32.mrf.mxu0
  %v4162 = vadd.f32 0.0, %v4161
  %4163 = vmatmul.bf16.gmra.mxu0 %v4006
  %v4164 = vpop.f32.mrf.mxu0
  %v4165 = vadd.f32 0.0, %v4164
  %v4166 = vpop.f32.mrf.mxu0
  %v4167 = vadd.f32 0.0, %v4166
  %4168 = vmatmul.bf16.gmra.mxu0 %v4008
  %v4169 = vpop.f32.mrf.mxu0
  %v4170 = vadd.f32 0.0, %v4169
  %v4171 = vpop.f32.mrf.mxu0
  %v4172 = vadd.f32 0.0, %v4171
  %4173 = vmatmul.bf16.gmra.mxu0 %v4010
  %v4174 = vpop.f32.mrf.mxu0
  %v4175 = vadd.f32 0.0, %v4174
  %v4176 = vpop.f32.mrf.mxu0
  %v4177 = vadd.f32 0.0, %v4176
  %4178 = vmatmul.bf16.gmra.mxu0 %v4012
  %v4179 = vpop.f32.mrf.mxu0
  %v4180 = vadd.f32 0.0, %v4179
  %v4181 = vpop.f32.mrf.mxu0
  %v4182 = vadd.f32 0.0, %v4181
  %4183 = vmatmul.bf16.gmra.mxu0 %v4014
  %v4184 = vpop.f32.mrf.mxu0
  %v4185 = vadd.f32 0.0, %v4184
  %v4186 = vpop.f32.mrf.mxu0
  %v4187 = vadd.f32 0.0, %v4186
  %4188 = vdwg.mxu0
  %4189 = vst.msk [vmem:[%s2] sm:$0xff] %vm194, %v4030
  %4190 = vst.msk [vmem:[%s2 + $0x8] sm:$0xff] %vm194, %v4032
  %4191 = vst.msk [vmem:[%s2 + $0x10] sm:$0xff] %vm194, %v4035
  %4192 = vst.msk [vmem:[%s2 + $0x18] sm:$0xff] %vm194, %v4037
  %4193 = vst.msk [vmem:[%s2 + $0x20] sm:$0xff] %vm194, %v4040
  %4194 = vst.msk [vmem:[%s2 + $0x28] sm:$0xff] %vm194, %v4042
  %4195 = vst.msk [vmem:[%s2 + $0x30] sm:$0xff] %vm194, %v4045
  %4196 = vst.msk [vmem:[%s2 + $0x38] sm:$0xff] %vm194, %v4047
  %4197 = vst.msk [vmem:[%s2 + $0x40] sm:$0xff] %vm194, %v4050
  %4198 = vst.msk [vmem:[%s2 + $0x48] sm:$0xff] %vm194, %v4052
  %4199 = vst.msk [vmem:[%s2 + $0x50] sm:$0xff] %vm194, %v4055
  %4200 = vst.msk [vmem:[%s2 + $0x58] sm:$0xff] %vm194, %v4057
  %4201 = vst.msk [vmem:[%s2 + $0x60] sm:$0xff] %vm194, %v4060
  %4202 = vst.msk [vmem:[%s2 + $0x68] sm:$0xff] %vm194, %v4062
  %4203 = vst.msk [vmem:[%s2 + $0x70] sm:$0xff] %vm194, %v4065
  %4204 = vst.msk [vmem:[%s2 + $0x78] sm:$0xff] %vm194, %v4067
  %4205 = vst.msk [vmem:[%s2 + $0x80] sm:$0xff] %vm194, %v4070
  %4206 = vst.msk [vmem:[%s2 + $0x88] sm:$0xff] %vm194, %v4072
  %4207 = vst.msk [vmem:[%s2 + $0x90] sm:$0xff] %vm194, %v4075
  %4208 = vst.msk [vmem:[%s2 + $0x98] sm:$0xff] %vm194, %v4077
  %4209 = vst.msk [vmem:[%s2 + $0xa0] sm:$0xff] %vm194, %v4080
  %4210 = vst.msk [vmem:[%s2 + $0xa8] sm:$0xff] %vm194, %v4082
  %4211 = vst.msk [vmem:[%s2 + $0xb0] sm:$0xff] %vm194, %v4085
  %4212 = vst.msk [vmem:[%s2 + $0xb8] sm:$0xff] %vm194, %v4087
  %4213 = vst.msk [vmem:[%s2 + $0xc0] sm:$0xff] %vm194, %v4090
  %4214 = vst.msk [vmem:[%s2 + $0xc8] sm:$0xff] %vm194, %v4092
  %4215 = vst.msk [vmem:[%s2 + $0xd0] sm:$0xff] %vm194, %v4095
  %4216 = vst.msk [vmem:[%s2 + $0xd8] sm:$0xff] %vm194, %v4097
  %4217 = vst.msk [vmem:[%s2 + $0xe0] sm:$0xff] %vm194, %v4100
  %4218 = vst.msk [vmem:[%s2 + $0xe8] sm:$0xff] %vm194, %v4102
  %4219 = vst.msk [vmem:[%s2 + $0xf0] sm:$0xff] %vm194, %v4105
  %4220 = vst.msk [vmem:[%s2 + $0xf8] sm:$0xff] %vm194, %v4107
  %4221 = vst.msk [vmem:[%s2 + $0x100] sm:$0xff] %vm194, %v4110
  %4222 = vst.msk [vmem:[%s2 + $0x108] sm:$0xff] %vm194, %v4112
  %4223 = vst.msk [vmem:[%s2 + $0x110] sm:$0xff] %vm194, %v4115
  %4224 = vst.msk [vmem:[%s2 + $0x118] sm:$0xff] %vm194, %v4117
  %4225 = vst.msk [vmem:[%s2 + $0x120] sm:$0xff] %vm194, %v4120
  %4226 = vst.msk [vmem:[%s2 + $0x128] sm:$0xff] %vm194, %v4122
  %4227 = vst.msk [vmem:[%s2 + $0x130] sm:$0xff] %vm194, %v4125
  %4228 = vst.msk [vmem:[%s2 + $0x138] sm:$0xff] %vm194, %v4127
  %4229 = vst.msk [vmem:[%s2 + $0x140] sm:$0xff] %vm194, %v4130
  %4230 = vst.msk [vmem:[%s2 + $0x148] sm:$0xff] %vm194, %v4132
  %4231 = vst.msk [vmem:[%s2 + $0x150] sm:$0xff] %vm194, %v4135
  %4232 = vst.msk [vmem:[%s2 + $0x158] sm:$0xff] %vm194, %v4137
  %4233 = vst.msk [vmem:[%s2 + $0x160] sm:$0xff] %vm194, %v4140
  %4234 = vst.msk [vmem:[%s2 + $0x168] sm:$0xff] %vm194, %v4142
  %4235 = vst.msk [vmem:[%s2 + $0x170] sm:$0xff] %vm194, %v4145
  %4236 = vst.msk [vmem:[%s2 + $0x178] sm:$0xff] %vm194, %v4147
  %4237 = vst.msk [vmem:[%s2 + $0x180] sm:$0xff] %vm194, %v4150
  %4238 = vst.msk [vmem:[%s2 + $0x188] sm:$0xff] %vm194, %v4152
  %4239 = vst.msk [vmem:[%s2 + $0x190] sm:$0xff] %vm194, %v4155
  %4240 = vst.msk [vmem:[%s2 + $0x198] sm:$0xff] %vm194, %v4157
  %4241 = vst.msk [vmem:[%s2 + $0x1a0] sm:$0xff] %vm194, %v4160
  %4242 = vst.msk [vmem:[%s2 + $0x1a8] sm:$0xff] %vm194, %v4162
  %4243 = vst.msk [vmem:[%s2 + $0x1b0] sm:$0xff] %vm194, %v4165
  %4244 = vst.msk [vmem:[%s2 + $0x1b8] sm:$0xff] %vm194, %v4167
  %4245 = vst.msk [vmem:[%s2 + $0x1c0] sm:$0xff] %vm194, %v4170
  %4246 = vst.msk [vmem:[%s2 + $0x1c8] sm:$0xff] %vm194, %v4172
  %4247 = vst.msk [vmem:[%s2 + $0x1d0] sm:$0xff] %vm194, %v4175
  %4248 = vst.msk [vmem:[%s2 + $0x1d8] sm:$0xff] %vm194, %v4177
  %4249 = vst.msk [vmem:[%s2 + $0x1e0] sm:$0xff] %vm194, %v4180
  %4250 = vst.msk [vmem:[%s2 + $0x1e8] sm:$0xff] %vm194, %v4182
  %4251 = vst.msk [vmem:[%s2 + $0x1f0] sm:$0xff] %vm194, %v4185
  %4252 = vst.msk [vmem:[%s2 + $0x1f8] sm:$0xff] %vm194, %v4187
  %v4253 = vld [vmem:[%s3] sm:$0x3]
  %v4254 = vsel %vm194, %v4030, 0.0
  %v4255 = vsel %vm194, %v4032, 0.0
  %v4256 = vadd.f32 %v4254, %v4255
  %v4257 = vsel %vm194, %v4035, 0.0
  %v4258 = vadd.f32 %v4256, %v4257
  %v4259 = vsel %vm194, %v4037, 0.0
  %v4260 = vadd.f32 %v4258, %v4259
  %v4261 = vsel %vm194, %v4040, 0.0
  %v4262 = vadd.f32 %v4260, %v4261
  %v4263 = vsel %vm194, %v4042, 0.0
  %v4264 = vadd.f32 %v4262, %v4263
  %v4265 = vsel %vm194, %v4045, 0.0
  %v4266 = vadd.f32 %v4264, %v4265
  %v4267 = vsel %vm194, %v4047, 0.0
  %v4268 = vadd.f32 %v4266, %v4267
  %v4269 = vsel %vm194, %v4050, 0.0
  %v4270 = vadd.f32 %v4268, %v4269
  %v4271 = vsel %vm194, %v4052, 0.0
  %v4272 = vadd.f32 %v4270, %v4271
  %v4273 = vsel %vm194, %v4055, 0.0
  %v4274 = vadd.f32 %v4272, %v4273
  %v4275 = vsel %vm194, %v4057, 0.0
  %v4276 = vadd.f32 %v4274, %v4275
  %v4277 = vsel %vm194, %v4060, 0.0
  %v4278 = vadd.f32 %v4276, %v4277
  %v4279 = vsel %vm194, %v4062, 0.0
  %v4280 = vadd.f32 %v4278, %v4279
  %v4281 = vsel %vm194, %v4065, 0.0
  %v4282 = vadd.f32 %v4280, %v4281
  %v4283 = vsel %vm194, %v4067, 0.0
  %v4284 = vadd.f32 %v4282, %v4283
  %v4285 = vsel %vm194, %v4070, 0.0
  %v4286 = vadd.f32 %v4284, %v4285
  %v4287 = vsel %vm194, %v4072, 0.0
  %v4288 = vadd.f32 %v4286, %v4287
  %v4289 = vsel %vm194, %v4075, 0.0
  %v4290 = vadd.f32 %v4288, %v4289
  %v4291 = vsel %vm194, %v4077, 0.0
  %v4292 = vadd.f32 %v4290, %v4291
  %v4293 = vsel %vm194, %v4080, 0.0
  %v4294 = vadd.f32 %v4292, %v4293
  %v4295 = vsel %vm194, %v4082, 0.0
  %v4296 = vadd.f32 %v4294, %v4295
  %v4297 = vsel %vm194, %v4085, 0.0
  %v4298 = vadd.f32 %v4296, %v4297
  %v4299 = vsel %vm194, %v4087, 0.0
  %v4300 = vadd.f32 %v4298, %v4299
  %v4301 = vsel %vm194, %v4090, 0.0
  %v4302 = vadd.f32 %v4300, %v4301
  %v4303 = vsel %vm194, %v4092, 0.0
  %v4304 = vadd.f32 %v4302, %v4303
  %v4305 = vsel %vm194, %v4095, 0.0
  %v4306 = vadd.f32 %v4304, %v4305
  %v4307 = vsel %vm194, %v4097, 0.0
  %v4308 = vadd.f32 %v4306, %v4307
  %v4309 = vsel %vm194, %v4100, 0.0
  %v4310 = vadd.f32 %v4308, %v4309
  %v4311 = vsel %vm194, %v4102, 0.0
  %v4312 = vadd.f32 %v4310, %v4311
  %v4313 = vsel %vm194, %v4105, 0.0
  %v4314 = vadd.f32 %v4312, %v4313
  %v4315 = vsel %vm194, %v4107, 0.0
  %v4316 = vadd.f32 %v4314, %v4315
  %v4317 = vsel %vm194, %v4110, 0.0
  %v4318 = vadd.f32 %v4316, %v4317
  %v4319 = vsel %vm194, %v4112, 0.0
  %v4320 = vadd.f32 %v4318, %v4319
  %v4321 = vsel %vm194, %v4115, 0.0
  %v4322 = vadd.f32 %v4320, %v4321
  %v4323 = vsel %vm194, %v4117, 0.0
  %v4324 = vadd.f32 %v4322, %v4323
  %v4325 = vsel %vm194, %v4120, 0.0
  %v4326 = vadd.f32 %v4324, %v4325
  %v4327 = vsel %vm194, %v4122, 0.0
  %v4328 = vadd.f32 %v4326, %v4327
  %v4329 = vsel %vm194, %v4125, 0.0
  %v4330 = vadd.f32 %v4328, %v4329
  %v4331 = vsel %vm194, %v4127, 0.0
  %v4332 = vadd.f32 %v4330, %v4331
  %v4333 = vsel %vm194, %v4130, 0.0
  %v4334 = vadd.f32 %v4332, %v4333
  %v4335 = vsel %vm194, %v4132, 0.0
  %v4336 = vadd.f32 %v4334, %v4335
  %v4337 = vsel %vm194, %v4135, 0.0
  %v4338 = vadd.f32 %v4336, %v4337
  %v4339 = vsel %vm194, %v4137, 0.0
  %v4340 = vadd.f32 %v4338, %v4339
  %v4341 = vsel %vm194, %v4140, 0.0
  %v4342 = vadd.f32 %v4340, %v4341
  %v4343 = vsel %vm194, %v4142, 0.0
  %v4344 = vadd.f32 %v4342, %v4343
  %v4345 = vsel %vm194, %v4145, 0.0
  %v4346 = vadd.f32 %v4344, %v4345
  %v4347 = vsel %vm194, %v4147, 0.0
  %v4348 = vadd.f32 %v4346, %v4347
  %v4349 = vsel %vm194, %v4150, 0.0
  %v4350 = vadd.f32 %v4348, %v4349
  %v4351 = vsel %vm194, %v4152, 0.0
  %v4352 = vadd.f32 %v4350, %v4351
  %v4353 = vsel %vm194, %v4155, 0.0
  %v4354 = vadd.f32 %v4352, %v4353
  %v4355 = vsel %vm194, %v4157, 0.0
  %v4356 = vadd.f32 %v4354, %v4355
  %v4357 = vsel %vm194, %v4160, 0.0
  %v4358 = vadd.f32 %v4356, %v4357
  %v4359 = vsel %vm194, %v4162, 0.0
  %v4360 = vadd.f32 %v4358, %v4359
  %v4361 = vsel %vm194, %v4165, 0.0
  %v4362 = vadd.f32 %v4360, %v4361
  %v4363 = vsel %vm194, %v4167, 0.0
  %v4364 = vadd.f32 %v4362, %v4363
  %v4365 = vsel %vm194, %v4170, 0.0
  %v4366 = vadd.f32 %v4364, %v4365
  %v4367 = vsel %vm194, %v4172, 0.0
  %v4368 = vadd.f32 %v4366, %v4367
  %v4369 = vsel %vm194, %v4175, 0.0
  %v4370 = vadd.f32 %v4368, %v4369
  %v4371 = vsel %vm194, %v4177, 0.0
  %v4372 = vadd.f32 %v4370, %v4371
  %v4373 = vsel %vm194, %v4180, 0.0
  %v4374 = vadd.f32 %v4372, %v4373
  %v4375 = vsel %vm194, %v4182, 0.0
  %v4376 = vadd.f32 %v4374, %v4375
  %v4377 = vsel %vm194, %v4185, 0.0
  %v4378 = vadd.f32 %v4376, %v4377
  %v4379 = vsel %vm194, %v4187, 0.0
  %v4380 = vadd.f32 %v4378, %v4379
  %v4381 = vrot.slane %v4380, 4
  %v4382 = vadd.f32 %v4380, %v4381
  %v4383 = vrot.slane %v4382, 2
  %v4384 = vadd.f32 %v4382, %v4383
  %v4385 = vrot.slane %v4384, 1
  %v4386 = vadd.f32 %v4384, %v4385
  %v4387 = vmul.f32 %v4030, %v4030
  %v4388 = vmul.f32 %v4032, %v4032
  %v4389 = vmul.f32 %v4035, %v4035
  %v4390 = vmul.f32 %v4037, %v4037
  %v4391 = vmul.f32 %v4040, %v4040
  %v4392 = vmul.f32 %v4042, %v4042
  %v4393 = vmul.f32 %v4045, %v4045
  %v4394 = vmul.f32 %v4047, %v4047
  %v4395 = vmul.f32 %v4050, %v4050
  %v4396 = vmul.f32 %v4052, %v4052
  %v4397 = vmul.f32 %v4055, %v4055
  %v4398 = vmul.f32 %v4057, %v4057
  %v4399 = vmul.f32 %v4060, %v4060
  %v4400 = vmul.f32 %v4062, %v4062
  %v4401 = vmul.f32 %v4065, %v4065
  %v4402 = vmul.f32 %v4067, %v4067
  %v4403 = vmul.f32 %v4070, %v4070
  %v4404 = vmul.f32 %v4072, %v4072
  %v4405 = vmul.f32 %v4075, %v4075
  %v4406 = vmul.f32 %v4077, %v4077
  %v4407 = vmul.f32 %v4080, %v4080
  %v4408 = vmul.f32 %v4082, %v4082
  %v4409 = vmul.f32 %v4085, %v4085
  %v4410 = vmul.f32 %v4087, %v4087
  %v4411 = vmul.f32 %v4090, %v4090
  %v4412 = vmul.f32 %v4092, %v4092
  %v4413 = vmul.f32 %v4095, %v4095
  %v4414 = vmul.f32 %v4097, %v4097
  %v4415 = vmul.f32 %v4100, %v4100
  %v4416 = vmul.f32 %v4102, %v4102
  %v4417 = vmul.f32 %v4105, %v4105
  %v4418 = vmul.f32 %v4107, %v4107
  %v4419 = vmul.f32 %v4110, %v4110
  %v4420 = vmul.f32 %v4112, %v4112
  %v4421 = vmul.f32 %v4115, %v4115
  %v4422 = vmul.f32 %v4117, %v4117
  %v4423 = vmul.f32 %v4120, %v4120
  %v4424 = vmul.f32 %v4122, %v4122
  %v4425 = vmul.f32 %v4125, %v4125
  %v4426 = vmul.f32 %v4127, %v4127
  %v4427 = vmul.f32 %v4130, %v4130
  %v4428 = vmul.f32 %v4132, %v4132
  %v4429 = vmul.f32 %v4135, %v4135
  %v4430 = vmul.f32 %v4137, %v4137
  %v4431 = vmul.f32 %v4140, %v4140
  %v4432 = vmul.f32 %v4142, %v4142
  %v4433 = vmul.f32 %v4145, %v4145
  %v4434 = vmul.f32 %v4147, %v4147
  %v4435 = vmul.f32 %v4150, %v4150
  %v4436 = vmul.f32 %v4152, %v4152
  %v4437 = vmul.f32 %v4155, %v4155
  %v4438 = vmul.f32 %v4157, %v4157
  %v4439 = vmul.f32 %v4160, %v4160
  %v4440 = vmul.f32 %v4162, %v4162
  %v4441 = vmul.f32 %v4165, %v4165
  %v4442 = vmul.f32 %v4167, %v4167
  %v4443 = vmul.f32 %v4170, %v4170
  %v4444 = vmul.f32 %v4172, %v4172
  %v4445 = vmul.f32 %v4175, %v4175
  %v4446 = vmul.f32 %v4177, %v4177
  %v4447 = vmul.f32 %v4180, %v4180
  %v4448 = vmul.f32 %v4182, %v4182
  %v4449 = vmul.f32 %v4185, %v4185
  %v4450 = vmul.f32 %v4187, %v4187
  %v4451 = vsel %vm194, %v4387, 0.0
  %v4452 = vsel %vm194, %v4388, 0.0
  %v4453 = vadd.f32 %v4451, %v4452
  %v4454 = vsel %vm194, %v4389, 0.0
  %v4455 = vadd.f32 %v4453, %v4454
  %v4456 = vsel %vm194, %v4390, 0.0
  %v4457 = vadd.f32 %v4455, %v4456
  %v4458 = vsel %vm194, %v4391, 0.0
  %v4459 = vadd.f32 %v4457, %v4458
  %v4460 = vsel %vm194, %v4392, 0.0
  %v4461 = vadd.f32 %v4459, %v4460
  %v4462 = vsel %vm194, %v4393, 0.0
  %v4463 = vadd.f32 %v4461, %v4462
  %v4464 = vsel %vm194, %v4394, 0.0
  %v4465 = vadd.f32 %v4463, %v4464
  %v4466 = vsel %vm194, %v4395, 0.0
  %v4467 = vadd.f32 %v4465, %v4466
  %v4468 = vsel %vm194, %v4396, 0.0
  %v4469 = vadd.f32 %v4467, %v4468
  %v4470 = vsel %vm194, %v4397, 0.0
  %v4471 = vadd.f32 %v4469, %v4470
  %v4472 = vsel %vm194, %v4398, 0.0
  %v4473 = vadd.f32 %v4471, %v4472
  %v4474 = vsel %vm194, %v4399, 0.0
  %v4475 = vadd.f32 %v4473, %v4474
  %v4476 = vsel %vm194, %v4400, 0.0
  %v4477 = vadd.f32 %v4475, %v4476
  %v4478 = vsel %vm194, %v4401, 0.0
  %v4479 = vadd.f32 %v4477, %v4478
  %v4480 = vsel %vm194, %v4402, 0.0
  %v4481 = vadd.f32 %v4479, %v4480
  %v4482 = vsel %vm194, %v4403, 0.0
  %v4483 = vadd.f32 %v4481, %v4482
  %v4484 = vsel %vm194, %v4404, 0.0
  %v4485 = vadd.f32 %v4483, %v4484
  %v4486 = vsel %vm194, %v4405, 0.0
  %v4487 = vadd.f32 %v4485, %v4486
  %v4488 = vsel %vm194, %v4406, 0.0
  %v4489 = vadd.f32 %v4487, %v4488
  %v4490 = vsel %vm194, %v4407, 0.0
  %v4491 = vadd.f32 %v4489, %v4490
  %v4492 = vsel %vm194, %v4408, 0.0
  %v4493 = vadd.f32 %v4491, %v4492
  %v4494 = vsel %vm194, %v4409, 0.0
  %v4495 = vadd.f32 %v4493, %v4494
  %v4496 = vsel %vm194, %v4410, 0.0
  %v4497 = vadd.f32 %v4495, %v4496
  %v4498 = vsel %vm194, %v4411, 0.0
  %v4499 = vadd.f32 %v4497, %v4498
  %v4500 = vsel %vm194, %v4412, 0.0
  %v4501 = vadd.f32 %v4499, %v4500
  %v4502 = vsel %vm194, %v4413, 0.0
  %v4503 = vadd.f32 %v4501, %v4502
  %v4504 = vsel %vm194, %v4414, 0.0
  %v4505 = vadd.f32 %v4503, %v4504
  %v4506 = vsel %vm194, %v4415, 0.0
  %v4507 = vadd.f32 %v4505, %v4506
  %v4508 = vsel %vm194, %v4416, 0.0
  %v4509 = vadd.f32 %v4507, %v4508
  %v4510 = vsel %vm194, %v4417, 0.0
  %v4511 = vadd.f32 %v4509, %v4510
  %v4512 = vsel %vm194, %v4418, 0.0
  %v4513 = vadd.f32 %v4511, %v4512
  %v4514 = vsel %vm194, %v4419, 0.0
  %v4515 = vadd.f32 %v4513, %v4514
  %v4516 = vsel %vm194, %v4420, 0.0
  %v4517 = vadd.f32 %v4515, %v4516
  %v4518 = vsel %vm194, %v4421, 0.0
  %v4519 = vadd.f32 %v4517, %v4518
  %v4520 = vsel %vm194, %v4422, 0.0
  %v4521 = vadd.f32 %v4519, %v4520
  %v4522 = vsel %vm194, %v4423, 0.0
  %v4523 = vadd.f32 %v4521, %v4522
  %v4524 = vsel %vm194, %v4424, 0.0
  %v4525 = vadd.f32 %v4523, %v4524
  %v4526 = vsel %vm194, %v4425, 0.0
  %v4527 = vadd.f32 %v4525, %v4526
  %v4528 = vsel %vm194, %v4426, 0.0
  %v4529 = vadd.f32 %v4527, %v4528
  %v4530 = vsel %vm194, %v4427, 0.0
  %v4531 = vadd.f32 %v4529, %v4530
  %v4532 = vsel %vm194, %v4428, 0.0
  %v4533 = vadd.f32 %v4531, %v4532
  %v4534 = vsel %vm194, %v4429, 0.0
  %v4535 = vadd.f32 %v4533, %v4534
  %v4536 = vsel %vm194, %v4430, 0.0
  %v4537 = vadd.f32 %v4535, %v4536
  %v4538 = vsel %vm194, %v4431, 0.0
  %v4539 = vadd.f32 %v4537, %v4538
  %v4540 = vsel %vm194, %v4432, 0.0
  %v4541 = vadd.f32 %v4539, %v4540
  %v4542 = vsel %vm194, %v4433, 0.0
  %v4543 = vadd.f32 %v4541, %v4542
  %v4544 = vsel %vm194, %v4434, 0.0
  %v4545 = vadd.f32 %v4543, %v4544
  %v4546 = vsel %vm194, %v4435, 0.0
  %v4547 = vadd.f32 %v4545, %v4546
  %v4548 = vsel %vm194, %v4436, 0.0
  %v4549 = vadd.f32 %v4547, %v4548
  %v4550 = vsel %vm194, %v4437, 0.0
  %v4551 = vadd.f32 %v4549, %v4550
  %v4552 = vsel %vm194, %v4438, 0.0
  %v4553 = vadd.f32 %v4551, %v4552
  %v4554 = vsel %vm194, %v4439, 0.0
  %v4555 = vadd.f32 %v4553, %v4554
  %v4556 = vsel %vm194, %v4440, 0.0
  %v4557 = vadd.f32 %v4555, %v4556
  %v4558 = vsel %vm194, %v4441, 0.0
  %v4559 = vadd.f32 %v4557, %v4558
  %v4560 = vsel %vm194, %v4442, 0.0
  %v4561 = vadd.f32 %v4559, %v4560
  %v4562 = vsel %vm194, %v4443, 0.0
  %v4563 = vadd.f32 %v4561, %v4562
  %v4564 = vsel %vm194, %v4444, 0.0
  %v4565 = vadd.f32 %v4563, %v4564
  %v4566 = vsel %vm194, %v4445, 0.0
  %v4567 = vadd.f32 %v4565, %v4566
  %v4568 = vsel %vm194, %v4446, 0.0
  %v4569 = vadd.f32 %v4567, %v4568
  %v4570 = vsel %vm194, %v4447, 0.0
  %v4571 = vadd.f32 %v4569, %v4570
  %v4572 = vsel %vm194, %v4448, 0.0
  %v4573 = vadd.f32 %v4571, %v4572
  %v4574 = vsel %vm194, %v4449, 0.0
  %v4575 = vadd.f32 %v4573, %v4574
  %v4576 = vsel %vm194, %v4450, 0.0
  %v4577 = vadd.f32 %v4575, %v4576
  %v4578 = vrot.slane %v4577, 4
  %v4579 = vadd.f32 %v4577, %v4578
  %v4580 = vrot.slane %v4579, 2
  %v4581 = vadd.f32 %v4579, %v4580
  %v4582 = vrot.slane %v4581, 1
  %v4583 = vadd.f32 %v4581, %v4582
  %vm4584 = vcmask 1040384
  %v4585 = vsel %vm4584, %v4386, %v4583
  %v4586 = vadd.f32 %v4253, %v4585
  %vm4587 = vcmask 58368
  %4588 = vst.msk [vmem:[%s3] sm:$0x3] %vm4587, %v4586
  // Predicated region
  $region14: #{basic_block_forward.3} parent=0 // pred_check
    _
  $region15: #{basic_block_forward.3} parent=0 // pred_check_branch
    %4590 = sbr.rel (0) target = $region17
  $region16: #{basic_block_forward.3} parent=0 // pred_region
    _
  $region17: #{basic_block_forward.3} parent=0 // pred_fallthru
    _
  // Predicated region
  $region18: #{basic_block_forward.3} parent=0 // pred_check
    _
  $region19: #{basic_block_forward.3} parent=0 // pred_check_branch
    %4592 = sbr.rel (0) target = $region21
  $region20: #{basic_block_forward.3} parent=0 // pred_region
    _
  $region21: #{basic_block_forward.3} parent=0 // pred_fallthru
    _
  // Predicated region
  $region22: #{basic_block_forward.3} parent=0 // pred_check
    _
  $region23: #{basic_block_forward.3} parent=0 // pred_check_branch
    %4594 = sbr.rel (0) target = $region25
  $region24: #{basic_block_forward.3} parent=0 // pred_region
    _
  $region25: #{basic_block_forward.3} parent=0 // pred_fallthru
    _
  // Predicated region
  $region26: #{basic_block_forward.3} parent=0 // pred_check
    _
  $region27: #{basic_block_forward.3} parent=0 // pred_check_branch
    %4596 = sbr.rel (0) target = $region29
  $region28: #{basic_block_forward.3} parent=0 // pred_region
    _
  $region29: #{basic_block_forward.3} parent=0 // pred_fallthru
    _

// kernel: basic_block_forward.4
$region0: #{basic_block_forward.4}
  #allocation0 [shape = 'u32[]', space=smem, size = 0x4, offset = 0x4, fixed_abs, tag = 'smem constant byte address 0x4 - core index']
  #allocation1 [shape = 'u32[72,128]{1,0:T(1,128)}', space=vmem, size = 0x9000, scoped, tag = 'internal scratch']
  #allocation2 [shape = 'f32[2,18,18,8]{3,2,1,0:T(8,128)}', space=vmem, size = 0x6c000, scoped, tag = 'scratch operand']
  %s0 = inlined_call_operand.vmem [shape: f32[2,16,16,8], index: 0, kind: input, shape index: {}]
  %s1 = inlined_call_operand.vmem [shape: f32[1,8], index: 1, kind: input, shape index: {}]
  %s2 = inlined_call_operand.vmem [shape: f32[1,8], index: 2, kind: input, shape index: {}]
  %s3 = inlined_call_operand.vmem [shape: bf16[72,8], index: 3, kind: input, shape index: {}]
  %s4 = inlined_call_operand.vmem [shape: f32[512,8], index: 4, kind: output, shape index: {0}]
  %s5 = inlined_call_operand.vmem [shape: f32[2,8], index: 5, kind: output, shape index: {1}]
  %6 = xla_tuple %s4, %s5
  %s7 = sld [smem:[#allocation0]]
  $region38: #{basic_block_forward.4} parent=0
    _
  %s9 = ssub.s32 1, %s7
  %s10 = scalar_select 0, %s9, %s7
  // Predicated region
  $region2: #{basic_block_forward.4} parent=0 // pred_check
    _
  $region3: #{basic_block_forward.4} parent=0 // pred_check_branch
    %12 = sbr.rel (0) target = $region5
  $region4: #{basic_block_forward.4} parent=0 // pred_region
    _
  $region5: #{basic_block_forward.4} parent=0 // pred_fallthru
    _
  // Predicated region
  $region6: #{basic_block_forward.4} parent=0 // pred_check
    _
  $region7: #{basic_block_forward.4} parent=0 // pred_check_branch
    %14 = sbr.rel (0) target = $region9
  $region8: #{basic_block_forward.4} parent=0 // pred_region
    _
  $region9: #{basic_block_forward.4} parent=0 // pred_fallthru
    _
  // Predicated region
  $region10: #{basic_block_forward.4} parent=0 // pred_check
    _
  $region11: #{basic_block_forward.4} parent=0 // pred_check_branch
    %16 = sbr.rel (0) target = $region13
  $region12: #{basic_block_forward.4} parent=0 // pred_region
    _
  $region13: #{basic_block_forward.4} parent=0 // pred_fallthru
    _
  // Predicated region
  $region14: #{basic_block_forward.4} parent=0 // pred_check
    _
  $region15: #{basic_block_forward.4} parent=0 // pred_check_branch
    %18 = sbr.rel (0) target = $region17
  $region16: #{basic_block_forward.4} parent=0 // pred_region
    _
  $region17: #{basic_block_forward.4} parent=0 // pred_fallthru
    _
  %p20 = scmp.eq.s32.totalorder 0, 0
  // Predicated region
  $region18: #{basic_block_forward.4} parent=0 // pred_check
    %p21 = pneg %p20
  $region19: #{basic_block_forward.4} parent=0 // pred_check_branch
    %23 = sbr.rel (%p21) target = $region21
  $region20: #{basic_block_forward.4} parent=0 // pred_region
    %vm24 = vcmask 58368
    %25 = vst.msk [vmem:[%s5] sm:$0x3] %vm24, 0.0
    %vm26 = vcmask 64512
    %27 = vst.msk [vmem:[#allocation2] sm:$0xff] %vm26, 0.0
    %28 = vst.msk [vmem:[#allocation2 + $0x8] sm:$0xff] %vm26, 0.0
    %29 = vst.msk [vmem:[#allocation2 + $0x10] sm:$0x3] %vm24, 0.0
    %30 = vst.msk [vmem:[#allocation2 + $0x18] sm:$0xff] %vm26, 0.0
    %31 = vst.msk [vmem:[#allocation2 + $0x20] sm:$0xff] %vm26, 0.0
    %32 = vst.msk [vmem:[#allocation2 + $0x28] sm:$0x3] %vm24, 0.0
    %33 = vst.msk [vmem:[#allocation2 + $0x30] sm:$0xff] %vm26, 0.0
    %34 = vst.msk [vmem:[#allocation2 + $0x38] sm:$0xff] %vm26, 0.0
    %35 = vst.msk [vmem:[#allocation2 + $0x40] sm:$0x3] %vm24, 0.0
    %36 = vst.msk [vmem:[#allocation2 + $0x48] sm:$0xff] %vm26, 0.0
    %37 = vst.msk [vmem:[#allocation2 + $0x50] sm:$0xff] %vm26, 0.0
    %38 = vst.msk [vmem:[#allocation2 + $0x58] sm:$0x3] %vm24, 0.0
    %39 = vst.msk [vmem:[#allocation2 + $0x60] sm:$0xff] %vm26, 0.0
    %40 = vst.msk [vmem:[#allocation2 + $0x68] sm:$0xff] %vm26, 0.0
    %41 = vst.msk [vmem:[#allocation2 + $0x70] sm:$0x3] %vm24, 0.0
    %42 = vst.msk [vmem:[#allocation2 + $0x78] sm:$0xff] %vm26, 0.0
    %43 = vst.msk [vmem:[#allocation2 + $0x80] sm:$0xff] %vm26, 0.0
    %44 = vst.msk [vmem:[#allocation2 + $0x88] sm:$0x3] %vm24, 0.0
    %45 = vst.msk [vmem:[#allocation2 + $0x90] sm:$0xff] %vm26, 0.0
    %46 = vst.msk [vmem:[#allocation2 + $0x98] sm:$0xff] %vm26, 0.0
    %47 = vst.msk [vmem:[#allocation2 + $0xa0] sm:$0x3] %vm24, 0.0
    %48 = vst.msk [vmem:[#allocation2 + $0xa8] sm:$0xff] %vm26, 0.0
    %49 = vst.msk [vmem:[#allocation2 + $0xb0] sm:$0xff] %vm26, 0.0
    %50 = vst.msk [vmem:[#allocation2 + $0xb8] sm:$0x3] %vm24, 0.0
    %51 = vst.msk [vmem:[#allocation2 + $0xc0] sm:$0xff] %vm26, 0.0
    %52 = vst.msk [vmem:[#allocation2 + $0xc8] sm:$0xff] %vm26, 0.0
    %53 = vst.msk [vmem:[#allocation2 + $0xd0] sm:$0x3] %vm24, 0.0
    %54 = vst.msk [vmem:[#allocation2 + $0xd8] sm:$0xff] %vm26, 0.0
    %55 = vst.msk [vmem:[#allocation2 + $0xe0] sm:$0xff] %vm26, 0.0
    %56 = vst.msk [vmem:[#allocation2 + $0xe8] sm:$0x3] %vm24, 0.0
    %57 = vst.msk [vmem:[#allocation2 + $0xf0] sm:$0xff] %vm26, 0.0
    %58 = vst.msk [vmem:[#allocation2 + $0xf8] sm:$0xff] %vm26, 0.0
    %59 = vst.msk [vmem:[#allocation2 + $0x100] sm:$0x3] %vm24, 0.0
    %60 = vst.msk [vmem:[#allocation2 + $0x108] sm:$0xff] %vm26, 0.0
    %61 = vst.msk [vmem:[#allocation2 + $0x110] sm:$0xff] %vm26, 0.0
    %62 = vst.msk [vmem:[#allocation2 + $0x118] sm:$0x3] %vm24, 0.0
    %63 = vst.msk [vmem:[#allocation2 + $0x120] sm:$0xff] %vm26, 0.0
    %64 = vst.msk [vmem:[#allocation2 + $0x128] sm:$0xff] %vm26, 0.0
    %65 = vst.msk [vmem:[#allocation2 + $0x130] sm:$0x3] %vm24, 0.0
    %66 = vst.msk [vmem:[#allocation2 + $0x138] sm:$0xff] %vm26, 0.0
    %67 = vst.msk [vmem:[#allocation2 + $0x140] sm:$0xff] %vm26, 0.0
    %68 = vst.msk [vmem:[#allocation2 + $0x148] sm:$0x3] %vm24, 0.0
    %69 = vst.msk [vmem:[#allocation2 + $0x150] sm:$0xff] %vm26, 0.0
    %70 = vst.msk [vmem:[#allocation2 + $0x158] sm:$0xff] %vm26, 0.0
    %71 = vst.msk [vmem:[#allocation2 + $0x160] sm:$0x3] %vm24, 0.0
    %72 = vst.msk [vmem:[#allocation2 + $0x168] sm:$0xff] %vm26, 0.0
    %73 = vst.msk [vmem:[#allocation2 + $0x170] sm:$0xff] %vm26, 0.0
    %74 = vst.msk [vmem:[#allocation2 + $0x178] sm:$0x3] %vm24, 0.0
    %75 = vst.msk [vmem:[#allocation2 + $0x180] sm:$0xff] %vm26, 0.0
    %76 = vst.msk [vmem:[#allocation2 + $0x188] sm:$0xff] %vm26, 0.0
    %77 = vst.msk [vmem:[#allocation2 + $0x190] sm:$0x3] %vm24, 0.0
    %78 = vst.msk [vmem:[#allocation2 + $0x198] sm:$0xff] %vm26, 0.0
    %79 = vst.msk [vmem:[#allocation2 + $0x1a0] sm:$0xff] %vm26, 0.0
    %80 = vst.msk [vmem:[#allocation2 + $0x1a8] sm:$0x3] %vm24, 0.0
    %81 = vst.msk [vmem:[#allocation2 + $0x1b0] sm:$0xff] %vm26, 0.0
    %82 = vst.msk [vmem:[#allocation2 + $0x1b8] sm:$0xff] %vm26, 0.0
    %83 = vst.msk [vmem:[#allocation2 + $0x1c0] sm:$0x3] %vm24, 0.0
    %84 = vst.msk [vmem:[#allocation2 + $0x1c8] sm:$0xff] %vm26, 0.0
    %85 = vst.msk [vmem:[#allocation2 + $0x1d0] sm:$0xff] %vm26, 0.0
    %86 = vst.msk [vmem:[#allocation2 + $0x1d8] sm:$0x3] %vm24, 0.0
    %87 = vst.msk [vmem:[#allocation2 + $0x1e0] sm:$0xff] %vm26, 0.0
    %88 = vst.msk [vmem:[#allocation2 + $0x1e8] sm:$0xff] %vm26, 0.0
    %89 = vst.msk [vmem:[#allocation2 + $0x1f0] sm:$0x3] %vm24, 0.0
    %90 = vst.msk [vmem:[#allocation2 + $0x1f8] sm:$0xff] %vm26, 0.0
    %91 = vst.msk [vmem:[#allocation2 + $0x200] sm:$0xff] %vm26, 0.0
    %92 = vst.msk [vmem:[#allocation2 + $0x208] sm:$0x3] %vm24, 0.0
    %93 = vst.msk [vmem:[#allocation2 + $0x210] sm:$0xff] %vm26, 0.0
    %94 = vst.msk [vmem:[#allocation2 + $0x218] sm:$0xff] %vm26, 0.0
    %95 = vst.msk [vmem:[#allocation2 + $0x220] sm:$0x3] %vm24, 0.0
    %96 = vst.msk [vmem:[#allocation2 + $0x228] sm:$0xff] %vm26, 0.0
    %97 = vst.msk [vmem:[#allocation2 + $0x230] sm:$0xff] %vm26, 0.0
    %98 = vst.msk [vmem:[#allocation2 + $0x238] sm:$0x3] %vm24, 0.0
    %99 = vst.msk [vmem:[#allocation2 + $0x240] sm:$0xff] %vm26, 0.0
    %100 = vst.msk [vmem:[#allocation2 + $0x248] sm:$0xff] %vm26, 0.0
    %101 = vst.msk [vmem:[#allocation2 + $0x250] sm:$0x3] %vm24, 0.0
    %102 = vst.msk [vmem:[#allocation2 + $0x258] sm:$0xff] %vm26, 0.0
    %103 = vst.msk [vmem:[#allocation2 + $0x260] sm:$0xff] %vm26, 0.0
    %104 = vst.msk [vmem:[#allocation2 + $0x268] sm:$0x3] %vm24, 0.0
    %105 = vst.msk [vmem:[#allocation2 + $0x270] sm:$0xff] %vm26, 0.0
    %106 = vst.msk [vmem:[#allocation2 + $0x278] sm:$0xff] %vm26, 0.0
    %107 = vst.msk [vmem:[#allocation2 + $0x280] sm:$0x3] %vm24, 0.0
    %108 = vst.msk [vmem:[#allocation2 + $0x288] sm:$0xff] %vm26, 0.0
    %109 = vst.msk [vmem:[#allocation2 + $0x290] sm:$0xff] %vm26, 0.0
    %110 = vst.msk [vmem:[#allocation2 + $0x298] sm:$0x3] %vm24, 0.0
    %111 = vst.msk [vmem:[#allocation2 + $0x2a0] sm:$0xff] %vm26, 0.0
    %112 = vst.msk [vmem:[#allocation2 + $0x2a8] sm:$0xff] %vm26, 0.0
    %113 = vst.msk [vmem:[#allocation2 + $0x2b0] sm:$0x3] %vm24, 0.0
    %114 = vst.msk [vmem:[#allocation2 + $0x2b8] sm:$0xff] %vm26, 0.0
    %115 = vst.msk [vmem:[#allocation2 + $0x2c0] sm:$0xff] %vm26, 0.0
    %116 = vst.msk [vmem:[#allocation2 + $0x2c8] sm:$0x3] %vm24, 0.0
    %117 = vst.msk [vmem:[#allocation2 + $0x2d0] sm:$0xff] %vm26, 0.0
    %118 = vst.msk [vmem:[#allocation2 + $0x2d8] sm:$0xff] %vm26, 0.0
    %119 = vst.msk [vmem:[#allocation2 + $0x2e0] sm:$0x3] %vm24, 0.0
    %120 = vst.msk [vmem:[#allocation2 + $0x2e8] sm:$0xff] %vm26, 0.0
    %121 = vst.msk [vmem:[#allocation2 + $0x2f0] sm:$0xff] %vm26, 0.0
    %122 = vst.msk [vmem:[#allocation2 + $0x2f8] sm:$0x3] %vm24, 0.0
    %123 = vst.msk [vmem:[#allocation2 + $0x300] sm:$0xff] %vm26, 0.0
    %124 = vst.msk [vmem:[#allocation2 + $0x308] sm:$0xff] %vm26, 0.0
    %125 = vst.msk [vmem:[#allocation2 + $0x310] sm:$0x3] %vm24, 0.0
    %126 = vst.msk [vmem:[#allocation2 + $0x318] sm:$0xff] %vm26, 0.0
    %127 = vst.msk [vmem:[#allocation2 + $0x320] sm:$0xff] %vm26, 0.0
    %128 = vst.msk [vmem:[#allocation2 + $0x328] sm:$0x3] %vm24, 0.0
    %129 = vst.msk [vmem:[#allocation2 + $0x330] sm:$0xff] %vm26, 0.0
    %130 = vst.msk [vmem:[#allocation2 + $0x338] sm:$0xff] %vm26, 0.0
    %131 = vst.msk [vmem:[#allocation2 + $0x340] sm:$0x3] %vm24, 0.0
    %132 = vst.msk [vmem:[#allocation2 + $0x348] sm:$0xff] %vm26, 0.0
    %133 = vst.msk [vmem:[#allocation2 + $0x350] sm:$0xff] %vm26, 0.0
    %134 = vst.msk [vmem:[#allocation2 + $0x358] sm:$0x3] %vm24, 0.0
  $region21: #{basic_block_forward.4} parent=0 // pred_fallthru
    _
  %v135 = vld [vmem:[%s0] sm:$0xff]
  %v136 = vld [vmem:[%s0 + $0x8] sm:$0xff]
  %v137 = vld [vmem:[%s0 + $0x10] sm:$0xff]
  %v138 = vld [vmem:[%s0 + $0x18] sm:$0xff]
  %v139 = vld [vmem:[%s0 + $0x20] sm:$0xff]
  %v140 = vld [vmem:[%s0 + $0x28] sm:$0xff]
  %v141 = vld [vmem:[%s0 + $0x30] sm:$0xff]
  %v142 = vld [vmem:[%s0 + $0x38] sm:$0xff]
  %v143 = vld [vmem:[%s0 + $0x40] sm:$0xff]
  %v144 = vld [vmem:[%s0 + $0x48] sm:$0xff]
  %v145 = vld [vmem:[%s0 + $0x50] sm:$0xff]
  %v146 = vld [vmem:[%s0 + $0x58] sm:$0xff]
  %v147 = vld [vmem:[%s0 + $0x60] sm:$0xff]
  %v148 = vld [vmem:[%s0 + $0x68] sm:$0xff]
  %v149 = vld [vmem:[%s0 + $0x70] sm:$0xff]
  %v150 = vld [vmem:[%s0 + $0x78] sm:$0xff]
  %v151 = vld [vmem:[%s0 + $0x80] sm:$0xff]
  %v152 = vld [vmem:[%s0 + $0x88] sm:$0xff]
  %v153 = vld [vmem:[%s0 + $0x90] sm:$0xff]
  %v154 = vld [vmem:[%s0 + $0x98] sm:$0xff]
  %v155 = vld [vmem:[%s0 + $0xa0] sm:$0xff]
  %v156 = vld [vmem:[%s0 + $0xa8] sm:$0xff]
  %v157 = vld [vmem:[%s0 + $0xb0] sm:$0xff]
  %v158 = vld [vmem:[%s0 + $0xb8] sm:$0xff]
  %v159 = vld [vmem:[%s0 + $0xc0] sm:$0xff]
  %v160 = vld [vmem:[%s0 + $0xc8] sm:$0xff]
  %v161 = vld [vmem:[%s0 + $0xd0] sm:$0xff]
  %v162 = vld [vmem:[%s0 + $0xd8] sm:$0xff]
  %v163 = vld [vmem:[%s0 + $0xe0] sm:$0xff]
  %v164 = vld [vmem:[%s0 + $0xe8] sm:$0xff]
  %v165 = vld [vmem:[%s0 + $0xf0] sm:$0xff]
  %v166 = vld [vmem:[%s0 + $0xf8] sm:$0xff]
  %v167 = vld [vmem:[%s0 + $0x100] sm:$0xff]
  %v168 = vld [vmem:[%s0 + $0x108] sm:$0xff]
  %v169 = vld [vmem:[%s0 + $0x110] sm:$0xff]
  %v170 = vld [vmem:[%s0 + $0x118] sm:$0xff]
  %v171 = vld [vmem:[%s0 + $0x120] sm:$0xff]
  %v172 = vld [vmem:[%s0 + $0x128] sm:$0xff]
  %v173 = vld [vmem:[%s0 + $0x130] sm:$0xff]
  %v174 = vld [vmem:[%s0 + $0x138] sm:$0xff]
  %v175 = vld [vmem:[%s0 + $0x140] sm:$0xff]
  %v176 = vld [vmem:[%s0 + $0x148] sm:$0xff]
  %v177 = vld [vmem:[%s0 + $0x150] sm:$0xff]
  %v178 = vld [vmem:[%s0 + $0x158] sm:$0xff]
  %v179 = vld [vmem:[%s0 + $0x160] sm:$0xff]
  %v180 = vld [vmem:[%s0 + $0x168] sm:$0xff]
  %v181 = vld [vmem:[%s0 + $0x170] sm:$0xff]
  %v182 = vld [vmem:[%s0 + $0x178] sm:$0xff]
  %v183 = vld [vmem:[%s0 + $0x180] sm:$0xff]
  %v184 = vld [vmem:[%s0 + $0x188] sm:$0xff]
  %v185 = vld [vmem:[%s0 + $0x190] sm:$0xff]
  %v186 = vld [vmem:[%s0 + $0x198] sm:$0xff]
  %v187 = vld [vmem:[%s0 + $0x1a0] sm:$0xff]
  %v188 = vld [vmem:[%s0 + $0x1a8] sm:$0xff]
  %v189 = vld [vmem:[%s0 + $0x1b0] sm:$0xff]
  %v190 = vld [vmem:[%s0 + $0x1b8] sm:$0xff]
  %v191 = vld [vmem:[%s0 + $0x1c0] sm:$0xff]
  %v192 = vld [vmem:[%s0 + $0x1c8] sm:$0xff]
  %v193 = vld [vmem:[%s0 + $0x1d0] sm:$0xff]
  %v194 = vld [vmem:[%s0 + $0x1d8] sm:$0xff]
  %v195 = vld [vmem:[%s0 + $0x1e0] sm:$0xff]
  %v196 = vld [vmem:[%s0 + $0x1e8] sm:$0xff]
  %v197 = vld [vmem:[%s0 + $0x1f0] sm:$0xff]
  %v198 = vld [vmem:[%s0 + $0x1f8] sm:$0xff]
  %v199 = vld [vmem:[%s1] sm:$0x1]
  %v201 = vperm.slane %v199, 0
  %v203 = vmul.f32 %v135, %v201
  %v204 = vmul.f32 %v136, %v201
  %v205 = vmul.f32 %v137, %v201
  %v206 = vmul.f32 %v138, %v201
  %v207 = vmul.f32 %v139, %v201
  %v208 = vmul.f32 %v140, %v201
  %v209 = vmul.f32 %v141, %v201
  %v210 = vmul.f32 %v142, %v201
  %v211 = vmul.f32 %v143, %v201
  %v212 = vmul.f32 %v144, %v201
  %v213 = vmul.f32 %v145, %v201
  %v214 = vmul.f32 %v146, %v201
  %v215 = vmul.f32 %v147, %v201
  %v216 = vmul.f32 %v148, %v201
  %v217 = vmul.f32 %v149, %v201
  %v218 = vmul.f32 %v150, %v201
  %v219 = vmul.f32 %v151, %v201
  %v220 = vmul.f32 %v152, %v201
  %v221 = vmul.f32 %v153, %v201
  %v222 = vmul.f32 %v154, %v201
  %v223 = vmul.f32 %v155, %v201
  %v224 = vmul.f32 %v156, %v201
  %v225 = vmul.f32 %v157, %v201
  %v226 = vmul.f32 %v158, %v201
  %v227 = vmul.f32 %v159, %v201
  %v228 = vmul.f32 %v160, %v201
  %v229 = vmul.f32 %v161, %v201
  %v230 = vmul.f32 %v162, %v201
  %v231 = vmul.f32 %v163, %v201
  %v232 = vmul.f32 %v164, %v201
  %v233 = vmul.f32 %v165, %v201
  %v234 = vmul.f32 %v166, %v201
  %v235 = vmul.f32 %v167, %v201
  %v236 = vmul.f32 %v168, %v201
  %v237 = vmul.f32 %v169, %v201
  %v238 = vmul.f32 %v170, %v201
  %v239 = vmul.f32 %v171, %v201
  %v240 = vmul.f32 %v172, %v201
  %v241 = vmul.f32 %v173, %v201
  %v242 = vmul.f32 %v174, %v201
  %v243 = vmul.f32 %v175, %v201
  %v244 = vmul.f32 %v176, %v201
  %v245 = vmul.f32 %v177, %v201
  %v246 = vmul.f32 %v178, %v201
  %v247 = vmul.f32 %v179, %v201
  %v248 = vmul.f32 %v180, %v201
  %v249 = vmul.f32 %v181, %v201
  %v250 = vmul.f32 %v182, %v201
  %v251 = vmul.f32 %v183, %v201
  %v252 = vmul.f32 %v184, %v201
  %v253 = vmul.f32 %v185, %v201
  %v254 = vmul.f32 %v186, %v201
  %v255 = vmul.f32 %v187, %v201
  %v256 = vmul.f32 %v188, %v201
  %v257 = vmul.f32 %v189, %v201
  %v258 = vmul.f32 %v190, %v201
  %v259 = vmul.f32 %v191, %v201
  %v260 = vmul.f32 %v192, %v201
  %v261 = vmul.f32 %v193, %v201
  %v262 = vmul.f32 %v194, %v201
  %v263 = vmul.f32 %v195, %v201
  %v264 = vmul.f32 %v196, %v201
  %v265 = vmul.f32 %v197, %v201
  %v266 = vmul.f32 %v198, %v201
  %v267 = vld [vmem:[%s2] sm:$0x1]
  %v269 = vperm.slane %v267, 0
  %v271 = vadd.f32 %v203, %v269
  %v272 = vadd.f32 %v204, %v269
  %v273 = vadd.f32 %v205, %v269
  %v274 = vadd.f32 %v206, %v269
  %v275 = vadd.f32 %v207, %v269
  %v276 = vadd.f32 %v208, %v269
  %v277 = vadd.f32 %v209, %v269
  %v278 = vadd.f32 %v210, %v269
  %v279 = vadd.f32 %v211, %v269
  %v280 = vadd.f32 %v212, %v269
  %v281 = vadd.f32 %v213, %v269
  %v282 = vadd.f32 %v214, %v269
  %v283 = vadd.f32 %v215, %v269
  %v284 = vadd.f32 %v216, %v269
  %v285 = vadd.f32 %v217, %v269
  %v286 = vadd.f32 %v218, %v269
  %v287 = vadd.f32 %v219, %v269
  %v288 = vadd.f32 %v220, %v269
  %v289 = vadd.f32 %v221, %v269
  %v290 = vadd.f32 %v222, %v269
  %v291 = vadd.f32 %v223, %v269
  %v292 = vadd.f32 %v224, %v269
  %v293 = vadd.f32 %v225, %v269
  %v294 = vadd.f32 %v226, %v269
  %v295 = vadd.f32 %v227, %v269
  %v296 = vadd.f32 %v228, %v269
  %v297 = vadd.f32 %v229, %v269
  %v298 = vadd.f32 %v230, %v269
  %v299 = vadd.f32 %v231, %v269
  %v300 = vadd.f32 %v232, %v269
  %v301 = vadd.f32 %v233, %v269
  %v302 = vadd.f32 %v234, %v269
  %v303 = vadd.f32 %v235, %v269
  %v304 = vadd.f32 %v236, %v269
  %v305 = vadd.f32 %v237, %v269
  %v306 = vadd.f32 %v238, %v269
  %v307 = vadd.f32 %v239, %v269
  %v308 = vadd.f32 %v240, %v269
  %v309 = vadd.f32 %v241, %v269
  %v310 = vadd.f32 %v242, %v269
  %v311 = vadd.f32 %v243, %v269
  %v312 = vadd.f32 %v244, %v269
  %v313 = vadd.f32 %v245, %v269
  %v314 = vadd.f32 %v246, %v269
  %v315 = vadd.f32 %v247, %v269
  %v316 = vadd.f32 %v248, %v269
  %v317 = vadd.f32 %v249, %v269
  %v318 = vadd.f32 %v250, %v269
  %v319 = vadd.f32 %v251, %v269
  %v320 = vadd.f32 %v252, %v269
  %v321 = vadd.f32 %v253, %v269
  %v322 = vadd.f32 %v254, %v269
  %v323 = vadd.f32 %v255, %v269
  %v324 = vadd.f32 %v256, %v269
  %v325 = vadd.f32 %v257, %v269
  %v326 = vadd.f32 %v258, %v269
  %v327 = vadd.f32 %v259, %v269
  %v328 = vadd.f32 %v260, %v269
  %v329 = vadd.f32 %v261, %v269
  %v330 = vadd.f32 %v262, %v269
  %v331 = vadd.f32 %v263, %v269
  %v332 = vadd.f32 %v264, %v269
  %v333 = vadd.f32 %v265, %v269
  %v334 = vadd.f32 %v266, %v269
  %v335 = vmax.f32 %v271, 0.0
  %v336 = vmax.f32 %v272, 0.0
  %v337 = vmax.f32 %v273, 0.0
  %v338 = vmax.f32 %v274, 0.0
  %v339 = vmax.f32 %v275, 0.0
  %v340 = vmax.f32 %v276, 0.0
  %v341 = vmax.f32 %v277, 0.0
  %v342 = vmax.f32 %v278, 0.0
  %v343 = vmax.f32 %v279, 0.0
  %v344 = vmax.f32 %v280, 0.0
  %v345 = vmax.f32 %v281, 0.0
  %v346 = vmax.f32 %v282, 0.0
  %v347 = vmax.f32 %v283, 0.0
  %v348 = vmax.f32 %v284, 0.0
  %v349 = vmax.f32 %v285, 0.0
  %v350 = vmax.f32 %v286, 0.0
  %v351 = vmax.f32 %v287, 0.0
  %v352 = vmax.f32 %v288, 0.0
  %v353 = vmax.f32 %v289, 0.0
  %v354 = vmax.f32 %v290, 0.0
  %v355 = vmax.f32 %v291, 0.0
  %v356 = vmax.f32 %v292, 0.0
  %v357 = vmax.f32 %v293, 0.0
  %v358 = vmax.f32 %v294, 0.0
  %v359 = vmax.f32 %v295, 0.0
  %v360 = vmax.f32 %v296, 0.0
  %v361 = vmax.f32 %v297, 0.0
  %v362 = vmax.f32 %v298, 0.0
  %v363 = vmax.f32 %v299, 0.0
  %v364 = vmax.f32 %v300, 0.0
  %v365 = vmax.f32 %v301, 0.0
  %v366 = vmax.f32 %v302, 0.0
  %v367 = vmax.f32 %v303, 0.0
  %v368 = vmax.f32 %v304, 0.0
  %v369 = vmax.f32 %v305, 0.0
  %v370 = vmax.f32 %v306, 0.0
  %v371 = vmax.f32 %v307, 0.0
  %v372 = vmax.f32 %v308, 0.0
  %v373 = vmax.f32 %v309, 0.0
  %v374 = vmax.f32 %v310, 0.0
  %v375 = vmax.f32 %v311, 0.0
  %v376 = vmax.f32 %v312, 0.0
  %v377 = vmax.f32 %v313, 0.0
  %v378 = vmax.f32 %v314, 0.0
  %v379 = vmax.f32 %v315, 0.0
  %v380 = vmax.f32 %v316, 0.0
  %v381 = vmax.f32 %v317, 0.0
  %v382 = vmax.f32 %v318, 0.0
  %v383 = vmax.f32 %v319, 0.0
  %v384 = vmax.f32 %v320, 0.0
  %v385 = vmax.f32 %v321, 0.0
  %v386 = vmax.f32 %v322, 0.0
  %v387 = vmax.f32 %v323, 0.0
  %v388 = vmax.f32 %v324, 0.0
  %v389 = vmax.f32 %v325, 0.0
  %v390 = vmax.f32 %v326, 0.0
  %v391 = vmax.f32 %v327, 0.0
  %v392 = vmax.f32 %v328, 0.0
  %v393 = vmax.f32 %v329, 0.0
  %v394 = vmax.f32 %v330, 0.0
  %v395 = vmax.f32 %v331, 0.0
  %v396 = vmax.f32 %v332, 0.0
  %v397 = vmax.f32 %v333, 0.0
  %v398 = vmax.f32 %v334, 0.0
  %s399 = scalar_lea.vmem [#allocation2], 24
  %vm400 = vcmask 64512
  %401 = vst.msk [vmem:[%s399 + $0x1] sm:$0xff] %vm400, %v335
  %402 = vst.msk [vmem:[%s399 + $0x9] sm:$0xff] %vm400, %v336
  %403 = vst.msk [vmem:[%s399 + $0x19] sm:$0xff] %vm400, %v337
  %404 = vst.msk [vmem:[%s399 + $0x21] sm:$0xff] %vm400, %v338
  %405 = vst.msk [vmem:[%s399 + $0x31] sm:$0xff] %vm400, %v339
  %406 = vst.msk [vmem:[%s399 + $0x39] sm:$0xff] %vm400, %v340
  %407 = vst.msk [vmem:[%s399 + $0x49] sm:$0xff] %vm400, %v341
  %408 = vst.msk [vmem:[%s399 + $0x51] sm:$0xff] %vm400, %v342
  %409 = vst.msk [vmem:[%s399 + $0x61] sm:$0xff] %vm400, %v343
  %410 = vst.msk [vmem:[%s399 + $0x69] sm:$0xff] %vm400, %v344
  %411 = vst.msk [vmem:[%s399 + $0x79] sm:$0xff] %vm400, %v345
  %412 = vst.msk [vmem:[%s399 + $0x81] sm:$0xff] %vm400, %v346
  %413 = vst.msk [vmem:[%s399 + $0x91] sm:$0xff] %vm400, %v347
  %414 = vst.msk [vmem:[%s399 + $0x99] sm:$0xff] %vm400, %v348
  %415 = vst.msk [vmem:[%s399 + $0xa9] sm:$0xff] %vm400, %v349
  %416 = vst.msk [vmem:[%s399 + $0xb1] sm:$0xff] %vm400, %v350
  %417 = vst.msk [vmem:[%s399 + $0xc1] sm:$0xff] %vm400, %v351
  %418 = vst.msk [vmem:[%s399 + $0xc9] sm:$0xff] %vm400, %v352
  %419 = vst.msk [vmem:[%s399 + $0xd9] sm:$0xff] %vm400, %v353
  %420 = vst.msk [vmem:[%s399 + $0xe1] sm:$0xff] %vm400, %v354
  %421 = vst.msk [vmem:[%s399 + $0xf1] sm:$0xff] %vm400, %v355
  %422 = vst.msk [vmem:[%s399 + $0xf9] sm:$0xff] %vm400, %v356
  %423 = vst.msk [vmem:[%s399 + $0x109] sm:$0xff] %vm400, %v357
  %424 = vst.msk [vmem:[%s399 + $0x111] sm:$0xff] %vm400, %v358
  %425 = vst.msk [vmem:[%s399 + $0x121] sm:$0xff] %vm400, %v359
  %426 = vst.msk [vmem:[%s399 + $0x129] sm:$0xff] %vm400, %v360
  %427 = vst.msk [vmem:[%s399 + $0x139] sm:$0xff] %vm400, %v361
  %428 = vst.msk [vmem:[%s399 + $0x141] sm:$0xff] %vm400, %v362
  %429 = vst.msk [vmem:[%s399 + $0x151] sm:$0xff] %vm400, %v363
  %430 = vst.msk [vmem:[%s399 + $0x159] sm:$0xff] %vm400, %v364
  %431 = vst.msk [vmem:[%s399 + $0x169] sm:$0xff] %vm400, %v365
  %432 = vst.msk [vmem:[%s399 + $0x171] sm:$0xff] %vm400, %v366
  %433 = vst.msk [vmem:[%s399 + $0x1b1] sm:$0xff] %vm400, %v367
  %434 = vst.msk [vmem:[%s399 + $0x1b9] sm:$0xff] %vm400, %v368
  %435 = vst.msk [vmem:[%s399 + $0x1c9] sm:$0xff] %vm400, %v369
  %436 = vst.msk [vmem:[%s399 + $0x1d1] sm:$0xff] %vm400, %v370
  %437 = vst.msk [vmem:[%s399 + $0x1e1] sm:$0xff] %vm400, %v371
  %438 = vst.msk [vmem:[%s399 + $0x1e9] sm:$0xff] %vm400, %v372
  %439 = vst.msk [vmem:[%s399 + $0x1f9] sm:$0xff] %vm400, %v373
  %440 = vst.msk [vmem:[%s399 + $0x201] sm:$0xff] %vm400, %v374
  %441 = vst.msk [vmem:[%s399 + $0x211] sm:$0xff] %vm400, %v375
  %442 = vst.msk [vmem:[%s399 + $0x219] sm:$0xff] %vm400, %v376
  %443 = vst.msk [vmem:[%s399 + $0x229] sm:$0xff] %vm400, %v377
  %444 = vst.msk [vmem:[%s399 + $0x231] sm:$0xff] %vm400, %v378
  %445 = vst.msk [vmem:[%s399 + $0x241] sm:$0xff] %vm400, %v379
  %446 = vst.msk [vmem:[%s399 + $0x249] sm:$0xff] %vm400, %v380
  %447 = vst.msk [vmem:[%s399 + $0x259] sm:$0xff] %vm400, %v381
  %448 = vst.msk [vmem:[%s399 + $0x261] sm:$0xff] %vm400, %v382
  %449 = vst.msk [vmem:[%s399 + $0x271] sm:$0xff] %vm400, %v383
  %450 = vst.msk [vmem:[%s399 + $0x279] sm:$0xff] %vm400, %v384
  %451 = vst.msk [vmem:[%s399 + $0x289] sm:$0xff] %vm400, %v385
  %452 = vst.msk [vmem:[%s399 + $0x291] sm:$0xff] %vm400, %v386
  %453 = vst.msk [vmem:[%s399 + $0x2a1] sm:$0xff] %vm400, %v387
  %454 = vst.msk [vmem:[%s399 + $0x2a9] sm:$0xff] %vm400, %v388
  %455 = vst.msk [vmem:[%s399 + $0x2b9] sm:$0xff] %vm400, %v389
  %456 = vst.msk [vmem:[%s399 + $0x2c1] sm:$0xff] %vm400, %v390
  %457 = vst.msk [vmem:[%s399 + $0x2d1] sm:$0xff] %vm400, %v391
  %458 = vst.msk [vmem:[%s399 + $0x2d9] sm:$0xff] %vm400, %v392
  %459 = vst.msk [vmem:[%s399 + $0x2e9] sm:$0xff] %vm400, %v393
  %460 = vst.msk [vmem:[%s399 + $0x2f1] sm:$0xff] %vm400, %v394
  %461 = vst.msk [vmem:[%s399 + $0x301] sm:$0xff] %vm400, %v395
  %462 = vst.msk [vmem:[%s399 + $0x309] sm:$0xff] %vm400, %v396
  %463 = vst.msk [vmem:[%s399 + $0x319] sm:$0xff] %vm400, %v397
  %464 = vst.msk [vmem:[%s399 + $0x321] sm:$0xff] %vm400, %v398
  %v465 = vld [vmem:[#allocation2] sm:$0xff]
  %v466 = vld [vmem:[#allocation2 + $0x8] sm:$0xff]
  %v467 = vld [vmem:[#allocation2 + $0x18] sm:$0xff]
  %v468 = vld [vmem:[#allocation2 + $0x20] sm:$0xff]
  %v469 = vld [vmem:[#allocation2 + $0x30] sm:$0xff]
  %v470 = vld [vmem:[#allocation2 + $0x38] sm:$0xff]
  %v471 = vld [vmem:[#allocation2 + $0x48] sm:$0xff]
  %v472 = vld [vmem:[#allocation2 + $0x50] sm:$0xff]
  %v473 = vld [vmem:[#allocation2 + $0x60] sm:$0xff]
  %v474 = vld [vmem:[#allocation2 + $0x68] sm:$0xff]
  %v475 = vld [vmem:[#allocation2 + $0x78] sm:$0xff]
  %v476 = vld [vmem:[#allocation2 + $0x80] sm:$0xff]
  %v477 = vld [vmem:[#allocation2 + $0x90] sm:$0xff]
  %v478 = vld [vmem:[#allocation2 + $0x98] sm:$0xff]
  %v479 = vld [vmem:[#allocation2 + $0xa8] sm:$0xff]
  %v480 = vld [vmem:[#allocation2 + $0xb0] sm:$0xff]
  %v481 = vld [vmem:[#allocation2 + $0xc0] sm:$0xff]
  %v482 = vld [vmem:[#allocation2 + $0xc8] sm:$0xff]
  %v483 = vld [vmem:[#allocation2 + $0xd8] sm:$0xff]
  %v484 = vld [vmem:[#allocation2 + $0xe0] sm:$0xff]
  %v485 = vld [vmem:[#allocation2 + $0xf0] sm:$0xff]
  %v486 = vld [vmem:[#allocation2 + $0xf8] sm:$0xff]
  %v487 = vld [vmem:[#allocation2 + $0x108] sm:$0xff]
  %v488 = vld [vmem:[#allocation2 + $0x110] sm:$0xff]
  %v489 = vld [vmem:[#allocation2 + $0x120] sm:$0xff]
  %v490 = vld [vmem:[#allocation2 + $0x128] sm:$0xff]
  %v491 = vld [vmem:[#allocation2 + $0x138] sm:$0xff]
  %v492 = vld [vmem:[#allocation2 + $0x140] sm:$0xff]
  %v493 = vld [vmem:[#allocation2 + $0x150] sm:$0xff]
  %v494 = vld [vmem:[#allocation2 + $0x158] sm:$0xff]
  %v495 = vld [vmem:[#allocation2 + $0x168] sm:$0xff]
  %v496 = vld [vmem:[#allocation2 + $0x170] sm:$0xff]
  %v497 = vld [vmem:[#allocation2 + $0x1b0] sm:$0xff]
  %v498 = vld [vmem:[#allocation2 + $0x1b8] sm:$0xff]
  %v499 = vld [vmem:[#allocation2 + $0x1c8] sm:$0xff]
  %v500 = vld [vmem:[#allocation2 + $0x1d0] sm:$0xff]
  %v501 = vld [vmem:[#allocation2 + $0x1e0] sm:$0xff]
  %v502 = vld [vmem:[#allocation2 + $0x1e8] sm:$0xff]
  %v503 = vld [vmem:[#allocation2 + $0x1f8] sm:$0xff]
  %v504 = vld [vmem:[#allocation2 + $0x200] sm:$0xff]
  %v505 = vld [vmem:[#allocation2 + $0x210] sm:$0xff]
  %v506 = vld [vmem:[#allocation2 + $0x218] sm:$0xff]
  %v507 = vld [vmem:[#allocation2 + $0x228] sm:$0xff]
  %v508 = vld [vmem:[#allocation2 + $0x230] sm:$0xff]
  %v509 = vld [vmem:[#allocation2 + $0x240] sm:$0xff]
  %v510 = vld [vmem:[#allocation2 + $0x248] sm:$0xff]
  %v511 = vld [vmem:[#allocation2 + $0x258] sm:$0xff]
  %v512 = vld [vmem:[#allocation2 + $0x260] sm:$0xff]
  %v513 = vld [vmem:[#allocation2 + $0x270] sm:$0xff]
  %v514 = vld [vmem:[#allocation2 + $0x278] sm:$0xff]
  %v515 = vld [vmem:[#allocation2 + $0x288] sm:$0xff]
  %v516 = vld [vmem:[#allocation2 + $0x290] sm:$0xff]
  %v517 = vld [vmem:[#allocation2 + $0x2a0] sm:$0xff]
  %v518 = vld [vmem:[#allocation2 + $0x2a8] sm:$0xff]
  %v519 = vld [vmem:[#allocation2 + $0x2b8] sm:$0xff]
  %v520 = vld [vmem:[#allocation2 + $0x2c0] sm:$0xff]
  %v521 = vld [vmem:[#allocation2 + $0x2d0] sm:$0xff]
  %v522 = vld [vmem:[#allocation2 + $0x2d8] sm:$0xff]
  %v523 = vld [vmem:[#allocation2 + $0x2e8] sm:$0xff]
  %v524 = vld [vmem:[#allocation2 + $0x2f0] sm:$0xff]
  %v525 = vld [vmem:[#allocation2 + $0x300] sm:$0xff]
  %v526 = vld [vmem:[#allocation2 + $0x308] sm:$0xff]
  %v527 = vld [vmem:[#allocation2 + $0x318] sm:$0xff]
  %v528 = vld [vmem:[#allocation2 + $0x320] sm:$0xff]
  %v529 = vpack.c.bf16 %v465, %v465
  %v530 = vpack.c.bf16 %v466, %v466
  %v531 = vpack.c.bf16 %v467, %v467
  %v532 = vpack.c.bf16 %v468, %v468
  %v533 = vpack.c.bf16 %v469, %v469
  %v534 = vpack.c.bf16 %v470, %v470
  %v535 = vpack.c.bf16 %v471, %v471
  %v536 = vpack.c.bf16 %v472, %v472
  %v537 = vpack.c.bf16 %v473, %v473
  %v538 = vpack.c.bf16 %v474, %v474
  %v539 = vpack.c.bf16 %v475, %v475
  %v540 = vpack.c.bf16 %v476, %v476
  %v541 = vpack.c.bf16 %v477, %v477
  %v542 = vpack.c.bf16 %v478, %v478
  %v543 = vpack.c.bf16 %v479, %v479
  %v544 = vpack.c.bf16 %v480, %v480
  %v545 = vpack.c.bf16 %v481, %v481
  %v546 = vpack.c.bf16 %v482, %v482
  %v547 = vpack.c.bf16 %v483, %v483
  %v548 = vpack.c.bf16 %v484, %v484
  %v549 = vpack.c.bf16 %v485, %v485
  %v550 = vpack.c.bf16 %v486, %v486
  %v551 = vpack.c.bf16 %v487, %v487
  %v552 = vpack.c.bf16 %v488, %v488
  %v553 = vpack.c.bf16 %v489, %v489
  %v554 = vpack.c.bf16 %v490, %v490
  %v555 = vpack.c.bf16 %v491, %v491
  %v556 = vpack.c.bf16 %v492, %v492
  %v557 = vpack.c.bf16 %v493, %v493
  %v558 = vpack.c.bf16 %v494, %v494
  %v559 = vpack.c.bf16 %v495, %v495
  %v560 = vpack.c.bf16 %v496, %v496
  %v561 = vpack.c.bf16 %v497, %v497
  %v562 = vpack.c.bf16 %v498, %v498
  %v563 = vpack.c.bf16 %v499, %v499
  %v564 = vpack.c.bf16 %v500, %v500
  %v565 = vpack.c.bf16 %v501, %v501
  %v566 = vpack.c.bf16 %v502, %v502
  %v567 = vpack.c.bf16 %v503, %v503
  %v568 = vpack.c.bf16 %v504, %v504
  %v569 = vpack.c.bf16 %v505, %v505
  %v570 = vpack.c.bf16 %v506, %v506
  %v571 = vpack.c.bf16 %v507, %v507
  %v572 = vpack.c.bf16 %v508, %v508
  %v573 = vpack.c.bf16 %v509, %v509
  %v574 = vpack.c.bf16 %v510, %v510
  %v575 = vpack.c.bf16 %v511, %v511
  %v576 = vpack.c.bf16 %v512, %v512
  %v577 = vpack.c.bf16 %v513, %v513
  %v578 = vpack.c.bf16 %v514, %v514
  %v579 = vpack.c.bf16 %v515, %v515
  %v580 = vpack.c.bf16 %v516, %v516
  %v581 = vpack.c.bf16 %v517, %v517
  %v582 = vpack.c.bf16 %v518, %v518
  %v583 = vpack.c.bf16 %v519, %v519
  %v584 = vpack.c.bf16 %v520, %v520
  %v585 = vpack.c.bf16 %v521, %v521
  %v586 = vpack.c.bf16 %v522, %v522
  %v587 = vpack.c.bf16 %v523, %v523
  %v588 = vpack.c.bf16 %v524, %v524
  %v589 = vpack.c.bf16 %v525, %v525
  %v590 = vpack.c.bf16 %v526, %v526
  %v591 = vpack.c.bf16 %v527, %v527
  %v592 = vpack.c.bf16 %v528, %v528
  %v593 = vld [vmem:[#allocation2 + $0x1] sm:$0xff]
  %v594 = vld [vmem:[#allocation2 + $0x9] sm:$0xff]
  %v595 = vld [vmem:[#allocation2 + $0x19] sm:$0xff]
  %v596 = vld [vmem:[#allocation2 + $0x21] sm:$0xff]
  %v597 = vld [vmem:[#allocation2 + $0x31] sm:$0xff]
  %v598 = vld [vmem:[#allocation2 + $0x39] sm:$0xff]
  %v599 = vld [vmem:[#allocation2 + $0x49] sm:$0xff]
  %v600 = vld [vmem:[#allocation2 + $0x51] sm:$0xff]
  %v601 = vld [vmem:[#allocation2 + $0x61] sm:$0xff]
  %v602 = vld [vmem:[#allocation2 + $0x69] sm:$0xff]
  %v603 = vld [vmem:[#allocation2 + $0x79] sm:$0xff]
  %v604 = vld [vmem:[#allocation2 + $0x81] sm:$0xff]
  %v605 = vld [vmem:[#allocation2 + $0x91] sm:$0xff]
  %v606 = vld [vmem:[#allocation2 + $0x99] sm:$0xff]
  %v607 = vld [vmem:[#allocation2 + $0xa9] sm:$0xff]
  %v608 = vld [vmem:[#allocation2 + $0xb1] sm:$0xff]
  %v609 = vld [vmem:[#allocation2 + $0xc1] sm:$0xff]
  %v610 = vld [vmem:[#allocation2 + $0xc9] sm:$0xff]
  %v611 = vld [vmem:[#allocation2 + $0xd9] sm:$0xff]
  %v612 = vld [vmem:[#allocation2 + $0xe1] sm:$0xff]
  %v613 = vld [vmem:[#allocation2 + $0xf1] sm:$0xff]
  %v614 = vld [vmem:[#allocation2 + $0xf9] sm:$0xff]
  %v615 = vld [vmem:[#allocation2 + $0x109] sm:$0xff]
  %v616 = vld [vmem:[#allocation2 + $0x111] sm:$0xff]
  %v617 = vld [vmem:[#allocation2 + $0x121] sm:$0xff]
  %v618 = vld [vmem:[#allocation2 + $0x129] sm:$0xff]
  %v619 = vld [vmem:[#allocation2 + $0x139] sm:$0xff]
  %v620 = vld [vmem:[#allocation2 + $0x141] sm:$0xff]
  %v621 = vld [vmem:[#allocation2 + $0x151] sm:$0xff]
  %v622 = vld [vmem:[#allocation2 + $0x159] sm:$0xff]
  %v623 = vld [vmem:[#allocation2 + $0x169] sm:$0xff]
  %v624 = vld [vmem:[#allocation2 + $0x171] sm:$0xff]
  %v625 = vld [vmem:[#allocation2 + $0x1b1] sm:$0xff]
  %v626 = vld [vmem:[#allocation2 + $0x1b9] sm:$0xff]
  %v627 = vld [vmem:[#allocation2 + $0x1c9] sm:$0xff]
  %v628 = vld [vmem:[#allocation2 + $0x1d1] sm:$0xff]
  %v629 = vld [vmem:[#allocation2 + $0x1e1] sm:$0xff]
  %v630 = vld [vmem:[#allocation2 + $0x1e9] sm:$0xff]
  %v631 = vld [vmem:[#allocation2 + $0x1f9] sm:$0xff]
  %v632 = vld [vmem:[#allocation2 + $0x201] sm:$0xff]
  %v633 = vld [vmem:[#allocation2 + $0x211] sm:$0xff]
  %v634 = vld [vmem:[#allocation2 + $0x219] sm:$0xff]
  %v635 = vld [vmem:[#allocation2 + $0x229] sm:$0xff]
  %v636 = vld [vmem:[#allocation2 + $0x231] sm:$0xff]
  %v637 = vld [vmem:[#allocation2 + $0x241] sm:$0xff]
  %v638 = vld [vmem:[#allocation2 + $0x249] sm:$0xff]
  %v639 = vld [vmem:[#allocation2 + $0x259] sm:$0xff]
  %v640 = vld [vmem:[#allocation2 + $0x261] sm:$0xff]
  %v641 = vld [vmem:[#allocation2 + $0x271] sm:$0xff]
  %v642 = vld [vmem:[#allocation2 + $0x279] sm:$0xff]
  %v643 = vld [vmem:[#allocation2 + $0x289] sm:$0xff]
  %v644 = vld [vmem:[#allocation2 + $0x291] sm:$0xff]
  %v645 = vld [vmem:[#allocation2 + $0x2a1] sm:$0xff]
  %v646 = vld [vmem:[#allocation2 + $0x2a9] sm:$0xff]
  %v647 = vld [vmem:[#allocation2 + $0x2b9] sm:$0xff]
  %v648 = vld [vmem:[#allocation2 + $0x2c1] sm:$0xff]
  %v649 = vld [vmem:[#allocation2 + $0x2d1] sm:$0xff]
  %v650 = vld [vmem:[#allocation2 + $0x2d9] sm:$0xff]
  %v651 = vld [vmem:[#allocation2 + $0x2e9] sm:$0xff]
  %v652 = vld [vmem:[#allocation2 + $0x2f1] sm:$0xff]
  %v653 = vld [vmem:[#allocation2 + $0x301] sm:$0xff]
  %v654 = vld [vmem:[#allocation2 + $0x309] sm:$0xff]
  %v655 = vld [vmem:[#allocation2 + $0x319] sm:$0xff]
  %v656 = vld [vmem:[#allocation2 + $0x321] sm:$0xff]
  %v657 = vpack.c.bf16 %v593, %v593
  %v658 = vpack.c.bf16 %v594, %v594
  %v659 = vpack.c.bf16 %v595, %v595
  %v660 = vpack.c.bf16 %v596, %v596
  %v661 = vpack.c.bf16 %v597, %v597
  %v662 = vpack.c.bf16 %v598, %v598
  %v663 = vpack.c.bf16 %v599, %v599
  %v664 = vpack.c.bf16 %v600, %v600
  %v665 = vpack.c.bf16 %v601, %v601
  %v666 = vpack.c.bf16 %v602, %v602
  %v667 = vpack.c.bf16 %v603, %v603
  %v668 = vpack.c.bf16 %v604, %v604
  %v669 = vpack.c.bf16 %v605, %v605
  %v670 = vpack.c.bf16 %v606, %v606
  %v671 = vpack.c.bf16 %v607, %v607
  %v672 = vpack.c.bf16 %v608, %v608
  %v673 = vpack.c.bf16 %v609, %v609
  %v674 = vpack.c.bf16 %v610, %v610
  %v675 = vpack.c.bf16 %v611, %v611
  %v676 = vpack.c.bf16 %v612, %v612
  %v677 = vpack.c.bf16 %v613, %v613
  %v678 = vpack.c.bf16 %v614, %v614
  %v679 = vpack.c.bf16 %v615, %v615
  %v680 = vpack.c.bf16 %v616, %v616
  %v681 = vpack.c.bf16 %v617, %v617
  %v682 = vpack.c.bf16 %v618, %v618
  %v683 = vpack.c.bf16 %v619, %v619
  %v684 = vpack.c.bf16 %v620, %v620
  %v685 = vpack.c.bf16 %v621, %v621
  %v686 = vpack.c.bf16 %v622, %v622
  %v687 = vpack.c.bf16 %v623, %v623
  %v688 = vpack.c.bf16 %v624, %v624
  %v689 = vpack.c.bf16 %v625, %v625
  %v690 = vpack.c.bf16 %v626, %v626
  %v691 = vpack.c.bf16 %v627, %v627
  %v692 = vpack.c.bf16 %v628, %v628
  %v693 = vpack.c.bf16 %v629, %v629
  %v694 = vpack.c.bf16 %v630, %v630
  %v695 = vpack.c.bf16 %v631, %v631
  %v696 = vpack.c.bf16 %v632, %v632
  %v697 = vpack.c.bf16 %v633, %v633
  %v698 = vpack.c.bf16 %v634, %v634
  %v699 = vpack.c.bf16 %v635, %v635
  %v700 = vpack.c.bf16 %v636, %v636
  %v701 = vpack.c.bf16 %v637, %v637
  %v702 = vpack.c.bf16 %v638, %v638
  %v703 = vpack.c.bf16 %v639, %v639
  %v704 = vpack.c.bf16 %v640, %v640
  %v705 = vpack.c.bf16 %v641, %v641
  %v706 = vpack.c.bf16 %v642, %v642
  %v707 = vpack.c.bf16 %v643, %v643
  %v708 = vpack.c.bf16 %v644, %v644
  %v709 = vpack.c.bf16 %v645, %v645
  %v710 = vpack.c.bf16 %v646, %v646
  %v711 = vpack.c.bf16 %v647, %v647
  %v712 = vpack.c.bf16 %v648, %v648
  %v713 = vpack.c.bf16 %v649, %v649
  %v714 = vpack.c.bf16 %v650, %v650
  %v715 = vpack.c.bf16 %v651, %v651
  %v716 = vpack.c.bf16 %v652, %v652
  %v717 = vpack.c.bf16 %v653, %v653
  %v718 = vpack.c.bf16 %v654, %v654
  %v719 = vpack.c.bf16 %v655, %v655
  %v720 = vpack.c.bf16 %v656, %v656
  %v721 = vld [vmem:[#allocation2 + $0x2] sm:$0xff]
  %v722 = vld [vmem:[#allocation2 + $0xa] sm:$0xff]
  %v723 = vld [vmem:[#allocation2 + $0x1a] sm:$0xff]
  %v724 = vld [vmem:[#allocation2 + $0x22] sm:$0xff]
  %v725 = vld [vmem:[#allocation2 + $0x32] sm:$0xff]
  %v726 = vld [vmem:[#allocation2 + $0x3a] sm:$0xff]
  %v727 = vld [vmem:[#allocation2 + $0x4a] sm:$0xff]
  %v728 = vld [vmem:[#allocation2 + $0x52] sm:$0xff]
  %v729 = vld [vmem:[#allocation2 + $0x62] sm:$0xff]
  %v730 = vld [vmem:[#allocation2 + $0x6a] sm:$0xff]
  %v731 = vld [vmem:[#allocation2 + $0x7a] sm:$0xff]
  %v732 = vld [vmem:[#allocation2 + $0x82] sm:$0xff]
  %v733 = vld [vmem:[#allocation2 + $0x92] sm:$0xff]
  %v734 = vld [vmem:[#allocation2 + $0x9a] sm:$0xff]
  %v735 = vld [vmem:[#allocation2 + $0xaa] sm:$0xff]
  %v736 = vld [vmem:[#allocation2 + $0xb2] sm:$0xff]
  %v737 = vld [vmem:[#allocation2 + $0xc2] sm:$0xff]
  %v738 = vld [vmem:[#allocation2 + $0xca] sm:$0xff]
  %v739 = vld [vmem:[#allocation2 + $0xda] sm:$0xff]
  %v740 = vld [vmem:[#allocation2 + $0xe2] sm:$0xff]
  %v741 = vld [vmem:[#allocation2 + $0xf2] sm:$0xff]
  %v742 = vld [vmem:[#allocation2 + $0xfa] sm:$0xff]
  %v743 = vld [vmem:[#allocation2 + $0x10a] sm:$0xff]
  %v744 = vld [vmem:[#allocation2 + $0x112] sm:$0xff]
  %v745 = vld [vmem:[#allocation2 + $0x122] sm:$0xff]
  %v746 = vld [vmem:[#allocation2 + $0x12a] sm:$0xff]
  %v747 = vld [vmem:[#allocation2 + $0x13a] sm:$0xff]
  %v748 = vld [vmem:[#allocation2 + $0x142] sm:$0xff]
  %v749 = vld [vmem:[#allocation2 + $0x152] sm:$0xff]
  %v750 = vld [vmem:[#allocation2 + $0x15a] sm:$0xff]
  %v751 = vld [vmem:[#allocation2 + $0x16a] sm:$0xff]
  %v752 = vld [vmem:[#allocation2 + $0x172] sm:$0xff]
  %v753 = vld [vmem:[#allocation2 + $0x1b2] sm:$0xff]
  %v754 = vld [vmem:[#allocation2 + $0x1ba] sm:$0xff]
  %v755 = vld [vmem:[#allocation2 + $0x1ca] sm:$0xff]
  %v756 = vld [vmem:[#allocation2 + $0x1d2] sm:$0xff]
  %v757 = vld [vmem:[#allocation2 + $0x1e2] sm:$0xff]
  %v758 = vld [vmem:[#allocation2 + $0x1ea] sm:$0xff]
  %v759 = vld [vmem:[#allocation2 + $0x1fa] sm:$0xff]
  %v760 = vld [vmem:[#allocation2 + $0x202] sm:$0xff]
  %v761 = vld [vmem:[#allocation2 + $0x212] sm:$0xff]
  %v762 = vld [vmem:[#allocation2 + $0x21a] sm:$0xff]
  %v763 = vld [vmem:[#allocation2 + $0x22a] sm:$0xff]
  %v764 = vld [vmem:[#allocation2 + $0x232] sm:$0xff]
  %v765 = vld [vmem:[#allocation2 + $0x242] sm:$0xff]
  %v766 = vld [vmem:[#allocation2 + $0x24a] sm:$0xff]
  %v767 = vld [vmem:[#allocation2 + $0x25a] sm:$0xff]
  %v768 = vld [vmem:[#allocation2 + $0x262] sm:$0xff]
  %v769 = vld [vmem:[#allocation2 + $0x272] sm:$0xff]
  %v770 = vld [vmem:[#allocation2 + $0x27a] sm:$0xff]
  %v771 = vld [vmem:[#allocation2 + $0x28a] sm:$0xff]
  %v772 = vld [vmem:[#allocation2 + $0x292] sm:$0xff]
  %v773 = vld [vmem:[#allocation2 + $0x2a2] sm:$0xff]
  %v774 = vld [vmem:[#allocation2 + $0x2aa] sm:$0xff]
  %v775 = vld [vmem:[#allocation2 + $0x2ba] sm:$0xff]
  %v776 = vld [vmem:[#allocation2 + $0x2c2] sm:$0xff]
  %v777 = vld [vmem:[#allocation2 + $0x2d2] sm:$0xff]
  %v778 = vld [vmem:[#allocation2 + $0x2da] sm:$0xff]
  %v779 = vld [vmem:[#allocation2 + $0x2ea] sm:$0xff]
  %v780 = vld [vmem:[#allocation2 + $0x2f2] sm:$0xff]
  %v781 = vld [vmem:[#allocation2 + $0x302] sm:$0xff]
  %v782 = vld [vmem:[#allocation2 + $0x30a] sm:$0xff]
  %v783 = vld [vmem:[#allocation2 + $0x31a] sm:$0xff]
  %v784 = vld [vmem:[#allocation2 + $0x322] sm:$0xff]
  %v785 = vpack.c.bf16 %v721, %v721
  %v786 = vpack.c.bf16 %v722, %v722
  %v787 = vpack.c.bf16 %v723, %v723
  %v788 = vpack.c.bf16 %v724, %v724
  %v789 = vpack.c.bf16 %v725, %v725
  %v790 = vpack.c.bf16 %v726, %v726
  %v791 = vpack.c.bf16 %v727, %v727
  %v792 = vpack.c.bf16 %v728, %v728
  %v793 = vpack.c.bf16 %v729, %v729
  %v794 = vpack.c.bf16 %v730, %v730
  %v795 = vpack.c.bf16 %v731, %v731
  %v796 = vpack.c.bf16 %v732, %v732
  %v797 = vpack.c.bf16 %v733, %v733
  %v798 = vpack.c.bf16 %v734, %v734
  %v799 = vpack.c.bf16 %v735, %v735
  %v800 = vpack.c.bf16 %v736, %v736
  %v801 = vpack.c.bf16 %v737, %v737
  %v802 = vpack.c.bf16 %v738, %v738
  %v803 = vpack.c.bf16 %v739, %v739
  %v804 = vpack.c.bf16 %v740, %v740
  %v805 = vpack.c.bf16 %v741, %v741
  %v806 = vpack.c.bf16 %v742, %v742
  %v807 = vpack.c.bf16 %v743, %v743
  %v808 = vpack.c.bf16 %v744, %v744
  %v809 = vpack.c.bf16 %v745, %v745
  %v810 = vpack.c.bf16 %v746, %v746
  %v811 = vpack.c.bf16 %v747, %v747
  %v812 = vpack.c.bf16 %v748, %v748
  %v813 = vpack.c.bf16 %v749, %v749
  %v814 = vpack.c.bf16 %v750, %v750
  %v815 = vpack.c.bf16 %v751, %v751
  %v816 = vpack.c.bf16 %v752, %v752
  %v817 = vpack.c.bf16 %v753, %v753
  %v818 = vpack.c.bf16 %v754, %v754
  %v819 = vpack.c.bf16 %v755, %v755
  %v820 = vpack.c.bf16 %v756, %v756
  %v821 = vpack.c.bf16 %v757, %v757
  %v822 = vpack.c.bf16 %v758, %v758
  %v823 = vpack.c.bf16 %v759, %v759
  %v824 = vpack.c.bf16 %v760, %v760
  %v825 = vpack.c.bf16 %v761, %v761
  %v826 = vpack.c.bf16 %v762, %v762
  %v827 = vpack.c.bf16 %v763, %v763
  %v828 = vpack.c.bf16 %v764, %v764
  %v829 = vpack.c.bf16 %v765, %v765
  %v830 = vpack.c.bf16 %v766, %v766
  %v831 = vpack.c.bf16 %v767, %v767
  %v832 = vpack.c.bf16 %v768, %v768
  %v833 = vpack.c.bf16 %v769, %v769
  %v834 = vpack.c.bf16 %v770, %v770
  %v835 = vpack.c.bf16 %v771, %v771
  %v836 = vpack.c.bf16 %v772, %v772
  %v837 = vpack.c.bf16 %v773, %v773
  %v838 = vpack.c.bf16 %v774, %v774
  %v839 = vpack.c.bf16 %v775, %v775
  %v840 = vpack.c.bf16 %v776, %v776
  %v841 = vpack.c.bf16 %v777, %v777
  %v842 = vpack.c.bf16 %v778, %v778
  %v843 = vpack.c.bf16 %v779, %v779
  %v844 = vpack.c.bf16 %v780, %v780
  %v845 = vpack.c.bf16 %v781, %v781
  %v846 = vpack.c.bf16 %v782, %v782
  %v847 = vpack.c.bf16 %v783, %v783
  %v848 = vpack.c.bf16 %v784, %v784
  %v849 = vld [vmem:[%s399] sm:$0xff]
  %v850 = vld [vmem:[%s399 + $0x8] sm:$0xff]
  %v851 = vld [vmem:[%s399 + $0x18] sm:$0xff]
  %v852 = vld [vmem:[%s399 + $0x20] sm:$0xff]
  %v853 = vld [vmem:[%s399 + $0x30] sm:$0xff]
  %v854 = vld [vmem:[%s399 + $0x38] sm:$0xff]
  %v855 = vld [vmem:[%s399 + $0x48] sm:$0xff]
  %v856 = vld [vmem:[%s399 + $0x50] sm:$0xff]
  %v857 = vld [vmem:[%s399 + $0x60] sm:$0xff]
  %v858 = vld [vmem:[%s399 + $0x68] sm:$0xff]
  %v859 = vld [vmem:[%s399 + $0x78] sm:$0xff]
  %v860 = vld [vmem:[%s399 + $0x80] sm:$0xff]
  %v861 = vld [vmem:[%s399 + $0x90] sm:$0xff]
  %v862 = vld [vmem:[%s399 + $0x98] sm:$0xff]
  %v863 = vld [vmem:[%s399 + $0xa8] sm:$0xff]
  %v864 = vld [vmem:[%s399 + $0xb0] sm:$0xff]
  %v865 = vld [vmem:[%s399 + $0xc0] sm:$0xff]
  %v866 = vld [vmem:[%s399 + $0xc8] sm:$0xff]
  %v867 = vld [vmem:[%s399 + $0xd8] sm:$0xff]
  %v868 = vld [vmem:[%s399 + $0xe0] sm:$0xff]
  %v869 = vld [vmem:[%s399 + $0xf0] sm:$0xff]
  %v870 = vld [vmem:[%s399 + $0xf8] sm:$0xff]
  %v871 = vld [vmem:[%s399 + $0x108] sm:$0xff]
  %v872 = vld [vmem:[%s399 + $0x110] sm:$0xff]
  %v873 = vld [vmem:[%s399 + $0x120] sm:$0xff]
  %v874 = vld [vmem:[%s399 + $0x128] sm:$0xff]
  %v875 = vld [vmem:[%s399 + $0x138] sm:$0xff]
  %v876 = vld [vmem:[%s399 + $0x140] sm:$0xff]
  %v877 = vld [vmem:[%s399 + $0x150] sm:$0xff]
  %v878 = vld [vmem:[%s399 + $0x158] sm:$0xff]
  %v879 = vld [vmem:[%s399 + $0x168] sm:$0xff]
  %v880 = vld [vmem:[%s399 + $0x170] sm:$0xff]
  %v881 = vld [vmem:[%s399 + $0x1b0] sm:$0xff]
  %v882 = vld [vmem:[%s399 + $0x1b8] sm:$0xff]
  %v883 = vld [vmem:[%s399 + $0x1c8] sm:$0xff]
  %v884 = vld [vmem:[%s399 + $0x1d0] sm:$0xff]
  %v885 = vld [vmem:[%s399 + $0x1e0] sm:$0xff]
  %v886 = vld [vmem:[%s399 + $0x1e8] sm:$0xff]
  %v887 = vld [vmem:[%s399 + $0x1f8] sm:$0xff]
  %v888 = vld [vmem:[%s399 + $0x200] sm:$0xff]
  %v889 = vld [vmem:[%s399 + $0x210] sm:$0xff]
  %v890 = vld [vmem:[%s399 + $0x218] sm:$0xff]
  %v891 = vld [vmem:[%s399 + $0x228] sm:$0xff]
  %v892 = vld [vmem:[%s399 + $0x230] sm:$0xff]
  %v893 = vld [vmem:[%s399 + $0x240] sm:$0xff]
  %v894 = vld [vmem:[%s399 + $0x248] sm:$0xff]
  %v895 = vld [vmem:[%s399 + $0x258] sm:$0xff]
  %v896 = vld [vmem:[%s399 + $0x260] sm:$0xff]
  %v897 = vld [vmem:[%s399 + $0x270] sm:$0xff]
  %v898 = vld [vmem:[%s399 + $0x278] sm:$0xff]
  %v899 = vld [vmem:[%s399 + $0x288] sm:$0xff]
  %v900 = vld [vmem:[%s399 + $0x290] sm:$0xff]
  %v901 = vld [vmem:[%s399 + $0x2a0] sm:$0xff]
  %v902 = vld [vmem:[%s399 + $0x2a8] sm:$0xff]
  %v903 = vld [vmem:[%s399 + $0x2b8] sm:$0xff]
  %v904 = vld [vmem:[%s399 + $0x2c0] sm:$0xff]
  %v905 = vld [vmem:[%s399 + $0x2d0] sm:$0xff]
  %v906 = vld [vmem:[%s399 + $0x2d8] sm:$0xff]
  %v907 = vld [vmem:[%s399 + $0x2e8] sm:$0xff]
  %v908 = vld [vmem:[%s399 + $0x2f0] sm:$0xff]
  %v909 = vld [vmem:[%s399 + $0x300] sm:$0xff]
  %v910 = vld [vmem:[%s399 + $0x308] sm:$0xff]
  %v911 = vld [vmem:[%s399 + $0x318] sm:$0xff]
  %v912 = vld [vmem:[%s399 + $0x320] sm:$0xff]
  %v913 = vpack.c.bf16 %v849, %v849
  %v914 = vpack.c.bf16 %v850, %v850
  %v915 = vpack.c.bf16 %v851, %v851
  %v916 = vpack.c.bf16 %v852, %v852
  %v917 = vpack.c.bf16 %v853, %v853
  %v918 = vpack.c.bf16 %v854, %v854
  %v919 = vpack.c.bf16 %v855, %v855
  %v920 = vpack.c.bf16 %v856, %v856
  %v921 = vpack.c.bf16 %v857, %v857
  %v922 = vpack.c.bf16 %v858, %v858
  %v923 = vpack.c.bf16 %v859, %v859
  %v924 = vpack.c.bf16 %v860, %v860
  %v925 = vpack.c.bf16 %v861, %v861
  %v926 = vpack.c.bf16 %v862, %v862
  %v927 = vpack.c.bf16 %v863, %v863
  %v928 = vpack.c.bf16 %v864, %v864
  %v929 = vpack.c.bf16 %v865, %v865
  %v930 = vpack.c.bf16 %v866, %v866
  %v931 = vpack.c.bf16 %v867, %v867
  %v932 = vpack.c.bf16 %v868, %v868
  %v933 = vpack.c.bf16 %v869, %v869
  %v934 = vpack.c.bf16 %v870, %v870
  %v935 = vpack.c.bf16 %v871, %v871
  %v936 = vpack.c.bf16 %v872, %v872
  %v937 = vpack.c.bf16 %v873, %v873
  %v938 = vpack.c.bf16 %v874, %v874
  %v939 = vpack.c.bf16 %v875, %v875
  %v940 = vpack.c.bf16 %v876, %v876
  %v941 = vpack.c.bf16 %v877, %v877
  %v942 = vpack.c.bf16 %v878, %v878
  %v943 = vpack.c.bf16 %v879, %v879
  %v944 = vpack.c.bf16 %v880, %v880
  %v945 = vpack.c.bf16 %v881, %v881
  %v946 = vpack.c.bf16 %v882, %v882
  %v947 = vpack.c.bf16 %v883, %v883
  %v948 = vpack.c.bf16 %v884, %v884
  %v949 = vpack.c.bf16 %v885, %v885
  %v950 = vpack.c.bf16 %v886, %v886
  %v951 = vpack.c.bf16 %v887, %v887
  %v952 = vpack.c.bf16 %v888, %v888
  %v953 = vpack.c.bf16 %v889, %v889
  %v954 = vpack.c.bf16 %v890, %v890
  %v955 = vpack.c.bf16 %v891, %v891
  %v956 = vpack.c.bf16 %v892, %v892
  %v957 = vpack.c.bf16 %v893, %v893
  %v958 = vpack.c.bf16 %v894, %v894
  %v959 = vpack.c.bf16 %v895, %v895
  %v960 = vpack.c.bf16 %v896, %v896
  %v961 = vpack.c.bf16 %v897, %v897
  %v962 = vpack.c.bf16 %v898, %v898
  %v963 = vpack.c.bf16 %v899, %v899
  %v964 = vpack.c.bf16 %v900, %v900
  %v965 = vpack.c.bf16 %v901, %v901
  %v966 = vpack.c.bf16 %v902, %v902
  %v967 = vpack.c.bf16 %v903, %v903
  %v968 = vpack.c.bf16 %v904, %v904
  %v969 = vpack.c.bf16 %v905, %v905
  %v970 = vpack.c.bf16 %v906, %v906
  %v971 = vpack.c.bf16 %v907, %v907
  %v972 = vpack.c.bf16 %v908, %v908
  %v973 = vpack.c.bf16 %v909, %v909
  %v974 = vpack.c.bf16 %v910, %v910
  %v975 = vpack.c.bf16 %v911, %v911
  %v976 = vpack.c.bf16 %v912, %v912
  %v977 = vld [vmem:[%s399 + $0x1] sm:$0xff]
  %v978 = vld [vmem:[%s399 + $0x9] sm:$0xff]
  %v979 = vld [vmem:[%s399 + $0x19] sm:$0xff]
  %v980 = vld [vmem:[%s399 + $0x21] sm:$0xff]
  %v981 = vld [vmem:[%s399 + $0x31] sm:$0xff]
  %v982 = vld [vmem:[%s399 + $0x39] sm:$0xff]
  %v983 = vld [vmem:[%s399 + $0x49] sm:$0xff]
  %v984 = vld [vmem:[%s399 + $0x51] sm:$0xff]
  %v985 = vld [vmem:[%s399 + $0x61] sm:$0xff]
  %v986 = vld [vmem:[%s399 + $0x69] sm:$0xff]
  %v987 = vld [vmem:[%s399 + $0x79] sm:$0xff]
  %v988 = vld [vmem:[%s399 + $0x81] sm:$0xff]
  %v989 = vld [vmem:[%s399 + $0x91] sm:$0xff]
  %v990 = vld [vmem:[%s399 + $0x99] sm:$0xff]
  %v991 = vld [vmem:[%s399 + $0xa9] sm:$0xff]
  %v992 = vld [vmem:[%s399 + $0xb1] sm:$0xff]
  %v993 = vld [vmem:[%s399 + $0xc1] sm:$0xff]
  %v994 = vld [vmem:[%s399 + $0xc9] sm:$0xff]
  %v995 = vld [vmem:[%s399 + $0xd9] sm:$0xff]
  %v996 = vld [vmem:[%s399 + $0xe1] sm:$0xff]
  %v997 = vld [vmem:[%s399 + $0xf1] sm:$0xff]
  %v998 = vld [vmem:[%s399 + $0xf9] sm:$0xff]
  %v999 = vld [vmem:[%s399 + $0x109] sm:$0xff]
  %v1000 = vld [vmem:[%s399 + $0x111] sm:$0xff]
  %v1001 = vld [vmem:[%s399 + $0x121] sm:$0xff]
  %v1002 = vld [vmem:[%s399 + $0x129] sm:$0xff]
  %v1003 = vld [vmem:[%s399 + $0x139] sm:$0xff]
  %v1004 = vld [vmem:[%s399 + $0x141] sm:$0xff]
  %v1005 = vld [vmem:[%s399 + $0x151] sm:$0xff]
  %v1006 = vld [vmem:[%s399 + $0x159] sm:$0xff]
  %v1007 = vld [vmem:[%s399 + $0x169] sm:$0xff]
  %v1008 = vld [vmem:[%s399 + $0x171] sm:$0xff]
  %v1009 = vld [vmem:[%s399 + $0x1b1] sm:$0xff]
  %v1010 = vld [vmem:[%s399 + $0x1b9] sm:$0xff]
  %v1011 = vld [vmem:[%s399 + $0x1c9] sm:$0xff]
  %v1012 = vld [vmem:[%s399 + $0x1d1] sm:$0xff]
  %v1013 = vld [vmem:[%s399 + $0x1e1] sm:$0xff]
  %v1014 = vld [vmem:[%s399 + $0x1e9] sm:$0xff]
  %v1015 = vld [vmem:[%s399 + $0x1f9] sm:$0xff]
  %v1016 = vld [vmem:[%s399 + $0x201] sm:$0xff]
  %v1017 = vld [vmem:[%s399 + $0x211] sm:$0xff]
  %v1018 = vld [vmem:[%s399 + $0x219] sm:$0xff]
  %v1019 = vld [vmem:[%s399 + $0x229] sm:$0xff]
  %v1020 = vld [vmem:[%s399 + $0x231] sm:$0xff]
  %v1021 = vld [vmem:[%s399 + $0x241] sm:$0xff]
  %v1022 = vld [vmem:[%s399 + $0x249] sm:$0xff]
  %v1023 = vld [vmem:[%s399 + $0x259] sm:$0xff]
  %v1024 = vld [vmem:[%s399 + $0x261] sm:$0xff]
  %v1025 = vld [vmem:[%s399 + $0x271] sm:$0xff]
  %v1026 = vld [vmem:[%s399 + $0x279] sm:$0xff]
  %v1027 = vld [vmem:[%s399 + $0x289] sm:$0xff]
  %v1028 = vld [vmem:[%s399 + $0x291] sm:$0xff]
  %v1029 = vld [vmem:[%s399 + $0x2a1] sm:$0xff]
  %v1030 = vld [vmem:[%s399 + $0x2a9] sm:$0xff]
  %v1031 = vld [vmem:[%s399 + $0x2b9] sm:$0xff]
  %v1032 = vld [vmem:[%s399 + $0x2c1] sm:$0xff]
  %v1033 = vld [vmem:[%s399 + $0x2d1] sm:$0xff]
  %v1034 = vld [vmem:[%s399 + $0x2d9] sm:$0xff]
  %v1035 = vld [vmem:[%s399 + $0x2e9] sm:$0xff]
  %v1036 = vld [vmem:[%s399 + $0x2f1] sm:$0xff]
  %v1037 = vld [vmem:[%s399 + $0x301] sm:$0xff]
  %v1038 = vld [vmem:[%s399 + $0x309] sm:$0xff]
  %v1039 = vld [vmem:[%s399 + $0x319] sm:$0xff]
  %v1040 = vld [vmem:[%s399 + $0x321] sm:$0xff]
  %v1041 = vpack.c.bf16 %v977, %v977
  %v1042 = vpack.c.bf16 %v978, %v978
  %v1043 = vpack.c.bf16 %v979, %v979
  %v1044 = vpack.c.bf16 %v980, %v980
  %v1045 = vpack.c.bf16 %v981, %v981
  %v1046 = vpack.c.bf16 %v982, %v982
  %v1047 = vpack.c.bf16 %v983, %v983
  %v1048 = vpack.c.bf16 %v984, %v984
  %v1049 = vpack.c.bf16 %v985, %v985
  %v1050 = vpack.c.bf16 %v986, %v986
  %v1051 = vpack.c.bf16 %v987, %v987
  %v1052 = vpack.c.bf16 %v988, %v988
  %v1053 = vpack.c.bf16 %v989, %v989
  %v1054 = vpack.c.bf16 %v990, %v990
  %v1055 = vpack.c.bf16 %v991, %v991
  %v1056 = vpack.c.bf16 %v992, %v992
  %v1057 = vpack.c.bf16 %v993, %v993
  %v1058 = vpack.c.bf16 %v994, %v994
  %v1059 = vpack.c.bf16 %v995, %v995
  %v1060 = vpack.c.bf16 %v996, %v996
  %v1061 = vpack.c.bf16 %v997, %v997
  %v1062 = vpack.c.bf16 %v998, %v998
  %v1063 = vpack.c.bf16 %v999, %v999
  %v1064 = vpack.c.bf16 %v1000, %v1000
  %v1065 = vpack.c.bf16 %v1001, %v1001
  %v1066 = vpack.c.bf16 %v1002, %v1002
  %v1067 = vpack.c.bf16 %v1003, %v1003
  %v1068 = vpack.c.bf16 %v1004, %v1004
  %v1069 = vpack.c.bf16 %v1005, %v1005
  %v1070 = vpack.c.bf16 %v1006, %v1006
  %v1071 = vpack.c.bf16 %v1007, %v1007
  %v1072 = vpack.c.bf16 %v1008, %v1008
  %v1073 = vpack.c.bf16 %v1009, %v1009
  %v1074 = vpack.c.bf16 %v1010, %v1010
  %v1075 = vpack.c.bf16 %v1011, %v1011
  %v1076 = vpack.c.bf16 %v1012, %v1012
  %v1077 = vpack.c.bf16 %v1013, %v1013
  %v1078 = vpack.c.bf16 %v1014, %v1014
  %v1079 = vpack.c.bf16 %v1015, %v1015
  %v1080 = vpack.c.bf16 %v1016, %v1016
  %v1081 = vpack.c.bf16 %v1017, %v1017
  %v1082 = vpack.c.bf16 %v1018, %v1018
  %v1083 = vpack.c.bf16 %v1019, %v1019
  %v1084 = vpack.c.bf16 %v1020, %v1020
  %v1085 = vpack.c.bf16 %v1021, %v1021
  %v1086 = vpack.c.bf16 %v1022, %v1022
  %v1087 = vpack.c.bf16 %v1023, %v1023
  %v1088 = vpack.c.bf16 %v1024, %v1024
  %v1089 = vpack.c.bf16 %v1025, %v1025
  %v1090 = vpack.c.bf16 %v1026, %v1026
  %v1091 = vpack.c.bf16 %v1027, %v1027
  %v1092 = vpack.c.bf16 %v1028, %v1028
  %v1093 = vpack.c.bf16 %v1029, %v1029
  %v1094 = vpack.c.bf16 %v1030, %v1030
  %v1095 = vpack.c.bf16 %v1031, %v1031
  %v1096 = vpack.c.bf16 %v1032, %v1032
  %v1097 = vpack.c.bf16 %v1033, %v1033
  %v1098 = vpack.c.bf16 %v1034, %v1034
  %v1099 = vpack.c.bf16 %v1035, %v1035
  %v1100 = vpack.c.bf16 %v1036, %v1036
  %v1101 = vpack.c.bf16 %v1037, %v1037
  %v1102 = vpack.c.bf16 %v1038, %v1038
  %v1103 = vpack.c.bf16 %v1039, %v1039
  %v1104 = vpack.c.bf16 %v1040, %v1040
  %v1105 = vld [vmem:[%s399 + $0x2] sm:$0xff]
  %v1106 = vld [vmem:[%s399 + $0xa] sm:$0xff]
  %v1107 = vld [vmem:[%s399 + $0x1a] sm:$0xff]
  %v1108 = vld [vmem:[%s399 + $0x22] sm:$0xff]
  %v1109 = vld [vmem:[%s399 + $0x32] sm:$0xff]
  %v1110 = vld [vmem:[%s399 + $0x3a] sm:$0xff]
  %v1111 = vld [vmem:[%s399 + $0x4a] sm:$0xff]
  %v1112 = vld [vmem:[%s399 + $0x52] sm:$0xff]
  %v1113 = vld [vmem:[%s399 + $0x62] sm:$0xff]
  %v1114 = vld [vmem:[%s399 + $0x6a] sm:$0xff]
  %v1115 = vld [vmem:[%s399 + $0x7a] sm:$0xff]
  %v1116 = vld [vmem:[%s399 + $0x82] sm:$0xff]
  %v1117 = vld [vmem:[%s399 + $0x92] sm:$0xff]
  %v1118 = vld [vmem:[%s399 + $0x9a] sm:$0xff]
  %v1119 = vld [vmem:[%s399 + $0xaa] sm:$0xff]
  %v1120 = vld [vmem:[%s399 + $0xb2] sm:$0xff]
  %v1121 = vld [vmem:[%s399 + $0xc2] sm:$0xff]
  %v1122 = vld [vmem:[%s399 + $0xca] sm:$0xff]
  %v1123 = vld [vmem:[%s399 + $0xda] sm:$0xff]
  %v1124 = vld [vmem:[%s399 + $0xe2] sm:$0xff]
  %v1125 = vld [vmem:[%s399 + $0xf2] sm:$0xff]
  %v1126 = vld [vmem:[%s399 + $0xfa] sm:$0xff]
  %v1127 = vld [vmem:[%s399 + $0x10a] sm:$0xff]
  %v1128 = vld [vmem:[%s399 + $0x112] sm:$0xff]
  %v1129 = vld [vmem:[%s399 + $0x122] sm:$0xff]
  %v1130 = vld [vmem:[%s399 + $0x12a] sm:$0xff]
  %v1131 = vld [vmem:[%s399 + $0x13a] sm:$0xff]
  %v1132 = vld [vmem:[%s399 + $0x142] sm:$0xff]
  %v1133 = vld [vmem:[%s399 + $0x152] sm:$0xff]
  %v1134 = vld [vmem:[%s399 + $0x15a] sm:$0xff]
  %v1135 = vld [vmem:[%s399 + $0x16a] sm:$0xff]
  %v1136 = vld [vmem:[%s399 + $0x172] sm:$0xff]
  %v1137 = vld [vmem:[%s399 + $0x1b2] sm:$0xff]
  %v1138 = vld [vmem:[%s399 + $0x1ba] sm:$0xff]
  %v1139 = vld [vmem:[%s399 + $0x1ca] sm:$0xff]
  %v1140 = vld [vmem:[%s399 + $0x1d2] sm:$0xff]
  %v1141 = vld [vmem:[%s399 + $0x1e2] sm:$0xff]
  %v1142 = vld [vmem:[%s399 + $0x1ea] sm:$0xff]
  %v1143 = vld [vmem:[%s399 + $0x1fa] sm:$0xff]
  %v1144 = vld [vmem:[%s399 + $0x202] sm:$0xff]
  %v1145 = vld [vmem:[%s399 + $0x212] sm:$0xff]
  %v1146 = vld [vmem:[%s399 + $0x21a] sm:$0xff]
  %v1147 = vld [vmem:[%s399 + $0x22a] sm:$0xff]
  %v1148 = vld [vmem:[%s399 + $0x232] sm:$0xff]
  %v1149 = vld [vmem:[%s399 + $0x242] sm:$0xff]
  %v1150 = vld [vmem:[%s399 + $0x24a] sm:$0xff]
  %v1151 = vld [vmem:[%s399 + $0x25a] sm:$0xff]
  %v1152 = vld [vmem:[%s399 + $0x262] sm:$0xff]
  %v1153 = vld [vmem:[%s399 + $0x272] sm:$0xff]
  %v1154 = vld [vmem:[%s399 + $0x27a] sm:$0xff]
  %v1155 = vld [vmem:[%s399 + $0x28a] sm:$0xff]
  %v1156 = vld [vmem:[%s399 + $0x292] sm:$0xff]
  %v1157 = vld [vmem:[%s399 + $0x2a2] sm:$0xff]
  %v1158 = vld [vmem:[%s399 + $0x2aa] sm:$0xff]
  %v1159 = vld [vmem:[%s399 + $0x2ba] sm:$0xff]
  %v1160 = vld [vmem:[%s399 + $0x2c2] sm:$0xff]
  %v1161 = vld [vmem:[%s399 + $0x2d2] sm:$0xff]
  %v1162 = vld [vmem:[%s399 + $0x2da] sm:$0xff]
  %v1163 = vld [vmem:[%s399 + $0x2ea] sm:$0xff]
  %v1164 = vld [vmem:[%s399 + $0x2f2] sm:$0xff]
  %v1165 = vld [vmem:[%s399 + $0x302] sm:$0xff]
  %v1166 = vld [vmem:[%s399 + $0x30a] sm:$0xff]
  %v1167 = vld [vmem:[%s399 + $0x31a] sm:$0xff]
  %v1168 = vld [vmem:[%s399 + $0x322] sm:$0xff]
  %v1169 = vpack.c.bf16 %v1105, %v1105
  %v1170 = vpack.c.bf16 %v1106, %v1106
  %v1171 = vpack.c.bf16 %v1107, %v1107
  %v1172 = vpack.c.bf16 %v1108, %v1108
  %v1173 = vpack.c.bf16 %v1109, %v1109
  %v1174 = vpack.c.bf16 %v1110, %v1110
  %v1175 = vpack.c.bf16 %v1111, %v1111
  %v1176 = vpack.c.bf16 %v1112, %v1112
  %v1177 = vpack.c.bf16 %v1113, %v1113
  %v1178 = vpack.c.bf16 %v1114, %v1114
  %v1179 = vpack.c.bf16 %v1115, %v1115
  %v1180 = vpack.c.bf16 %v1116, %v1116
  %v1181 = vpack.c.bf16 %v1117, %v1117
  %v1182 = vpack.c.bf16 %v1118, %v1118
  %v1183 = vpack.c.bf16 %v1119, %v1119
  %v1184 = vpack.c.bf16 %v1120, %v1120
  %v1185 = vpack.c.bf16 %v1121, %v1121
  %v1186 = vpack.c.bf16 %v1122, %v1122
  %v1187 = vpack.c.bf16 %v1123, %v1123
  %v1188 = vpack.c.bf16 %v1124, %v1124
  %v1189 = vpack.c.bf16 %v1125, %v1125
  %v1190 = vpack.c.bf16 %v1126, %v1126
  %v1191 = vpack.c.bf16 %v1127, %v1127
  %v1192 = vpack.c.bf16 %v1128, %v1128
  %v1193 = vpack.c.bf16 %v1129, %v1129
  %v1194 = vpack.c.bf16 %v1130, %v1130
  %v1195 = vpack.c.bf16 %v1131, %v1131
  %v1196 = vpack.c.bf16 %v1132, %v1132
  %v1197 = vpack.c.bf16 %v1133, %v1133
  %v1198 = vpack.c.bf16 %v1134, %v1134
  %v1199 = vpack.c.bf16 %v1135, %v1135
  %v1200 = vpack.c.bf16 %v1136, %v1136
  %v1201 = vpack.c.bf16 %v1137, %v1137
  %v1202 = vpack.c.bf16 %v1138, %v1138
  %v1203 = vpack.c.bf16 %v1139, %v1139
  %v1204 = vpack.c.bf16 %v1140, %v1140
  %v1205 = vpack.c.bf16 %v1141, %v1141
  %v1206 = vpack.c.bf16 %v1142, %v1142
  %v1207 = vpack.c.bf16 %v1143, %v1143
  %v1208 = vpack.c.bf16 %v1144, %v1144
  %v1209 = vpack.c.bf16 %v1145, %v1145
  %v1210 = vpack.c.bf16 %v1146, %v1146
  %v1211 = vpack.c.bf16 %v1147, %v1147
  %v1212 = vpack.c.bf16 %v1148, %v1148
  %v1213 = vpack.c.bf16 %v1149, %v1149
  %v1214 = vpack.c.bf16 %v1150, %v1150
  %v1215 = vpack.c.bf16 %v1151, %v1151
  %v1216 = vpack.c.bf16 %v1152, %v1152
  %v1217 = vpack.c.bf16 %v1153, %v1153
  %v1218 = vpack.c.bf16 %v1154, %v1154
  %v1219 = vpack.c.bf16 %v1155, %v1155
  %v1220 = vpack.c.bf16 %v1156, %v1156
  %v1221 = vpack.c.bf16 %v1157, %v1157
  %v1222 = vpack.c.bf16 %v1158, %v1158
  %v1223 = vpack.c.bf16 %v1159, %v1159
  %v1224 = vpack.c.bf16 %v1160, %v1160
  %v1225 = vpack.c.bf16 %v1161, %v1161
  %v1226 = vpack.c.bf16 %v1162, %v1162
  %v1227 = vpack.c.bf16 %v1163, %v1163
  %v1228 = vpack.c.bf16 %v1164, %v1164
  %v1229 = vpack.c.bf16 %v1165, %v1165
  %v1230 = vpack.c.bf16 %v1166, %v1166
  %v1231 = vpack.c.bf16 %v1167, %v1167
  %v1232 = vpack.c.bf16 %v1168, %v1168
  %s1233 = scalar_lea.vmem [#allocation2], 48
  %v1234 = vld [vmem:[%s1233] sm:$0xff]
  %v1235 = vld [vmem:[%s1233 + $0x8] sm:$0xff]
  %v1236 = vld [vmem:[%s1233 + $0x18] sm:$0xff]
  %v1237 = vld [vmem:[%s1233 + $0x20] sm:$0xff]
  %v1238 = vld [vmem:[%s1233 + $0x30] sm:$0xff]
  %v1239 = vld [vmem:[%s1233 + $0x38] sm:$0xff]
  %v1240 = vld [vmem:[%s1233 + $0x48] sm:$0xff]
  %v1241 = vld [vmem:[%s1233 + $0x50] sm:$0xff]
  %v1242 = vld [vmem:[%s1233 + $0x60] sm:$0xff]
  %v1243 = vld [vmem:[%s1233 + $0x68] sm:$0xff]
  %v1244 = vld [vmem:[%s1233 + $0x78] sm:$0xff]
  %v1245 = vld [vmem:[%s1233 + $0x80] sm:$0xff]
  %v1246 = vld [vmem:[%s1233 + $0x90] sm:$0xff]
  %v1247 = vld [vmem:[%s1233 + $0x98] sm:$0xff]
  %v1248 = vld [vmem:[%s1233 + $0xa8] sm:$0xff]
  %v1249 = vld [vmem:[%s1233 + $0xb0] sm:$0xff]
  %v1250 = vld [vmem:[%s1233 + $0xc0] sm:$0xff]
  %v1251 = vld [vmem:[%s1233 + $0xc8] sm:$0xff]
  %v1252 = vld [vmem:[%s1233 + $0xd8] sm:$0xff]
  %v1253 = vld [vmem:[%s1233 + $0xe0] sm:$0xff]
  %v1254 = vld [vmem:[%s1233 + $0xf0] sm:$0xff]
  %v1255 = vld [vmem:[%s1233 + $0xf8] sm:$0xff]
  %v1256 = vld [vmem:[%s1233 + $0x108] sm:$0xff]
  %v1257 = vld [vmem:[%s1233 + $0x110] sm:$0xff]
  %v1258 = vld [vmem:[%s1233 + $0x120] sm:$0xff]
  %v1259 = vld [vmem:[%s1233 + $0x128] sm:$0xff]
  %v1260 = vld [vmem:[%s1233 + $0x138] sm:$0xff]
  %v1261 = vld [vmem:[%s1233 + $0x140] sm:$0xff]
  %v1262 = vld [vmem:[%s1233 + $0x150] sm:$0xff]
  %v1263 = vld [vmem:[%s1233 + $0x158] sm:$0xff]
  %v1264 = vld [vmem:[%s1233 + $0x168] sm:$0xff]
  %v1265 = vld [vmem:[%s1233 + $0x170] sm:$0xff]
  %v1266 = vld [vmem:[%s1233 + $0x1b0] sm:$0xff]
  %v1267 = vld [vmem:[%s1233 + $0x1b8] sm:$0xff]
  %v1268 = vld [vmem:[%s1233 + $0x1c8] sm:$0xff]
  %v1269 = vld [vmem:[%s1233 + $0x1d0] sm:$0xff]
  %v1270 = vld [vmem:[%s1233 + $0x1e0] sm:$0xff]
  %v1271 = vld [vmem:[%s1233 + $0x1e8] sm:$0xff]
  %v1272 = vld [vmem:[%s1233 + $0x1f8] sm:$0xff]
  %v1273 = vld [vmem:[%s1233 + $0x200] sm:$0xff]
  %v1274 = vld [vmem:[%s1233 + $0x210] sm:$0xff]
  %v1275 = vld [vmem:[%s1233 + $0x218] sm:$0xff]
  %v1276 = vld [vmem:[%s1233 + $0x228] sm:$0xff]
  %v1277 = vld [vmem:[%s1233 + $0x230] sm:$0xff]
  %v1278 = vld [vmem:[%s1233 + $0x240] sm:$0xff]
  %v1279 = vld [vmem:[%s1233 + $0x248] sm:$0xff]
  %v1280 = vld [vmem:[%s1233 + $0x258] sm:$0xff]
  %v1281 = vld [vmem:[%s1233 + $0x260] sm:$0xff]
  %v1282 = vld [vmem:[%s1233 + $0x270] sm:$0xff]
  %v1283 = vld [vmem:[%s1233 + $0x278] sm:$0xff]
  %v1284 = vld [vmem:[%s1233 + $0x288] sm:$0xff]
  %v1285 = vld [vmem:[%s1233 + $0x290] sm:$0xff]
  %v1286 = vld [vmem:[%s1233 + $0x2a0] sm:$0xff]
  %v1287 = vld [vmem:[%s1233 + $0x2a8] sm:$0xff]
  %v1288 = vld [vmem:[%s1233 + $0x2b8] sm:$0xff]
  %v1289 = vld [vmem:[%s1233 + $0x2c0] sm:$0xff]
  %v1290 = vld [vmem:[%s1233 + $0x2d0] sm:$0xff]
  %v1291 = vld [vmem:[%s1233 + $0x2d8] sm:$0xff]
  %v1292 = vld [vmem:[%s1233 + $0x2e8] sm:$0xff]
  %v1293 = vld [vmem:[%s1233 + $0x2f0] sm:$0xff]
  %v1294 = vld [vmem:[%s1233 + $0x300] sm:$0xff]
  %v1295 = vld [vmem:[%s1233 + $0x308] sm:$0xff]
  %v1296 = vld [vmem:[%s1233 + $0x318] sm:$0xff]
  %v1297 = vld [vmem:[%s1233 + $0x320] sm:$0xff]
  %v1298 = vpack.c.bf16 %v1234, %v1234
  %v1299 = vpack.c.bf16 %v1235, %v1235
  %v1300 = vpack.c.bf16 %v1236, %v1236
  %v1301 = vpack.c.bf16 %v1237, %v1237
  %v1302 = vpack.c.bf16 %v1238, %v1238
  %v1303 = vpack.c.bf16 %v1239, %v1239
  %v1304 = vpack.c.bf16 %v1240, %v1240
  %v1305 = vpack.c.bf16 %v1241, %v1241
  %v1306 = vpack.c.bf16 %v1242, %v1242
  %v1307 = vpack.c.bf16 %v1243, %v1243
  %v1308 = vpack.c.bf16 %v1244, %v1244
  %v1309 = vpack.c.bf16 %v1245, %v1245
  %v1310 = vpack.c.bf16 %v1246, %v1246
  %v1311 = vpack.c.bf16 %v1247, %v1247
  %v1312 = vpack.c.bf16 %v1248, %v1248
  %v1313 = vpack.c.bf16 %v1249, %v1249
  %v1314 = vpack.c.bf16 %v1250, %v1250
  %v1315 = vpack.c.bf16 %v1251, %v1251
  %v1316 = vpack.c.bf16 %v1252, %v1252
  %v1317 = vpack.c.bf16 %v1253, %v1253
  %v1318 = vpack.c.bf16 %v1254, %v1254
  %v1319 = vpack.c.bf16 %v1255, %v1255
  %v1320 = vpack.c.bf16 %v1256, %v1256
  %v1321 = vpack.c.bf16 %v1257, %v1257
  %v1322 = vpack.c.bf16 %v1258, %v1258
  %v1323 = vpack.c.bf16 %v1259, %v1259
  %v1324 = vpack.c.bf16 %v1260, %v1260
  %v1325 = vpack.c.bf16 %v1261, %v1261
  %v1326 = vpack.c.bf16 %v1262, %v1262
  %v1327 = vpack.c.bf16 %v1263, %v1263
  %v1328 = vpack.c.bf16 %v1264, %v1264
  %v1329 = vpack.c.bf16 %v1265, %v1265
  %v1330 = vpack.c.bf16 %v1266, %v1266
  %v1331 = vpack.c.bf16 %v1267, %v1267
  %v1332 = vpack.c.bf16 %v1268, %v1268
  %v1333 = vpack.c.bf16 %v1269, %v1269
  %v1334 = vpack.c.bf16 %v1270, %v1270
  %v1335 = vpack.c.bf16 %v1271, %v1271
  %v1336 = vpack.c.bf16 %v1272, %v1272
  %v1337 = vpack.c.bf16 %v1273, %v1273
  %v1338 = vpack.c.bf16 %v1274, %v1274
  %v1339 = vpack.c.bf16 %v1275, %v1275
  %v1340 = vpack.c.bf16 %v1276, %v1276
  %v1341 = vpack.c.bf16 %v1277, %v1277
  %v1342 = vpack.c.bf16 %v1278, %v1278
  %v1343 = vpack.c.bf16 %v1279, %v1279
  %v1344 = vpack.c.bf16 %v1280, %v1280
  %v1345 = vpack.c.bf16 %v1281, %v1281
  %v1346 = vpack.c.bf16 %v1282, %v1282
  %v1347 = vpack.c.bf16 %v1283, %v1283
  %v1348 = vpack.c.bf16 %v1284, %v1284
  %v1349 = vpack.c.bf16 %v1285, %v1285
  %v1350 = vpack.c.bf16 %v1286, %v1286
  %v1351 = vpack.c.bf16 %v1287, %v1287
  %v1352 = vpack.c.bf16 %v1288, %v1288
  %v1353 = vpack.c.bf16 %v1289, %v1289
  %v1354 = vpack.c.bf16 %v1290, %v1290
  %v1355 = vpack.c.bf16 %v1291, %v1291
  %v1356 = vpack.c.bf16 %v1292, %v1292
  %v1357 = vpack.c.bf16 %v1293, %v1293
  %v1358 = vpack.c.bf16 %v1294, %v1294
  %v1359 = vpack.c.bf16 %v1295, %v1295
  %v1360 = vpack.c.bf16 %v1296, %v1296
  %v1361 = vpack.c.bf16 %v1297, %v1297
  %v1362 = vld [vmem:[%s1233 + $0x1] sm:$0xff]
  %v1363 = vld [vmem:[%s1233 + $0x9] sm:$0xff]
  %v1364 = vld [vmem:[%s1233 + $0x19] sm:$0xff]
  %v1365 = vld [vmem:[%s1233 + $0x21] sm:$0xff]
  %v1366 = vld [vmem:[%s1233 + $0x31] sm:$0xff]
  %v1367 = vld [vmem:[%s1233 + $0x39] sm:$0xff]
  %v1368 = vld [vmem:[%s1233 + $0x49] sm:$0xff]
  %v1369 = vld [vmem:[%s1233 + $0x51] sm:$0xff]
  %v1370 = vld [vmem:[%s1233 + $0x61] sm:$0xff]
  %v1371 = vld [vmem:[%s1233 + $0x69] sm:$0xff]
  %v1372 = vld [vmem:[%s1233 + $0x79] sm:$0xff]
  %v1373 = vld [vmem:[%s1233 + $0x81] sm:$0xff]
  %v1374 = vld [vmem:[%s1233 + $0x91] sm:$0xff]
  %v1375 = vld [vmem:[%s1233 + $0x99] sm:$0xff]
  %v1376 = vld [vmem:[%s1233 + $0xa9] sm:$0xff]
  %v1377 = vld [vmem:[%s1233 + $0xb1] sm:$0xff]
  %v1378 = vld [vmem:[%s1233 + $0xc1] sm:$0xff]
  %v1379 = vld [vmem:[%s1233 + $0xc9] sm:$0xff]
  %v1380 = vld [vmem:[%s1233 + $0xd9] sm:$0xff]
  %v1381 = vld [vmem:[%s1233 + $0xe1] sm:$0xff]
  %v1382 = vld [vmem:[%s1233 + $0xf1] sm:$0xff]
  %v1383 = vld [vmem:[%s1233 + $0xf9] sm:$0xff]
  %v1384 = vld [vmem:[%s1233 + $0x109] sm:$0xff]
  %v1385 = vld [vmem:[%s1233 + $0x111] sm:$0xff]
  %v1386 = vld [vmem:[%s1233 + $0x121] sm:$0xff]
  %v1387 = vld [vmem:[%s1233 + $0x129] sm:$0xff]
  %v1388 = vld [vmem:[%s1233 + $0x139] sm:$0xff]
  %v1389 = vld [vmem:[%s1233 + $0x141] sm:$0xff]
  %v1390 = vld [vmem:[%s1233 + $0x151] sm:$0xff]
  %v1391 = vld [vmem:[%s1233 + $0x159] sm:$0xff]
  %v1392 = vld [vmem:[%s1233 + $0x169] sm:$0xff]
  %v1393 = vld [vmem:[%s1233 + $0x171] sm:$0xff]
  %v1394 = vld [vmem:[%s1233 + $0x1b1] sm:$0xff]
  %v1395 = vld [vmem:[%s1233 + $0x1b9] sm:$0xff]
  %v1396 = vld [vmem:[%s1233 + $0x1c9] sm:$0xff]
  %v1397 = vld [vmem:[%s1233 + $0x1d1] sm:$0xff]
  %v1398 = vld [vmem:[%s1233 + $0x1e1] sm:$0xff]
  %v1399 = vld [vmem:[%s1233 + $0x1e9] sm:$0xff]
  %v1400 = vld [vmem:[%s1233 + $0x1f9] sm:$0xff]
  %v1401 = vld [vmem:[%s1233 + $0x201] sm:$0xff]
  %v1402 = vld [vmem:[%s1233 + $0x211] sm:$0xff]
  %v1403 = vld [vmem:[%s1233 + $0x219] sm:$0xff]
  %v1404 = vld [vmem:[%s1233 + $0x229] sm:$0xff]
  %v1405 = vld [vmem:[%s1233 + $0x231] sm:$0xff]
  %v1406 = vld [vmem:[%s1233 + $0x241] sm:$0xff]
  %v1407 = vld [vmem:[%s1233 + $0x249] sm:$0xff]
  %v1408 = vld [vmem:[%s1233 + $0x259] sm:$0xff]
  %v1409 = vld [vmem:[%s1233 + $0x261] sm:$0xff]
  %v1410 = vld [vmem:[%s1233 + $0x271] sm:$0xff]
  %v1411 = vld [vmem:[%s1233 + $0x279] sm:$0xff]
  %v1412 = vld [vmem:[%s1233 + $0x289] sm:$0xff]
  %v1413 = vld [vmem:[%s1233 + $0x291] sm:$0xff]
  %v1414 = vld [vmem:[%s1233 + $0x2a1] sm:$0xff]
  %v1415 = vld [vmem:[%s1233 + $0x2a9] sm:$0xff]
  %v1416 = vld [vmem:[%s1233 + $0x2b9] sm:$0xff]
  %v1417 = vld [vmem:[%s1233 + $0x2c1] sm:$0xff]
  %v1418 = vld [vmem:[%s1233 + $0x2d1] sm:$0xff]
  %v1419 = vld [vmem:[%s1233 + $0x2d9] sm:$0xff]
  %v1420 = vld [vmem:[%s1233 + $0x2e9] sm:$0xff]
  %v1421 = vld [vmem:[%s1233 + $0x2f1] sm:$0xff]
  %v1422 = vld [vmem:[%s1233 + $0x301] sm:$0xff]
  %v1423 = vld [vmem:[%s1233 + $0x309] sm:$0xff]
  %v1424 = vld [vmem:[%s1233 + $0x319] sm:$0xff]
  %v1425 = vld [vmem:[%s1233 + $0x321] sm:$0xff]
  %v1426 = vpack.c.bf16 %v1362, %v1362
  %v1427 = vpack.c.bf16 %v1363, %v1363
  %v1428 = vpack.c.bf16 %v1364, %v1364
  %v1429 = vpack.c.bf16 %v1365, %v1365
  %v1430 = vpack.c.bf16 %v1366, %v1366
  %v1431 = vpack.c.bf16 %v1367, %v1367
  %v1432 = vpack.c.bf16 %v1368, %v1368
  %v1433 = vpack.c.bf16 %v1369, %v1369
  %v1434 = vpack.c.bf16 %v1370, %v1370
  %v1435 = vpack.c.bf16 %v1371, %v1371
  %v1436 = vpack.c.bf16 %v1372, %v1372
  %v1437 = vpack.c.bf16 %v1373, %v1373
  %v1438 = vpack.c.bf16 %v1374, %v1374
  %v1439 = vpack.c.bf16 %v1375, %v1375
  %v1440 = vpack.c.bf16 %v1376, %v1376
  %v1441 = vpack.c.bf16 %v1377, %v1377
  %v1442 = vpack.c.bf16 %v1378, %v1378
  %v1443 = vpack.c.bf16 %v1379, %v1379
  %v1444 = vpack.c.bf16 %v1380, %v1380
  %v1445 = vpack.c.bf16 %v1381, %v1381
  %v1446 = vpack.c.bf16 %v1382, %v1382
  %v1447 = vpack.c.bf16 %v1383, %v1383
  %v1448 = vpack.c.bf16 %v1384, %v1384
  %v1449 = vpack.c.bf16 %v1385, %v1385
  %v1450 = vpack.c.bf16 %v1386, %v1386
  %v1451 = vpack.c.bf16 %v1387, %v1387
  %v1452 = vpack.c.bf16 %v1388, %v1388
  %v1453 = vpack.c.bf16 %v1389, %v1389
  %v1454 = vpack.c.bf16 %v1390, %v1390
  %v1455 = vpack.c.bf16 %v1391, %v1391
  %v1456 = vpack.c.bf16 %v1392, %v1392
  %v1457 = vpack.c.bf16 %v1393, %v1393
  %v1458 = vpack.c.bf16 %v1394, %v1394
  %v1459 = vpack.c.bf16 %v1395, %v1395
  %v1460 = vpack.c.bf16 %v1396, %v1396
  %v1461 = vpack.c.bf16 %v1397, %v1397
  %v1462 = vpack.c.bf16 %v1398, %v1398
  %v1463 = vpack.c.bf16 %v1399, %v1399
  %v1464 = vpack.c.bf16 %v1400, %v1400
  %v1465 = vpack.c.bf16 %v1401, %v1401
  %v1466 = vpack.c.bf16 %v1402, %v1402
  %v1467 = vpack.c.bf16 %v1403, %v1403
  %v1468 = vpack.c.bf16 %v1404, %v1404
  %v1469 = vpack.c.bf16 %v1405, %v1405
  %v1470 = vpack.c.bf16 %v1406, %v1406
  %v1471 = vpack.c.bf16 %v1407, %v1407
  %v1472 = vpack.c.bf16 %v1408, %v1408
  %v1473 = vpack.c.bf16 %v1409, %v1409
  %v1474 = vpack.c.bf16 %v1410, %v1410
  %v1475 = vpack.c.bf16 %v1411, %v1411
  %v1476 = vpack.c.bf16 %v1412, %v1412
  %v1477 = vpack.c.bf16 %v1413, %v1413
  %v1478 = vpack.c.bf16 %v1414, %v1414
  %v1479 = vpack.c.bf16 %v1415, %v1415
  %v1480 = vpack.c.bf16 %v1416, %v1416
  %v1481 = vpack.c.bf16 %v1417, %v1417
  %v1482 = vpack.c.bf16 %v1418, %v1418
  %v1483 = vpack.c.bf16 %v1419, %v1419
  %v1484 = vpack.c.bf16 %v1420, %v1420
  %v1485 = vpack.c.bf16 %v1421, %v1421
  %v1486 = vpack.c.bf16 %v1422, %v1422
  %v1487 = vpack.c.bf16 %v1423, %v1423
  %v1488 = vpack.c.bf16 %v1424, %v1424
  %v1489 = vpack.c.bf16 %v1425, %v1425
  %v1490 = vld [vmem:[%s1233 + $0x2] sm:$0xff]
  %v1491 = vld [vmem:[%s1233 + $0xa] sm:$0xff]
  %v1492 = vld [vmem:[%s1233 + $0x1a] sm:$0xff]
  %v1493 = vld [vmem:[%s1233 + $0x22] sm:$0xff]
  %v1494 = vld [vmem:[%s1233 + $0x32] sm:$0xff]
  %v1495 = vld [vmem:[%s1233 + $0x3a] sm:$0xff]
  %v1496 = vld [vmem:[%s1233 + $0x4a] sm:$0xff]
  %v1497 = vld [vmem:[%s1233 + $0x52] sm:$0xff]
  %v1498 = vld [vmem:[%s1233 + $0x62] sm:$0xff]
  %v1499 = vld [vmem:[%s1233 + $0x6a] sm:$0xff]
  %v1500 = vld [vmem:[%s1233 + $0x7a] sm:$0xff]
  %v1501 = vld [vmem:[%s1233 + $0x82] sm:$0xff]
  %v1502 = vld [vmem:[%s1233 + $0x92] sm:$0xff]
  %v1503 = vld [vmem:[%s1233 + $0x9a] sm:$0xff]
  %v1504 = vld [vmem:[%s1233 + $0xaa] sm:$0xff]
  %v1505 = vld [vmem:[%s1233 + $0xb2] sm:$0xff]
  %v1506 = vld [vmem:[%s1233 + $0xc2] sm:$0xff]
  %v1507 = vld [vmem:[%s1233 + $0xca] sm:$0xff]
  %v1508 = vld [vmem:[%s1233 + $0xda] sm:$0xff]
  %v1509 = vld [vmem:[%s1233 + $0xe2] sm:$0xff]
  %v1510 = vld [vmem:[%s1233 + $0xf2] sm:$0xff]
  %v1511 = vld [vmem:[%s1233 + $0xfa] sm:$0xff]
  %v1512 = vld [vmem:[%s1233 + $0x10a] sm:$0xff]
  %v1513 = vld [vmem:[%s1233 + $0x112] sm:$0xff]
  %v1514 = vld [vmem:[%s1233 + $0x122] sm:$0xff]
  %v1515 = vld [vmem:[%s1233 + $0x12a] sm:$0xff]
  %v1516 = vld [vmem:[%s1233 + $0x13a] sm:$0xff]
  %v1517 = vld [vmem:[%s1233 + $0x142] sm:$0xff]
  %v1518 = vld [vmem:[%s1233 + $0x152] sm:$0xff]
  %v1519 = vld [vmem:[%s1233 + $0x15a] sm:$0xff]
  %v1520 = vld [vmem:[%s1233 + $0x16a] sm:$0xff]
  %v1521 = vld [vmem:[%s1233 + $0x172] sm:$0xff]
  %v1522 = vld [vmem:[%s1233 + $0x1b2] sm:$0xff]
  %v1523 = vld [vmem:[%s1233 + $0x1ba] sm:$0xff]
  %v1524 = vld [vmem:[%s1233 + $0x1ca] sm:$0xff]
  %v1525 = vld [vmem:[%s1233 + $0x1d2] sm:$0xff]
  %v1526 = vld [vmem:[%s1233 + $0x1e2] sm:$0xff]
  %v1527 = vld [vmem:[%s1233 + $0x1ea] sm:$0xff]
  %v1528 = vld [vmem:[%s1233 + $0x1fa] sm:$0xff]
  %v1529 = vld [vmem:[%s1233 + $0x202] sm:$0xff]
  %v1530 = vld [vmem:[%s1233 + $0x212] sm:$0xff]
  %v1531 = vld [vmem:[%s1233 + $0x21a] sm:$0xff]
  %v1532 = vld [vmem:[%s1233 + $0x22a] sm:$0xff]
  %v1533 = vld [vmem:[%s1233 + $0x232] sm:$0xff]
  %v1534 = vld [vmem:[%s1233 + $0x242] sm:$0xff]
  %v1535 = vld [vmem:[%s1233 + $0x24a] sm:$0xff]
  %v1536 = vld [vmem:[%s1233 + $0x25a] sm:$0xff]
  %v1537 = vld [vmem:[%s1233 + $0x262] sm:$0xff]
  %v1538 = vld [vmem:[%s1233 + $0x272] sm:$0xff]
  %v1539 = vld [vmem:[%s1233 + $0x27a] sm:$0xff]
  %v1540 = vld [vmem:[%s1233 + $0x28a] sm:$0xff]
  %v1541 = vld [vmem:[%s1233 + $0x292] sm:$0xff]
  %v1542 = vld [vmem:[%s1233 + $0x2a2] sm:$0xff]
  %v1543 = vld [vmem:[%s1233 + $0x2aa] sm:$0xff]
  %v1544 = vld [vmem:[%s1233 + $0x2ba] sm:$0xff]
  %v1545 = vld [vmem:[%s1233 + $0x2c2] sm:$0xff]
  %v1546 = vld [vmem:[%s1233 + $0x2d2] sm:$0xff]
  %v1547 = vld [vmem:[%s1233 + $0x2da] sm:$0xff]
  %v1548 = vld [vmem:[%s1233 + $0x2ea] sm:$0xff]
  %v1549 = vld [vmem:[%s1233 + $0x2f2] sm:$0xff]
  %v1550 = vld [vmem:[%s1233 + $0x302] sm:$0xff]
  %v1551 = vld [vmem:[%s1233 + $0x30a] sm:$0xff]
  %v1552 = vld [vmem:[%s1233 + $0x31a] sm:$0xff]
  %v1553 = vld [vmem:[%s1233 + $0x322] sm:$0xff]
  %v1554 = vpack.c.bf16 %v1490, %v1490
  %v1555 = vpack.c.bf16 %v1491, %v1491
  %v1556 = vpack.c.bf16 %v1492, %v1492
  %v1557 = vpack.c.bf16 %v1493, %v1493
  %v1558 = vpack.c.bf16 %v1494, %v1494
  %v1559 = vpack.c.bf16 %v1495, %v1495
  %v1560 = vpack.c.bf16 %v1496, %v1496
  %v1561 = vpack.c.bf16 %v1497, %v1497
  %v1562 = vpack.c.bf16 %v1498, %v1498
  %v1563 = vpack.c.bf16 %v1499, %v1499
  %v1564 = vpack.c.bf16 %v1500, %v1500
  %v1565 = vpack.c.bf16 %v1501, %v1501
  %v1566 = vpack.c.bf16 %v1502, %v1502
  %v1567 = vpack.c.bf16 %v1503, %v1503
  %v1568 = vpack.c.bf16 %v1504, %v1504
  %v1569 = vpack.c.bf16 %v1505, %v1505
  %v1570 = vpack.c.bf16 %v1506, %v1506
  %v1571 = vpack.c.bf16 %v1507, %v1507
  %v1572 = vpack.c.bf16 %v1508, %v1508
  %v1573 = vpack.c.bf16 %v1509, %v1509
  %v1574 = vpack.c.bf16 %v1510, %v1510
  %v1575 = vpack.c.bf16 %v1511, %v1511
  %v1576 = vpack.c.bf16 %v1512, %v1512
  %v1577 = vpack.c.bf16 %v1513, %v1513
  %v1578 = vpack.c.bf16 %v1514, %v1514
  %v1579 = vpack.c.bf16 %v1515, %v1515
  %v1580 = vpack.c.bf16 %v1516, %v1516
  %v1581 = vpack.c.bf16 %v1517, %v1517
  %v1582 = vpack.c.bf16 %v1518, %v1518
  %v1583 = vpack.c.bf16 %v1519, %v1519
  %v1584 = vpack.c.bf16 %v1520, %v1520
  %v1585 = vpack.c.bf16 %v1521, %v1521
  %v1586 = vpack.c.bf16 %v1522, %v1522
  %v1587 = vpack.c.bf16 %v1523, %v1523
  %v1588 = vpack.c.bf16 %v1524, %v1524
  %v1589 = vpack.c.bf16 %v1525, %v1525
  %v1590 = vpack.c.bf16 %v1526, %v1526
  %v1591 = vpack.c.bf16 %v1527, %v1527
  %v1592 = vpack.c.bf16 %v1528, %v1528
  %v1593 = vpack.c.bf16 %v1529, %v1529
  %v1594 = vpack.c.bf16 %v1530, %v1530
  %v1595 = vpack.c.bf16 %v1531, %v1531
  %v1596 = vpack.c.bf16 %v1532, %v1532
  %v1597 = vpack.c.bf16 %v1533, %v1533
  %v1598 = vpack.c.bf16 %v1534, %v1534
  %v1599 = vpack.c.bf16 %v1535, %v1535
  %v1600 = vpack.c.bf16 %v1536, %v1536
  %v1601 = vpack.c.bf16 %v1537, %v1537
  %v1602 = vpack.c.bf16 %v1538, %v1538
  %v1603 = vpack.c.bf16 %v1539, %v1539
  %v1604 = vpack.c.bf16 %v1540, %v1540
  %v1605 = vpack.c.bf16 %v1541, %v1541
  %v1606 = vpack.c.bf16 %v1542, %v1542
  %v1607 = vpack.c.bf16 %v1543, %v1543
  %v1608 = vpack.c.bf16 %v1544, %v1544
  %v1609 = vpack.c.bf16 %v1545, %v1545
  %v1610 = vpack.c.bf16 %v1546, %v1546
  %v1611 = vpack.c.bf16 %v1547, %v1547
  %v1612 = vpack.c.bf16 %v1548, %v1548
  %v1613 = vpack.c.bf16 %v1549, %v1549
  %v1614 = vpack.c.bf16 %v1550, %v1550
  %v1615 = vpack.c.bf16 %v1551, %v1551
  %v1616 = vpack.c.bf16 %v1552, %v1552
  %v1617 = vpack.c.bf16 %v1553, %v1553
  %v1682 = vunpack.c.l.b16 %v529
  %v1683 = vunpack.c.l.b16 %v530
  %v1684 = vunpack.c.l.b16 %v531
  %v1685 = vunpack.c.l.b16 %v532
  %v1686 = vunpack.c.l.b16 %v533
  %v1687 = vunpack.c.l.b16 %v534
  %v1688 = vunpack.c.l.b16 %v535
  %v1689 = vunpack.c.l.b16 %v536
  %v1690 = vunpack.c.l.b16 %v537
  %v1691 = vunpack.c.l.b16 %v538
  %v1692 = vunpack.c.l.b16 %v539
  %v1693 = vunpack.c.l.b16 %v540
  %v1694 = vunpack.c.l.b16 %v541
  %v1695 = vunpack.c.l.b16 %v542
  %v1696 = vunpack.c.l.b16 %v543
  %v1697 = vunpack.c.l.b16 %v544
  %v1698 = vunpack.c.l.b16 %v545
  %v1699 = vunpack.c.l.b16 %v546
  %v1700 = vunpack.c.l.b16 %v547
  %v1701 = vunpack.c.l.b16 %v548
  %v1702 = vunpack.c.l.b16 %v549
  %v1703 = vunpack.c.l.b16 %v550
  %v1704 = vunpack.c.l.b16 %v551
  %v1705 = vunpack.c.l.b16 %v552
  %v1706 = vunpack.c.l.b16 %v553
  %v1707 = vunpack.c.l.b16 %v554
  %v1708 = vunpack.c.l.b16 %v555
  %v1709 = vunpack.c.l.b16 %v556
  %v1710 = vunpack.c.l.b16 %v557
  %v1711 = vunpack.c.l.b16 %v558
  %v1712 = vunpack.c.l.b16 %v559
  %v1713 = vunpack.c.l.b16 %v560
  %v1714 = vunpack.c.l.b16 %v561
  %v1715 = vunpack.c.l.b16 %v562
  %v1716 = vunpack.c.l.b16 %v563
  %v1717 = vunpack.c.l.b16 %v564
  %v1718 = vunpack.c.l.b16 %v565
  %v1719 = vunpack.c.l.b16 %v566
  %v1720 = vunpack.c.l.b16 %v567
  %v1721 = vunpack.c.l.b16 %v568
  %v1722 = vunpack.c.l.b16 %v569
  %v1723 = vunpack.c.l.b16 %v570
  %v1724 = vunpack.c.l.b16 %v571
  %v1725 = vunpack.c.l.b16 %v572
  %v1726 = vunpack.c.l.b16 %v573
  %v1727 = vunpack.c.l.b16 %v574
  %v1728 = vunpack.c.l.b16 %v575
  %v1729 = vunpack.c.l.b16 %v576
  %v1730 = vunpack.c.l.b16 %v577
  %v1731 = vunpack.c.l.b16 %v578
  %v1732 = vunpack.c.l.b16 %v579
  %v1733 = vunpack.c.l.b16 %v580
  %v1734 = vunpack.c.l.b16 %v581
  %v1735 = vunpack.c.l.b16 %v582
  %v1736 = vunpack.c.l.b16 %v583
  %v1737 = vunpack.c.l.b16 %v584
  %v1738 = vunpack.c.l.b16 %v585
  %v1739 = vunpack.c.l.b16 %v586
  %v1740 = vunpack.c.l.b16 %v587
  %v1741 = vunpack.c.l.b16 %v588
  %v1742 = vunpack.c.l.b16 %v589
  %v1743 = vunpack.c.l.b16 %v590
  %v1744 = vunpack.c.l.b16 %v591
  %v1745 = vunpack.c.l.b16 %v592
  %v1746 = vpack.c.b16 %v1683, %v1682
  %v1747 = vpack.c.b16 %v1685, %v1684
  %v1748 = vpack.c.b16 %v1687, %v1686
  %v1749 = vpack.c.b16 %v1689, %v1688
  %v1750 = vpack.c.b16 %v1691, %v1690
  %v1751 = vpack.c.b16 %v1693, %v1692
  %v1752 = vpack.c.b16 %v1695, %v1694
  %v1753 = vpack.c.b16 %v1697, %v1696
  %v1754 = vpack.c.b16 %v1699, %v1698
  %v1755 = vpack.c.b16 %v1701, %v1700
  %v1756 = vpack.c.b16 %v1703, %v1702
  %v1757 = vpack.c.b16 %v1705, %v1704
  %v1758 = vpack.c.b16 %v1707, %v1706
  %v1759 = vpack.c.b16 %v1709, %v1708
  %v1760 = vpack.c.b16 %v1711, %v1710
  %v1761 = vpack.c.b16 %v1713, %v1712
  %v1762 = vpack.c.b16 %v1715, %v1714
  %v1763 = vpack.c.b16 %v1717, %v1716
  %v1764 = vpack.c.b16 %v1719, %v1718
  %v1765 = vpack.c.b16 %v1721, %v1720
  %v1766 = vpack.c.b16 %v1723, %v1722
  %v1767 = vpack.c.b16 %v1725, %v1724
  %v1768 = vpack.c.b16 %v1727, %v1726
  %v1769 = vpack.c.b16 %v1729, %v1728
  %v1770 = vpack.c.b16 %v1731, %v1730
  %v1771 = vpack.c.b16 %v1733, %v1732
  %v1772 = vpack.c.b16 %v1735, %v1734
  %v1773 = vpack.c.b16 %v1737, %v1736
  %v1774 = vpack.c.b16 %v1739, %v1738
  %v1775 = vpack.c.b16 %v1741, %v1740
  %v1776 = vpack.c.b16 %v1743, %v1742
  %v1777 = vpack.c.b16 %v1745, %v1744
  %v1842 = vunpack.c.l.b16 %v657
  %v1843 = vunpack.c.l.b16 %v658
  %v1844 = vunpack.c.l.b16 %v659
  %v1845 = vunpack.c.l.b16 %v660
  %v1846 = vunpack.c.l.b16 %v661
  %v1847 = vunpack.c.l.b16 %v662
  %v1848 = vunpack.c.l.b16 %v663
  %v1849 = vunpack.c.l.b16 %v664
  %v1850 = vunpack.c.l.b16 %v665
  %v1851 = vunpack.c.l.b16 %v666
  %v1852 = vunpack.c.l.b16 %v667
  %v1853 = vunpack.c.l.b16 %v668
  %v1854 = vunpack.c.l.b16 %v669
  %v1855 = vunpack.c.l.b16 %v670
  %v1856 = vunpack.c.l.b16 %v671
  %v1857 = vunpack.c.l.b16 %v672
  %v1858 = vunpack.c.l.b16 %v673
  %v1859 = vunpack.c.l.b16 %v674
  %v1860 = vunpack.c.l.b16 %v675
  %v1861 = vunpack.c.l.b16 %v676
  %v1862 = vunpack.c.l.b16 %v677
  %v1863 = vunpack.c.l.b16 %v678
  %v1864 = vunpack.c.l.b16 %v679
  %v1865 = vunpack.c.l.b16 %v680
  %v1866 = vunpack.c.l.b16 %v681
  %v1867 = vunpack.c.l.b16 %v682
  %v1868 = vunpack.c.l.b16 %v683
  %v1869 = vunpack.c.l.b16 %v684
  %v1870 = vunpack.c.l.b16 %v685
  %v1871 = vunpack.c.l.b16 %v686
  %v1872 = vunpack.c.l.b16 %v687
  %v1873 = vunpack.c.l.b16 %v688
  %v1874 = vunpack.c.l.b16 %v689
  %v1875 = vunpack.c.l.b16 %v690
  %v1876 = vunpack.c.l.b16 %v691
  %v1877 = vunpack.c.l.b16 %v692
  %v1878 = vunpack.c.l.b16 %v693
  %v1879 = vunpack.c.l.b16 %v694
  %v1880 = vunpack.c.l.b16 %v695
  %v1881 = vunpack.c.l.b16 %v696
  %v1882 = vunpack.c.l.b16 %v697
  %v1883 = vunpack.c.l.b16 %v698
  %v1884 = vunpack.c.l.b16 %v699
  %v1885 = vunpack.c.l.b16 %v700
  %v1886 = vunpack.c.l.b16 %v701
  %v1887 = vunpack.c.l.b16 %v702
  %v1888 = vunpack.c.l.b16 %v703
  %v1889 = vunpack.c.l.b16 %v704
  %v1890 = vunpack.c.l.b16 %v705
  %v1891 = vunpack.c.l.b16 %v706
  %v1892 = vunpack.c.l.b16 %v707
  %v1893 = vunpack.c.l.b16 %v708
  %v1894 = vunpack.c.l.b16 %v709
  %v1895 = vunpack.c.l.b16 %v710
  %v1896 = vunpack.c.l.b16 %v711
  %v1897 = vunpack.c.l.b16 %v712
  %v1898 = vunpack.c.l.b16 %v713
  %v1899 = vunpack.c.l.b16 %v714
  %v1900 = vunpack.c.l.b16 %v715
  %v1901 = vunpack.c.l.b16 %v716
  %v1902 = vunpack.c.l.b16 %v717
  %v1903 = vunpack.c.l.b16 %v718
  %v1904 = vunpack.c.l.b16 %v719
  %v1905 = vunpack.c.l.b16 %v720
  %v1906 = vpack.c.b16 %v1843, %v1842
  %v1907 = vpack.c.b16 %v1845, %v1844
  %v1908 = vpack.c.b16 %v1847, %v1846
  %v1909 = vpack.c.b16 %v1849, %v1848
  %v1910 = vpack.c.b16 %v1851, %v1850
  %v1911 = vpack.c.b16 %v1853, %v1852
  %v1912 = vpack.c.b16 %v1855, %v1854
  %v1913 = vpack.c.b16 %v1857, %v1856
  %v1914 = vpack.c.b16 %v1859, %v1858
  %v1915 = vpack.c.b16 %v1861, %v1860
  %v1916 = vpack.c.b16 %v1863, %v1862
  %v1917 = vpack.c.b16 %v1865, %v1864
  %v1918 = vpack.c.b16 %v1867, %v1866
  %v1919 = vpack.c.b16 %v1869, %v1868
  %v1920 = vpack.c.b16 %v1871, %v1870
  %v1921 = vpack.c.b16 %v1873, %v1872
  %v1922 = vpack.c.b16 %v1875, %v1874
  %v1923 = vpack.c.b16 %v1877, %v1876
  %v1924 = vpack.c.b16 %v1879, %v1878
  %v1925 = vpack.c.b16 %v1881, %v1880
  %v1926 = vpack.c.b16 %v1883, %v1882
  %v1927 = vpack.c.b16 %v1885, %v1884
  %v1928 = vpack.c.b16 %v1887, %v1886
  %v1929 = vpack.c.b16 %v1889, %v1888
  %v1930 = vpack.c.b16 %v1891, %v1890
  %v1931 = vpack.c.b16 %v1893, %v1892
  %v1932 = vpack.c.b16 %v1895, %v1894
  %v1933 = vpack.c.b16 %v1897, %v1896
  %v1934 = vpack.c.b16 %v1899, %v1898
  %v1935 = vpack.c.b16 %v1901, %v1900
  %v1936 = vpack.c.b16 %v1903, %v1902
  %v1937 = vpack.c.b16 %v1905, %v1904
  %1938 = vrot.lane.b32.xlu0 %v1906, 8
  %v1939 = vpop.permute.xlu0 %1938
  %1940 = vrot.lane.b32.xlu0 %v1907, 8
  %v1941 = vpop.permute.xlu0 %1940
  %1942 = vrot.lane.b32.xlu0 %v1908, 8
  %v1943 = vpop.permute.xlu0 %1942
  %1944 = vrot.lane.b32.xlu0 %v1909, 8
  %v1945 = vpop.permute.xlu0 %1944
  %1946 = vrot.lane.b32.xlu0 %v1910, 8
  %v1947 = vpop.permute.xlu0 %1946
  %1948 = vrot.lane.b32.xlu0 %v1911, 8
  %v1949 = vpop.permute.xlu0 %1948
  %1950 = vrot.lane.b32.xlu0 %v1912, 8
  %v1951 = vpop.permute.xlu0 %1950
  %1952 = vrot.lane.b32.xlu0 %v1913, 8
  %v1953 = vpop.permute.xlu0 %1952
  %1954 = vrot.lane.b32.xlu0 %v1914, 8
  %v1955 = vpop.permute.xlu0 %1954
  %1956 = vrot.lane.b32.xlu0 %v1915, 8
  %v1957 = vpop.permute.xlu0 %1956
  %1958 = vrot.lane.b32.xlu0 %v1916, 8
  %v1959 = vpop.permute.xlu0 %1958
  %1960 = vrot.lane.b32.xlu0 %v1917, 8
  %v1961 = vpop.permute.xlu0 %1960
  %1962 = vrot.lane.b32.xlu0 %v1918, 8
  %v1963 = vpop.permute.xlu0 %1962
  %1964 = vrot.lane.b32.xlu0 %v1919, 8
  %v1965 = vpop.permute.xlu0 %1964
  %1966 = vrot.lane.b32.xlu0 %v1920, 8
  %v1967 = vpop.permute.xlu0 %1966
  %1968 = vrot.lane.b32.xlu0 %v1921, 8
  %v1969 = vpop.permute.xlu0 %1968
  %1970 = vrot.lane.b32.xlu0 %v1922, 8
  %v1971 = vpop.permute.xlu0 %1970
  %1972 = vrot.lane.b32.xlu0 %v1923, 8
  %v1973 = vpop.permute.xlu0 %1972
  %1974 = vrot.lane.b32.xlu0 %v1924, 8
  %v1975 = vpop.permute.xlu0 %1974
  %1976 = vrot.lane.b32.xlu0 %v1925, 8
  %v1977 = vpop.permute.xlu0 %1976
  %1978 = vrot.lane.b32.xlu0 %v1926, 8
  %v1979 = vpop.permute.xlu0 %1978
  %1980 = vrot.lane.b32.xlu0 %v1927, 8
  %v1981 = vpop.permute.xlu0 %1980
  %1982 = vrot.lane.b32.xlu0 %v1928, 8
  %v1983 = vpop.permute.xlu0 %1982
  %1984 = vrot.lane.b32.xlu0 %v1929, 8
  %v1985 = vpop.permute.xlu0 %1984
  %1986 = vrot.lane.b32.xlu0 %v1930, 8
  %v1987 = vpop.permute.xlu0 %1986
  %1988 = vrot.lane.b32.xlu0 %v1931, 8
  %v1989 = vpop.permute.xlu0 %1988
  %1990 = vrot.lane.b32.xlu0 %v1932, 8
  %v1991 = vpop.permute.xlu0 %1990
  %1992 = vrot.lane.b32.xlu0 %v1933, 8
  %v1993 = vpop.permute.xlu0 %1992
  %1994 = vrot.lane.b32.xlu0 %v1934, 8
  %v1995 = vpop.permute.xlu0 %1994
  %1996 = vrot.lane.b32.xlu0 %v1935, 8
  %v1997 = vpop.permute.xlu0 %1996
  %1998 = vrot.lane.b32.xlu0 %v1936, 8
  %v1999 = vpop.permute.xlu0 %1998
  %2000 = vrot.lane.b32.xlu0 %v1937, 8
  %v2001 = vpop.permute.xlu0 %2000
  %v2066 = vunpack.c.l.b16 %v785
  %v2067 = vunpack.c.l.b16 %v786
  %v2068 = vunpack.c.l.b16 %v787
  %v2069 = vunpack.c.l.b16 %v788
  %v2070 = vunpack.c.l.b16 %v789
  %v2071 = vunpack.c.l.b16 %v790
  %v2072 = vunpack.c.l.b16 %v791
  %v2073 = vunpack.c.l.b16 %v792
  %v2074 = vunpack.c.l.b16 %v793
  %v2075 = vunpack.c.l.b16 %v794
  %v2076 = vunpack.c.l.b16 %v795
  %v2077 = vunpack.c.l.b16 %v796
  %v2078 = vunpack.c.l.b16 %v797
  %v2079 = vunpack.c.l.b16 %v798
  %v2080 = vunpack.c.l.b16 %v799
  %v2081 = vunpack.c.l.b16 %v800
  %v2082 = vunpack.c.l.b16 %v801
  %v2083 = vunpack.c.l.b16 %v802
  %v2084 = vunpack.c.l.b16 %v803
  %v2085 = vunpack.c.l.b16 %v804
  %v2086 = vunpack.c.l.b16 %v805
  %v2087 = vunpack.c.l.b16 %v806
  %v2088 = vunpack.c.l.b16 %v807
  %v2089 = vunpack.c.l.b16 %v808
  %v2090 = vunpack.c.l.b16 %v809
  %v2091 = vunpack.c.l.b16 %v810
  %v2092 = vunpack.c.l.b16 %v811
  %v2093 = vunpack.c.l.b16 %v812
  %v2094 = vunpack.c.l.b16 %v813
  %v2095 = vunpack.c.l.b16 %v814
  %v2096 = vunpack.c.l.b16 %v815
  %v2097 = vunpack.c.l.b16 %v816
  %v2098 = vunpack.c.l.b16 %v817
  %v2099 = vunpack.c.l.b16 %v818
  %v2100 = vunpack.c.l.b16 %v819
  %v2101 = vunpack.c.l.b16 %v820
  %v2102 = vunpack.c.l.b16 %v821
  %v2103 = vunpack.c.l.b16 %v822
  %v2104 = vunpack.c.l.b16 %v823
  %v2105 = vunpack.c.l.b16 %v824
  %v2106 = vunpack.c.l.b16 %v825
  %v2107 = vunpack.c.l.b16 %v826
  %v2108 = vunpack.c.l.b16 %v827
  %v2109 = vunpack.c.l.b16 %v828
  %v2110 = vunpack.c.l.b16 %v829
  %v2111 = vunpack.c.l.b16 %v830
  %v2112 = vunpack.c.l.b16 %v831
  %v2113 = vunpack.c.l.b16 %v832
  %v2114 = vunpack.c.l.b16 %v833
  %v2115 = vunpack.c.l.b16 %v834
  %v2116 = vunpack.c.l.b16 %v835
  %v2117 = vunpack.c.l.b16 %v836
  %v2118 = vunpack.c.l.b16 %v837
  %v2119 = vunpack.c.l.b16 %v838
  %v2120 = vunpack.c.l.b16 %v839
  %v2121 = vunpack.c.l.b16 %v840
  %v2122 = vunpack.c.l.b16 %v841
  %v2123 = vunpack.c.l.b16 %v842
  %v2124 = vunpack.c.l.b16 %v843
  %v2125 = vunpack.c.l.b16 %v844
  %v2126 = vunpack.c.l.b16 %v845
  %v2127 = vunpack.c.l.b16 %v846
  %v2128 = vunpack.c.l.b16 %v847
  %v2129 = vunpack.c.l.b16 %v848
  %v2130 = vpack.c.b16 %v2067, %v2066
  %v2131 = vpack.c.b16 %v2069, %v2068
  %v2132 = vpack.c.b16 %v2071, %v2070
  %v2133 = vpack.c.b16 %v2073, %v2072
  %v2134 = vpack.c.b16 %v2075, %v2074
  %v2135 = vpack.c.b16 %v2077, %v2076
  %v2136 = vpack.c.b16 %v2079, %v2078
  %v2137 = vpack.c.b16 %v2081, %v2080
  %v2138 = vpack.c.b16 %v2083, %v2082
  %v2139 = vpack.c.b16 %v2085, %v2084
  %v2140 = vpack.c.b16 %v2087, %v2086
  %v2141 = vpack.c.b16 %v2089, %v2088
  %v2142 = vpack.c.b16 %v2091, %v2090
  %v2143 = vpack.c.b16 %v2093, %v2092
  %v2144 = vpack.c.b16 %v2095, %v2094
  %v2145 = vpack.c.b16 %v2097, %v2096
  %v2146 = vpack.c.b16 %v2099, %v2098
  %v2147 = vpack.c.b16 %v2101, %v2100
  %v2148 = vpack.c.b16 %v2103, %v2102
  %v2149 = vpack.c.b16 %v2105, %v2104
  %v2150 = vpack.c.b16 %v2107, %v2106
  %v2151 = vpack.c.b16 %v2109, %v2108
  %v2152 = vpack.c.b16 %v2111, %v2110
  %v2153 = vpack.c.b16 %v2113, %v2112
  %v2154 = vpack.c.b16 %v2115, %v2114
  %v2155 = vpack.c.b16 %v2117, %v2116
  %v2156 = vpack.c.b16 %v2119, %v2118
  %v2157 = vpack.c.b16 %v2121, %v2120
  %v2158 = vpack.c.b16 %v2123, %v2122
  %v2159 = vpack.c.b16 %v2125, %v2124
  %v2160 = vpack.c.b16 %v2127, %v2126
  %v2161 = vpack.c.b16 %v2129, %v2128
  %2162 = vrot.lane.b32.xlu0 %v2130, 16
  %v2163 = vpop.permute.xlu0 %2162
  %2164 = vrot.lane.b32.xlu0 %v2131, 16
  %v2165 = vpop.permute.xlu0 %2164
  %2166 = vrot.lane.b32.xlu0 %v2132, 16
  %v2167 = vpop.permute.xlu0 %2166
  %2168 = vrot.lane.b32.xlu0 %v2133, 16
  %v2169 = vpop.permute.xlu0 %2168
  %2170 = vrot.lane.b32.xlu0 %v2134, 16
  %v2171 = vpop.permute.xlu0 %2170
  %2172 = vrot.lane.b32.xlu0 %v2135, 16
  %v2173 = vpop.permute.xlu0 %2172
  %2174 = vrot.lane.b32.xlu0 %v2136, 16
  %v2175 = vpop.permute.xlu0 %2174
  %2176 = vrot.lane.b32.xlu0 %v2137, 16
  %v2177 = vpop.permute.xlu0 %2176
  %2178 = vrot.lane.b32.xlu0 %v2138, 16
  %v2179 = vpop.permute.xlu0 %2178
  %2180 = vrot.lane.b32.xlu0 %v2139, 16
  %v2181 = vpop.permute.xlu0 %2180
  %2182 = vrot.lane.b32.xlu0 %v2140, 16
  %v2183 = vpop.permute.xlu0 %2182
  %2184 = vrot.lane.b32.xlu0 %v2141, 16
  %v2185 = vpop.permute.xlu0 %2184
  %2186 = vrot.lane.b32.xlu0 %v2142, 16
  %v2187 = vpop.permute.xlu0 %2186
  %2188 = vrot.lane.b32.xlu0 %v2143, 16
  %v2189 = vpop.permute.xlu0 %2188
  %2190 = vrot.lane.b32.xlu0 %v2144, 16
  %v2191 = vpop.permute.xlu0 %2190
  %2192 = vrot.lane.b32.xlu0 %v2145, 16
  %v2193 = vpop.permute.xlu0 %2192
  %2194 = vrot.lane.b32.xlu0 %v2146, 16
  %v2195 = vpop.permute.xlu0 %2194
  %2196 = vrot.lane.b32.xlu0 %v2147, 16
  %v2197 = vpop.permute.xlu0 %2196
  %2198 = vrot.lane.b32.xlu0 %v2148, 16
  %v2199 = vpop.permute.xlu0 %2198
  %2200 = vrot.lane.b32.xlu0 %v2149, 16
  %v2201 = vpop.permute.xlu0 %2200
  %2202 = vrot.lane.b32.xlu0 %v2150, 16
  %v2203 = vpop.permute.xlu0 %2202
  %2204 = vrot.lane.b32.xlu0 %v2151, 16
  %v2205 = vpop.permute.xlu0 %2204
  %2206 = vrot.lane.b32.xlu0 %v2152, 16
  %v2207 = vpop.permute.xlu0 %2206
  %2208 = vrot.lane.b32.xlu0 %v2153, 16
  %v2209 = vpop.permute.xlu0 %2208
  %2210 = vrot.lane.b32.xlu0 %v2154, 16
  %v2211 = vpop.permute.xlu0 %2210
  %2212 = vrot.lane.b32.xlu0 %v2155, 16
  %v2213 = vpop.permute.xlu0 %2212
  %2214 = vrot.lane.b32.xlu0 %v2156, 16
  %v2215 = vpop.permute.xlu0 %2214
  %2216 = vrot.lane.b32.xlu0 %v2157, 16
  %v2217 = vpop.permute.xlu0 %2216
  %2218 = vrot.lane.b32.xlu0 %v2158, 16
  %v2219 = vpop.permute.xlu0 %2218
  %2220 = vrot.lane.b32.xlu0 %v2159, 16
  %v2221 = vpop.permute.xlu0 %2220
  %2222 = vrot.lane.b32.xlu0 %v2160, 16
  %v2223 = vpop.permute.xlu0 %2222
  %2224 = vrot.lane.b32.xlu0 %v2161, 16
  %v2225 = vpop.permute.xlu0 %2224
  %v2290 = vunpack.c.l.b16 %v913
  %v2291 = vunpack.c.l.b16 %v914
  %v2292 = vunpack.c.l.b16 %v915
  %v2293 = vunpack.c.l.b16 %v916
  %v2294 = vunpack.c.l.b16 %v917
  %v2295 = vunpack.c.l.b16 %v918
  %v2296 = vunpack.c.l.b16 %v919
  %v2297 = vunpack.c.l.b16 %v920
  %v2298 = vunpack.c.l.b16 %v921
  %v2299 = vunpack.c.l.b16 %v922
  %v2300 = vunpack.c.l.b16 %v923
  %v2301 = vunpack.c.l.b16 %v924
  %v2302 = vunpack.c.l.b16 %v925
  %v2303 = vunpack.c.l.b16 %v926
  %v2304 = vunpack.c.l.b16 %v927
  %v2305 = vunpack.c.l.b16 %v928
  %v2306 = vunpack.c.l.b16 %v929
  %v2307 = vunpack.c.l.b16 %v930
  %v2308 = vunpack.c.l.b16 %v931
  %v2309 = vunpack.c.l.b16 %v932
  %v2310 = vunpack.c.l.b16 %v933
  %v2311 = vunpack.c.l.b16 %v934
  %v2312 = vunpack.c.l.b16 %v935
  %v2313 = vunpack.c.l.b16 %v936
  %v2314 = vunpack.c.l.b16 %v937
  %v2315 = vunpack.c.l.b16 %v938
  %v2316 = vunpack.c.l.b16 %v939
  %v2317 = vunpack.c.l.b16 %v940
  %v2318 = vunpack.c.l.b16 %v941
  %v2319 = vunpack.c.l.b16 %v942
  %v2320 = vunpack.c.l.b16 %v943
  %v2321 = vunpack.c.l.b16 %v944
  %v2322 = vunpack.c.l.b16 %v945
  %v2323 = vunpack.c.l.b16 %v946
  %v2324 = vunpack.c.l.b16 %v947
  %v2325 = vunpack.c.l.b16 %v948
  %v2326 = vunpack.c.l.b16 %v949
  %v2327 = vunpack.c.l.b16 %v950
  %v2328 = vunpack.c.l.b16 %v951
  %v2329 = vunpack.c.l.b16 %v952
  %v2330 = vunpack.c.l.b16 %v953
  %v2331 = vunpack.c.l.b16 %v954
  %v2332 = vunpack.c.l.b16 %v955
  %v2333 = vunpack.c.l.b16 %v956
  %v2334 = vunpack.c.l.b16 %v957
  %v2335 = vunpack.c.l.b16 %v958
  %v2336 = vunpack.c.l.b16 %v959
  %v2337 = vunpack.c.l.b16 %v960
  %v2338 = vunpack.c.l.b16 %v961
  %v2339 = vunpack.c.l.b16 %v962
  %v2340 = vunpack.c.l.b16 %v963
  %v2341 = vunpack.c.l.b16 %v964
  %v2342 = vunpack.c.l.b16 %v965
  %v2343 = vunpack.c.l.b16 %v966
  %v2344 = vunpack.c.l.b16 %v967
  %v2345 = vunpack.c.l.b16 %v968
  %v2346 = vunpack.c.l.b16 %v969
  %v2347 = vunpack.c.l.b16 %v970
  %v2348 = vunpack.c.l.b16 %v971
  %v2349 = vunpack.c.l.b16 %v972
  %v2350 = vunpack.c.l.b16 %v973
  %v2351 = vunpack.c.l.b16 %v974
  %v2352 = vunpack.c.l.b16 %v975
  %v2353 = vunpack.c.l.b16 %v976
  %v2354 = vpack.c.b16 %v2291, %v2290
  %v2355 = vpack.c.b16 %v2293, %v2292
  %v2356 = vpack.c.b16 %v2295, %v2294
  %v2357 = vpack.c.b16 %v2297, %v2296
  %v2358 = vpack.c.b16 %v2299, %v2298
  %v2359 = vpack.c.b16 %v2301, %v2300
  %v2360 = vpack.c.b16 %v2303, %v2302
  %v2361 = vpack.c.b16 %v2305, %v2304
  %v2362 = vpack.c.b16 %v2307, %v2306
  %v2363 = vpack.c.b16 %v2309, %v2308
  %v2364 = vpack.c.b16 %v2311, %v2310
  %v2365 = vpack.c.b16 %v2313, %v2312
  %v2366 = vpack.c.b16 %v2315, %v2314
  %v2367 = vpack.c.b16 %v2317, %v2316
  %v2368 = vpack.c.b16 %v2319, %v2318
  %v2369 = vpack.c.b16 %v2321, %v2320
  %v2370 = vpack.c.b16 %v2323, %v2322
  %v2371 = vpack.c.b16 %v2325, %v2324
  %v2372 = vpack.c.b16 %v2327, %v2326
  %v2373 = vpack.c.b16 %v2329, %v2328
  %v2374 = vpack.c.b16 %v2331, %v2330
  %v2375 = vpack.c.b16 %v2333, %v2332
  %v2376 = vpack.c.b16 %v2335, %v2334
  %v2377 = vpack.c.b16 %v2337, %v2336
  %v2378 = vpack.c.b16 %v2339, %v2338
  %v2379 = vpack.c.b16 %v2341, %v2340
  %v2380 = vpack.c.b16 %v2343, %v2342
  %v2381 = vpack.c.b16 %v2345, %v2344
  %v2382 = vpack.c.b16 %v2347, %v2346
  %v2383 = vpack.c.b16 %v2349, %v2348
  %v2384 = vpack.c.b16 %v2351, %v2350
  %v2385 = vpack.c.b16 %v2353, %v2352
  %2386 = vrot.lane.b32.xlu0 %v2354, 24
  %v2387 = vpop.permute.xlu0 %2386
  %2388 = vrot.lane.b32.xlu0 %v2355, 24
  %v2389 = vpop.permute.xlu0 %2388
  %2390 = vrot.lane.b32.xlu0 %v2356, 24
  %v2391 = vpop.permute.xlu0 %2390
  %2392 = vrot.lane.b32.xlu0 %v2357, 24
  %v2393 = vpop.permute.xlu0 %2392
  %2394 = vrot.lane.b32.xlu0 %v2358, 24
  %v2395 = vpop.permute.xlu0 %2394
  %2396 = vrot.lane.b32.xlu0 %v2359, 24
  %v2397 = vpop.permute.xlu0 %2396
  %2398 = vrot.lane.b32.xlu0 %v2360, 24
  %v2399 = vpop.permute.xlu0 %2398
  %2400 = vrot.lane.b32.xlu0 %v2361, 24
  %v2401 = vpop.permute.xlu0 %2400
  %2402 = vrot.lane.b32.xlu0 %v2362, 24
  %v2403 = vpop.permute.xlu0 %2402
  %2404 = vrot.lane.b32.xlu0 %v2363, 24
  %v2405 = vpop.permute.xlu0 %2404
  %2406 = vrot.lane.b32.xlu0 %v2364, 24
  %v2407 = vpop.permute.xlu0 %2406
  %2408 = vrot.lane.b32.xlu0 %v2365, 24
  %v2409 = vpop.permute.xlu0 %2408
  %2410 = vrot.lane.b32.xlu0 %v2366, 24
  %v2411 = vpop.permute.xlu0 %2410
  %2412 = vrot.lane.b32.xlu0 %v2367, 24
  %v2413 = vpop.permute.xlu0 %2412
  %2414 = vrot.lane.b32.xlu0 %v2368, 24
  %v2415 = vpop.permute.xlu0 %2414
  %2416 = vrot.lane.b32.xlu0 %v2369, 24
  %v2417 = vpop.permute.xlu0 %2416
  %2418 = vrot.lane.b32.xlu0 %v2370, 24
  %v2419 = vpop.permute.xlu0 %2418
  %2420 = vrot.lane.b32.xlu0 %v2371, 24
  %v2421 = vpop.permute.xlu0 %2420
  %2422 = vrot.lane.b32.xlu0 %v2372, 24
  %v2423 = vpop.permute.xlu0 %2422
  %2424 = vrot.lane.b32.xlu0 %v2373, 24
  %v2425 = vpop.permute.xlu0 %2424
  %2426 = vrot.lane.b32.xlu0 %v2374, 24
  %v2427 = vpop.permute.xlu0 %2426
  %2428 = vrot.lane.b32.xlu0 %v2375, 24
  %v2429 = vpop.permute.xlu0 %2428
  %2430 = vrot.lane.b32.xlu0 %v2376, 24
  %v2431 = vpop.permute.xlu0 %2430
  %2432 = vrot.lane.b32.xlu0 %v2377, 24
  %v2433 = vpop.permute.xlu0 %2432
  %2434 = vrot.lane.b32.xlu0 %v2378, 24
  %v2435 = vpop.permute.xlu0 %2434
  %2436 = vrot.lane.b32.xlu0 %v2379, 24
  %v2437 = vpop.permute.xlu0 %2436
  %2438 = vrot.lane.b32.xlu0 %v2380, 24
  %v2439 = vpop.permute.xlu0 %2438
  %2440 = vrot.lane.b32.xlu0 %v2381, 24
  %v2441 = vpop.permute.xlu0 %2440
  %2442 = vrot.lane.b32.xlu0 %v2382, 24
  %v2443 = vpop.permute.xlu0 %2442
  %2444 = vrot.lane.b32.xlu0 %v2383, 24
  %v2445 = vpop.permute.xlu0 %2444
  %2446 = vrot.lane.b32.xlu0 %v2384, 24
  %v2447 = vpop.permute.xlu0 %2446
  %2448 = vrot.lane.b32.xlu0 %v2385, 24
  %v2449 = vpop.permute.xlu0 %2448
  %v2514 = vunpack.c.l.b16 %v1041
  %v2515 = vunpack.c.l.b16 %v1042
  %v2516 = vunpack.c.l.b16 %v1043
  %v2517 = vunpack.c.l.b16 %v1044
  %v2518 = vunpack.c.l.b16 %v1045
  %v2519 = vunpack.c.l.b16 %v1046
  %v2520 = vunpack.c.l.b16 %v1047
  %v2521 = vunpack.c.l.b16 %v1048
  %v2522 = vunpack.c.l.b16 %v1049
  %v2523 = vunpack.c.l.b16 %v1050
  %v2524 = vunpack.c.l.b16 %v1051
  %v2525 = vunpack.c.l.b16 %v1052
  %v2526 = vunpack.c.l.b16 %v1053
  %v2527 = vunpack.c.l.b16 %v1054
  %v2528 = vunpack.c.l.b16 %v1055
  %v2529 = vunpack.c.l.b16 %v1056
  %v2530 = vunpack.c.l.b16 %v1057
  %v2531 = vunpack.c.l.b16 %v1058
  %v2532 = vunpack.c.l.b16 %v1059
  %v2533 = vunpack.c.l.b16 %v1060
  %v2534 = vunpack.c.l.b16 %v1061
  %v2535 = vunpack.c.l.b16 %v1062
  %v2536 = vunpack.c.l.b16 %v1063
  %v2537 = vunpack.c.l.b16 %v1064
  %v2538 = vunpack.c.l.b16 %v1065
  %v2539 = vunpack.c.l.b16 %v1066
  %v2540 = vunpack.c.l.b16 %v1067
  %v2541 = vunpack.c.l.b16 %v1068
  %v2542 = vunpack.c.l.b16 %v1069
  %v2543 = vunpack.c.l.b16 %v1070
  %v2544 = vunpack.c.l.b16 %v1071
  %v2545 = vunpack.c.l.b16 %v1072
  %v2546 = vunpack.c.l.b16 %v1073
  %v2547 = vunpack.c.l.b16 %v1074
  %v2548 = vunpack.c.l.b16 %v1075
  %v2549 = vunpack.c.l.b16 %v1076
  %v2550 = vunpack.c.l.b16 %v1077
  %v2551 = vunpack.c.l.b16 %v1078
  %v2552 = vunpack.c.l.b16 %v1079
  %v2553 = vunpack.c.l.b16 %v1080
  %v2554 = vunpack.c.l.b16 %v1081
  %v2555 = vunpack.c.l.b16 %v1082
  %v2556 = vunpack.c.l.b16 %v1083
  %v2557 = vunpack.c.l.b16 %v1084
  %v2558 = vunpack.c.l.b16 %v1085
  %v2559 = vunpack.c.l.b16 %v1086
  %v2560 = vunpack.c.l.b16 %v1087
  %v2561 = vunpack.c.l.b16 %v1088
  %v2562 = vunpack.c.l.b16 %v1089
  %v2563 = vunpack.c.l.b16 %v1090
  %v2564 = vunpack.c.l.b16 %v1091
  %v2565 = vunpack.c.l.b16 %v1092
  %v2566 = vunpack.c.l.b16 %v1093
  %v2567 = vunpack.c.l.b16 %v1094
  %v2568 = vunpack.c.l.b16 %v1095
  %v2569 = vunpack.c.l.b16 %v1096
  %v2570 = vunpack.c.l.b16 %v1097
  %v2571 = vunpack.c.l.b16 %v1098
  %v2572 = vunpack.c.l.b16 %v1099
  %v2573 = vunpack.c.l.b16 %v1100
  %v2574 = vunpack.c.l.b16 %v1101
  %v2575 = vunpack.c.l.b16 %v1102
  %v2576 = vunpack.c.l.b16 %v1103
  %v2577 = vunpack.c.l.b16 %v1104
  %v2578 = vpack.c.b16 %v2515, %v2514
  %v2579 = vpack.c.b16 %v2517, %v2516
  %v2580 = vpack.c.b16 %v2519, %v2518
  %v2581 = vpack.c.b16 %v2521, %v2520
  %v2582 = vpack.c.b16 %v2523, %v2522
  %v2583 = vpack.c.b16 %v2525, %v2524
  %v2584 = vpack.c.b16 %v2527, %v2526
  %v2585 = vpack.c.b16 %v2529, %v2528
  %v2586 = vpack.c.b16 %v2531, %v2530
  %v2587 = vpack.c.b16 %v2533, %v2532
  %v2588 = vpack.c.b16 %v2535, %v2534
  %v2589 = vpack.c.b16 %v2537, %v2536
  %v2590 = vpack.c.b16 %v2539, %v2538
  %v2591 = vpack.c.b16 %v2541, %v2540
  %v2592 = vpack.c.b16 %v2543, %v2542
  %v2593 = vpack.c.b16 %v2545, %v2544
  %v2594 = vpack.c.b16 %v2547, %v2546
  %v2595 = vpack.c.b16 %v2549, %v2548
  %v2596 = vpack.c.b16 %v2551, %v2550
  %v2597 = vpack.c.b16 %v2553, %v2552
  %v2598 = vpack.c.b16 %v2555, %v2554
  %v2599 = vpack.c.b16 %v2557, %v2556
  %v2600 = vpack.c.b16 %v2559, %v2558
  %v2601 = vpack.c.b16 %v2561, %v2560
  %v2602 = vpack.c.b16 %v2563, %v2562
  %v2603 = vpack.c.b16 %v2565, %v2564
  %v2604 = vpack.c.b16 %v2567, %v2566
  %v2605 = vpack.c.b16 %v2569, %v2568
  %v2606 = vpack.c.b16 %v2571, %v2570
  %v2607 = vpack.c.b16 %v2573, %v2572
  %v2608 = vpack.c.b16 %v2575, %v2574
  %v2609 = vpack.c.b16 %v2577, %v2576
  %2610 = vrot.lane.b32.xlu0 %v2578, 32
  %v2611 = vpop.permute.xlu0 %2610
  %2612 = vrot.lane.b32.xlu0 %v2579, 32
  %v2613 = vpop.permute.xlu0 %2612
  %2614 = vrot.lane.b32.xlu0 %v2580, 32
  %v2615 = vpop.permute.xlu0 %2614
  %2616 = vrot.lane.b32.xlu0 %v2581, 32
  %v2617 = vpop.permute.xlu0 %2616
  %2618 = vrot.lane.b32.xlu0 %v2582, 32
  %v2619 = vpop.permute.xlu0 %2618
  %2620 = vrot.lane.b32.xlu0 %v2583, 32
  %v2621 = vpop.permute.xlu0 %2620
  %2622 = vrot.lane.b32.xlu0 %v2584, 32
  %v2623 = vpop.permute.xlu0 %2622
  %2624 = vrot.lane.b32.xlu0 %v2585, 32
  %v2625 = vpop.permute.xlu0 %2624
  %2626 = vrot.lane.b32.xlu0 %v2586, 32
  %v2627 = vpop.permute.xlu0 %2626
  %2628 = vrot.lane.b32.xlu0 %v2587, 32
  %v2629 = vpop.permute.xlu0 %2628
  %2630 = vrot.lane.b32.xlu0 %v2588, 32
  %v2631 = vpop.permute.xlu0 %2630
  %2632 = vrot.lane.b32.xlu0 %v2589, 32
  %v2633 = vpop.permute.xlu0 %2632
  %2634 = vrot.lane.b32.xlu0 %v2590, 32
  %v2635 = vpop.permute.xlu0 %2634
  %2636 = vrot.lane.b32.xlu0 %v2591, 32
  %v2637 = vpop.permute.xlu0 %2636
  %2638 = vrot.lane.b32.xlu0 %v2592, 32
  %v2639 = vpop.permute.xlu0 %2638
  %2640 = vrot.lane.b32.xlu0 %v2593, 32
  %v2641 = vpop.permute.xlu0 %2640
  %2642 = vrot.lane.b32.xlu0 %v2594, 32
  %v2643 = vpop.permute.xlu0 %2642
  %2644 = vrot.lane.b32.xlu0 %v2595, 32
  %v2645 = vpop.permute.xlu0 %2644
  %2646 = vrot.lane.b32.xlu0 %v2596, 32
  %v2647 = vpop.permute.xlu0 %2646
  %2648 = vrot.lane.b32.xlu0 %v2597, 32
  %v2649 = vpop.permute.xlu0 %2648
  %2650 = vrot.lane.b32.xlu0 %v2598, 32
  %v2651 = vpop.permute.xlu0 %2650
  %2652 = vrot.lane.b32.xlu0 %v2599, 32
  %v2653 = vpop.permute.xlu0 %2652
  %2654 = vrot.lane.b32.xlu0 %v2600, 32
  %v2655 = vpop.permute.xlu0 %2654
  %2656 = vrot.lane.b32.xlu0 %v2601, 32
  %v2657 = vpop.permute.xlu0 %2656
  %2658 = vrot.lane.b32.xlu0 %v2602, 32
  %v2659 = vpop.permute.xlu0 %2658
  %2660 = vrot.lane.b32.xlu0 %v2603, 32
  %v2661 = vpop.permute.xlu0 %2660
  %2662 = vrot.lane.b32.xlu0 %v2604, 32
  %v2663 = vpop.permute.xlu0 %2662
  %2664 = vrot.lane.b32.xlu0 %v2605, 32
  %v2665 = vpop.permute.xlu0 %2664
  %2666 = vrot.lane.b32.xlu0 %v2606, 32
  %v2667 = vpop.permute.xlu0 %2666
  %2668 = vrot.lane.b32.xlu0 %v2607, 32
  %v2669 = vpop.permute.xlu0 %2668
  %2670 = vrot.lane.b32.xlu0 %v2608, 32
  %v2671 = vpop.permute.xlu0 %2670
  %2672 = vrot.lane.b32.xlu0 %v2609, 32
  %v2673 = vpop.permute.xlu0 %2672
  %v2738 = vunpack.c.l.b16 %v1169
  %v2739 = vunpack.c.l.b16 %v1170
  %v2740 = vunpack.c.l.b16 %v1171
  %v2741 = vunpack.c.l.b16 %v1172
  %v2742 = vunpack.c.l.b16 %v1173
  %v2743 = vunpack.c.l.b16 %v1174
  %v2744 = vunpack.c.l.b16 %v1175
  %v2745 = vunpack.c.l.b16 %v1176
  %v2746 = vunpack.c.l.b16 %v1177
  %v2747 = vunpack.c.l.b16 %v1178
  %v2748 = vunpack.c.l.b16 %v1179
  %v2749 = vunpack.c.l.b16 %v1180
  %v2750 = vunpack.c.l.b16 %v1181
  %v2751 = vunpack.c.l.b16 %v1182
  %v2752 = vunpack.c.l.b16 %v1183
  %v2753 = vunpack.c.l.b16 %v1184
  %v2754 = vunpack.c.l.b16 %v1185
  %v2755 = vunpack.c.l.b16 %v1186
  %v2756 = vunpack.c.l.b16 %v1187
  %v2757 = vunpack.c.l.b16 %v1188
  %v2758 = vunpack.c.l.b16 %v1189
  %v2759 = vunpack.c.l.b16 %v1190
  %v2760 = vunpack.c.l.b16 %v1191
  %v2761 = vunpack.c.l.b16 %v1192
  %v2762 = vunpack.c.l.b16 %v1193
  %v2763 = vunpack.c.l.b16 %v1194
  %v2764 = vunpack.c.l.b16 %v1195
  %v2765 = vunpack.c.l.b16 %v1196
  %v2766 = vunpack.c.l.b16 %v1197
  %v2767 = vunpack.c.l.b16 %v1198
  %v2768 = vunpack.c.l.b16 %v1199
  %v2769 = vunpack.c.l.b16 %v1200
  %v2770 = vunpack.c.l.b16 %v1201
  %v2771 = vunpack.c.l.b16 %v1202
  %v2772 = vunpack.c.l.b16 %v1203
  %v2773 = vunpack.c.l.b16 %v1204
  %v2774 = vunpack.c.l.b16 %v1205
  %v2775 = vunpack.c.l.b16 %v1206
  %v2776 = vunpack.c.l.b16 %v1207
  %v2777 = vunpack.c.l.b16 %v1208
  %v2778 = vunpack.c.l.b16 %v1209
  %v2779 = vunpack.c.l.b16 %v1210
  %v2780 = vunpack.c.l.b16 %v1211
  %v2781 = vunpack.c.l.b16 %v1212
  %v2782 = vunpack.c.l.b16 %v1213
  %v2783 = vunpack.c.l.b16 %v1214
  %v2784 = vunpack.c.l.b16 %v1215
  %v2785 = vunpack.c.l.b16 %v1216
  %v2786 = vunpack.c.l.b16 %v1217
  %v2787 = vunpack.c.l.b16 %v1218
  %v2788 = vunpack.c.l.b16 %v1219
  %v2789 = vunpack.c.l.b16 %v1220
  %v2790 = vunpack.c.l.b16 %v1221
  %v2791 = vunpack.c.l.b16 %v1222
  %v2792 = vunpack.c.l.b16 %v1223
  %v2793 = vunpack.c.l.b16 %v1224
  %v2794 = vunpack.c.l.b16 %v1225
  %v2795 = vunpack.c.l.b16 %v1226
  %v2796 = vunpack.c.l.b16 %v1227
  %v2797 = vunpack.c.l.b16 %v1228
  %v2798 = vunpack.c.l.b16 %v1229
  %v2799 = vunpack.c.l.b16 %v1230
  %v2800 = vunpack.c.l.b16 %v1231
  %v2801 = vunpack.c.l.b16 %v1232
  %v2802 = vpack.c.b16 %v2739, %v2738
  %v2803 = vpack.c.b16 %v2741, %v2740
  %v2804 = vpack.c.b16 %v2743, %v2742
  %v2805 = vpack.c.b16 %v2745, %v2744
  %v2806 = vpack.c.b16 %v2747, %v2746
  %v2807 = vpack.c.b16 %v2749, %v2748
  %v2808 = vpack.c.b16 %v2751, %v2750
  %v2809 = vpack.c.b16 %v2753, %v2752
  %v2810 = vpack.c.b16 %v2755, %v2754
  %v2811 = vpack.c.b16 %v2757, %v2756
  %v2812 = vpack.c.b16 %v2759, %v2758
  %v2813 = vpack.c.b16 %v2761, %v2760
  %v2814 = vpack.c.b16 %v2763, %v2762
  %v2815 = vpack.c.b16 %v2765, %v2764
  %v2816 = vpack.c.b16 %v2767, %v2766
  %v2817 = vpack.c.b16 %v2769, %v2768
  %v2818 = vpack.c.b16 %v2771, %v2770
  %v2819 = vpack.c.b16 %v2773, %v2772
  %v2820 = vpack.c.b16 %v2775, %v2774
  %v2821 = vpack.c.b16 %v2777, %v2776
  %v2822 = vpack.c.b16 %v2779, %v2778
  %v2823 = vpack.c.b16 %v2781, %v2780
  %v2824 = vpack.c.b16 %v2783, %v2782
  %v2825 = vpack.c.b16 %v2785, %v2784
  %v2826 = vpack.c.b16 %v2787, %v2786
  %v2827 = vpack.c.b16 %v2789, %v2788
  %v2828 = vpack.c.b16 %v2791, %v2790
  %v2829 = vpack.c.b16 %v2793, %v2792
  %v2830 = vpack.c.b16 %v2795, %v2794
  %v2831 = vpack.c.b16 %v2797, %v2796
  %v2832 = vpack.c.b16 %v2799, %v2798
  %v2833 = vpack.c.b16 %v2801, %v2800
  %2834 = vrot.lane.b32.xlu0 %v2802, 40
  %v2835 = vpop.permute.xlu0 %2834
  %2836 = vrot.lane.b32.xlu0 %v2803, 40
  %v2837 = vpop.permute.xlu0 %2836
  %2838 = vrot.lane.b32.xlu0 %v2804, 40
  %v2839 = vpop.permute.xlu0 %2838
  %2840 = vrot.lane.b32.xlu0 %v2805, 40
  %v2841 = vpop.permute.xlu0 %2840
  %2842 = vrot.lane.b32.xlu0 %v2806, 40
  %v2843 = vpop.permute.xlu0 %2842
  %2844 = vrot.lane.b32.xlu0 %v2807, 40
  %v2845 = vpop.permute.xlu0 %2844
  %2846 = vrot.lane.b32.xlu0 %v2808, 40
  %v2847 = vpop.permute.xlu0 %2846
  %2848 = vrot.lane.b32.xlu0 %v2809, 40
  %v2849 = vpop.permute.xlu0 %2848
  %2850 = vrot.lane.b32.xlu0 %v2810, 40
  %v2851 = vpop.permute.xlu0 %2850
  %2852 = vrot.lane.b32.xlu0 %v2811, 40
  %v2853 = vpop.permute.xlu0 %2852
  %2854 = vrot.lane.b32.xlu0 %v2812, 40
  %v2855 = vpop.permute.xlu0 %2854
  %2856 = vrot.lane.b32.xlu0 %v2813, 40
  %v2857 = vpop.permute.xlu0 %2856
  %2858 = vrot.lane.b32.xlu0 %v2814, 40
  %v2859 = vpop.permute.xlu0 %2858
  %2860 = vrot.lane.b32.xlu0 %v2815, 40
  %v2861 = vpop.permute.xlu0 %2860
  %2862 = vrot.lane.b32.xlu0 %v2816, 40
  %v2863 = vpop.permute.xlu0 %2862
  %2864 = vrot.lane.b32.xlu0 %v2817, 40
  %v2865 = vpop.permute.xlu0 %2864
  %2866 = vrot.lane.b32.xlu0 %v2818, 40
  %v2867 = vpop.permute.xlu0 %2866
  %2868 = vrot.lane.b32.xlu0 %v2819, 40
  %v2869 = vpop.permute.xlu0 %2868
  %2870 = vrot.lane.b32.xlu0 %v2820, 40
  %v2871 = vpop.permute.xlu0 %2870
  %2872 = vrot.lane.b32.xlu0 %v2821, 40
  %v2873 = vpop.permute.xlu0 %2872
  %2874 = vrot.lane.b32.xlu0 %v2822, 40
  %v2875 = vpop.permute.xlu0 %2874
  %2876 = vrot.lane.b32.xlu0 %v2823, 40
  %v2877 = vpop.permute.xlu0 %2876
  %2878 = vrot.lane.b32.xlu0 %v2824, 40
  %v2879 = vpop.permute.xlu0 %2878
  %2880 = vrot.lane.b32.xlu0 %v2825, 40
  %v2881 = vpop.permute.xlu0 %2880
  %2882 = vrot.lane.b32.xlu0 %v2826, 40
  %v2883 = vpop.permute.xlu0 %2882
  %2884 = vrot.lane.b32.xlu0 %v2827, 40
  %v2885 = vpop.permute.xlu0 %2884
  %2886 = vrot.lane.b32.xlu0 %v2828, 40
  %v2887 = vpop.permute.xlu0 %2886
  %2888 = vrot.lane.b32.xlu0 %v2829, 40
  %v2889 = vpop.permute.xlu0 %2888
  %2890 = vrot.lane.b32.xlu0 %v2830, 40
  %v2891 = vpop.permute.xlu0 %2890
  %2892 = vrot.lane.b32.xlu0 %v2831, 40
  %v2893 = vpop.permute.xlu0 %2892
  %2894 = vrot.lane.b32.xlu0 %v2832, 40
  %v2895 = vpop.permute.xlu0 %2894
  %2896 = vrot.lane.b32.xlu0 %v2833, 40
  %v2897 = vpop.permute.xlu0 %2896
  %v2962 = vunpack.c.l.b16 %v1298
  %v2963 = vunpack.c.l.b16 %v1299
  %v2964 = vunpack.c.l.b16 %v1300
  %v2965 = vunpack.c.l.b16 %v1301
  %v2966 = vunpack.c.l.b16 %v1302
  %v2967 = vunpack.c.l.b16 %v1303
  %v2968 = vunpack.c.l.b16 %v1304
  %v2969 = vunpack.c.l.b16 %v1305
  %v2970 = vunpack.c.l.b16 %v1306
  %v2971 = vunpack.c.l.b16 %v1307
  %v2972 = vunpack.c.l.b16 %v1308
  %v2973 = vunpack.c.l.b16 %v1309
  %v2974 = vunpack.c.l.b16 %v1310
  %v2975 = vunpack.c.l.b16 %v1311
  %v2976 = vunpack.c.l.b16 %v1312
  %v2977 = vunpack.c.l.b16 %v1313
  %v2978 = vunpack.c.l.b16 %v1314
  %v2979 = vunpack.c.l.b16 %v1315
  %v2980 = vunpack.c.l.b16 %v1316
  %v2981 = vunpack.c.l.b16 %v1317
  %v2982 = vunpack.c.l.b16 %v1318
  %v2983 = vunpack.c.l.b16 %v1319
  %v2984 = vunpack.c.l.b16 %v1320
  %v2985 = vunpack.c.l.b16 %v1321
  %v2986 = vunpack.c.l.b16 %v1322
  %v2987 = vunpack.c.l.b16 %v1323
  %v2988 = vunpack.c.l.b16 %v1324
  %v2989 = vunpack.c.l.b16 %v1325
  %v2990 = vunpack.c.l.b16 %v1326
  %v2991 = vunpack.c.l.b16 %v1327
  %v2992 = vunpack.c.l.b16 %v1328
  %v2993 = vunpack.c.l.b16 %v1329
  %v2994 = vunpack.c.l.b16 %v1330
  %v2995 = vunpack.c.l.b16 %v1331
  %v2996 = vunpack.c.l.b16 %v1332
  %v2997 = vunpack.c.l.b16 %v1333
  %v2998 = vunpack.c.l.b16 %v1334
  %v2999 = vunpack.c.l.b16 %v1335
  %v3000 = vunpack.c.l.b16 %v1336
  %v3001 = vunpack.c.l.b16 %v1337
  %v3002 = vunpack.c.l.b16 %v1338
  %v3003 = vunpack.c.l.b16 %v1339
  %v3004 = vunpack.c.l.b16 %v1340
  %v3005 = vunpack.c.l.b16 %v1341
  %v3006 = vunpack.c.l.b16 %v1342
  %v3007 = vunpack.c.l.b16 %v1343
  %v3008 = vunpack.c.l.b16 %v1344
  %v3009 = vunpack.c.l.b16 %v1345
  %v3010 = vunpack.c.l.b16 %v1346
  %v3011 = vunpack.c.l.b16 %v1347
  %v3012 = vunpack.c.l.b16 %v1348
  %v3013 = vunpack.c.l.b16 %v1349
  %v3014 = vunpack.c.l.b16 %v1350
  %v3015 = vunpack.c.l.b16 %v1351
  %v3016 = vunpack.c.l.b16 %v1352
  %v3017 = vunpack.c.l.b16 %v1353
  %v3018 = vunpack.c.l.b16 %v1354
  %v3019 = vunpack.c.l.b16 %v1355
  %v3020 = vunpack.c.l.b16 %v1356
  %v3021 = vunpack.c.l.b16 %v1357
  %v3022 = vunpack.c.l.b16 %v1358
  %v3023 = vunpack.c.l.b16 %v1359
  %v3024 = vunpack.c.l.b16 %v1360
  %v3025 = vunpack.c.l.b16 %v1361
  %v3026 = vpack.c.b16 %v2963, %v2962
  %v3027 = vpack.c.b16 %v2965, %v2964
  %v3028 = vpack.c.b16 %v2967, %v2966
  %v3029 = vpack.c.b16 %v2969, %v2968
  %v3030 = vpack.c.b16 %v2971, %v2970
  %v3031 = vpack.c.b16 %v2973, %v2972
  %v3032 = vpack.c.b16 %v2975, %v2974
  %v3033 = vpack.c.b16 %v2977, %v2976
  %v3034 = vpack.c.b16 %v2979, %v2978
  %v3035 = vpack.c.b16 %v2981, %v2980
  %v3036 = vpack.c.b16 %v2983, %v2982
  %v3037 = vpack.c.b16 %v2985, %v2984
  %v3038 = vpack.c.b16 %v2987, %v2986
  %v3039 = vpack.c.b16 %v2989, %v2988
  %v3040 = vpack.c.b16 %v2991, %v2990
  %v3041 = vpack.c.b16 %v2993, %v2992
  %v3042 = vpack.c.b16 %v2995, %v2994
  %v3043 = vpack.c.b16 %v2997, %v2996
  %v3044 = vpack.c.b16 %v2999, %v2998
  %v3045 = vpack.c.b16 %v3001, %v3000
  %v3046 = vpack.c.b16 %v3003, %v3002
  %v3047 = vpack.c.b16 %v3005, %v3004
  %v3048 = vpack.c.b16 %v3007, %v3006
  %v3049 = vpack.c.b16 %v3009, %v3008
  %v3050 = vpack.c.b16 %v3011, %v3010
  %v3051 = vpack.c.b16 %v3013, %v3012
  %v3052 = vpack.c.b16 %v3015, %v3014
  %v3053 = vpack.c.b16 %v3017, %v3016
  %v3054 = vpack.c.b16 %v3019, %v3018
  %v3055 = vpack.c.b16 %v3021, %v3020
  %v3056 = vpack.c.b16 %v3023, %v3022
  %v3057 = vpack.c.b16 %v3025, %v3024
  %3058 = vrot.lane.b32.xlu0 %v3026, 48
  %v3059 = vpop.permute.xlu0 %3058
  %3060 = vrot.lane.b32.xlu0 %v3027, 48
  %v3061 = vpop.permute.xlu0 %3060
  %3062 = vrot.lane.b32.xlu0 %v3028, 48
  %v3063 = vpop.permute.xlu0 %3062
  %3064 = vrot.lane.b32.xlu0 %v3029, 48
  %v3065 = vpop.permute.xlu0 %3064
  %3066 = vrot.lane.b32.xlu0 %v3030, 48
  %v3067 = vpop.permute.xlu0 %3066
  %3068 = vrot.lane.b32.xlu0 %v3031, 48
  %v3069 = vpop.permute.xlu0 %3068
  %3070 = vrot.lane.b32.xlu0 %v3032, 48
  %v3071 = vpop.permute.xlu0 %3070
  %3072 = vrot.lane.b32.xlu0 %v3033, 48
  %v3073 = vpop.permute.xlu0 %3072
  %3074 = vrot.lane.b32.xlu0 %v3034, 48
  %v3075 = vpop.permute.xlu0 %3074
  %3076 = vrot.lane.b32.xlu0 %v3035, 48
  %v3077 = vpop.permute.xlu0 %3076
  %3078 = vrot.lane.b32.xlu0 %v3036, 48
  %v3079 = vpop.permute.xlu0 %3078
  %3080 = vrot.lane.b32.xlu0 %v3037, 48
  %v3081 = vpop.permute.xlu0 %3080
  %3082 = vrot.lane.b32.xlu0 %v3038, 48
  %v3083 = vpop.permute.xlu0 %3082
  %3084 = vrot.lane.b32.xlu0 %v3039, 48
  %v3085 = vpop.permute.xlu0 %3084
  %3086 = vrot.lane.b32.xlu0 %v3040, 48
  %v3087 = vpop.permute.xlu0 %3086
  %3088 = vrot.lane.b32.xlu0 %v3041, 48
  %v3089 = vpop.permute.xlu0 %3088
  %3090 = vrot.lane.b32.xlu0 %v3042, 48
  %v3091 = vpop.permute.xlu0 %3090
  %3092 = vrot.lane.b32.xlu0 %v3043, 48
  %v3093 = vpop.permute.xlu0 %3092
  %3094 = vrot.lane.b32.xlu0 %v3044, 48
  %v3095 = vpop.permute.xlu0 %3094
  %3096 = vrot.lane.b32.xlu0 %v3045, 48
  %v3097 = vpop.permute.xlu0 %3096
  %3098 = vrot.lane.b32.xlu0 %v3046, 48
  %v3099 = vpop.permute.xlu0 %3098
  %3100 = vrot.lane.b32.xlu0 %v3047, 48
  %v3101 = vpop.permute.xlu0 %3100
  %3102 = vrot.lane.b32.xlu0 %v3048, 48
  %v3103 = vpop.permute.xlu0 %3102
  %3104 = vrot.lane.b32.xlu0 %v3049, 48
  %v3105 = vpop.permute.xlu0 %3104
  %3106 = vrot.lane.b32.xlu0 %v3050, 48
  %v3107 = vpop.permute.xlu0 %3106
  %3108 = vrot.lane.b32.xlu0 %v3051, 48
  %v3109 = vpop.permute.xlu0 %3108
  %3110 = vrot.lane.b32.xlu0 %v3052, 48
  %v3111 = vpop.permute.xlu0 %3110
  %3112 = vrot.lane.b32.xlu0 %v3053, 48
  %v3113 = vpop.permute.xlu0 %3112
  %3114 = vrot.lane.b32.xlu0 %v3054, 48
  %v3115 = vpop.permute.xlu0 %3114
  %3116 = vrot.lane.b32.xlu0 %v3055, 48
  %v3117 = vpop.permute.xlu0 %3116
  %3118 = vrot.lane.b32.xlu0 %v3056, 48
  %v3119 = vpop.permute.xlu0 %3118
  %3120 = vrot.lane.b32.xlu0 %v3057, 48
  %v3121 = vpop.permute.xlu0 %3120
  %v3186 = vunpack.c.l.b16 %v1426
  %v3187 = vunpack.c.l.b16 %v1427
  %v3188 = vunpack.c.l.b16 %v1428
  %v3189 = vunpack.c.l.b16 %v1429
  %v3190 = vunpack.c.l.b16 %v1430
  %v3191 = vunpack.c.l.b16 %v1431
  %v3192 = vunpack.c.l.b16 %v1432
  %v3193 = vunpack.c.l.b16 %v1433
  %v3194 = vunpack.c.l.b16 %v1434
  %v3195 = vunpack.c.l.b16 %v1435
  %v3196 = vunpack.c.l.b16 %v1436
  %v3197 = vunpack.c.l.b16 %v1437
  %v3198 = vunpack.c.l.b16 %v1438
  %v3199 = vunpack.c.l.b16 %v1439
  %v3200 = vunpack.c.l.b16 %v1440
  %v3201 = vunpack.c.l.b16 %v1441
  %v3202 = vunpack.c.l.b16 %v1442
  %v3203 = vunpack.c.l.b16 %v1443
  %v3204 = vunpack.c.l.b16 %v1444
  %v3205 = vunpack.c.l.b16 %v1445
  %v3206 = vunpack.c.l.b16 %v1446
  %v3207 = vunpack.c.l.b16 %v1447
  %v3208 = vunpack.c.l.b16 %v1448
  %v3209 = vunpack.c.l.b16 %v1449
  %v3210 = vunpack.c.l.b16 %v1450
  %v3211 = vunpack.c.l.b16 %v1451
  %v3212 = vunpack.c.l.b16 %v1452
  %v3213 = vunpack.c.l.b16 %v1453
  %v3214 = vunpack.c.l.b16 %v1454
  %v3215 = vunpack.c.l.b16 %v1455
  %v3216 = vunpack.c.l.b16 %v1456
  %v3217 = vunpack.c.l.b16 %v1457
  %v3218 = vunpack.c.l.b16 %v1458
  %v3219 = vunpack.c.l.b16 %v1459
  %v3220 = vunpack.c.l.b16 %v1460
  %v3221 = vunpack.c.l.b16 %v1461
  %v3222 = vunpack.c.l.b16 %v1462
  %v3223 = vunpack.c.l.b16 %v1463
  %v3224 = vunpack.c.l.b16 %v1464
  %v3225 = vunpack.c.l.b16 %v1465
  %v3226 = vunpack.c.l.b16 %v1466
  %v3227 = vunpack.c.l.b16 %v1467
  %v3228 = vunpack.c.l.b16 %v1468
  %v3229 = vunpack.c.l.b16 %v1469
  %v3230 = vunpack.c.l.b16 %v1470
  %v3231 = vunpack.c.l.b16 %v1471
  %v3232 = vunpack.c.l.b16 %v1472
  %v3233 = vunpack.c.l.b16 %v1473
  %v3234 = vunpack.c.l.b16 %v1474
  %v3235 = vunpack.c.l.b16 %v1475
  %v3236 = vunpack.c.l.b16 %v1476
  %v3237 = vunpack.c.l.b16 %v1477
  %v3238 = vunpack.c.l.b16 %v1478
  %v3239 = vunpack.c.l.b16 %v1479
  %v3240 = vunpack.c.l.b16 %v1480
  %v3241 = vunpack.c.l.b16 %v1481
  %v3242 = vunpack.c.l.b16 %v1482
  %v3243 = vunpack.c.l.b16 %v1483
  %v3244 = vunpack.c.l.b16 %v1484
  %v3245 = vunpack.c.l.b16 %v1485
  %v3246 = vunpack.c.l.b16 %v1486
  %v3247 = vunpack.c.l.b16 %v1487
  %v3248 = vunpack.c.l.b16 %v1488
  %v3249 = vunpack.c.l.b16 %v1489
  %v3250 = vpack.c.b16 %v3187, %v3186
  %v3251 = vpack.c.b16 %v3189, %v3188
  %v3252 = vpack.c.b16 %v3191, %v3190
  %v3253 = vpack.c.b16 %v3193, %v3192
  %v3254 = vpack.c.b16 %v3195, %v3194
  %v3255 = vpack.c.b16 %v3197, %v3196
  %v3256 = vpack.c.b16 %v3199, %v3198
  %v3257 = vpack.c.b16 %v3201, %v3200
  %v3258 = vpack.c.b16 %v3203, %v3202
  %v3259 = vpack.c.b16 %v3205, %v3204
  %v3260 = vpack.c.b16 %v3207, %v3206
  %v3261 = vpack.c.b16 %v3209, %v3208
  %v3262 = vpack.c.b16 %v3211, %v3210
  %v3263 = vpack.c.b16 %v3213, %v3212
  %v3264 = vpack.c.b16 %v3215, %v3214
  %v3265 = vpack.c.b16 %v3217, %v3216
  %v3266 = vpack.c.b16 %v3219, %v3218
  %v3267 = vpack.c.b16 %v3221, %v3220
  %v3268 = vpack.c.b16 %v3223, %v3222
  %v3269 = vpack.c.b16 %v3225, %v3224
  %v3270 = vpack.c.b16 %v3227, %v3226
  %v3271 = vpack.c.b16 %v3229, %v3228
  %v3272 = vpack.c.b16 %v3231, %v3230
  %v3273 = vpack.c.b16 %v3233, %v3232
  %v3274 = vpack.c.b16 %v3235, %v3234
  %v3275 = vpack.c.b16 %v3237, %v3236
  %v3276 = vpack.c.b16 %v3239, %v3238
  %v3277 = vpack.c.b16 %v3241, %v3240
  %v3278 = vpack.c.b16 %v3243, %v3242
  %v3279 = vpack.c.b16 %v3245, %v3244
  %v3280 = vpack.c.b16 %v3247, %v3246
  %v3281 = vpack.c.b16 %v3249, %v3248
  %3282 = vrot.lane.b32.xlu0 %v3250, 56
  %v3283 = vpop.permute.xlu0 %3282
  %3284 = vrot.lane.b32.xlu0 %v3251, 56
  %v3285 = vpop.permute.xlu0 %3284
  %3286 = vrot.lane.b32.xlu0 %v3252, 56
  %v3287 = vpop.permute.xlu0 %3286
  %3288 = vrot.lane.b32.xlu0 %v3253, 56
  %v3289 = vpop.permute.xlu0 %3288
  %3290 = vrot.lane.b32.xlu0 %v3254, 56
  %v3291 = vpop.permute.xlu0 %3290
  %3292 = vrot.lane.b32.xlu0 %v3255, 56
  %v3293 = vpop.permute.xlu0 %3292
  %3294 = vrot.lane.b32.xlu0 %v3256, 56
  %v3295 = vpop.permute.xlu0 %3294
  %3296 = vrot.lane.b32.xlu0 %v3257, 56
  %v3297 = vpop.permute.xlu0 %3296
  %3298 = vrot.lane.b32.xlu0 %v3258, 56
  %v3299 = vpop.permute.xlu0 %3298
  %3300 = vrot.lane.b32.xlu0 %v3259, 56
  %v3301 = vpop.permute.xlu0 %3300
  %3302 = vrot.lane.b32.xlu0 %v3260, 56
  %v3303 = vpop.permute.xlu0 %3302
  %3304 = vrot.lane.b32.xlu0 %v3261, 56
  %v3305 = vpop.permute.xlu0 %3304
  %3306 = vrot.lane.b32.xlu0 %v3262, 56
  %v3307 = vpop.permute.xlu0 %3306
  %3308 = vrot.lane.b32.xlu0 %v3263, 56
  %v3309 = vpop.permute.xlu0 %3308
  %3310 = vrot.lane.b32.xlu0 %v3264, 56
  %v3311 = vpop.permute.xlu0 %3310
  %3312 = vrot.lane.b32.xlu0 %v3265, 56
  %v3313 = vpop.permute.xlu0 %3312
  %3314 = vrot.lane.b32.xlu0 %v3266, 56
  %v3315 = vpop.permute.xlu0 %3314
  %3316 = vrot.lane.b32.xlu0 %v3267, 56
  %v3317 = vpop.permute.xlu0 %3316
  %3318 = vrot.lane.b32.xlu0 %v3268, 56
  %v3319 = vpop.permute.xlu0 %3318
  %3320 = vrot.lane.b32.xlu0 %v3269, 56
  %v3321 = vpop.permute.xlu0 %3320
  %3322 = vrot.lane.b32.xlu0 %v3270, 56
  %v3323 = vpop.permute.xlu0 %3322
  %3324 = vrot.lane.b32.xlu0 %v3271, 56
  %v3325 = vpop.permute.xlu0 %3324
  %3326 = vrot.lane.b32.xlu0 %v3272, 56
  %v3327 = vpop.permute.xlu0 %3326
  %3328 = vrot.lane.b32.xlu0 %v3273, 56
  %v3329 = vpop.permute.xlu0 %3328
  %3330 = vrot.lane.b32.xlu0 %v3274, 56
  %v3331 = vpop.permute.xlu0 %3330
  %3332 = vrot.lane.b32.xlu0 %v3275, 56
  %v3333 = vpop.permute.xlu0 %3332
  %3334 = vrot.lane.b32.xlu0 %v3276, 56
  %v3335 = vpop.permute.xlu0 %3334
  %3336 = vrot.lane.b32.xlu0 %v3277, 56
  %v3337 = vpop.permute.xlu0 %3336
  %3338 = vrot.lane.b32.xlu0 %v3278, 56
  %v3339 = vpop.permute.xlu0 %3338
  %3340 = vrot.lane.b32.xlu0 %v3279, 56
  %v3341 = vpop.permute.xlu0 %3340
  %3342 = vrot.lane.b32.xlu0 %v3280, 56
  %v3343 = vpop.permute.xlu0 %3342
  %3344 = vrot.lane.b32.xlu0 %v3281, 56
  %v3345 = vpop.permute.xlu0 %3344
  %v3410 = vunpack.c.l.b16 %v1554
  %v3411 = vunpack.c.l.b16 %v1555
  %v3412 = vunpack.c.l.b16 %v1556
  %v3413 = vunpack.c.l.b16 %v1557
  %v3414 = vunpack.c.l.b16 %v1558
  %v3415 = vunpack.c.l.b16 %v1559
  %v3416 = vunpack.c.l.b16 %v1560
  %v3417 = vunpack.c.l.b16 %v1561
  %v3418 = vunpack.c.l.b16 %v1562
  %v3419 = vunpack.c.l.b16 %v1563
  %v3420 = vunpack.c.l.b16 %v1564
  %v3421 = vunpack.c.l.b16 %v1565
  %v3422 = vunpack.c.l.b16 %v1566
  %v3423 = vunpack.c.l.b16 %v1567
  %v3424 = vunpack.c.l.b16 %v1568
  %v3425 = vunpack.c.l.b16 %v1569
  %v3426 = vunpack.c.l.b16 %v1570
  %v3427 = vunpack.c.l.b16 %v1571
  %v3428 = vunpack.c.l.b16 %v1572
  %v3429 = vunpack.c.l.b16 %v1573
  %v3430 = vunpack.c.l.b16 %v1574
  %v3431 = vunpack.c.l.b16 %v1575
  %v3432 = vunpack.c.l.b16 %v1576
  %v3433 = vunpack.c.l.b16 %v1577
  %v3434 = vunpack.c.l.b16 %v1578
  %v3435 = vunpack.c.l.b16 %v1579
  %v3436 = vunpack.c.l.b16 %v1580
  %v3437 = vunpack.c.l.b16 %v1581
  %v3438 = vunpack.c.l.b16 %v1582
  %v3439 = vunpack.c.l.b16 %v1583
  %v3440 = vunpack.c.l.b16 %v1584
  %v3441 = vunpack.c.l.b16 %v1585
  %v3442 = vunpack.c.l.b16 %v1586
  %v3443 = vunpack.c.l.b16 %v1587
  %v3444 = vunpack.c.l.b16 %v1588
  %v3445 = vunpack.c.l.b16 %v1589
  %v3446 = vunpack.c.l.b16 %v1590
  %v3447 = vunpack.c.l.b16 %v1591
  %v3448 = vunpack.c.l.b16 %v1592
  %v3449 = vunpack.c.l.b16 %v1593
  %v3450 = vunpack.c.l.b16 %v1594
  %v3451 = vunpack.c.l.b16 %v1595
  %v3452 = vunpack.c.l.b16 %v1596
  %v3453 = vunpack.c.l.b16 %v1597
  %v3454 = vunpack.c.l.b16 %v1598
  %v3455 = vunpack.c.l.b16 %v1599
  %v3456 = vunpack.c.l.b16 %v1600
  %v3457 = vunpack.c.l.b16 %v1601
  %v3458 = vunpack.c.l.b16 %v1602
  %v3459 = vunpack.c.l.b16 %v1603
  %v3460 = vunpack.c.l.b16 %v1604
  %v3461 = vunpack.c.l.b16 %v1605
  %v3462 = vunpack.c.l.b16 %v1606
  %v3463 = vunpack.c.l.b16 %v1607
  %v3464 = vunpack.c.l.b16 %v1608
  %v3465 = vunpack.c.l.b16 %v1609
  %v3466 = vunpack.c.l.b16 %v1610
  %v3467 = vunpack.c.l.b16 %v1611
  %v3468 = vunpack.c.l.b16 %v1612
  %v3469 = vunpack.c.l.b16 %v1613
  %v3470 = vunpack.c.l.b16 %v1614
  %v3471 = vunpack.c.l.b16 %v1615
  %v3472 = vunpack.c.l.b16 %v1616
  %v3473 = vunpack.c.l.b16 %v1617
  %v3474 = vpack.c.b16 %v3411, %v3410
  %v3475 = vpack.c.b16 %v3413, %v3412
  %v3476 = vpack.c.b16 %v3415, %v3414
  %v3477 = vpack.c.b16 %v3417, %v3416
  %v3478 = vpack.c.b16 %v3419, %v3418
  %v3479 = vpack.c.b16 %v3421, %v3420
  %v3480 = vpack.c.b16 %v3423, %v3422
  %v3481 = vpack.c.b16 %v3425, %v3424
  %v3482 = vpack.c.b16 %v3427, %v3426
  %v3483 = vpack.c.b16 %v3429, %v3428
  %v3484 = vpack.c.b16 %v3431, %v3430
  %v3485 = vpack.c.b16 %v3433, %v3432
  %v3486 = vpack.c.b16 %v3435, %v3434
  %v3487 = vpack.c.b16 %v3437, %v3436
  %v3488 = vpack.c.b16 %v3439, %v3438
  %v3489 = vpack.c.b16 %v3441, %v3440
  %v3490 = vpack.c.b16 %v3443, %v3442
  %v3491 = vpack.c.b16 %v3445, %v3444
  %v3492 = vpack.c.b16 %v3447, %v3446
  %v3493 = vpack.c.b16 %v3449, %v3448
  %v3494 = vpack.c.b16 %v3451, %v3450
  %v3495 = vpack.c.b16 %v3453, %v3452
  %v3496 = vpack.c.b16 %v3455, %v3454
  %v3497 = vpack.c.b16 %v3457, %v3456
  %v3498 = vpack.c.b16 %v3459, %v3458
  %v3499 = vpack.c.b16 %v3461, %v3460
  %v3500 = vpack.c.b16 %v3463, %v3462
  %v3501 = vpack.c.b16 %v3465, %v3464
  %v3502 = vpack.c.b16 %v3467, %v3466
  %v3503 = vpack.c.b16 %v3469, %v3468
  %v3504 = vpack.c.b16 %v3471, %v3470
  %v3505 = vpack.c.b16 %v3473, %v3472
  %3506 = vrot.lane.b32.xlu0 %v3474, 64
  %v3507 = vpop.permute.xlu0 %3506
  %3508 = vrot.lane.b32.xlu0 %v3475, 64
  %v3509 = vpop.permute.xlu0 %3508
  %3510 = vrot.lane.b32.xlu0 %v3476, 64
  %v3511 = vpop.permute.xlu0 %3510
  %3512 = vrot.lane.b32.xlu0 %v3477, 64
  %v3513 = vpop.permute.xlu0 %3512
  %3514 = vrot.lane.b32.xlu0 %v3478, 64
  %v3515 = vpop.permute.xlu0 %3514
  %3516 = vrot.lane.b32.xlu0 %v3479, 64
  %v3517 = vpop.permute.xlu0 %3516
  %3518 = vrot.lane.b32.xlu0 %v3480, 64
  %v3519 = vpop.permute.xlu0 %3518
  %3520 = vrot.lane.b32.xlu0 %v3481, 64
  %v3521 = vpop.permute.xlu0 %3520
  %3522 = vrot.lane.b32.xlu0 %v3482, 64
  %v3523 = vpop.permute.xlu0 %3522
  %3524 = vrot.lane.b32.xlu0 %v3483, 64
  %v3525 = vpop.permute.xlu0 %3524
  %3526 = vrot.lane.b32.xlu0 %v3484, 64
  %v3527 = vpop.permute.xlu0 %3526
  %3528 = vrot.lane.b32.xlu0 %v3485, 64
  %v3529 = vpop.permute.xlu0 %3528
  %3530 = vrot.lane.b32.xlu0 %v3486, 64
  %v3531 = vpop.permute.xlu0 %3530
  %3532 = vrot.lane.b32.xlu0 %v3487, 64
  %v3533 = vpop.permute.xlu0 %3532
  %3534 = vrot.lane.b32.xlu0 %v3488, 64
  %v3535 = vpop.permute.xlu0 %3534
  %3536 = vrot.lane.b32.xlu0 %v3489, 64
  %v3537 = vpop.permute.xlu0 %3536
  %3538 = vrot.lane.b32.xlu0 %v3490, 64
  %v3539 = vpop.permute.xlu0 %3538
  %3540 = vrot.lane.b32.xlu0 %v3491, 64
  %v3541 = vpop.permute.xlu0 %3540
  %3542 = vrot.lane.b32.xlu0 %v3492, 64
  %v3543 = vpop.permute.xlu0 %3542
  %3544 = vrot.lane.b32.xlu0 %v3493, 64
  %v3545 = vpop.permute.xlu0 %3544
  %3546 = vrot.lane.b32.xlu0 %v3494, 64
  %v3547 = vpop.permute.xlu0 %3546
  %3548 = vrot.lane.b32.xlu0 %v3495, 64
  %v3549 = vpop.permute.xlu0 %3548
  %3550 = vrot.lane.b32.xlu0 %v3496, 64
  %v3551 = vpop.permute.xlu0 %3550
  %3552 = vrot.lane.b32.xlu0 %v3497, 64
  %v3553 = vpop.permute.xlu0 %3552
  %3554 = vrot.lane.b32.xlu0 %v3498, 64
  %v3555 = vpop.permute.xlu0 %3554
  %3556 = vrot.lane.b32.xlu0 %v3499, 64
  %v3557 = vpop.permute.xlu0 %3556
  %3558 = vrot.lane.b32.xlu0 %v3500, 64
  %v3559 = vpop.permute.xlu0 %3558
  %3560 = vrot.lane.b32.xlu0 %v3501, 64
  %v3561 = vpop.permute.xlu0 %3560
  %3562 = vrot.lane.b32.xlu0 %v3502, 64
  %v3563 = vpop.permute.xlu0 %3562
  %3564 = vrot.lane.b32.xlu0 %v3503, 64
  %v3565 = vpop.permute.xlu0 %3564
  %3566 = vrot.lane.b32.xlu0 %v3504, 64
  %v3567 = vpop.permute.xlu0 %3566
  %3568 = vrot.lane.b32.xlu0 %v3505, 64
  %v3569 = vpop.permute.xlu0 %3568
  %v3572 = vsel %vm400, %v1746, %v1939
  %v3575 = vsel %vm400, %v1747, %v1941
  %v3578 = vsel %vm400, %v1748, %v1943
  %v3581 = vsel %vm400, %v1749, %v1945
  %v3584 = vsel %vm400, %v1750, %v1947
  %v3587 = vsel %vm400, %v1751, %v1949
  %v3590 = vsel %vm400, %v1752, %v1951
  %v3593 = vsel %vm400, %v1753, %v1953
  %v3596 = vsel %vm400, %v1754, %v1955
  %v3599 = vsel %vm400, %v1755, %v1957
  %v3602 = vsel %vm400, %v1756, %v1959
  %v3605 = vsel %vm400, %v1757, %v1961
  %v3608 = vsel %vm400, %v1758, %v1963
  %v3611 = vsel %vm400, %v1759, %v1965
  %v3614 = vsel %vm400, %v1760, %v1967
  %v3617 = vsel %vm400, %v1761, %v1969
  %v3620 = vsel %vm400, %v1762, %v1971
  %v3623 = vsel %vm400, %v1763, %v1973
  %v3626 = vsel %vm400, %v1764, %v1975
  %v3629 = vsel %vm400, %v1765, %v1977
  %v3632 = vsel %vm400, %v1766, %v1979
  %v3635 = vsel %vm400, %v1767, %v1981
  %v3638 = vsel %vm400, %v1768, %v1983
  %v3641 = vsel %vm400, %v1769, %v1985
  %v3644 = vsel %vm400, %v1770, %v1987
  %v3647 = vsel %vm400, %v1771, %v1989
  %v3650 = vsel %vm400, %v1772, %v1991
  %v3653 = vsel %vm400, %v1773, %v1993
  %v3656 = vsel %vm400, %v1774, %v1995
  %v3659 = vsel %vm400, %v1775, %v1997
  %v3662 = vsel %vm400, %v1776, %v1999
  %v3665 = vsel %vm400, %v1777, %v2001
  %vm3666 = vcmask 130048
  %v3668 = vsel %vm3666, %v3572, %v2163
  %v3670 = vsel %vm3666, %v3575, %v2165
  %v3672 = vsel %vm3666, %v3578, %v2167
  %v3674 = vsel %vm3666, %v3581, %v2169
  %v3676 = vsel %vm3666, %v3584, %v2171
  %v3678 = vsel %vm3666, %v3587, %v2173
  %v3680 = vsel %vm3666, %v3590, %v2175
  %v3682 = vsel %vm3666, %v3593, %v2177
  %v3684 = vsel %vm3666, %v3596, %v2179
  %v3686 = vsel %vm3666, %v3599, %v2181
  %v3688 = vsel %vm3666, %v3602, %v2183
  %v3690 = vsel %vm3666, %v3605, %v2185
  %v3692 = vsel %vm3666, %v3608, %v2187
  %v3694 = vsel %vm3666, %v3611, %v2189
  %v3696 = vsel %vm3666, %v3614, %v2191
  %v3698 = vsel %vm3666, %v3617, %v2193
  %v3700 = vsel %vm3666, %v3620, %v2195
  %v3702 = vsel %vm3666, %v3623, %v2197
  %v3704 = vsel %vm3666, %v3626, %v2199
  %v3706 = vsel %vm3666, %v3629, %v2201
  %v3708 = vsel %vm3666, %v3632, %v2203
  %v3710 = vsel %vm3666, %v3635, %v2205
  %v3712 = vsel %vm3666, %v3638, %v2207
  %v3714 = vsel %vm3666, %v3641, %v2209
  %v3716 = vsel %vm3666, %v3644, %v2211
  %v3718 = vsel %vm3666, %v3647, %v2213
  %v3720 = vsel %vm3666, %v3650, %v2215
  %v3722 = vsel %vm3666, %v3653, %v2217
  %v3724 = vsel %vm3666, %v3656, %v2219
  %v3726 = vsel %vm3666, %v3659, %v2221
  %v3728 = vsel %vm3666, %v3662, %v2223
  %v3730 = vsel %vm3666, %v3665, %v2225
  %vm3731 = vcmask 195584
  %v3733 = vsel %vm3731, %v3668, %v2387
  %v3735 = vsel %vm3731, %v3670, %v2389
  %v3737 = vsel %vm3731, %v3672, %v2391
  %v3739 = vsel %vm3731, %v3674, %v2393
  %v3741 = vsel %vm3731, %v3676, %v2395
  %v3743 = vsel %vm3731, %v3678, %v2397
  %v3745 = vsel %vm3731, %v3680, %v2399
  %v3747 = vsel %vm3731, %v3682, %v2401
  %v3749 = vsel %vm3731, %v3684, %v2403
  %v3751 = vsel %vm3731, %v3686, %v2405
  %v3753 = vsel %vm3731, %v3688, %v2407
  %v3755 = vsel %vm3731, %v3690, %v2409
  %v3757 = vsel %vm3731, %v3692, %v2411
  %v3759 = vsel %vm3731, %v3694, %v2413
  %v3761 = vsel %vm3731, %v3696, %v2415
  %v3763 = vsel %vm3731, %v3698, %v2417
  %v3765 = vsel %vm3731, %v3700, %v2419
  %v3767 = vsel %vm3731, %v3702, %v2421
  %v3769 = vsel %vm3731, %v3704, %v2423
  %v3771 = vsel %vm3731, %v3706, %v2425
  %v3773 = vsel %vm3731, %v3708, %v2427
  %v3775 = vsel %vm3731, %v3710, %v2429
  %v3777 = vsel %vm3731, %v3712, %v2431
  %v3779 = vsel %vm3731, %v3714, %v2433
  %v3781 = vsel %vm3731, %v3716, %v2435
  %v3783 = vsel %vm3731, %v3718, %v2437
  %v3785 = vsel %vm3731, %v3720, %v2439
  %v3787 = vsel %vm3731, %v3722, %v2441
  %v3789 = vsel %vm3731, %v3724, %v2443
  %v3791 = vsel %vm3731, %v3726, %v2445
  %v3793 = vsel %vm3731, %v3728, %v2447
  %v3795 = vsel %vm3731, %v3730, %v2449
  %vm3796 = vcmask 261120
  %v3798 = vsel %vm3796, %v3733, %v2611
  %v3800 = vsel %vm3796, %v3735, %v2613
  %v3802 = vsel %vm3796, %v3737, %v2615
  %v3804 = vsel %vm3796, %v3739, %v2617
  %v3806 = vsel %vm3796, %v3741, %v2619
  %v3808 = vsel %vm3796, %v3743, %v2621
  %v3810 = vsel %vm3796, %v3745, %v2623
  %v3812 = vsel %vm3796, %v3747, %v2625
  %v3814 = vsel %vm3796, %v3749, %v2627
  %v3816 = vsel %vm3796, %v3751, %v2629
  %v3818 = vsel %vm3796, %v3753, %v2631
  %v3820 = vsel %vm3796, %v3755, %v2633
  %v3822 = vsel %vm3796, %v3757, %v2635
  %v3824 = vsel %vm3796, %v3759, %v2637
  %v3826 = vsel %vm3796, %v3761, %v2639
  %v3828 = vsel %vm3796, %v3763, %v2641
  %v3830 = vsel %vm3796, %v3765, %v2643
  %v3832 = vsel %vm3796, %v3767, %v2645
  %v3834 = vsel %vm3796, %v3769, %v2647
  %v3836 = vsel %vm3796, %v3771, %v2649
  %v3838 = vsel %vm3796, %v3773, %v2651
  %v3840 = vsel %vm3796, %v3775, %v2653
  %v3842 = vsel %vm3796, %v3777, %v2655
  %v3844 = vsel %vm3796, %v3779, %v2657
  %v3846 = vsel %vm3796, %v3781, %v2659
  %v3848 = vsel %vm3796, %v3783, %v2661
  %v3850 = vsel %vm3796, %v3785, %v2663
  %v3852 = vsel %vm3796, %v3787, %v2665
  %v3854 = vsel %vm3796, %v3789, %v2667
  %v3856 = vsel %vm3796, %v3791, %v2669
  %v3858 = vsel %vm3796, %v3793, %v2671
  %v3860 = vsel %vm3796, %v3795, %v2673
  %vm3861 = vcmask 326656
  %v3863 = vsel %vm3861, %v3798, %v2835
  %v3865 = vsel %vm3861, %v3800, %v2837
  %v3867 = vsel %vm3861, %v3802, %v2839
  %v3869 = vsel %vm3861, %v3804, %v2841
  %v3871 = vsel %vm3861, %v3806, %v2843
  %v3873 = vsel %vm3861, %v3808, %v2845
  %v3875 = vsel %vm3861, %v3810, %v2847
  %v3877 = vsel %vm3861, %v3812, %v2849
  %v3879 = vsel %vm3861, %v3814, %v2851
  %v3881 = vsel %vm3861, %v3816, %v2853
  %v3883 = vsel %vm3861, %v3818, %v2855
  %v3885 = vsel %vm3861, %v3820, %v2857
  %v3887 = vsel %vm3861, %v3822, %v2859
  %v3889 = vsel %vm3861, %v3824, %v2861
  %v3891 = vsel %vm3861, %v3826, %v2863
  %v3893 = vsel %vm3861, %v3828, %v2865
  %v3895 = vsel %vm3861, %v3830, %v2867
  %v3897 = vsel %vm3861, %v3832, %v2869
  %v3899 = vsel %vm3861, %v3834, %v2871
  %v3901 = vsel %vm3861, %v3836, %v2873
  %v3903 = vsel %vm3861, %v3838, %v2875
  %v3905 = vsel %vm3861, %v3840, %v2877
  %v3907 = vsel %vm3861, %v3842, %v2879
  %v3909 = vsel %vm3861, %v3844, %v2881
  %v3911 = vsel %vm3861, %v3846, %v2883
  %v3913 = vsel %vm3861, %v3848, %v2885
  %v3915 = vsel %vm3861, %v3850, %v2887
  %v3917 = vsel %vm3861, %v3852, %v2889
  %v3919 = vsel %vm3861, %v3854, %v2891
  %v3921 = vsel %vm3861, %v3856, %v2893
  %v3923 = vsel %vm3861, %v3858, %v2895
  %v3925 = vsel %vm3861, %v3860, %v2897
  %vm3926 = vcmask 392192
  %v3928 = vsel %vm3926, %v3863, %v3059
  %v3930 = vsel %vm3926, %v3865, %v3061
  %v3932 = vsel %vm3926, %v3867, %v3063
  %v3934 = vsel %vm3926, %v3869, %v3065
  %v3936 = vsel %vm3926, %v3871, %v3067
  %v3938 = vsel %vm3926, %v3873, %v3069
  %v3940 = vsel %vm3926, %v3875, %v3071
  %v3942 = vsel %vm3926, %v3877, %v3073
  %v3944 = vsel %vm3926, %v3879, %v3075
  %v3946 = vsel %vm3926, %v3881, %v3077
  %v3948 = vsel %vm3926, %v3883, %v3079
  %v3950 = vsel %vm3926, %v3885, %v3081
  %v3952 = vsel %vm3926, %v3887, %v3083
  %v3954 = vsel %vm3926, %v3889, %v3085
  %v3956 = vsel %vm3926, %v3891, %v3087
  %v3958 = vsel %vm3926, %v3893, %v3089
  %v3960 = vsel %vm3926, %v3895, %v3091
  %v3962 = vsel %vm3926, %v3897, %v3093
  %v3964 = vsel %vm3926, %v3899, %v3095
  %v3966 = vsel %vm3926, %v3901, %v3097
  %v3968 = vsel %vm3926, %v3903, %v3099
  %v3970 = vsel %vm3926, %v3905, %v3101
  %v3972 = vsel %vm3926, %v3907, %v3103
  %v3974 = vsel %vm3926, %v3909, %v3105
  %v3976 = vsel %vm3926, %v3911, %v3107
  %v3978 = vsel %vm3926, %v3913, %v3109
  %v3980 = vsel %vm3926, %v3915, %v3111
  %v3982 = vsel %vm3926, %v3917, %v3113
  %v3984 = vsel %vm3926, %v3919, %v3115
  %v3986 = vsel %vm3926, %v3921, %v3117
  %v3988 = vsel %vm3926, %v3923, %v3119
  %v3990 = vsel %vm3926, %v3925, %v3121
  %vm3991 = vcmask 457728
  %v3993 = vsel %vm3991, %v3928, %v3283
  %v3995 = vsel %vm3991, %v3930, %v3285
  %v3997 = vsel %vm3991, %v3932, %v3287
  %v3999 = vsel %vm3991, %v3934, %v3289
  %v4001 = vsel %vm3991, %v3936, %v3291
  %v4003 = vsel %vm3991, %v3938, %v3293
  %v4005 = vsel %vm3991, %v3940, %v3295
  %v4007 = vsel %vm3991, %v3942, %v3297
  %v4009 = vsel %vm3991, %v3944, %v3299
  %v4011 = vsel %vm3991, %v3946, %v3301
  %v4013 = vsel %vm3991, %v3948, %v3303
  %v4015 = vsel %vm3991, %v3950, %v3305
  %v4017 = vsel %vm3991, %v3952, %v3307
  %v4019 = vsel %vm3991, %v3954, %v3309
  %v4021 = vsel %vm3991, %v3956, %v3311
  %v4023 = vsel %vm3991, %v3958, %v3313
  %v4025 = vsel %vm3991, %v3960, %v3315
  %v4027 = vsel %vm3991, %v3962, %v3317
  %v4029 = vsel %vm3991, %v3964, %v3319
  %v4031 = vsel %vm3991, %v3966, %v3321
  %v4033 = vsel %vm3991, %v3968, %v3323
  %v4035 = vsel %vm3991, %v3970, %v3325
  %v4037 = vsel %vm3991, %v3972, %v3327
  %v4039 = vsel %vm3991, %v3974, %v3329
  %v4041 = vsel %vm3991, %v3976, %v3331
  %v4043 = vsel %vm3991, %v3978, %v3333
  %v4045 = vsel %vm3991, %v3980, %v3335
  %v4047 = vsel %vm3991, %v3982, %v3337
  %v4049 = vsel %vm3991, %v3984, %v3339
  %v4051 = vsel %vm3991, %v3986, %v3341
  %v4053 = vsel %vm3991, %v3988, %v3343
  %v4055 = vsel %vm3991, %v3990, %v3345
  %vm4056 = vcmask 523264
  %v4058 = vsel %vm4056, %v3993, %v3507
  %v4060 = vsel %vm4056, %v3995, %v3509
  %v4062 = vsel %vm4056, %v3997, %v3511
  %v4064 = vsel %vm4056, %v3999, %v3513
  %v4066 = vsel %vm4056, %v4001, %v3515
  %v4068 = vsel %vm4056, %v4003, %v3517
  %v4070 = vsel %vm4056, %v4005, %v3519
  %v4072 = vsel %vm4056, %v4007, %v3521
  %v4074 = vsel %vm4056, %v4009, %v3523
  %v4076 = vsel %vm4056, %v4011, %v3525
  %v4078 = vsel %vm4056, %v4013, %v3527
  %v4080 = vsel %vm4056, %v4015, %v3529
  %v4082 = vsel %vm4056, %v4017, %v3531
  %v4084 = vsel %vm4056, %v4019, %v3533
  %v4086 = vsel %vm4056, %v4021, %v3535
  %v4088 = vsel %vm4056, %v4023, %v3537
  %v4090 = vsel %vm4056, %v4025, %v3539
  %v4092 = vsel %vm4056, %v4027, %v3541
  %v4094 = vsel %vm4056, %v4029, %v3543
  %v4096 = vsel %vm4056, %v4031, %v3545
  %v4098 = vsel %vm4056, %v4033, %v3547
  %v4100 = vsel %vm4056, %v4035, %v3549
  %v4102 = vsel %vm4056, %v4037, %v3551
  %v4104 = vsel %vm4056, %v4039, %v3553
  %v4106 = vsel %vm4056, %v4041, %v3555
  %v4108 = vsel %vm4056, %v4043, %v3557
  %v4110 = vsel %vm4056, %v4045, %v3559
  %v4112 = vsel %vm4056, %v4047, %v3561
  %v4114 = vsel %vm4056, %v4049, %v3563
  %v4116 = vsel %vm4056, %v4051, %v3565
  %v4118 = vsel %vm4056, %v4053, %v3567
  %v4120 = vsel %vm4056, %v4055, %v3569
  %v4121 = vld [vmem:[%s3] sm:$0xf]
  %v4122 = vld [vmem:[%s3 + $0x4] sm:$0xf]
  %v4123 = vld [vmem:[%s3 + $0x8] sm:$0xf]
  %v4124 = vld [vmem:[%s3 + $0xc] sm:$0xf]
  %v4125 = vld [vmem:[%s3 + $0x10] sm:$0xf]
  %v4126 = vld [vmem:[%s3 + $0x14] sm:$0xf]
  %v4127 = vld [vmem:[%s3 + $0x18] sm:$0xf]
  %v4128 = vld [vmem:[%s3 + $0x1c] sm:$0xf]
  %v4129 = vld [vmem:[%s3 + $0x20] sm:$0xf]
  %v4139 = vunpack.c.l.b16 %v4121
  %v4140 = vunpack.c.l.b16 %v4122
  %v4141 = vunpack.c.l.b16 %v4123
  %v4142 = vunpack.c.l.b16 %v4124
  %v4143 = vunpack.c.l.b16 %v4125
  %v4144 = vunpack.c.l.b16 %v4126
  %v4145 = vunpack.c.l.b16 %v4127
  %v4146 = vunpack.c.l.b16 %v4128
  %v4147 = vunpack.c.l.b16 %v4129
  %v4148 = vpack.c.b16 %v4140, %v4139
  %v4149 = vpack.c.b16 %v4142, %v4141
  %v4150 = vpack.c.b16 %v4144, %v4143
  %v4151 = vpack.c.b16 %v4146, %v4145
  %v4152 = vpack.c.b16 %v4147, %v4147
  %vm4157 = vcmask 588800
  %v4158 = vsel %vm4157, %v4058, 0
  %v4160 = vsel %vm4157, %v4060, 0
  %v4162 = vsel %vm4157, %v4062, 0
  %v4164 = vsel %vm4157, %v4064, 0
  %v4166 = vsel %vm4157, %v4066, 0
  %v4168 = vsel %vm4157, %v4068, 0
  %v4170 = vsel %vm4157, %v4070, 0
  %v4172 = vsel %vm4157, %v4072, 0
  %v4174 = vsel %vm4157, %v4074, 0
  %v4176 = vsel %vm4157, %v4076, 0
  %v4178 = vsel %vm4157, %v4078, 0
  %v4180 = vsel %vm4157, %v4080, 0
  %v4182 = vsel %vm4157, %v4082, 0
  %v4184 = vsel %vm4157, %v4084, 0
  %v4186 = vsel %vm4157, %v4086, 0
  %v4188 = vsel %vm4157, %v4088, 0
  %v4190 = vsel %vm4157, %v4090, 0
  %v4192 = vsel %vm4157, %v4092, 0
  %v4194 = vsel %vm4157, %v4094, 0
  %v4196 = vsel %vm4157, %v4096, 0
  %v4198 = vsel %vm4157, %v4098, 0
  %v4200 = vsel %vm4157, %v4100, 0
  %v4202 = vsel %vm4157, %v4102, 0
  %v4204 = vsel %vm4157, %v4104, 0
  %v4206 = vsel %vm4157, %v4106, 0
  %v4208 = vsel %vm4157, %v4108, 0
  %v4210 = vsel %vm4157, %v4110, 0
  %v4212 = vsel %vm4157, %v4112, 0
  %v4214 = vsel %vm4157, %v4114, 0
  %v4216 = vsel %vm4157, %v4116, 0
  %v4218 = vsel %vm4157, %v4118, 0
  %v4220 = vsel %vm4157, %v4120, 0
  %vm4222 = vcmask 1043456
  %v4224 = vsel %vm4222, %v4152, 0
  %4226 = vmatpush.bf16.msra.mxu0 0
  %4227 = vmatpush.bf16.msra.mxu0 0
  %4228 = vmatpush.bf16.msra.mxu0 0
  %4229 = vmatpush.bf16.msra.mxu0 %v4224
  %4230 = vmatpush.bf16.msra.mxu0 %v4151
  %4231 = vmatpush.bf16.msra.mxu0 %v4150
  %4232 = vmatpush.bf16.msra.mxu0 %v4149
  %4233 = vmatpush.bf16.msra.mxu0 %v4148
  %4234 = vmatmul.bf16.gmra.mxu0 %v4158
  %v4235 = vpop.f32.mrf.mxu0
  %v4236 = vadd.f32 0.0, %v4235
  %v4237 = vpop.f32.mrf.mxu0
  %v4238 = vadd.f32 0.0, %v4237
  %4239 = vmatmul.bf16.gmra.mxu0 %v4160
  %v4240 = vpop.f32.mrf.mxu0
  %v4241 = vadd.f32 0.0, %v4240
  %v4242 = vpop.f32.mrf.mxu0
  %v4243 = vadd.f32 0.0, %v4242
  %4244 = vmatmul.bf16.gmra.mxu0 %v4162
  %v4245 = vpop.f32.mrf.mxu0
  %v4246 = vadd.f32 0.0, %v4245
  %v4247 = vpop.f32.mrf.mxu0
  %v4248 = vadd.f32 0.0, %v4247
  %4249 = vmatmul.bf16.gmra.mxu0 %v4164
  %v4250 = vpop.f32.mrf.mxu0
  %v4251 = vadd.f32 0.0, %v4250
  %v4252 = vpop.f32.mrf.mxu0
  %v4253 = vadd.f32 0.0, %v4252
  %4254 = vmatmul.bf16.gmra.mxu0 %v4166
  %v4255 = vpop.f32.mrf.mxu0
  %v4256 = vadd.f32 0.0, %v4255
  %v4257 = vpop.f32.mrf.mxu0
  %v4258 = vadd.f32 0.0, %v4257
  %4259 = vmatmul.bf16.gmra.mxu0 %v4168
  %v4260 = vpop.f32.mrf.mxu0
  %v4261 = vadd.f32 0.0, %v4260
  %v4262 = vpop.f32.mrf.mxu0
  %v4263 = vadd.f32 0.0, %v4262
  %4264 = vmatmul.bf16.gmra.mxu0 %v4170
  %v4265 = vpop.f32.mrf.mxu0
  %v4266 = vadd.f32 0.0, %v4265
  %v4267 = vpop.f32.mrf.mxu0
  %v4268 = vadd.f32 0.0, %v4267
  %4269 = vmatmul.bf16.gmra.mxu0 %v4172
  %v4270 = vpop.f32.mrf.mxu0
  %v4271 = vadd.f32 0.0, %v4270
  %v4272 = vpop.f32.mrf.mxu0
  %v4273 = vadd.f32 0.0, %v4272
  %4274 = vmatmul.bf16.gmra.mxu0 %v4174
  %v4275 = vpop.f32.mrf.mxu0
  %v4276 = vadd.f32 0.0, %v4275
  %v4277 = vpop.f32.mrf.mxu0
  %v4278 = vadd.f32 0.0, %v4277
  %4279 = vmatmul.bf16.gmra.mxu0 %v4176
  %v4280 = vpop.f32.mrf.mxu0
  %v4281 = vadd.f32 0.0, %v4280
  %v4282 = vpop.f32.mrf.mxu0
  %v4283 = vadd.f32 0.0, %v4282
  %4284 = vmatmul.bf16.gmra.mxu0 %v4178
  %v4285 = vpop.f32.mrf.mxu0
  %v4286 = vadd.f32 0.0, %v4285
  %v4287 = vpop.f32.mrf.mxu0
  %v4288 = vadd.f32 0.0, %v4287
  %4289 = vmatmul.bf16.gmra.mxu0 %v4180
  %v4290 = vpop.f32.mrf.mxu0
  %v4291 = vadd.f32 0.0, %v4290
  %v4292 = vpop.f32.mrf.mxu0
  %v4293 = vadd.f32 0.0, %v4292
  %4294 = vmatmul.bf16.gmra.mxu0 %v4182
  %v4295 = vpop.f32.mrf.mxu0
  %v4296 = vadd.f32 0.0, %v4295
  %v4297 = vpop.f32.mrf.mxu0
  %v4298 = vadd.f32 0.0, %v4297
  %4299 = vmatmul.bf16.gmra.mxu0 %v4184
  %v4300 = vpop.f32.mrf.mxu0
  %v4301 = vadd.f32 0.0, %v4300
  %v4302 = vpop.f32.mrf.mxu0
  %v4303 = vadd.f32 0.0, %v4302
  %4304 = vmatmul.bf16.gmra.mxu0 %v4186
  %v4305 = vpop.f32.mrf.mxu0
  %v4306 = vadd.f32 0.0, %v4305
  %v4307 = vpop.f32.mrf.mxu0
  %v4308 = vadd.f32 0.0, %v4307
  %4309 = vmatmul.bf16.gmra.mxu0 %v4188
  %v4310 = vpop.f32.mrf.mxu0
  %v4311 = vadd.f32 0.0, %v4310
  %v4312 = vpop.f32.mrf.mxu0
  %v4313 = vadd.f32 0.0, %v4312
  %4314 = vmatmul.bf16.gmra.mxu0 %v4190
  %v4315 = vpop.f32.mrf.mxu0
  %v4316 = vadd.f32 0.0, %v4315
  %v4317 = vpop.f32.mrf.mxu0
  %v4318 = vadd.f32 0.0, %v4317
  %4319 = vmatmul.bf16.gmra.mxu0 %v4192
  %v4320 = vpop.f32.mrf.mxu0
  %v4321 = vadd.f32 0.0, %v4320
  %v4322 = vpop.f32.mrf.mxu0
  %v4323 = vadd.f32 0.0, %v4322
  %4324 = vmatmul.bf16.gmra.mxu0 %v4194
  %v4325 = vpop.f32.mrf.mxu0
  %v4326 = vadd.f32 0.0, %v4325
  %v4327 = vpop.f32.mrf.mxu0
  %v4328 = vadd.f32 0.0, %v4327
  %4329 = vmatmul.bf16.gmra.mxu0 %v4196
  %v4330 = vpop.f32.mrf.mxu0
  %v4331 = vadd.f32 0.0, %v4330
  %v4332 = vpop.f32.mrf.mxu0
  %v4333 = vadd.f32 0.0, %v4332
  %4334 = vmatmul.bf16.gmra.mxu0 %v4198
  %v4335 = vpop.f32.mrf.mxu0
  %v4336 = vadd.f32 0.0, %v4335
  %v4337 = vpop.f32.mrf.mxu0
  %v4338 = vadd.f32 0.0, %v4337
  %4339 = vmatmul.bf16.gmra.mxu0 %v4200
  %v4340 = vpop.f32.mrf.mxu0
  %v4341 = vadd.f32 0.0, %v4340
  %v4342 = vpop.f32.mrf.mxu0
  %v4343 = vadd.f32 0.0, %v4342
  %4344 = vmatmul.bf16.gmra.mxu0 %v4202
  %v4345 = vpop.f32.mrf.mxu0
  %v4346 = vadd.f32 0.0, %v4345
  %v4347 = vpop.f32.mrf.mxu0
  %v4348 = vadd.f32 0.0, %v4347
  %4349 = vmatmul.bf16.gmra.mxu0 %v4204
  %v4350 = vpop.f32.mrf.mxu0
  %v4351 = vadd.f32 0.0, %v4350
  %v4352 = vpop.f32.mrf.mxu0
  %v4353 = vadd.f32 0.0, %v4352
  %4354 = vmatmul.bf16.gmra.mxu0 %v4206
  %v4355 = vpop.f32.mrf.mxu0
  %v4356 = vadd.f32 0.0, %v4355
  %v4357 = vpop.f32.mrf.mxu0
  %v4358 = vadd.f32 0.0, %v4357
  %4359 = vmatmul.bf16.gmra.mxu0 %v4208
  %v4360 = vpop.f32.mrf.mxu0
  %v4361 = vadd.f32 0.0, %v4360
  %v4362 = vpop.f32.mrf.mxu0
  %v4363 = vadd.f32 0.0, %v4362
  %4364 = vmatmul.bf16.gmra.mxu0 %v4210
  %v4365 = vpop.f32.mrf.mxu0
  %v4366 = vadd.f32 0.0, %v4365
  %v4367 = vpop.f32.mrf.mxu0
  %v4368 = vadd.f32 0.0, %v4367
  %4369 = vmatmul.bf16.gmra.mxu0 %v4212
  %v4370 = vpop.f32.mrf.mxu0
  %v4371 = vadd.f32 0.0, %v4370
  %v4372 = vpop.f32.mrf.mxu0
  %v4373 = vadd.f32 0.0, %v4372
  %4374 = vmatmul.bf16.gmra.mxu0 %v4214
  %v4375 = vpop.f32.mrf.mxu0
  %v4376 = vadd.f32 0.0, %v4375
  %v4377 = vpop.f32.mrf.mxu0
  %v4378 = vadd.f32 0.0, %v4377
  %4379 = vmatmul.bf16.gmra.mxu0 %v4216
  %v4380 = vpop.f32.mrf.mxu0
  %v4381 = vadd.f32 0.0, %v4380
  %v4382 = vpop.f32.mrf.mxu0
  %v4383 = vadd.f32 0.0, %v4382
  %4384 = vmatmul.bf16.gmra.mxu0 %v4218
  %v4385 = vpop.f32.mrf.mxu0
  %v4386 = vadd.f32 0.0, %v4385
  %v4387 = vpop.f32.mrf.mxu0
  %v4388 = vadd.f32 0.0, %v4387
  %4389 = vmatmul.bf16.gmra.mxu0 %v4220
  %v4390 = vpop.f32.mrf.mxu0
  %v4391 = vadd.f32 0.0, %v4390
  %v4392 = vpop.f32.mrf.mxu0
  %v4393 = vadd.f32 0.0, %v4392
  %4394 = vdwg.mxu0
  %4395 = vst.msk [vmem:[%s4] sm:$0xff] %vm400, %v4236
  %4396 = vst.msk [vmem:[%s4 + $0x8] sm:$0xff] %vm400, %v4238
  %4397 = vst.msk [vmem:[%s4 + $0x10] sm:$0xff] %vm400, %v4241
  %4398 = vst.msk [vmem:[%s4 + $0x18] sm:$0xff] %vm400, %v4243
  %4399 = vst.msk [vmem:[%s4 + $0x20] sm:$0xff] %vm400, %v4246
  %4400 = vst.msk [vmem:[%s4 + $0x28] sm:$0xff] %vm400, %v4248
  %4401 = vst.msk [vmem:[%s4 + $0x30] sm:$0xff] %vm400, %v4251
  %4402 = vst.msk [vmem:[%s4 + $0x38] sm:$0xff] %vm400, %v4253
  %4403 = vst.msk [vmem:[%s4 + $0x40] sm:$0xff] %vm400, %v4256
  %4404 = vst.msk [vmem:[%s4 + $0x48] sm:$0xff] %vm400, %v4258
  %4405 = vst.msk [vmem:[%s4 + $0x50] sm:$0xff] %vm400, %v4261
  %4406 = vst.msk [vmem:[%s4 + $0x58] sm:$0xff] %vm400, %v4263
  %4407 = vst.msk [vmem:[%s4 + $0x60] sm:$0xff] %vm400, %v4266
  %4408 = vst.msk [vmem:[%s4 + $0x68] sm:$0xff] %vm400, %v4268
  %4409 = vst.msk [vmem:[%s4 + $0x70] sm:$0xff] %vm400, %v4271
  %4410 = vst.msk [vmem:[%s4 + $0x78] sm:$0xff] %vm400, %v4273
  %4411 = vst.msk [vmem:[%s4 + $0x80] sm:$0xff] %vm400, %v4276
  %4412 = vst.msk [vmem:[%s4 + $0x88] sm:$0xff] %vm400, %v4278
  %4413 = vst.msk [vmem:[%s4 + $0x90] sm:$0xff] %vm400, %v4281
  %4414 = vst.msk [vmem:[%s4 + $0x98] sm:$0xff] %vm400, %v4283
  %4415 = vst.msk [vmem:[%s4 + $0xa0] sm:$0xff] %vm400, %v4286
  %4416 = vst.msk [vmem:[%s4 + $0xa8] sm:$0xff] %vm400, %v4288
  %4417 = vst.msk [vmem:[%s4 + $0xb0] sm:$0xff] %vm400, %v4291
  %4418 = vst.msk [vmem:[%s4 + $0xb8] sm:$0xff] %vm400, %v4293
  %4419 = vst.msk [vmem:[%s4 + $0xc0] sm:$0xff] %vm400, %v4296
  %4420 = vst.msk [vmem:[%s4 + $0xc8] sm:$0xff] %vm400, %v4298
  %4421 = vst.msk [vmem:[%s4 + $0xd0] sm:$0xff] %vm400, %v4301
  %4422 = vst.msk [vmem:[%s4 + $0xd8] sm:$0xff] %vm400, %v4303
  %4423 = vst.msk [vmem:[%s4 + $0xe0] sm:$0xff] %vm400, %v4306
  %4424 = vst.msk [vmem:[%s4 + $0xe8] sm:$0xff] %vm400, %v4308
  %4425 = vst.msk [vmem:[%s4 + $0xf0] sm:$0xff] %vm400, %v4311
  %4426 = vst.msk [vmem:[%s4 + $0xf8] sm:$0xff] %vm400, %v4313
  %4427 = vst.msk [vmem:[%s4 + $0x100] sm:$0xff] %vm400, %v4316
  %4428 = vst.msk [vmem:[%s4 + $0x108] sm:$0xff] %vm400, %v4318
  %4429 = vst.msk [vmem:[%s4 + $0x110] sm:$0xff] %vm400, %v4321
  %4430 = vst.msk [vmem:[%s4 + $0x118] sm:$0xff] %vm400, %v4323
  %4431 = vst.msk [vmem:[%s4 + $0x120] sm:$0xff] %vm400, %v4326
  %4432 = vst.msk [vmem:[%s4 + $0x128] sm:$0xff] %vm400, %v4328
  %4433 = vst.msk [vmem:[%s4 + $0x130] sm:$0xff] %vm400, %v4331
  %4434 = vst.msk [vmem:[%s4 + $0x138] sm:$0xff] %vm400, %v4333
  %4435 = vst.msk [vmem:[%s4 + $0x140] sm:$0xff] %vm400, %v4336
  %4436 = vst.msk [vmem:[%s4 + $0x148] sm:$0xff] %vm400, %v4338
  %4437 = vst.msk [vmem:[%s4 + $0x150] sm:$0xff] %vm400, %v4341
  %4438 = vst.msk [vmem:[%s4 + $0x158] sm:$0xff] %vm400, %v4343
  %4439 = vst.msk [vmem:[%s4 + $0x160] sm:$0xff] %vm400, %v4346
  %4440 = vst.msk [vmem:[%s4 + $0x168] sm:$0xff] %vm400, %v4348
  %4441 = vst.msk [vmem:[%s4 + $0x170] sm:$0xff] %vm400, %v4351
  %4442 = vst.msk [vmem:[%s4 + $0x178] sm:$0xff] %vm400, %v4353
  %4443 = vst.msk [vmem:[%s4 + $0x180] sm:$0xff] %vm400, %v4356
  %4444 = vst.msk [vmem:[%s4 + $0x188] sm:$0xff] %vm400, %v4358
  %4445 = vst.msk [vmem:[%s4 + $0x190] sm:$0xff] %vm400, %v4361
  %4446 = vst.msk [vmem:[%s4 + $0x198] sm:$0xff] %vm400, %v4363
  %4447 = vst.msk [vmem:[%s4 + $0x1a0] sm:$0xff] %vm400, %v4366
  %4448 = vst.msk [vmem:[%s4 + $0x1a8] sm:$0xff] %vm400, %v4368
  %4449 = vst.msk [vmem:[%s4 + $0x1b0] sm:$0xff] %vm400, %v4371
  %4450 = vst.msk [vmem:[%s4 + $0x1b8] sm:$0xff] %vm400, %v4373
  %4451 = vst.msk [vmem:[%s4 + $0x1c0] sm:$0xff] %vm400, %v4376
  %4452 = vst.msk [vmem:[%s4 + $0x1c8] sm:$0xff] %vm400, %v4378
  %4453 = vst.msk [vmem:[%s4 + $0x1d0] sm:$0xff] %vm400, %v4381
  %4454 = vst.msk [vmem:[%s4 + $0x1d8] sm:$0xff] %vm400, %v4383
  %4455 = vst.msk [vmem:[%s4 + $0x1e0] sm:$0xff] %vm400, %v4386
  %4456 = vst.msk [vmem:[%s4 + $0x1e8] sm:$0xff] %vm400, %v4388
  %4457 = vst.msk [vmem:[%s4 + $0x1f0] sm:$0xff] %vm400, %v4391
  %4458 = vst.msk [vmem:[%s4 + $0x1f8] sm:$0xff] %vm400, %v4393
  %v4459 = vld [vmem:[%s5] sm:$0x3]
  %v4460 = vsel %vm400, %v4236, 0.0
  %v4461 = vsel %vm400, %v4238, 0.0
  %v4462 = vadd.f32 %v4460, %v4461
  %v4463 = vsel %vm400, %v4241, 0.0
  %v4464 = vadd.f32 %v4462, %v4463
  %v4465 = vsel %vm400, %v4243, 0.0
  %v4466 = vadd.f32 %v4464, %v4465
  %v4467 = vsel %vm400, %v4246, 0.0
  %v4468 = vadd.f32 %v4466, %v4467
  %v4469 = vsel %vm400, %v4248, 0.0
  %v4470 = vadd.f32 %v4468, %v4469
  %v4471 = vsel %vm400, %v4251, 0.0
  %v4472 = vadd.f32 %v4470, %v4471
  %v4473 = vsel %vm400, %v4253, 0.0
  %v4474 = vadd.f32 %v4472, %v4473
  %v4475 = vsel %vm400, %v4256, 0.0
  %v4476 = vadd.f32 %v4474, %v4475
  %v4477 = vsel %vm400, %v4258, 0.0
  %v4478 = vadd.f32 %v4476, %v4477
  %v4479 = vsel %vm400, %v4261, 0.0
  %v4480 = vadd.f32 %v4478, %v4479
  %v4481 = vsel %vm400, %v4263, 0.0
  %v4482 = vadd.f32 %v4480, %v4481
  %v4483 = vsel %vm400, %v4266, 0.0
  %v4484 = vadd.f32 %v4482, %v4483
  %v4485 = vsel %vm400, %v4268, 0.0
  %v4486 = vadd.f32 %v4484, %v4485
  %v4487 = vsel %vm400, %v4271, 0.0
  %v4488 = vadd.f32 %v4486, %v4487
  %v4489 = vsel %vm400, %v4273, 0.0
  %v4490 = vadd.f32 %v4488, %v4489
  %v4491 = vsel %vm400, %v4276, 0.0
  %v4492 = vadd.f32 %v4490, %v4491
  %v4493 = vsel %vm400, %v4278, 0.0
  %v4494 = vadd.f32 %v4492, %v4493
  %v4495 = vsel %vm400, %v4281, 0.0
  %v4496 = vadd.f32 %v4494, %v4495
  %v4497 = vsel %vm400, %v4283, 0.0
  %v4498 = vadd.f32 %v4496, %v4497
  %v4499 = vsel %vm400, %v4286, 0.0
  %v4500 = vadd.f32 %v4498, %v4499
  %v4501 = vsel %vm400, %v4288, 0.0
  %v4502 = vadd.f32 %v4500, %v4501
  %v4503 = vsel %vm400, %v4291, 0.0
  %v4504 = vadd.f32 %v4502, %v4503
  %v4505 = vsel %vm400, %v4293, 0.0
  %v4506 = vadd.f32 %v4504, %v4505
  %v4507 = vsel %vm400, %v4296, 0.0
  %v4508 = vadd.f32 %v4506, %v4507
  %v4509 = vsel %vm400, %v4298, 0.0
  %v4510 = vadd.f32 %v4508, %v4509
  %v4511 = vsel %vm400, %v4301, 0.0
  %v4512 = vadd.f32 %v4510, %v4511
  %v4513 = vsel %vm400, %v4303, 0.0
  %v4514 = vadd.f32 %v4512, %v4513
  %v4515 = vsel %vm400, %v4306, 0.0
  %v4516 = vadd.f32 %v4514, %v4515
  %v4517 = vsel %vm400, %v4308, 0.0
  %v4518 = vadd.f32 %v4516, %v4517
  %v4519 = vsel %vm400, %v4311, 0.0
  %v4520 = vadd.f32 %v4518, %v4519
  %v4521 = vsel %vm400, %v4313, 0.0
  %v4522 = vadd.f32 %v4520, %v4521
  %v4523 = vsel %vm400, %v4316, 0.0
  %v4524 = vadd.f32 %v4522, %v4523
  %v4525 = vsel %vm400, %v4318, 0.0
  %v4526 = vadd.f32 %v4524, %v4525
  %v4527 = vsel %vm400, %v4321, 0.0
  %v4528 = vadd.f32 %v4526, %v4527
  %v4529 = vsel %vm400, %v4323, 0.0
  %v4530 = vadd.f32 %v4528, %v4529
  %v4531 = vsel %vm400, %v4326, 0.0
  %v4532 = vadd.f32 %v4530, %v4531
  %v4533 = vsel %vm400, %v4328, 0.0
  %v4534 = vadd.f32 %v4532, %v4533
  %v4535 = vsel %vm400, %v4331, 0.0
  %v4536 = vadd.f32 %v4534, %v4535
  %v4537 = vsel %vm400, %v4333, 0.0
  %v4538 = vadd.f32 %v4536, %v4537
  %v4539 = vsel %vm400, %v4336, 0.0
  %v4540 = vadd.f32 %v4538, %v4539
  %v4541 = vsel %vm400, %v4338, 0.0
  %v4542 = vadd.f32 %v4540, %v4541
  %v4543 = vsel %vm400, %v4341, 0.0
  %v4544 = vadd.f32 %v4542, %v4543
  %v4545 = vsel %vm400, %v4343, 0.0
  %v4546 = vadd.f32 %v4544, %v4545
  %v4547 = vsel %vm400, %v4346, 0.0
  %v4548 = vadd.f32 %v4546, %v4547
  %v4549 = vsel %vm400, %v4348, 0.0
  %v4550 = vadd.f32 %v4548, %v4549
  %v4551 = vsel %vm400, %v4351, 0.0
  %v4552 = vadd.f32 %v4550, %v4551
  %v4553 = vsel %vm400, %v4353, 0.0
  %v4554 = vadd.f32 %v4552, %v4553
  %v4555 = vsel %vm400, %v4356, 0.0
  %v4556 = vadd.f32 %v4554, %v4555
  %v4557 = vsel %vm400, %v4358, 0.0
  %v4558 = vadd.f32 %v4556, %v4557
  %v4559 = vsel %vm400, %v4361, 0.0
  %v4560 = vadd.f32 %v4558, %v4559
  %v4561 = vsel %vm400, %v4363, 0.0
  %v4562 = vadd.f32 %v4560, %v4561
  %v4563 = vsel %vm400, %v4366, 0.0
  %v4564 = vadd.f32 %v4562, %v4563
  %v4565 = vsel %vm400, %v4368, 0.0
  %v4566 = vadd.f32 %v4564, %v4565
  %v4567 = vsel %vm400, %v4371, 0.0
  %v4568 = vadd.f32 %v4566, %v4567
  %v4569 = vsel %vm400, %v4373, 0.0
  %v4570 = vadd.f32 %v4568, %v4569
  %v4571 = vsel %vm400, %v4376, 0.0
  %v4572 = vadd.f32 %v4570, %v4571
  %v4573 = vsel %vm400, %v4378, 0.0
  %v4574 = vadd.f32 %v4572, %v4573
  %v4575 = vsel %vm400, %v4381, 0.0
  %v4576 = vadd.f32 %v4574, %v4575
  %v4577 = vsel %vm400, %v4383, 0.0
  %v4578 = vadd.f32 %v4576, %v4577
  %v4579 = vsel %vm400, %v4386, 0.0
  %v4580 = vadd.f32 %v4578, %v4579
  %v4581 = vsel %vm400, %v4388, 0.0
  %v4582 = vadd.f32 %v4580, %v4581
  %v4583 = vsel %vm400, %v4391, 0.0
  %v4584 = vadd.f32 %v4582, %v4583
  %v4585 = vsel %vm400, %v4393, 0.0
  %v4586 = vadd.f32 %v4584, %v4585
  %v4587 = vrot.slane %v4586, 4
  %v4588 = vadd.f32 %v4586, %v4587
  %v4589 = vrot.slane %v4588, 2
  %v4590 = vadd.f32 %v4588, %v4589
  %v4591 = vrot.slane %v4590, 1
  %v4592 = vadd.f32 %v4590, %v4591
  %v4593 = vmul.f32 %v4236, %v4236
  %v4594 = vmul.f32 %v4238, %v4238
  %v4595 = vmul.f32 %v4241, %v4241
  %v4596 = vmul.f32 %v4243, %v4243
  %v4597 = vmul.f32 %v4246, %v4246
  %v4598 = vmul.f32 %v4248, %v4248
  %v4599 = vmul.f32 %v4251, %v4251
  %v4600 = vmul.f32 %v4253, %v4253
  %v4601 = vmul.f32 %v4256, %v4256
  %v4602 = vmul.f32 %v4258, %v4258
  %v4603 = vmul.f32 %v4261, %v4261
  %v4604 = vmul.f32 %v4263, %v4263
  %v4605 = vmul.f32 %v4266, %v4266
  %v4606 = vmul.f32 %v4268, %v4268
  %v4607 = vmul.f32 %v4271, %v4271
  %v4608 = vmul.f32 %v4273, %v4273
  %v4609 = vmul.f32 %v4276, %v4276
  %v4610 = vmul.f32 %v4278, %v4278
  %v4611 = vmul.f32 %v4281, %v4281
  %v4612 = vmul.f32 %v4283, %v4283
  %v4613 = vmul.f32 %v4286, %v4286
  %v4614 = vmul.f32 %v4288, %v4288
  %v4615 = vmul.f32 %v4291, %v4291
  %v4616 = vmul.f32 %v4293, %v4293
  %v4617 = vmul.f32 %v4296, %v4296
  %v4618 = vmul.f32 %v4298, %v4298
  %v4619 = vmul.f32 %v4301, %v4301
  %v4620 = vmul.f32 %v4303, %v4303
  %v4621 = vmul.f32 %v4306, %v4306
  %v4622 = vmul.f32 %v4308, %v4308
  %v4623 = vmul.f32 %v4311, %v4311
  %v4624 = vmul.f32 %v4313, %v4313
  %v4625 = vmul.f32 %v4316, %v4316
  %v4626 = vmul.f32 %v4318, %v4318
  %v4627 = vmul.f32 %v4321, %v4321
  %v4628 = vmul.f32 %v4323, %v4323
  %v4629 = vmul.f32 %v4326, %v4326
  %v4630 = vmul.f32 %v4328, %v4328
  %v4631 = vmul.f32 %v4331, %v4331
  %v4632 = vmul.f32 %v4333, %v4333
  %v4633 = vmul.f32 %v4336, %v4336
  %v4634 = vmul.f32 %v4338, %v4338
  %v4635 = vmul.f32 %v4341, %v4341
  %v4636 = vmul.f32 %v4343, %v4343
  %v4637 = vmul.f32 %v4346, %v4346
  %v4638 = vmul.f32 %v4348, %v4348
  %v4639 = vmul.f32 %v4351, %v4351
  %v4640 = vmul.f32 %v4353, %v4353
  %v4641 = vmul.f32 %v4356, %v4356
  %v4642 = vmul.f32 %v4358, %v4358
  %v4643 = vmul.f32 %v4361, %v4361
  %v4644 = vmul.f32 %v4363, %v4363
  %v4645 = vmul.f32 %v4366, %v4366
  %v4646 = vmul.f32 %v4368, %v4368
  %v4647 = vmul.f32 %v4371, %v4371
  %v4648 = vmul.f32 %v4373, %v4373
  %v4649 = vmul.f32 %v4376, %v4376
  %v4650 = vmul.f32 %v4378, %v4378
  %v4651 = vmul.f32 %v4381, %v4381
  %v4652 = vmul.f32 %v4383, %v4383
  %v4653 = vmul.f32 %v4386, %v4386
  %v4654 = vmul.f32 %v4388, %v4388
  %v4655 = vmul.f32 %v4391, %v4391
  %v4656 = vmul.f32 %v4393, %v4393
  %v4657 = vsel %vm400, %v4593, 0.0
  %v4658 = vsel %vm400, %v4594, 0.0
  %v4659 = vadd.f32 %v4657, %v4658
  %v4660 = vsel %vm400, %v4595, 0.0
  %v4661 = vadd.f32 %v4659, %v4660
  %v4662 = vsel %vm400, %v4596, 0.0
  %v4663 = vadd.f32 %v4661, %v4662
  %v4664 = vsel %vm400, %v4597, 0.0
  %v4665 = vadd.f32 %v4663, %v4664
  %v4666 = vsel %vm400, %v4598, 0.0
  %v4667 = vadd.f32 %v4665, %v4666
  %v4668 = vsel %vm400, %v4599, 0.0
  %v4669 = vadd.f32 %v4667, %v4668
  %v4670 = vsel %vm400, %v4600, 0.0
  %v4671 = vadd.f32 %v4669, %v4670
  %v4672 = vsel %vm400, %v4601, 0.0
  %v4673 = vadd.f32 %v4671, %v4672
  %v4674 = vsel %vm400, %v4602, 0.0
  %v4675 = vadd.f32 %v4673, %v4674
  %v4676 = vsel %vm400, %v4603, 0.0
  %v4677 = vadd.f32 %v4675, %v4676
  %v4678 = vsel %vm400, %v4604, 0.0
  %v4679 = vadd.f32 %v4677, %v4678
  %v4680 = vsel %vm400, %v4605, 0.0
  %v4681 = vadd.f32 %v4679, %v4680
  %v4682 = vsel %vm400, %v4606, 0.0
  %v4683 = vadd.f32 %v4681, %v4682
  %v4684 = vsel %vm400, %v4607, 0.0
  %v4685 = vadd.f32 %v4683, %v4684
  %v4686 = vsel %vm400, %v4608, 0.0
  %v4687 = vadd.f32 %v4685, %v4686
  %v4688 = vsel %vm400, %v4609, 0.0
  %v4689 = vadd.f32 %v4687, %v4688
  %v4690 = vsel %vm400, %v4610, 0.0
  %v4691 = vadd.f32 %v4689, %v4690
  %v4692 = vsel %vm400, %v4611, 0.0
  %v4693 = vadd.f32 %v4691, %v4692
  %v4694 = vsel %vm400, %v4612, 0.0
  %v4695 = vadd.f32 %v4693, %v4694
  %v4696 = vsel %vm400, %v4613, 0.0
  %v4697 = vadd.f32 %v4695, %v4696
  %v4698 = vsel %vm400, %v4614, 0.0
  %v4699 = vadd.f32 %v4697, %v4698
  %v4700 = vsel %vm400, %v4615, 0.0
  %v4701 = vadd.f32 %v4699, %v4700
  %v4702 = vsel %vm400, %v4616, 0.0
  %v4703 = vadd.f32 %v4701, %v4702
  %v4704 = vsel %vm400, %v4617, 0.0
  %v4705 = vadd.f32 %v4703, %v4704
  %v4706 = vsel %vm400, %v4618, 0.0
  %v4707 = vadd.f32 %v4705, %v4706
  %v4708 = vsel %vm400, %v4619, 0.0
  %v4709 = vadd.f32 %v4707, %v4708
  %v4710 = vsel %vm400, %v4620, 0.0
  %v4711 = vadd.f32 %v4709, %v4710
  %v4712 = vsel %vm400, %v4621, 0.0
  %v4713 = vadd.f32 %v4711, %v4712
  %v4714 = vsel %vm400, %v4622, 0.0
  %v4715 = vadd.f32 %v4713, %v4714
  %v4716 = vsel %vm400, %v4623, 0.0
  %v4717 = vadd.f32 %v4715, %v4716
  %v4718 = vsel %vm400, %v4624, 0.0
  %v4719 = vadd.f32 %v4717, %v4718
  %v4720 = vsel %vm400, %v4625, 0.0
  %v4721 = vadd.f32 %v4719, %v4720
  %v4722 = vsel %vm400, %v4626, 0.0
  %v4723 = vadd.f32 %v4721, %v4722
  %v4724 = vsel %vm400, %v4627, 0.0
  %v4725 = vadd.f32 %v4723, %v4724
  %v4726 = vsel %vm400, %v4628, 0.0
  %v4727 = vadd.f32 %v4725, %v4726
  %v4728 = vsel %vm400, %v4629, 0.0
  %v4729 = vadd.f32 %v4727, %v4728
  %v4730 = vsel %vm400, %v4630, 0.0
  %v4731 = vadd.f32 %v4729, %v4730
  %v4732 = vsel %vm400, %v4631, 0.0
  %v4733 = vadd.f32 %v4731, %v4732
  %v4734 = vsel %vm400, %v4632, 0.0
  %v4735 = vadd.f32 %v4733, %v4734
  %v4736 = vsel %vm400, %v4633, 0.0
  %v4737 = vadd.f32 %v4735, %v4736
  %v4738 = vsel %vm400, %v4634, 0.0
  %v4739 = vadd.f32 %v4737, %v4738
  %v4740 = vsel %vm400, %v4635, 0.0
  %v4741 = vadd.f32 %v4739, %v4740
  %v4742 = vsel %vm400, %v4636, 0.0
  %v4743 = vadd.f32 %v4741, %v4742
  %v4744 = vsel %vm400, %v4637, 0.0
  %v4745 = vadd.f32 %v4743, %v4744
  %v4746 = vsel %vm400, %v4638, 0.0
  %v4747 = vadd.f32 %v4745, %v4746
  %v4748 = vsel %vm400, %v4639, 0.0
  %v4749 = vadd.f32 %v4747, %v4748
  %v4750 = vsel %vm400, %v4640, 0.0
  %v4751 = vadd.f32 %v4749, %v4750
  %v4752 = vsel %vm400, %v4641, 0.0
  %v4753 = vadd.f32 %v4751, %v4752
  %v4754 = vsel %vm400, %v4642, 0.0
  %v4755 = vadd.f32 %v4753, %v4754
  %v4756 = vsel %vm400, %v4643, 0.0
  %v4757 = vadd.f32 %v4755, %v4756
  %v4758 = vsel %vm400, %v4644, 0.0
  %v4759 = vadd.f32 %v4757, %v4758
  %v4760 = vsel %vm400, %v4645, 0.0
  %v4761 = vadd.f32 %v4759, %v4760
  %v4762 = vsel %vm400, %v4646, 0.0
  %v4763 = vadd.f32 %v4761, %v4762
  %v4764 = vsel %vm400, %v4647, 0.0
  %v4765 = vadd.f32 %v4763, %v4764
  %v4766 = vsel %vm400, %v4648, 0.0
  %v4767 = vadd.f32 %v4765, %v4766
  %v4768 = vsel %vm400, %v4649, 0.0
  %v4769 = vadd.f32 %v4767, %v4768
  %v4770 = vsel %vm400, %v4650, 0.0
  %v4771 = vadd.f32 %v4769, %v4770
  %v4772 = vsel %vm400, %v4651, 0.0
  %v4773 = vadd.f32 %v4771, %v4772
  %v4774 = vsel %vm400, %v4652, 0.0
  %v4775 = vadd.f32 %v4773, %v4774
  %v4776 = vsel %vm400, %v4653, 0.0
  %v4777 = vadd.f32 %v4775, %v4776
  %v4778 = vsel %vm400, %v4654, 0.0
  %v4779 = vadd.f32 %v4777, %v4778
  %v4780 = vsel %vm400, %v4655, 0.0
  %v4781 = vadd.f32 %v4779, %v4780
  %v4782 = vsel %vm400, %v4656, 0.0
  %v4783 = vadd.f32 %v4781, %v4782
  %v4784 = vrot.slane %v4783, 4
  %v4785 = vadd.f32 %v4783, %v4784
  %v4786 = vrot.slane %v4785, 2
  %v4787 = vadd.f32 %v4785, %v4786
  %v4788 = vrot.slane %v4787, 1
  %v4789 = vadd.f32 %v4787, %v4788
  %vm4790 = vcmask 1040384
  %v4791 = vsel %vm4790, %v4592, %v4789
  %v4792 = vadd.f32 %v4459, %v4791
  %vm4793 = vcmask 58368
  %4794 = vst.msk [vmem:[%s5] sm:$0x3] %vm4793, %v4792
  // Predicated region
  $region22: #{basic_block_forward.4} parent=0 // pred_check
    _
  $region23: #{basic_block_forward.4} parent=0 // pred_check_branch
    %4796 = sbr.rel (0) target = $region25
  $region24: #{basic_block_forward.4} parent=0 // pred_region
    _
  $region25: #{basic_block_forward.4} parent=0 // pred_fallthru
    _
  // Predicated region
  $region26: #{basic_block_forward.4} parent=0 // pred_check
    _
  $region27: #{basic_block_forward.4} parent=0 // pred_check_branch
    %4798 = sbr.rel (0) target = $region29
  $region28: #{basic_block_forward.4} parent=0 // pred_region
    _
  $region29: #{basic_block_forward.4} parent=0 // pred_fallthru
    _
  // Predicated region
  $region30: #{basic_block_forward.4} parent=0 // pred_check
    _
  $region31: #{basic_block_forward.4} parent=0 // pred_check_branch
    %4800 = sbr.rel (0) target = $region33
  $region32: #{basic_block_forward.4} parent=0 // pred_region
    _
  $region33: #{basic_block_forward.4} parent=0 // pred_fallthru
    _
  // Predicated region
  $region34: #{basic_block_forward.4} parent=0 // pred_check
    _
  $region35: #{basic_block_forward.4} parent=0 // pred_check_branch
    %4802 = sbr.rel (0) target = $region37
  $region36: #{basic_block_forward.4} parent=0 // pred_region
    _
  $region37: #{basic_block_forward.4} parent=0 // pred_fallthru
    _

</llo_original>
